<compile_context>
chip_gen: v7x
topology: tpu7x:2x2x1
jax: 0.10.0
libtpu: 0.0.40
codegen_flags: <defaults>
</compile_context>

<pallas_src>
import jax
import jax.numpy as jnp
from jax.experimental import pallas as pl
from jax.experimental.pallas import tpu as pltpu


def _round_up(x, m):
    return ((x + m - 1) // m) * m


# ----------------------------------------------------------------------------
# Kernel 1: fused conv-as-matmul (single dot over the 4 pool corners) + MaxPool(2,2)
#           + bias + ReLU + BatchNorm (inference affine).
#   x_ref  : (4*Mp, K) bf16   im2col patches, corner-major row slabs
#   w_ref  : (K, N)    bf16   reshaped conv weight
#   aux_ref: (3, N)    f32    rows = [conv bias, BN scale, BN shift]
#   o_ref  : (Mp, N)   bf16   pooled + normalized output rows
# ----------------------------------------------------------------------------
def _conv_pool_bn_kernel(x_ref, w_ref, aux_ref, o_ref):
    mp = o_ref.shape[0]
    # One long MXU stream: (4*Mp, K) @ (K, N), f32 accumulation.
    r = jnp.dot(x_ref[...], w_ref[...], preferred_element_type=jnp.float32)
    # MaxPool(2,2): max over the four corner slabs (static, sublane-aligned slices).
    m = jnp.maximum(jnp.maximum(r[0 * mp:1 * mp], r[1 * mp:2 * mp]),
                    jnp.maximum(r[2 * mp:3 * mp], r[3 * mp:4 * mp]))
    z = jnp.maximum(m + aux_ref[0:1, :], 0.0)                            # bias + ReLU
    o_ref[...] = (z * aux_ref[1:2, :] + aux_ref[2:3, :]).astype(o_ref.dtype)  # BN affine


def conv_pool_bn(patches, w_mat, aux):
    """patches: (4, M, K) bf16, w_mat: (K, N) bf16, aux: (3, N) f32 -> (M, N) bf16."""
    _, M, K = patches.shape
    N = w_mat.shape[1]
    Mp = _round_up(M, 16)                       # bf16 sublane packing friendly
    if Mp != M:
        patches = jnp.pad(patches, ((0, 0), (0, Mp - M), (0, 0)))
    x2d = patches.reshape(4 * Mp, K)            # corner-major concat (XLA-side, cheap)

    flops = 2 * 4 * Mp * K * N
    bytes_acc = int(x2d.size * 2 + w_mat.size * 2 + aux.size * 4 + Mp * N * 2)

    # Single grid step: every block is tiny (< 1 MiB), so a multi-step grid would only
    # add ~0.35 us/step on single-TC chips with no compute to hide it under.
    out = pl.pallas_call(
        _conv_pool_bn_kernel,
        out_shape=jax.ShapeDtypeStruct((Mp, N), jnp.bfloat16),
        grid=(1,),
        in_specs=[
            pl.BlockSpec((4 * Mp, K), lambda i: (0, 0)),
            pl.BlockSpec((K, N), lambda i: (0, 0)),
            pl.BlockSpec((3, N), lambda i: (0, 0)),
        ],
        out_specs=pl.BlockSpec((Mp, N), lambda i: (0, 0)),
        compiler_params=pltpu.CompilerParams(dimension_semantics=("arbitrary",)),
        cost_estimate=pl.CostEstimate(flops=flops, transcendentals=0,
                                      bytes_accessed=bytes_acc),
    )(x2d, w_mat, aux)
    return out[:M]


# ----------------------------------------------------------------------------
# Kernel 2: the whole FC head fused into one call.
#   fc1(2048->512)+ReLU -> fc2(512->128)+ReLU -> fc3(128->10, zero-padded to 128 lanes)
#   Weights bf16, accumulation f32, intermediates stay in VMEM/vregs.
# ----------------------------------------------------------------------------
def _fc_fused_kernel(x_ref, w1_ref, b1_ref, w2_ref, b2_ref, w3_ref, b3_ref, o_ref):
    h = jnp.dot(x_ref[...], w1_ref[...], preferred_element_type=jnp.float32) + b1_ref[...]
    h = jnp.maximum(h, 0.0).astype(jnp.bfloat16)                       # fc1 + ReLU
    h = jnp.dot(h, w2_ref[...], preferred_element_type=jnp.float32) + b2_ref[...]
    h = jnp.maximum(h, 0.0).astype(jnp.bfloat16)                       # fc2 + ReLU
    o = jnp.dot(h, w3_ref[...], preferred_element_type=jnp.float32) + b3_ref[...]
    o_ref[...] = o                                                     # fc3 (lane-dense, 128 cols)


def fc_head(x, q, num_classes=10):
    """x: (B, 2048) bf16 -> logits (B, num_classes) f32, single fused pallas_call."""
    B, K = x.shape
    Mp = _round_up(B, 16)
    if Mp != B:
        x = jnp.pad(x, ((0, Mp - B), (0, 0)))
    N1 = q["fc1_w"].shape[1]
    N2 = q["fc2_w"].shape[1]
    N3 = q["fc3_w"].shape[1]                    # 128 (zero-padded from 10)

    flops = 2 * Mp * (K * N1 + N1 * N2 + N2 * N3)
    bytes_acc = int(x.size * 2 + (q["fc1_w"].size + q["fc2_w"].size + q["fc3_w"].size) * 2
                    + (N1 + N2 + N3) * 4 + Mp * N3 * 4)

    out = pl.pallas_call(
        _fc_fused_kernel,
        out_shape=jax.ShapeDtypeStruct((Mp, N3), jnp.float32),
        grid=(1,),
        in_specs=[
            pl.BlockSpec((Mp, K), lambda i: (0, 0)),
            pl.BlockSpec((K, N1), lambda i: (0, 0)),
            pl.BlockSpec((1, N1), lambda i: (0, 0)),
            pl.BlockSpec((N1, N2), lambda i: (0, 0)),
            pl.BlockSpec((1, N2), lambda i: (0, 0)),
            pl.BlockSpec((N2, N3), lambda i: (0, 0)),
            pl.BlockSpec((1, N3), lambda i: (0, 0)),
        ],
        out_specs=pl.BlockSpec((Mp, N3), lambda i: (0, 0)),
        compiler_params=pltpu.CompilerParams(dimension_semantics=("arbitrary",)),
        cost_estimate=pl.CostEstimate(flops=flops, transcendentals=0,
                                      bytes_accessed=bytes_acc),
    )(x, q["fc1_w"], q["fc1_b"], q["fc2_w"], q["fc2_b"], q["fc3_w"], q["fc3_b"])
    return out[:B, :num_classes]


# ----------------------------------------------------------------------------
# Glue: im2col arranged by 2x2-pool corner (matches PyTorch conv stride=1 +
# MaxPool2d(2) with ceil_mode=False; odd trailing rows/cols are dropped).
# Runs in bf16 so the materialized patches are half the size of v2.
# ----------------------------------------------------------------------------
def im2col_pooled(x_nhwc, kh, kw, pad):
    B, H, W, C = x_nhwc.shape
    xp = jnp.pad(x_nhwc, ((0, 0), (pad, pad), (pad, pad), (0, 0)))
    OH = H + 2 * pad - kh + 1
    OW = W + 2 * pad - kw + 1
    Ho, Wo = OH // 2, OW // 2
    corners = []
    for dy in (0, 1):
        for dx in (0, 1):
            taps = []
            for i in range(kh):
                for j in range(kw):
                    taps.append(xp[:, dy + i: dy + i + 2 * Ho: 2,
                                      dx + j: dx + j + 2 * Wo: 2, :])   # (B, Ho, Wo, C)
            c = jnp.stack(taps, axis=3)                  # (B, Ho, Wo, kh*kw, C)
            corners.append(c.reshape(B * Ho * Wo, kh * kw * C))
    patches = jnp.stack(corners, axis=0)                 # (4, B*Ho*Wo, kh*kw*C)
    return patches, Ho, Wo


def conv_block(x_nhwc, w_mat, kh, kw, pad, aux, cout):
    """Conv2d(stride=1, padding=pad) -> ReLU -> MaxPool(2,2) -> BatchNorm (eval)."""
    B = x_nhwc.shape[0]
    patches, Ho, Wo = im2col_pooled(x_nhwc, kh, kw, pad)
    y = conv_pool_bn(patches, w_mat, aux)                # (B*Ho*Wo, Cout) bf16
    return y.reshape(B, Ho, Wo, cout)                    # NHWC


# ----------------------------------------------------------------------------
# Parameters: torch-layout init, then a one-time layout/precision preparation
# (hoisted out of the forward pass entirely).
# ----------------------------------------------------------------------------
def init_params(key):
    ks = jax.random.split(key, 16)
    s = 0.05
    p = {}
    p["w1"] = jax.random.normal(ks[0], (32, 1, 3, 3), jnp.float32) * s
    p["b1"] = jax.random.normal(ks[1], (32,), jnp.float32) * s
    p["w2"] = jax.random.normal(ks[2], (64, 32, 5, 5), jnp.float32) * s
    p["b2"] = jax.random.normal(ks[3], (64,), jnp.float32) * s
    p["w3"] = jax.random.normal(ks[4], (128, 64, 1, 1), jnp.float32) * s
    p["b3"] = jax.random.normal(ks[5], (128,), jnp.float32) * s
    p["g1"] = 1.0 + jax.random.normal(ks[6], (32,), jnp.float32) * s
    p["be1"] = jax.random.normal(ks[7], (32,), jnp.float32) * s
    p["g2"] = 1.0 + jax.random.normal(ks[8], (64,), jnp.float32) * s
    p["be2"] = jax.random.normal(ks[9], (64,), jnp.float32) * s
    p["g3"] = 1.0 + jax.random.normal(ks[10], (128,), jnp.float32) * s
    p["be3"] = jax.random.normal(ks[11], (128,), jnp.float32) * s
    p["fc1_w"] = jax.random.normal(ks[12], (512, 2048), jnp.float32) * s  # torch Linear: (out, in)
    p["fc1_b"] = jnp.zeros((512,), jnp.float32)
    p["fc2_w"] = jax.random.normal(ks[13], (128, 512), jnp.float32) * s
    p["fc2_b"] = jnp.zeros((128,), jnp.float32)
    p["fc3_w"] = jax.random.normal(ks[14], (10, 128), jnp.float32) * s
    p["fc3_b"] = jnp.zeros((10,), jnp.float32)
    return p


def _bn_affine(gamma, beta, eps=1e-5):
    # inference: running_mean = 0, running_var = 1
    scale = gamma / jnp.sqrt(1.0 + eps)
    shift = beta
    return scale.reshape(1, -1), shift.reshape(1, -1)


def _conv_w_mat(w):
    # (Cout, Cin, kh, kw) -> (kh*kw*Cin, Cout); row index = (i*kw + j)*Cin + cin,
    # matching im2col_pooled's tap-major / channel-minor K ordering.
    cout, cin, kh, kw = w.shape
    return jnp.transpose(w, (2, 3, 1, 0)).reshape(kh * kw * cin, cout)


def prepare_params(p):
    """One-time layout/precision prep: no transposes/copies inside the forward pass."""
    q = {}
    for idx in (1, 2, 3):
        q[f"cw{idx}"] = _conv_w_mat(p[f"w{idx}"]).astype(jnp.bfloat16)
        scale, shift = _bn_affine(p[f"g{idx}"], p[f"be{idx}"])
        # Pack conv bias + BN scale + BN shift into one (3, N) array -> one DMA per call.
        q[f"aux{idx}"] = jnp.concatenate(
            [p[f"b{idx}"].reshape(1, -1), scale, shift], axis=0).astype(jnp.float32)

    # fc1: transpose to (in, out), permute rows so it consumes the NHWC flatten order
    # directly (equivalent to torch's NCHW flatten + Linear), then bf16.
    C, Hh, Ww = 128, 4, 4
    nchw_idx = jnp.arange(C * Hh * Ww).reshape(C, Hh, Ww).transpose(1, 2, 0).reshape(-1)
    q["fc1_w"] = p["fc1_w"].T[nchw_idx].astype(jnp.bfloat16)          # (2048, 512)
    q["fc1_b"] = p["fc1_b"].reshape(1, -1)
    q["fc2_w"] = p["fc2_w"].T.astype(jnp.bfloat16)                    # (512, 128)
    q["fc2_b"] = p["fc2_b"].reshape(1, -1)
    # fc3: pad N=10 -> 128 so the final store is lane-dense; slice back outside.
    q["fc3_w"] = jnp.pad(p["fc3_w"].T, ((0, 0), (0, 118))).astype(jnp.bfloat16)  # (128, 128)
    q["fc3_b"] = jnp.pad(p["fc3_b"], (0, 118)).reshape(1, -1)
    return q


@jax.jit
def model_forward(x_nchw, q):
    # x: (B, 1, 28, 28) NCHW float32
    B = x_nchw.shape[0]
    h = x_nchw.transpose(0, 2, 3, 1).astype(jnp.bfloat16)                 # NHWC, bf16 path

    h = conv_block(h, q["cw1"], 3, 3, 2, q["aux1"], 32)                   # (B, 15, 15, 32)
    h = conv_block(h, q["cw2"], 5, 5, 1, q["aux2"], 64)                   # (B, 6, 6, 64)
    h = conv_block(h, q["cw3"], 1, 1, 1, q["aux3"], 128)                  # (B, 4, 4, 128)

    h = h.reshape(B, -1)                    # NHWC flatten; fc1_w rows are pre-permuted
    return fc_head(h, q)                    # (B, 10) f32, fc1/fc2/fc3 in one kernel


if __name__ == "__main__":
    key = jax.random.PRNGKey(0)
    k_x, k_p = jax.random.split(key)
    x = jax.random.normal(k_x, (2, 1, 28, 28), jnp.float32)   # MNIST-like (flatten dim = 2048)
    params = init_params(k_p)
    prepped = prepare_params(params)                          # one-time layout/precision prep

    logits = model_forward(x, prepped)
    logits = jax.block_until_ready(logits)
    assert logits.shape == (2, 10), logits.shape
    assert bool(jnp.all(jnp.isfinite(logits)))
    print("KERNEL_OK")
</pallas_src>

<mosaic_0001>
module attributes {stable_mosaic.version = 11 : i64} {
  func.func @_conv_pool_bn_kernel(%arg0: i32, %arg1: memref<1856x9xbf16, #tpu.memory_space<vmem>>, %arg2: memref<9x32xbf16, #tpu.memory_space<vmem>>, %arg3: memref<3x32xf32, #tpu.memory_space<vmem>>, %arg4: memref<464x32xbf16, #tpu.memory_space<vmem>>) attributes {dimension_semantics = [#tpu.dimension_semantics<arbitrary>], iteration_bounds = array<i64: 1>, scalar_prefetch = 0 : i64, scratch_operands = 0 : i64, tpu.core_type = #tpu.core_type<tc>, window_params = [{pipeline_mode = #tpu.pipeline_mode<synchronous>, transform_indices = @transform_0, window_bounds = array<i64: 1856, 9>}, {pipeline_mode = #tpu.pipeline_mode<synchronous>, transform_indices = @transform_1, window_bounds = array<i64: 9, 32>}, {pipeline_mode = #tpu.pipeline_mode<synchronous>, transform_indices = @transform_2, window_bounds = array<i64: 3, 32>}, {pipeline_mode = #tpu.pipeline_mode<synchronous>, transform_indices = @transform_3, window_bounds = array<i64: 464, 32>}]} {
    %c0 = arith.constant 0 : index
    %c0_0 = arith.constant 0 : index
    %0 = vector.load %arg1[%c0, %c0_0] : memref<1856x9xbf16, #tpu.memory_space<vmem>>, vector<1856x9xbf16>
    %c0_1 = arith.constant 0 : index
    %c0_2 = arith.constant 0 : index
    %1 = vector.load %arg2[%c0_1, %c0_2] : memref<9x32xbf16, #tpu.memory_space<vmem>>, vector<9x32xbf16>
    %cst = arith.constant dense<0.000000e+00> : vector<1856x32xf32>
    %2 = tpu.matmul %0, %1, %cst {dimension_numbers = #tpu.dot_dimension_numbers<[1], [0], [0], [1], [0, 0, 1, 1], [], []>} : vector<1856x9xbf16>, vector<9x32xbf16>, vector<1856x32xf32> -> vector<1856x32xf32>
    %3 = vector.extract_strided_slice %2 {offsets = [0, 0], sizes = [464, 32], strides = [1, 1]} : vector<1856x32xf32> to vector<464x32xf32>
    %4 = vector.extract_strided_slice %2 {offsets = [464, 0], sizes = [464, 32], strides = [1, 1]} : vector<1856x32xf32> to vector<464x32xf32>
    %5 = arith.maximumf %3, %4 : vector<464x32xf32>
    %6 = vector.extract_strided_slice %2 {offsets = [928, 0], sizes = [464, 32], strides = [1, 1]} : vector<1856x32xf32> to vector<464x32xf32>
    %7 = vector.extract_strided_slice %2 {offsets = [1392, 0], sizes = [464, 32], strides = [1, 1]} : vector<1856x32xf32> to vector<464x32xf32>
    %8 = arith.maximumf %6, %7 : vector<464x32xf32>
    %9 = arith.maximumf %5, %8 : vector<464x32xf32>
    %c0_3 = arith.constant 0 : index
    %c0_4 = arith.constant 0 : index
    %10 = vector.load %arg3[%c0_3, %c0_4] : memref<3x32xf32, #tpu.memory_space<vmem>>, vector<1x32xf32>
    %11 = vector.broadcast %10 : vector<1x32xf32> to vector<464x32xf32>
    %12 = arith.addf %9, %11 : vector<464x32xf32>
    %cst_5 = arith.constant 0.000000e+00 : f32
    %13 = vector.broadcast %cst_5 : f32 to vector<464x32xf32>
    %14 = arith.maximumf %12, %13 : vector<464x32xf32>
    %c1 = arith.constant 1 : index
    %c0_6 = arith.constant 0 : index
    %15 = vector.load %arg3[%c1, %c0_6] : memref<3x32xf32, #tpu.memory_space<vmem>>, vector<1x32xf32>
    %16 = vector.broadcast %15 : vector<1x32xf32> to vector<464x32xf32>
    %17 = arith.mulf %14, %16 : vector<464x32xf32>
    %c2 = arith.constant 2 : index
    %c0_7 = arith.constant 0 : index
    %18 = vector.load %arg3[%c2, %c0_7] : memref<3x32xf32, #tpu.memory_space<vmem>>, vector<1x32xf32>
    %19 = vector.broadcast %18 : vector<1x32xf32> to vector<464x32xf32>
    %20 = arith.addf %17, %19 : vector<464x32xf32>
    %21 = arith.truncf %20 : vector<464x32xf32> to vector<464x32xbf16>
    %c0_8 = arith.constant 0 : index
    %c0_9 = arith.constant 0 : index
    %22 = vector.load %arg4[%c0_8, %c0_9] : memref<464x32xbf16, #tpu.memory_space<vmem>>, vector<464x32xbf16>
    tpu.vector_store %arg4[%c0_8, %c0_9], %21 {strides = array<i32>} : memref<464x32xbf16, #tpu.memory_space<vmem>>, vector<464x32xbf16>,
    return
  }
  func.func @transform_0(%arg0: i32) -> (i32, i32) {
    %c0_i32 = arith.constant 0 : i32
    %c0_i32_0 = arith.constant 0 : i32
    %c0_i32_1 = arith.constant 0 : i32
    return %c0_i32, %c0_i32_0 : i32, i32
  }
  func.func @transform_1(%arg0: i32) -> (i32, i32) {
    %c0_i32 = arith.constant 0 : i32
    %c0_i32_0 = arith.constant 0 : i32
    %c0_i32_1 = arith.constant 0 : i32
    return %c0_i32, %c0_i32_0 : i32, i32
  }
  func.func @transform_2(%arg0: i32) -> (i32, i32) {
    %c0_i32 = arith.constant 0 : i32
    %c0_i32_0 = arith.constant 0 : i32
    %c0_i32_1 = arith.constant 0 : i32
    return %c0_i32, %c0_i32_0 : i32, i32
  }
  func.func @transform_3(%arg0: i32) -> (i32, i32) {
    %c0_i32 = arith.constant 0 : i32
    %c0_i32_0 = arith.constant 0 : i32
    %c0_i32_1 = arith.constant 0 : i32
    return %c0_i32, %c0_i32_0 : i32, i32
  }
}

module attributes {stable_mosaic.version = 11 : i64} {
  func.func @_conv_pool_bn_kernel(%arg0: i32, %arg1: memref<320x800xbf16, #tpu.memory_space<vmem>>, %arg2: memref<800x64xbf16, #tpu.memory_space<vmem>>, %arg3: memref<3x64xf32, #tpu.memory_space<vmem>>, %arg4: memref<80x64xbf16, #tpu.memory_space<vmem>>) attributes {dimension_semantics = [#tpu.dimension_semantics<arbitrary>], iteration_bounds = array<i64: 1>, scalar_prefetch = 0 : i64, scratch_operands = 0 : i64, tpu.core_type = #tpu.core_type<tc>, window_params = [{pipeline_mode = #tpu.pipeline_mode<synchronous>, transform_indices = @transform_0, window_bounds = array<i64: 320, 800>}, {pipeline_mode = #tpu.pipeline_mode<synchronous>, transform_indices = @transform_1, window_bounds = array<i64: 800, 64>}, {pipeline_mode = #tpu.pipeline_mode<synchronous>, transform_indices = @transform_2, window_bounds = array<i64: 3, 64>}, {pipeline_mode = #tpu.pipeline_mode<synchronous>, transform_indices = @transform_3, window_bounds = array<i64: 80, 64>}]} {
    %c0 = arith.constant 0 : index
    %c0_0 = arith.constant 0 : index
    %0 = vector.load %arg1[%c0, %c0_0] : memref<320x800xbf16, #tpu.memory_space<vmem>>, vector<320x800xbf16>
    %c0_1 = arith.constant 0 : index
    %c0_2 = arith.constant 0 : index
    %1 = vector.load %arg2[%c0_1, %c0_2] : memref<800x64xbf16, #tpu.memory_space<vmem>>, vector<800x64xbf16>
    %cst = arith.constant dense<0.000000e+00> : vector<320x64xf32>
    %2 = tpu.matmul %0, %1, %cst {dimension_numbers = #tpu.dot_dimension_numbers<[1], [0], [0], [1], [0, 0, 1, 1], [], []>} : vector<320x800xbf16>, vector<800x64xbf16>, vector<320x64xf32> -> vector<320x64xf32>
    %3 = vector.extract_strided_slice %2 {offsets = [0, 0], sizes = [80, 64], strides = [1, 1]} : vector<320x64xf32> to vector<80x64xf32>
    %4 = vector.extract_strided_slice %2 {offsets = [80, 0], sizes = [80, 64], strides = [1, 1]} : vector<320x64xf32> to vector<80x64xf32>
    %5 = arith.maximumf %3, %4 : vector<80x64xf32>
    %6 = vector.extract_strided_slice %2 {offsets = [160, 0], sizes = [80, 64], strides = [1, 1]} : vector<320x64xf32> to vector<80x64xf32>
    %7 = vector.extract_strided_slice %2 {offsets = [240, 0], sizes = [80, 64], strides = [1, 1]} : vector<320x64xf32> to vector<80x64xf32>
    %8 = arith.maximumf %6, %7 : vector<80x64xf32>
    %9 = arith.maximumf %5, %8 : vector<80x64xf32>
    %c0_3 = arith.constant 0 : index
    %c0_4 = arith.constant 0 : index
    %10 = vector.load %arg3[%c0_3, %c0_4] : memref<3x64xf32, #tpu.memory_space<vmem>>, vector<1x64xf32>
    %11 = vector.broadcast %10 : vector<1x64xf32> to vector<80x64xf32>
    %12 = arith.addf %9, %11 : vector<80x64xf32>
    %cst_5 = arith.constant 0.000000e+00 : f32
    %13 = vector.broadcast %cst_5 : f32 to vector<80x64xf32>
    %14 = arith.maximumf %12, %13 : vector<80x64xf32>
    %c1 = arith.constant 1 : index
    %c0_6 = arith.constant 0 : index
    %15 = vector.load %arg3[%c1, %c0_6] : memref<3x64xf32, #tpu.memory_space<vmem>>, vector<1x64xf32>
    %16 = vector.broadcast %15 : vector<1x64xf32> to vector<80x64xf32>
    %17 = arith.mulf %14, %16 : vector<80x64xf32>
    %c2 = arith.constant 2 : index
    %c0_7 = arith.constant 0 : index
    %18 = vector.load %arg3[%c2, %c0_7] : memref<3x64xf32, #tpu.memory_space<vmem>>, vector<1x64xf32>
    %19 = vector.broadcast %18 : vector<1x64xf32> to vector<80x64xf32>
    %20 = arith.addf %17, %19 : vector<80x64xf32>
    %21 = arith.truncf %20 : vector<80x64xf32> to vector<80x64xbf16>
    %c0_8 = arith.constant 0 : index
    %c0_9 = arith.constant 0 : index
    %22 = vector.load %arg4[%c0_8, %c0_9] : memref<80x64xbf16, #tpu.memory_space<vmem>>, vector<80x64xbf16>
    tpu.vector_store %arg4[%c0_8, %c0_9], %21 {strides = array<i32>} : memref<80x64xbf16, #tpu.memory_space<vmem>>, vector<80x64xbf16>,
    return
  }
  func.func @transform_0(%arg0: i32) -> (i32, i32) {
    %c0_i32 = arith.constant 0 : i32
    %c0_i32_0 = arith.constant 0 : i32
    %c0_i32_1 = arith.constant 0 : i32
    return %c0_i32, %c0_i32_0 : i32, i32
  }
  func.func @transform_1(%arg0: i32) -> (i32, i32) {
    %c0_i32 = arith.constant 0 : i32
    %c0_i32_0 = arith.constant 0 : i32
    %c0_i32_1 = arith.constant 0 : i32
    return %c0_i32, %c0_i32_0 : i32, i32
  }
  func.func @transform_2(%arg0: i32) -> (i32, i32) {
    %c0_i32 = arith.constant 0 : i32
    %c0_i32_0 = arith.constant 0 : i32
    %c0_i32_1 = arith.constant 0 : i32
    return %c0_i32, %c0_i32_0 : i32, i32
  }
  func.func @transform_3(%arg0: i32) -> (i32, i32) {
    %c0_i32 = arith.constant 0 : i32
    %c0_i32_0 = arith.constant 0 : i32
    %c0_i32_1 = arith.constant 0 : i32
    return %c0_i32, %c0_i32_0 : i32, i32
  }
}

module attributes {stable_mosaic.version = 11 : i64} {
  func.func @_conv_pool_bn_kernel(%arg0: i32, %arg1: memref<128x64xbf16, #tpu.memory_space<vmem>>, %arg2: memref<64x128xbf16, #tpu.memory_space<vmem>>, %arg3: memref<3x128xf32, #tpu.memory_space<vmem>>, %arg4: memref<32x128xbf16, #tpu.memory_space<vmem>>) attributes {dimension_semantics = [#tpu.dimension_semantics<arbitrary>], iteration_bounds = array<i64: 1>, scalar_prefetch = 0 : i64, scratch_operands = 0 : i64, tpu.core_type = #tpu.core_type<tc>, window_params = [{pipeline_mode = #tpu.pipeline_mode<synchronous>, transform_indices = @transform_0, window_bounds = array<i64: 128, 64>}, {pipeline_mode = #tpu.pipeline_mode<synchronous>, transform_indices = @transform_1, window_bounds = array<i64: 64, 128>}, {pipeline_mode = #tpu.pipeline_mode<synchronous>, transform_indices = @transform_2, window_bounds = array<i64: 3, 128>}, {pipeline_mode = #tpu.pipeline_mode<synchronous>, transform_indices = @transform_3, window_bounds = array<i64: 32, 128>}]} {
    %c0 = arith.constant 0 : index
    %c0_0 = arith.constant 0 : index
    %0 = vector.load %arg1[%c0, %c0_0] : memref<128x64xbf16, #tpu.memory_space<vmem>>, vector<128x64xbf16>
    %c0_1 = arith.constant 0 : index
    %c0_2 = arith.constant 0 : index
    %1 = vector.load %arg2[%c0_1, %c0_2] : memref<64x128xbf16, #tpu.memory_space<vmem>>, vector<64x128xbf16>
    %cst = arith.constant dense<0.000000e+00> : vector<128x128xf32>
    %2 = tpu.matmul %0, %1, %cst {dimension_numbers = #tpu.dot_dimension_numbers<[1], [0], [0], [1], [0, 0, 1, 1], [], []>} : vector<128x64xbf16>, vector<64x128xbf16>, vector<128x128xf32> -> vector<128x128xf32>
    %3 = vector.extract_strided_slice %2 {offsets = [0, 0], sizes = [32, 128], strides = [1, 1]} : vector<128x128xf32> to vector<32x128xf32>
    %4 = vector.extract_strided_slice %2 {offsets = [32, 0], sizes = [32, 128], strides = [1, 1]} : vector<128x128xf32> to vector<32x128xf32>
    %5 = arith.maximumf %3, %4 : vector<32x128xf32>
    %6 = vector.extract_strided_slice %2 {offsets = [64, 0], sizes = [32, 128], strides = [1, 1]} : vector<128x128xf32> to vector<32x128xf32>
    %7 = vector.extract_strided_slice %2 {offsets = [96, 0], sizes = [32, 128], strides = [1, 1]} : vector<128x128xf32> to vector<32x128xf32>
    %8 = arith.maximumf %6, %7 : vector<32x128xf32>
    %9 = arith.maximumf %5, %8 : vector<32x128xf32>
    %c0_3 = arith.constant 0 : index
    %c0_4 = arith.constant 0 : index
    %10 = vector.load %arg3[%c0_3, %c0_4] : memref<3x128xf32, #tpu.memory_space<vmem>>, vector<1x128xf32>
    %11 = vector.broadcast %10 : vector<1x128xf32> to vector<32x128xf32>
    %12 = arith.addf %9, %11 : vector<32x128xf32>
    %cst_5 = arith.constant 0.000000e+00 : f32
    %13 = vector.broadcast %cst_5 : f32 to vector<32x128xf32>
    %14 = arith.maximumf %12, %13 : vector<32x128xf32>
    %c1 = arith.constant 1 : index
    %c0_6 = arith.constant 0 : index
    %15 = vector.load %arg3[%c1, %c0_6] : memref<3x128xf32, #tpu.memory_space<vmem>>, vector<1x128xf32>
    %16 = vector.broadcast %15 : vector<1x128xf32> to vector<32x128xf32>
    %17 = arith.mulf %14, %16 : vector<32x128xf32>
    %c2 = arith.constant 2 : index
    %c0_7 = arith.constant 0 : index
    %18 = vector.load %arg3[%c2, %c0_7] : memref<3x128xf32, #tpu.memory_space<vmem>>, vector<1x128xf32>
    %19 = vector.broadcast %18 : vector<1x128xf32> to vector<32x128xf32>
    %20 = arith.addf %17, %19 : vector<32x128xf32>
    %21 = arith.truncf %20 : vector<32x128xf32> to vector<32x128xbf16>
    %c0_8 = arith.constant 0 : index
    %c0_9 = arith.constant 0 : index
    %22 = vector.load %arg4[%c0_8, %c0_9] : memref<32x128xbf16, #tpu.memory_space<vmem>>, vector<32x128xbf16>
    tpu.vector_store %arg4[%c0_8, %c0_9], %21 {strides = array<i32>} : memref<32x128xbf16, #tpu.memory_space<vmem>>, vector<32x128xbf16>,
    return
  }
  func.func @transform_0(%arg0: i32) -> (i32, i32) {
    %c0_i32 = arith.constant 0 : i32
    %c0_i32_0 = arith.constant 0 : i32
    %c0_i32_1 = arith.constant 0 : i32
    return %c0_i32, %c0_i32_0 : i32, i32
  }
  func.func @transform_1(%arg0: i32) -> (i32, i32) {
    %c0_i32 = arith.constant 0 : i32
    %c0_i32_0 = arith.constant 0 : i32
    %c0_i32_1 = arith.constant 0 : i32
    return %c0_i32, %c0_i32_0 : i32, i32
  }
  func.func @transform_2(%arg0: i32) -> (i32, i32) {
    %c0_i32 = arith.constant 0 : i32
    %c0_i32_0 = arith.constant 0 : i32
    %c0_i32_1 = arith.constant 0 : i32
    return %c0_i32, %c0_i32_0 : i32, i32
  }
  func.func @transform_3(%arg0: i32) -> (i32, i32) {
    %c0_i32 = arith.constant 0 : i32
    %c0_i32_0 = arith.constant 0 : i32
    %c0_i32_1 = arith.constant 0 : i32
    return %c0_i32, %c0_i32_0 : i32, i32
  }
}

module attributes {stable_mosaic.version = 11 : i64} {
  func.func @_fc_fused_kernel(%arg0: i32, %arg1: memref<16x2048xbf16, #tpu.memory_space<vmem>>, %arg2: memref<2048x512xbf16, #tpu.memory_space<vmem>>, %arg3: memref<1x512xf32, #tpu.memory_space<vmem>>, %arg4: memref<512x128xbf16, #tpu.memory_space<vmem>>, %arg5: memref<1x128xf32, #tpu.memory_space<vmem>>, %arg6: memref<128x128xbf16, #tpu.memory_space<vmem>>, %arg7: memref<1x128xf32, #tpu.memory_space<vmem>>, %arg8: memref<16x128xf32, #tpu.memory_space<vmem>>) attributes {dimension_semantics = [#tpu.dimension_semantics<arbitrary>], iteration_bounds = array<i64: 1>, scalar_prefetch = 0 : i64, scratch_operands = 0 : i64, tpu.core_type = #tpu.core_type<tc>, window_params = [{pipeline_mode = #tpu.pipeline_mode<synchronous>, transform_indices = @transform_0, window_bounds = array<i64: 16, 2048>}, {pipeline_mode = #tpu.pipeline_mode<synchronous>, transform_indices = @transform_1, window_bounds = array<i64: 2048, 512>}, {pipeline_mode = #tpu.pipeline_mode<synchronous>, transform_indices = @transform_2, window_bounds = array<i64: 1, 512>}, {pipeline_mode = #tpu.pipeline_mode<synchronous>, transform_indices = @transform_3, window_bounds = array<i64: 512, 128>}, {pipeline_mode = #tpu.pipeline_mode<synchronous>, transform_indices = @transform_4, window_bounds = array<i64: 1, 128>}, {pipeline_mode = #tpu.pipeline_mode<synchronous>, transform_indices = @transform_5, window_bounds = array<i64: 128, 128>}, {pipeline_mode = #tpu.pipeline_mode<synchronous>, transform_indices = @transform_6, window_bounds = array<i64: 1, 128>}, {pipeline_mode = #tpu.pipeline_mode<synchronous>, transform_indices = @transform_7, window_bounds = array<i64: 16, 128>}]} {
    %c0 = arith.constant 0 : index
    %c0_0 = arith.constant 0 : index
    %0 = vector.load %arg1[%c0, %c0_0] : memref<16x2048xbf16, #tpu.memory_space<vmem>>, vector<16x2048xbf16>
    %c0_1 = arith.constant 0 : index
    %c0_2 = arith.constant 0 : index
    %1 = vector.load %arg2[%c0_1, %c0_2] : memref<2048x512xbf16, #tpu.memory_space<vmem>>, vector<2048x512xbf16>
    %cst = arith.constant dense<0.000000e+00> : vector<16x512xf32>
    %2 = tpu.matmul %0, %1, %cst {dimension_numbers = #tpu.dot_dimension_numbers<[1], [0], [0], [1], [0, 0, 1, 1], [], []>} : vector<16x2048xbf16>, vector<2048x512xbf16>, vector<16x512xf32> -> vector<16x512xf32>
    %c0_3 = arith.constant 0 : index
    %c0_4 = arith.constant 0 : index
    %3 = vector.load %arg3[%c0_3, %c0_4] : memref<1x512xf32, #tpu.memory_space<vmem>>, vector<1x512xf32>
    %4 = vector.broadcast %3 : vector<1x512xf32> to vector<16x512xf32>
    %5 = arith.addf %2, %4 : vector<16x512xf32>
    %cst_5 = arith.constant 0.000000e+00 : f32
    %6 = vector.broadcast %cst_5 : f32 to vector<16x512xf32>
    %7 = arith.maximumf %5, %6 : vector<16x512xf32>
    %8 = arith.truncf %7 : vector<16x512xf32> to vector<16x512xbf16>
    %c0_6 = arith.constant 0 : index
    %c0_7 = arith.constant 0 : index
    %9 = vector.load %arg4[%c0_6, %c0_7] : memref<512x128xbf16, #tpu.memory_space<vmem>>, vector<512x128xbf16>
    %cst_8 = arith.constant dense<0.000000e+00> : vector<16x128xf32>
    %10 = tpu.matmul %8, %9, %cst_8 {dimension_numbers = #tpu.dot_dimension_numbers<[1], [0], [0], [1], [0, 0, 1, 1], [], []>} : vector<16x512xbf16>, vector<512x128xbf16>, vector<16x128xf32> -> vector<16x128xf32>
    %c0_9 = arith.constant 0 : index
    %c0_10 = arith.constant 0 : index
    %11 = vector.load %arg5[%c0_9, %c0_10] : memref<1x128xf32, #tpu.memory_space<vmem>>, vector<1x128xf32>
    %12 = vector.broadcast %11 : vector<1x128xf32> to vector<16x128xf32>
    %13 = arith.addf %10, %12 : vector<16x128xf32>
    %cst_11 = arith.constant 0.000000e+00 : f32
    %14 = vector.broadcast %cst_11 : f32 to vector<16x128xf32>
    %15 = arith.maximumf %13, %14 : vector<16x128xf32>
    %16 = arith.truncf %15 : vector<16x128xf32> to vector<16x128xbf16>
    %c0_12 = arith.constant 0 : index
    %c0_13 = arith.constant 0 : index
    %17 = vector.load %arg6[%c0_12, %c0_13] : memref<128x128xbf16, #tpu.memory_space<vmem>>, vector<128x128xbf16>
    %cst_14 = arith.constant dense<0.000000e+00> : vector<16x128xf32>
    %18 = tpu.matmul %16, %17, %cst_14 {dimension_numbers = #tpu.dot_dimension_numbers<[1], [0], [0], [1], [0, 0, 1, 1], [], []>} : vector<16x128xbf16>, vector<128x128xbf16>, vector<16x128xf32> -> vector<16x128xf32>
    %c0_15 = arith.constant 0 : index
    %c0_16 = arith.constant 0 : index
    %19 = vector.load %arg7[%c0_15, %c0_16] : memref<1x128xf32, #tpu.memory_space<vmem>>, vector<1x128xf32>
    %20 = vector.broadcast %19 : vector<1x128xf32> to vector<16x128xf32>
    %21 = arith.addf %18, %20 : vector<16x128xf32>
    %c0_17 = arith.constant 0 : index
    %c0_18 = arith.constant 0 : index
    %22 = vector.load %arg8[%c0_17, %c0_18] : memref<16x128xf32, #tpu.memory_space<vmem>>, vector<16x128xf32>
    tpu.vector_store %arg8[%c0_17, %c0_18], %21 {strides = array<i32>} : memref<16x128xf32, #tpu.memory_space<vmem>>, vector<16x128xf32>,
    return
  }
  func.func @transform_0(%arg0: i32) -> (i32, i32) {
    %c0_i32 = arith.constant 0 : i32
    %c0_i32_0 = arith.constant 0 : i32
    %c0_i32_1 = arith.constant 0 : i32
    return %c0_i32, %c0_i32_0 : i32, i32
  }
  func.func @transform_1(%arg0: i32) -> (i32, i32) {
    %c0_i32 = arith.constant 0 : i32
    %c0_i32_0 = arith.constant 0 : i32
    %c0_i32_1 = arith.constant 0 : i32
    return %c0_i32, %c0_i32_0 : i32, i32
  }
  func.func @transform_2(%arg0: i32) -> (i32, i32) {
    %c0_i32 = arith.constant 0 : i32
    %c0_i32_0 = arith.constant 0 : i32
    %c0_i32_1 = arith.constant 0 : i32
    return %c0_i32, %c0_i32_0 : i32, i32
  }
  func.func @transform_3(%arg0: i32) -> (i32, i32) {
    %c0_i32 = arith.constant 0 : i32
    %c0_i32_0 = arith.constant 0 : i32
    %c0_i32_1 = arith.constant 0 : i32
    return %c0_i32, %c0_i32_0 : i32, i32
  }
  func.func @transform_4(%arg0: i32) -> (i32, i32) {
    %c0_i32 = arith.constant 0 : i32
    %c0_i32_0 = arith.constant 0 : i32
    %c0_i32_1 = arith.constant 0 : i32
    return %c0_i32, %c0_i32_0 : i32, i32
  }
  func.func @transform_5(%arg0: i32) -> (i32, i32) {
    %c0_i32 = arith.constant 0 : i32
    %c0_i32_0 = arith.constant 0 : i32
    %c0_i32_1 = arith.constant 0 : i32
    return %c0_i32, %c0_i32_0 : i32, i32
  }
  func.func @transform_6(%arg0: i32) -> (i32, i32) {
    %c0_i32 = arith.constant 0 : i32
    %c0_i32_0 = arith.constant 0 : i32
    %c0_i32_1 = arith.constant 0 : i32
    return %c0_i32, %c0_i32_0 : i32, i32
  }
  func.func @transform_7(%arg0: i32) -> (i32, i32) {
    %c0_i32 = arith.constant 0 : i32
    %c0_i32_0 = arith.constant 0 : i32
    %c0_i32_1 = arith.constant 0 : i32
    return %c0_i32, %c0_i32_0 : i32, i32
  }
}

</mosaic_0001>

<llo_original>
// kernel: model_forward.4
$region0: #{model_forward.4}
  #allocation0 [shape = 'u32[]', space=smem, size = 0x4, offset = 0x4, fixed_abs, tag = 'smem constant byte address 0x4 - core index']
  #allocation1 [shape = 'u32[144,128]{1,0:T(1,128)}', space=vmem, size = 0x12000, scoped, tag = 'internal scratch']
  %s0 = inlined_call_operand.vmem [shape: bf16[1856,9], index: 0, kind: input, shape index: {}]
  %s1 = inlined_call_operand.vmem [shape: bf16[9,32], index: 1, kind: input, shape index: {}]
  %s2 = inlined_call_operand.vmem [shape: f32[3,32], index: 2, kind: input, shape index: {}]
  %s3 = inlined_call_operand.vmem [shape: bf16[464,32], index: 3, kind: output, shape index: {}]
  %s4 = sld [smem:[#allocation0]]
  $region22: #{model_forward.4} parent=0
    _
  %s6 = ssub.s32 1, %s4
  %s7 = scalar_select 0, %s6, %s4
  // Predicated region
  $region2: #{model_forward.4} parent=0 // pred_check
    _
  $region3: #{model_forward.4} parent=0 // pred_check_branch
    %9 = sbr.rel (0) target = $region5
  $region4: #{model_forward.4} parent=0 // pred_region
    _
  $region5: #{model_forward.4} parent=0 // pred_fallthru
    _
  // Predicated region
  $region6: #{model_forward.4} parent=0 // pred_check
    _
  $region7: #{model_forward.4} parent=0 // pred_check_branch
    %11 = sbr.rel (0) target = $region9
  $region8: #{model_forward.4} parent=0 // pred_region
    _
  $region9: #{model_forward.4} parent=0 // pred_fallthru
    _
  // Predicated region
  $region10: #{model_forward.4} parent=0 // pred_check
    _
  $region11: #{model_forward.4} parent=0 // pred_check_branch
    %13 = sbr.rel (0) target = $region13
  $region12: #{model_forward.4} parent=0 // pred_region
    _
  $region13: #{model_forward.4} parent=0 // pred_fallthru
    _
  %v15 = vld [vmem:[%s0] sm:$0xf]
  %v16 = vld [vmem:[%s0 + $0x4] sm:$0xf]
  %v17 = vld [vmem:[%s0 + $0x8] sm:$0xf]
  %v18 = vld [vmem:[%s0 + $0xc] sm:$0xf]
  %v19 = vld [vmem:[%s0 + $0x10] sm:$0xf]
  %v20 = vld [vmem:[%s0 + $0x14] sm:$0xf]
  %v21 = vld [vmem:[%s0 + $0x18] sm:$0xf]
  %v22 = vld [vmem:[%s0 + $0x1c] sm:$0xf]
  %v23 = vld [vmem:[%s0 + $0x20] sm:$0xf]
  %v24 = vld [vmem:[%s0 + $0x24] sm:$0xf]
  %v25 = vld [vmem:[%s0 + $0x28] sm:$0xf]
  %v26 = vld [vmem:[%s0 + $0x2c] sm:$0xf]
  %v27 = vld [vmem:[%s0 + $0x30] sm:$0xf]
  %v28 = vld [vmem:[%s0 + $0x34] sm:$0xf]
  %v29 = vld [vmem:[%s0 + $0x38] sm:$0xf]
  %v30 = vld [vmem:[%s0 + $0x3c] sm:$0xf]
  %v31 = vld [vmem:[%s0 + $0x40] sm:$0xf]
  %v32 = vld [vmem:[%s0 + $0x44] sm:$0xf]
  %v33 = vld [vmem:[%s0 + $0x48] sm:$0xf]
  %v34 = vld [vmem:[%s0 + $0x4c] sm:$0xf]
  %v35 = vld [vmem:[%s0 + $0x50] sm:$0xf]
  %v36 = vld [vmem:[%s0 + $0x54] sm:$0xf]
  %v37 = vld [vmem:[%s0 + $0x58] sm:$0xf]
  %v38 = vld [vmem:[%s0 + $0x5c] sm:$0xf]
  %v39 = vld [vmem:[%s0 + $0x60] sm:$0xf]
  %v40 = vld [vmem:[%s0 + $0x64] sm:$0xf]
  %v41 = vld [vmem:[%s0 + $0x68] sm:$0xf]
  %v42 = vld [vmem:[%s0 + $0x6c] sm:$0xf]
  %v43 = vld [vmem:[%s0 + $0x70] sm:$0xf]
  %v44 = vld [vmem:[%s0 + $0x74] sm:$0xf]
  %v45 = vld [vmem:[%s0 + $0x78] sm:$0xf]
  %v46 = vld [vmem:[%s0 + $0x7c] sm:$0xf]
  %v47 = vld [vmem:[%s0 + $0x80] sm:$0xf]
  %v48 = vld [vmem:[%s0 + $0x84] sm:$0xf]
  %v49 = vld [vmem:[%s0 + $0x88] sm:$0xf]
  %v50 = vld [vmem:[%s0 + $0x8c] sm:$0xf]
  %v51 = vld [vmem:[%s0 + $0x90] sm:$0xf]
  %v52 = vld [vmem:[%s0 + $0x94] sm:$0xf]
  %v53 = vld [vmem:[%s0 + $0x98] sm:$0xf]
  %v54 = vld [vmem:[%s0 + $0x9c] sm:$0xf]
  %v55 = vld [vmem:[%s0 + $0xa0] sm:$0xf]
  %v56 = vld [vmem:[%s0 + $0xa4] sm:$0xf]
  %v57 = vld [vmem:[%s0 + $0xa8] sm:$0xf]
  %v58 = vld [vmem:[%s0 + $0xac] sm:$0xf]
  %v59 = vld [vmem:[%s0 + $0xb0] sm:$0xf]
  %v60 = vld [vmem:[%s0 + $0xb4] sm:$0xf]
  %v61 = vld [vmem:[%s0 + $0xb8] sm:$0xf]
  %v62 = vld [vmem:[%s0 + $0xbc] sm:$0xf]
  %v63 = vld [vmem:[%s0 + $0xc0] sm:$0xf]
  %v64 = vld [vmem:[%s0 + $0xc4] sm:$0xf]
  %v65 = vld [vmem:[%s0 + $0xc8] sm:$0xf]
  %v66 = vld [vmem:[%s0 + $0xcc] sm:$0xf]
  %v67 = vld [vmem:[%s0 + $0xd0] sm:$0xf]
  %v68 = vld [vmem:[%s0 + $0xd4] sm:$0xf]
  %v69 = vld [vmem:[%s0 + $0xd8] sm:$0xf]
  %v70 = vld [vmem:[%s0 + $0xdc] sm:$0xf]
  %v71 = vld [vmem:[%s0 + $0xe0] sm:$0xf]
  %v72 = vld [vmem:[%s0 + $0xe4] sm:$0xf]
  %v73 = vld [vmem:[%s0 + $0xe8] sm:$0xf]
  %v74 = vld [vmem:[%s0 + $0xec] sm:$0xf]
  %v75 = vld [vmem:[%s0 + $0xf0] sm:$0xf]
  %v76 = vld [vmem:[%s0 + $0xf4] sm:$0xf]
  %v77 = vld [vmem:[%s0 + $0xf8] sm:$0xf]
  %v78 = vld [vmem:[%s0 + $0xfc] sm:$0xf]
  %v79 = vld [vmem:[%s0 + $0x100] sm:$0xf]
  %v80 = vld [vmem:[%s0 + $0x104] sm:$0xf]
  %v81 = vld [vmem:[%s0 + $0x108] sm:$0xf]
  %v82 = vld [vmem:[%s0 + $0x10c] sm:$0xf]
  %v83 = vld [vmem:[%s0 + $0x110] sm:$0xf]
  %v84 = vld [vmem:[%s0 + $0x114] sm:$0xf]
  %v85 = vld [vmem:[%s0 + $0x118] sm:$0xf]
  %v86 = vld [vmem:[%s0 + $0x11c] sm:$0xf]
  %v87 = vld [vmem:[%s0 + $0x120] sm:$0xf]
  %v88 = vld [vmem:[%s0 + $0x124] sm:$0xf]
  %v89 = vld [vmem:[%s0 + $0x128] sm:$0xf]
  %v90 = vld [vmem:[%s0 + $0x12c] sm:$0xf]
  %v91 = vld [vmem:[%s0 + $0x130] sm:$0xf]
  %v92 = vld [vmem:[%s0 + $0x134] sm:$0xf]
  %v93 = vld [vmem:[%s0 + $0x138] sm:$0xf]
  %v94 = vld [vmem:[%s0 + $0x13c] sm:$0xf]
  %v95 = vld [vmem:[%s0 + $0x140] sm:$0xf]
  %v96 = vld [vmem:[%s0 + $0x144] sm:$0xf]
  %v97 = vld [vmem:[%s0 + $0x148] sm:$0xf]
  %v98 = vld [vmem:[%s0 + $0x14c] sm:$0xf]
  %v99 = vld [vmem:[%s0 + $0x150] sm:$0xf]
  %v100 = vld [vmem:[%s0 + $0x154] sm:$0xf]
  %v101 = vld [vmem:[%s0 + $0x158] sm:$0xf]
  %v102 = vld [vmem:[%s0 + $0x15c] sm:$0xf]
  %v103 = vld [vmem:[%s0 + $0x160] sm:$0xf]
  %v104 = vld [vmem:[%s0 + $0x164] sm:$0xf]
  %v105 = vld [vmem:[%s0 + $0x168] sm:$0xf]
  %v106 = vld [vmem:[%s0 + $0x16c] sm:$0xf]
  %v107 = vld [vmem:[%s0 + $0x170] sm:$0xf]
  %v108 = vld [vmem:[%s0 + $0x174] sm:$0xf]
  %v109 = vld [vmem:[%s0 + $0x178] sm:$0xf]
  %v110 = vld [vmem:[%s0 + $0x17c] sm:$0xf]
  %v111 = vld [vmem:[%s0 + $0x180] sm:$0xf]
  %v112 = vld [vmem:[%s0 + $0x184] sm:$0xf]
  %v113 = vld [vmem:[%s0 + $0x188] sm:$0xf]
  %v114 = vld [vmem:[%s0 + $0x18c] sm:$0xf]
  %v115 = vld [vmem:[%s0 + $0x190] sm:$0xf]
  %v116 = vld [vmem:[%s0 + $0x194] sm:$0xf]
  %v117 = vld [vmem:[%s0 + $0x198] sm:$0xf]
  %v118 = vld [vmem:[%s0 + $0x19c] sm:$0xf]
  %v119 = vld [vmem:[%s0 + $0x1a0] sm:$0xf]
  %v120 = vld [vmem:[%s0 + $0x1a4] sm:$0xf]
  %v121 = vld [vmem:[%s0 + $0x1a8] sm:$0xf]
  %v122 = vld [vmem:[%s0 + $0x1ac] sm:$0xf]
  %v123 = vld [vmem:[%s0 + $0x1b0] sm:$0xf]
  %v124 = vld [vmem:[%s0 + $0x1b4] sm:$0xf]
  %v125 = vld [vmem:[%s0 + $0x1b8] sm:$0xf]
  %v126 = vld [vmem:[%s0 + $0x1bc] sm:$0xf]
  %v127 = vld [vmem:[%s0 + $0x1c0] sm:$0xf]
  %v128 = vld [vmem:[%s0 + $0x1c4] sm:$0xf]
  %v129 = vld [vmem:[%s0 + $0x1c8] sm:$0xf]
  %v130 = vld [vmem:[%s0 + $0x1cc] sm:$0xf]
  %v131 = vld [vmem:[%s0 + $0x1d0] sm:$0xf]
  %v132 = vld [vmem:[%s0 + $0x1d4] sm:$0xf]
  %v133 = vld [vmem:[%s0 + $0x1d8] sm:$0xf]
  %v134 = vld [vmem:[%s0 + $0x1dc] sm:$0xf]
  %v135 = vld [vmem:[%s0 + $0x1e0] sm:$0xf]
  %v136 = vld [vmem:[%s0 + $0x1e4] sm:$0xf]
  %v137 = vld [vmem:[%s0 + $0x1e8] sm:$0xf]
  %v138 = vld [vmem:[%s0 + $0x1ec] sm:$0xf]
  %v139 = vld [vmem:[%s0 + $0x1f0] sm:$0xf]
  %v140 = vld [vmem:[%s0 + $0x1f4] sm:$0xf]
  %v141 = vld [vmem:[%s0 + $0x1f8] sm:$0xf]
  %v142 = vld [vmem:[%s0 + $0x1fc] sm:$0xf]
  %v143 = vld [vmem:[%s0 + $0x200] sm:$0xf]
  %v144 = vld [vmem:[%s0 + $0x204] sm:$0xf]
  %v145 = vld [vmem:[%s0 + $0x208] sm:$0xf]
  %v146 = vld [vmem:[%s0 + $0x20c] sm:$0xf]
  %v147 = vld [vmem:[%s0 + $0x210] sm:$0xf]
  %v148 = vld [vmem:[%s0 + $0x214] sm:$0xf]
  %v149 = vld [vmem:[%s0 + $0x218] sm:$0xf]
  %v150 = vld [vmem:[%s0 + $0x21c] sm:$0xf]
  %v151 = vld [vmem:[%s0 + $0x220] sm:$0xf]
  %v152 = vld [vmem:[%s0 + $0x224] sm:$0xf]
  %v153 = vld [vmem:[%s0 + $0x228] sm:$0xf]
  %v154 = vld [vmem:[%s0 + $0x22c] sm:$0xf]
  %v155 = vld [vmem:[%s0 + $0x230] sm:$0xf]
  %v156 = vld [vmem:[%s0 + $0x234] sm:$0xf]
  %v157 = vld [vmem:[%s0 + $0x238] sm:$0xf]
  %v158 = vld [vmem:[%s0 + $0x23c] sm:$0xf]
  %v159 = vld [vmem:[%s0 + $0x240] sm:$0xf]
  %v160 = vld [vmem:[%s0 + $0x244] sm:$0xf]
  %v161 = vld [vmem:[%s0 + $0x248] sm:$0xf]
  %v162 = vld [vmem:[%s0 + $0x24c] sm:$0xf]
  %v163 = vld [vmem:[%s0 + $0x250] sm:$0xf]
  %v164 = vld [vmem:[%s0 + $0x254] sm:$0xf]
  %v165 = vld [vmem:[%s0 + $0x258] sm:$0xf]
  %v166 = vld [vmem:[%s0 + $0x25c] sm:$0xf]
  %v167 = vld [vmem:[%s0 + $0x260] sm:$0xf]
  %v168 = vld [vmem:[%s0 + $0x264] sm:$0xf]
  %v169 = vld [vmem:[%s0 + $0x268] sm:$0xf]
  %v170 = vld [vmem:[%s0 + $0x26c] sm:$0xf]
  %v171 = vld [vmem:[%s0 + $0x270] sm:$0xf]
  %v172 = vld [vmem:[%s0 + $0x274] sm:$0xf]
  %v173 = vld [vmem:[%s0 + $0x278] sm:$0xf]
  %v174 = vld [vmem:[%s0 + $0x27c] sm:$0xf]
  %v175 = vld [vmem:[%s0 + $0x280] sm:$0xf]
  %v176 = vld [vmem:[%s0 + $0x284] sm:$0xf]
  %v177 = vld [vmem:[%s0 + $0x288] sm:$0xf]
  %v178 = vld [vmem:[%s0 + $0x28c] sm:$0xf]
  %v179 = vld [vmem:[%s0 + $0x290] sm:$0xf]
  %v180 = vld [vmem:[%s0 + $0x294] sm:$0xf]
  %v181 = vld [vmem:[%s0 + $0x298] sm:$0xf]
  %v182 = vld [vmem:[%s0 + $0x29c] sm:$0xf]
  %v183 = vld [vmem:[%s0 + $0x2a0] sm:$0xf]
  %v184 = vld [vmem:[%s0 + $0x2a4] sm:$0xf]
  %v185 = vld [vmem:[%s0 + $0x2a8] sm:$0xf]
  %v186 = vld [vmem:[%s0 + $0x2ac] sm:$0xf]
  %v187 = vld [vmem:[%s0 + $0x2b0] sm:$0xf]
  %v188 = vld [vmem:[%s0 + $0x2b4] sm:$0xf]
  %v189 = vld [vmem:[%s0 + $0x2b8] sm:$0xf]
  %v190 = vld [vmem:[%s0 + $0x2bc] sm:$0xf]
  %v191 = vld [vmem:[%s0 + $0x2c0] sm:$0xf]
  %v192 = vld [vmem:[%s0 + $0x2c4] sm:$0xf]
  %v193 = vld [vmem:[%s0 + $0x2c8] sm:$0xf]
  %v194 = vld [vmem:[%s0 + $0x2cc] sm:$0xf]
  %v195 = vld [vmem:[%s0 + $0x2d0] sm:$0xf]
  %v196 = vld [vmem:[%s0 + $0x2d4] sm:$0xf]
  %v197 = vld [vmem:[%s0 + $0x2d8] sm:$0xf]
  %v198 = vld [vmem:[%s0 + $0x2dc] sm:$0xf]
  %v199 = vld [vmem:[%s0 + $0x2e0] sm:$0xf]
  %v200 = vld [vmem:[%s0 + $0x2e4] sm:$0xf]
  %v201 = vld [vmem:[%s0 + $0x2e8] sm:$0xf]
  %v202 = vld [vmem:[%s0 + $0x2ec] sm:$0xf]
  %v203 = vld [vmem:[%s0 + $0x2f0] sm:$0xf]
  %v204 = vld [vmem:[%s0 + $0x2f4] sm:$0xf]
  %v205 = vld [vmem:[%s0 + $0x2f8] sm:$0xf]
  %v206 = vld [vmem:[%s0 + $0x2fc] sm:$0xf]
  %v207 = vld [vmem:[%s0 + $0x300] sm:$0xf]
  %v208 = vld [vmem:[%s0 + $0x304] sm:$0xf]
  %v209 = vld [vmem:[%s0 + $0x308] sm:$0xf]
  %v210 = vld [vmem:[%s0 + $0x30c] sm:$0xf]
  %v211 = vld [vmem:[%s0 + $0x310] sm:$0xf]
  %v212 = vld [vmem:[%s0 + $0x314] sm:$0xf]
  %v213 = vld [vmem:[%s0 + $0x318] sm:$0xf]
  %v214 = vld [vmem:[%s0 + $0x31c] sm:$0xf]
  %v215 = vld [vmem:[%s0 + $0x320] sm:$0xf]
  %v216 = vld [vmem:[%s0 + $0x324] sm:$0xf]
  %v217 = vld [vmem:[%s0 + $0x328] sm:$0xf]
  %v218 = vld [vmem:[%s0 + $0x32c] sm:$0xf]
  %v219 = vld [vmem:[%s0 + $0x330] sm:$0xf]
  %v220 = vld [vmem:[%s0 + $0x334] sm:$0xf]
  %v221 = vld [vmem:[%s0 + $0x338] sm:$0xf]
  %v222 = vld [vmem:[%s0 + $0x33c] sm:$0xf]
  %v223 = vld [vmem:[%s0 + $0x340] sm:$0xf]
  %v224 = vld [vmem:[%s0 + $0x344] sm:$0xf]
  %v225 = vld [vmem:[%s0 + $0x348] sm:$0xf]
  %v226 = vld [vmem:[%s0 + $0x34c] sm:$0xf]
  %v227 = vld [vmem:[%s0 + $0x350] sm:$0xf]
  %v228 = vld [vmem:[%s0 + $0x354] sm:$0xf]
  %v229 = vld [vmem:[%s0 + $0x358] sm:$0xf]
  %v230 = vld [vmem:[%s0 + $0x35c] sm:$0xf]
  %v231 = vld [vmem:[%s0 + $0x360] sm:$0xf]
  %v232 = vld [vmem:[%s0 + $0x364] sm:$0xf]
  %v233 = vld [vmem:[%s0 + $0x368] sm:$0xf]
  %v234 = vld [vmem:[%s0 + $0x36c] sm:$0xf]
  %v235 = vld [vmem:[%s0 + $0x370] sm:$0xf]
  %v236 = vld [vmem:[%s0 + $0x374] sm:$0xf]
  %v237 = vld [vmem:[%s0 + $0x378] sm:$0xf]
  %v238 = vld [vmem:[%s0 + $0x37c] sm:$0xf]
  %v239 = vld [vmem:[%s0 + $0x380] sm:$0xf]
  %v240 = vld [vmem:[%s0 + $0x384] sm:$0xf]
  %v241 = vld [vmem:[%s0 + $0x388] sm:$0xf]
  %v242 = vld [vmem:[%s0 + $0x38c] sm:$0xf]
  %v243 = vld [vmem:[%s0 + $0x390] sm:$0xf]
  %v244 = vld [vmem:[%s0 + $0x394] sm:$0xf]
  %v245 = vld [vmem:[%s0 + $0x398] sm:$0xf]
  %v246 = vld [vmem:[%s0 + $0x39c] sm:$0xf]
  %v247 = vld [vmem:[%s1] sm:$0xf]
  %v248 = vld [vmem:[%s1 + $0x4] sm:$0x1]
  %v481 = vunpack.c.l.b16 %v15
  %v482 = vunpack.c.l.b16 %v16
  %v483 = vunpack.c.l.b16 %v17
  %v484 = vunpack.c.l.b16 %v18
  %v485 = vunpack.c.l.b16 %v19
  %v486 = vunpack.c.l.b16 %v20
  %v487 = vunpack.c.l.b16 %v21
  %v488 = vunpack.c.l.b16 %v22
  %v489 = vunpack.c.l.b16 %v23
  %v490 = vunpack.c.l.b16 %v24
  %v491 = vunpack.c.l.b16 %v25
  %v492 = vunpack.c.l.b16 %v26
  %v493 = vunpack.c.l.b16 %v27
  %v494 = vunpack.c.l.b16 %v28
  %v495 = vunpack.c.l.b16 %v29
  %v496 = vunpack.c.l.b16 %v30
  %v497 = vunpack.c.l.b16 %v31
  %v498 = vunpack.c.l.b16 %v32
  %v499 = vunpack.c.l.b16 %v33
  %v500 = vunpack.c.l.b16 %v34
  %v501 = vunpack.c.l.b16 %v35
  %v502 = vunpack.c.l.b16 %v36
  %v503 = vunpack.c.l.b16 %v37
  %v504 = vunpack.c.l.b16 %v38
  %v505 = vunpack.c.l.b16 %v39
  %v506 = vunpack.c.l.b16 %v40
  %v507 = vunpack.c.l.b16 %v41
  %v508 = vunpack.c.l.b16 %v42
  %v509 = vunpack.c.l.b16 %v43
  %v510 = vunpack.c.l.b16 %v44
  %v511 = vunpack.c.l.b16 %v45
  %v512 = vunpack.c.l.b16 %v46
  %v513 = vunpack.c.l.b16 %v47
  %v514 = vunpack.c.l.b16 %v48
  %v515 = vunpack.c.l.b16 %v49
  %v516 = vunpack.c.l.b16 %v50
  %v517 = vunpack.c.l.b16 %v51
  %v518 = vunpack.c.l.b16 %v52
  %v519 = vunpack.c.l.b16 %v53
  %v520 = vunpack.c.l.b16 %v54
  %v521 = vunpack.c.l.b16 %v55
  %v522 = vunpack.c.l.b16 %v56
  %v523 = vunpack.c.l.b16 %v57
  %v524 = vunpack.c.l.b16 %v58
  %v525 = vunpack.c.l.b16 %v59
  %v526 = vunpack.c.l.b16 %v60
  %v527 = vunpack.c.l.b16 %v61
  %v528 = vunpack.c.l.b16 %v62
  %v529 = vunpack.c.l.b16 %v63
  %v530 = vunpack.c.l.b16 %v64
  %v531 = vunpack.c.l.b16 %v65
  %v532 = vunpack.c.l.b16 %v66
  %v533 = vunpack.c.l.b16 %v67
  %v534 = vunpack.c.l.b16 %v68
  %v535 = vunpack.c.l.b16 %v69
  %v536 = vunpack.c.l.b16 %v70
  %v537 = vunpack.c.l.b16 %v71
  %v538 = vunpack.c.l.b16 %v72
  %v539 = vunpack.c.l.b16 %v73
  %v540 = vunpack.c.l.b16 %v74
  %v541 = vunpack.c.l.b16 %v75
  %v542 = vunpack.c.l.b16 %v76
  %v543 = vunpack.c.l.b16 %v77
  %v544 = vunpack.c.l.b16 %v78
  %v545 = vunpack.c.l.b16 %v79
  %v546 = vunpack.c.l.b16 %v80
  %v547 = vunpack.c.l.b16 %v81
  %v548 = vunpack.c.l.b16 %v82
  %v549 = vunpack.c.l.b16 %v83
  %v550 = vunpack.c.l.b16 %v84
  %v551 = vunpack.c.l.b16 %v85
  %v552 = vunpack.c.l.b16 %v86
  %v553 = vunpack.c.l.b16 %v87
  %v554 = vunpack.c.l.b16 %v88
  %v555 = vunpack.c.l.b16 %v89
  %v556 = vunpack.c.l.b16 %v90
  %v557 = vunpack.c.l.b16 %v91
  %v558 = vunpack.c.l.b16 %v92
  %v559 = vunpack.c.l.b16 %v93
  %v560 = vunpack.c.l.b16 %v94
  %v561 = vunpack.c.l.b16 %v95
  %v562 = vunpack.c.l.b16 %v96
  %v563 = vunpack.c.l.b16 %v97
  %v564 = vunpack.c.l.b16 %v98
  %v565 = vunpack.c.l.b16 %v99
  %v566 = vunpack.c.l.b16 %v100
  %v567 = vunpack.c.l.b16 %v101
  %v568 = vunpack.c.l.b16 %v102
  %v569 = vunpack.c.l.b16 %v103
  %v570 = vunpack.c.l.b16 %v104
  %v571 = vunpack.c.l.b16 %v105
  %v572 = vunpack.c.l.b16 %v106
  %v573 = vunpack.c.l.b16 %v107
  %v574 = vunpack.c.l.b16 %v108
  %v575 = vunpack.c.l.b16 %v109
  %v576 = vunpack.c.l.b16 %v110
  %v577 = vunpack.c.l.b16 %v111
  %v578 = vunpack.c.l.b16 %v112
  %v579 = vunpack.c.l.b16 %v113
  %v580 = vunpack.c.l.b16 %v114
  %v581 = vunpack.c.l.b16 %v115
  %v582 = vunpack.c.l.b16 %v116
  %v583 = vunpack.c.l.b16 %v117
  %v584 = vunpack.c.l.b16 %v118
  %v585 = vunpack.c.l.b16 %v119
  %v586 = vunpack.c.l.b16 %v120
  %v587 = vunpack.c.l.b16 %v121
  %v588 = vunpack.c.l.b16 %v122
  %v589 = vunpack.c.l.b16 %v123
  %v590 = vunpack.c.l.b16 %v124
  %v591 = vunpack.c.l.b16 %v125
  %v592 = vunpack.c.l.b16 %v126
  %v593 = vunpack.c.l.b16 %v127
  %v594 = vunpack.c.l.b16 %v128
  %v595 = vunpack.c.l.b16 %v129
  %v596 = vunpack.c.l.b16 %v130
  %v597 = vunpack.c.l.b16 %v131
  %v598 = vunpack.c.l.b16 %v132
  %v599 = vunpack.c.l.b16 %v133
  %v600 = vunpack.c.l.b16 %v134
  %v601 = vunpack.c.l.b16 %v135
  %v602 = vunpack.c.l.b16 %v136
  %v603 = vunpack.c.l.b16 %v137
  %v604 = vunpack.c.l.b16 %v138
  %v605 = vunpack.c.l.b16 %v139
  %v606 = vunpack.c.l.b16 %v140
  %v607 = vunpack.c.l.b16 %v141
  %v608 = vunpack.c.l.b16 %v142
  %v609 = vunpack.c.l.b16 %v143
  %v610 = vunpack.c.l.b16 %v144
  %v611 = vunpack.c.l.b16 %v145
  %v612 = vunpack.c.l.b16 %v146
  %v613 = vunpack.c.l.b16 %v147
  %v614 = vunpack.c.l.b16 %v148
  %v615 = vunpack.c.l.b16 %v149
  %v616 = vunpack.c.l.b16 %v150
  %v617 = vunpack.c.l.b16 %v151
  %v618 = vunpack.c.l.b16 %v152
  %v619 = vunpack.c.l.b16 %v153
  %v620 = vunpack.c.l.b16 %v154
  %v621 = vunpack.c.l.b16 %v155
  %v622 = vunpack.c.l.b16 %v156
  %v623 = vunpack.c.l.b16 %v157
  %v624 = vunpack.c.l.b16 %v158
  %v625 = vunpack.c.l.b16 %v159
  %v626 = vunpack.c.l.b16 %v160
  %v627 = vunpack.c.l.b16 %v161
  %v628 = vunpack.c.l.b16 %v162
  %v629 = vunpack.c.l.b16 %v163
  %v630 = vunpack.c.l.b16 %v164
  %v631 = vunpack.c.l.b16 %v165
  %v632 = vunpack.c.l.b16 %v166
  %v633 = vunpack.c.l.b16 %v167
  %v634 = vunpack.c.l.b16 %v168
  %v635 = vunpack.c.l.b16 %v169
  %v636 = vunpack.c.l.b16 %v170
  %v637 = vunpack.c.l.b16 %v171
  %v638 = vunpack.c.l.b16 %v172
  %v639 = vunpack.c.l.b16 %v173
  %v640 = vunpack.c.l.b16 %v174
  %v641 = vunpack.c.l.b16 %v175
  %v642 = vunpack.c.l.b16 %v176
  %v643 = vunpack.c.l.b16 %v177
  %v644 = vunpack.c.l.b16 %v178
  %v645 = vunpack.c.l.b16 %v179
  %v646 = vunpack.c.l.b16 %v180
  %v647 = vunpack.c.l.b16 %v181
  %v648 = vunpack.c.l.b16 %v182
  %v649 = vunpack.c.l.b16 %v183
  %v650 = vunpack.c.l.b16 %v184
  %v651 = vunpack.c.l.b16 %v185
  %v652 = vunpack.c.l.b16 %v186
  %v653 = vunpack.c.l.b16 %v187
  %v654 = vunpack.c.l.b16 %v188
  %v655 = vunpack.c.l.b16 %v189
  %v656 = vunpack.c.l.b16 %v190
  %v657 = vunpack.c.l.b16 %v191
  %v658 = vunpack.c.l.b16 %v192
  %v659 = vunpack.c.l.b16 %v193
  %v660 = vunpack.c.l.b16 %v194
  %v661 = vunpack.c.l.b16 %v195
  %v662 = vunpack.c.l.b16 %v196
  %v663 = vunpack.c.l.b16 %v197
  %v664 = vunpack.c.l.b16 %v198
  %v665 = vunpack.c.l.b16 %v199
  %v666 = vunpack.c.l.b16 %v200
  %v667 = vunpack.c.l.b16 %v201
  %v668 = vunpack.c.l.b16 %v202
  %v669 = vunpack.c.l.b16 %v203
  %v670 = vunpack.c.l.b16 %v204
  %v671 = vunpack.c.l.b16 %v205
  %v672 = vunpack.c.l.b16 %v206
  %v673 = vunpack.c.l.b16 %v207
  %v674 = vunpack.c.l.b16 %v208
  %v675 = vunpack.c.l.b16 %v209
  %v676 = vunpack.c.l.b16 %v210
  %v677 = vunpack.c.l.b16 %v211
  %v678 = vunpack.c.l.b16 %v212
  %v679 = vunpack.c.l.b16 %v213
  %v680 = vunpack.c.l.b16 %v214
  %v681 = vunpack.c.l.b16 %v215
  %v682 = vunpack.c.l.b16 %v216
  %v683 = vunpack.c.l.b16 %v217
  %v684 = vunpack.c.l.b16 %v218
  %v685 = vunpack.c.l.b16 %v219
  %v686 = vunpack.c.l.b16 %v220
  %v687 = vunpack.c.l.b16 %v221
  %v688 = vunpack.c.l.b16 %v222
  %v689 = vunpack.c.l.b16 %v223
  %v690 = vunpack.c.l.b16 %v224
  %v691 = vunpack.c.l.b16 %v225
  %v692 = vunpack.c.l.b16 %v226
  %v693 = vunpack.c.l.b16 %v227
  %v694 = vunpack.c.l.b16 %v228
  %v695 = vunpack.c.l.b16 %v229
  %v696 = vunpack.c.l.b16 %v230
  %v697 = vunpack.c.l.b16 %v231
  %v698 = vunpack.c.l.b16 %v232
  %v699 = vunpack.c.l.b16 %v233
  %v700 = vunpack.c.l.b16 %v234
  %v701 = vunpack.c.l.b16 %v235
  %v702 = vunpack.c.l.b16 %v236
  %v703 = vunpack.c.l.b16 %v237
  %v704 = vunpack.c.l.b16 %v238
  %v705 = vunpack.c.l.b16 %v239
  %v706 = vunpack.c.l.b16 %v240
  %v707 = vunpack.c.l.b16 %v241
  %v708 = vunpack.c.l.b16 %v242
  %v709 = vunpack.c.l.b16 %v243
  %v710 = vunpack.c.l.b16 %v244
  %v711 = vunpack.c.l.b16 %v245
  %v712 = vunpack.c.l.b16 %v246
  %v713 = vpack.c.b16 %v482, %v481
  %v714 = vpack.c.b16 %v484, %v483
  %v715 = vpack.c.b16 %v486, %v485
  %v716 = vpack.c.b16 %v488, %v487
  %v717 = vpack.c.b16 %v490, %v489
  %v718 = vpack.c.b16 %v492, %v491
  %v719 = vpack.c.b16 %v494, %v493
  %v720 = vpack.c.b16 %v496, %v495
  %v721 = vpack.c.b16 %v498, %v497
  %v722 = vpack.c.b16 %v500, %v499
  %v723 = vpack.c.b16 %v502, %v501
  %v724 = vpack.c.b16 %v504, %v503
  %v725 = vpack.c.b16 %v506, %v505
  %v726 = vpack.c.b16 %v508, %v507
  %v727 = vpack.c.b16 %v510, %v509
  %v728 = vpack.c.b16 %v512, %v511
  %v729 = vpack.c.b16 %v514, %v513
  %v730 = vpack.c.b16 %v516, %v515
  %v731 = vpack.c.b16 %v518, %v517
  %v732 = vpack.c.b16 %v520, %v519
  %v733 = vpack.c.b16 %v522, %v521
  %v734 = vpack.c.b16 %v524, %v523
  %v735 = vpack.c.b16 %v526, %v525
  %v736 = vpack.c.b16 %v528, %v527
  %v737 = vpack.c.b16 %v530, %v529
  %v738 = vpack.c.b16 %v532, %v531
  %v739 = vpack.c.b16 %v534, %v533
  %v740 = vpack.c.b16 %v536, %v535
  %v741 = vpack.c.b16 %v538, %v537
  %v742 = vpack.c.b16 %v540, %v539
  %v743 = vpack.c.b16 %v542, %v541
  %v744 = vpack.c.b16 %v544, %v543
  %v745 = vpack.c.b16 %v546, %v545
  %v746 = vpack.c.b16 %v548, %v547
  %v747 = vpack.c.b16 %v550, %v549
  %v748 = vpack.c.b16 %v552, %v551
  %v749 = vpack.c.b16 %v554, %v553
  %v750 = vpack.c.b16 %v556, %v555
  %v751 = vpack.c.b16 %v558, %v557
  %v752 = vpack.c.b16 %v560, %v559
  %v753 = vpack.c.b16 %v562, %v561
  %v754 = vpack.c.b16 %v564, %v563
  %v755 = vpack.c.b16 %v566, %v565
  %v756 = vpack.c.b16 %v568, %v567
  %v757 = vpack.c.b16 %v570, %v569
  %v758 = vpack.c.b16 %v572, %v571
  %v759 = vpack.c.b16 %v574, %v573
  %v760 = vpack.c.b16 %v576, %v575
  %v761 = vpack.c.b16 %v578, %v577
  %v762 = vpack.c.b16 %v580, %v579
  %v763 = vpack.c.b16 %v582, %v581
  %v764 = vpack.c.b16 %v584, %v583
  %v765 = vpack.c.b16 %v586, %v585
  %v766 = vpack.c.b16 %v588, %v587
  %v767 = vpack.c.b16 %v590, %v589
  %v768 = vpack.c.b16 %v592, %v591
  %v769 = vpack.c.b16 %v594, %v593
  %v770 = vpack.c.b16 %v596, %v595
  %v771 = vpack.c.b16 %v598, %v597
  %v772 = vpack.c.b16 %v600, %v599
  %v773 = vpack.c.b16 %v602, %v601
  %v774 = vpack.c.b16 %v604, %v603
  %v775 = vpack.c.b16 %v606, %v605
  %v776 = vpack.c.b16 %v608, %v607
  %v777 = vpack.c.b16 %v610, %v609
  %v778 = vpack.c.b16 %v612, %v611
  %v779 = vpack.c.b16 %v614, %v613
  %v780 = vpack.c.b16 %v616, %v615
  %v781 = vpack.c.b16 %v618, %v617
  %v782 = vpack.c.b16 %v620, %v619
  %v783 = vpack.c.b16 %v622, %v621
  %v784 = vpack.c.b16 %v624, %v623
  %v785 = vpack.c.b16 %v626, %v625
  %v786 = vpack.c.b16 %v628, %v627
  %v787 = vpack.c.b16 %v630, %v629
  %v788 = vpack.c.b16 %v632, %v631
  %v789 = vpack.c.b16 %v634, %v633
  %v790 = vpack.c.b16 %v636, %v635
  %v791 = vpack.c.b16 %v638, %v637
  %v792 = vpack.c.b16 %v640, %v639
  %v793 = vpack.c.b16 %v642, %v641
  %v794 = vpack.c.b16 %v644, %v643
  %v795 = vpack.c.b16 %v646, %v645
  %v796 = vpack.c.b16 %v648, %v647
  %v797 = vpack.c.b16 %v650, %v649
  %v798 = vpack.c.b16 %v652, %v651
  %v799 = vpack.c.b16 %v654, %v653
  %v800 = vpack.c.b16 %v656, %v655
  %v801 = vpack.c.b16 %v658, %v657
  %v802 = vpack.c.b16 %v660, %v659
  %v803 = vpack.c.b16 %v662, %v661
  %v804 = vpack.c.b16 %v664, %v663
  %v805 = vpack.c.b16 %v666, %v665
  %v806 = vpack.c.b16 %v668, %v667
  %v807 = vpack.c.b16 %v670, %v669
  %v808 = vpack.c.b16 %v672, %v671
  %v809 = vpack.c.b16 %v674, %v673
  %v810 = vpack.c.b16 %v676, %v675
  %v811 = vpack.c.b16 %v678, %v677
  %v812 = vpack.c.b16 %v680, %v679
  %v813 = vpack.c.b16 %v682, %v681
  %v814 = vpack.c.b16 %v684, %v683
  %v815 = vpack.c.b16 %v686, %v685
  %v816 = vpack.c.b16 %v688, %v687
  %v817 = vpack.c.b16 %v690, %v689
  %v818 = vpack.c.b16 %v692, %v691
  %v819 = vpack.c.b16 %v694, %v693
  %v820 = vpack.c.b16 %v696, %v695
  %v821 = vpack.c.b16 %v698, %v697
  %v822 = vpack.c.b16 %v700, %v699
  %v823 = vpack.c.b16 %v702, %v701
  %v824 = vpack.c.b16 %v704, %v703
  %v825 = vpack.c.b16 %v706, %v705
  %v826 = vpack.c.b16 %v708, %v707
  %v827 = vpack.c.b16 %v710, %v709
  %v828 = vpack.c.b16 %v712, %v711
  %v831 = vunpack.c.l.b16 %v247
  %v832 = vunpack.c.l.b16 %v248
  %v833 = vpack.c.b16 %v832, %v831
  %vm834 = vcmask 72704
  %v836 = vsel %vm834, %v713, 0
  %v839 = vsel %vm834, %v714, 0
  %v842 = vsel %vm834, %v715, 0
  %v845 = vsel %vm834, %v716, 0
  %v848 = vsel %vm834, %v717, 0
  %v851 = vsel %vm834, %v718, 0
  %v854 = vsel %vm834, %v719, 0
  %v857 = vsel %vm834, %v720, 0
  %v860 = vsel %vm834, %v721, 0
  %v863 = vsel %vm834, %v722, 0
  %v866 = vsel %vm834, %v723, 0
  %v869 = vsel %vm834, %v724, 0
  %v872 = vsel %vm834, %v725, 0
  %v875 = vsel %vm834, %v726, 0
  %v878 = vsel %vm834, %v727, 0
  %v881 = vsel %vm834, %v728, 0
  %v884 = vsel %vm834, %v729, 0
  %v887 = vsel %vm834, %v730, 0
  %v890 = vsel %vm834, %v731, 0
  %v893 = vsel %vm834, %v732, 0
  %v896 = vsel %vm834, %v733, 0
  %v899 = vsel %vm834, %v734, 0
  %v902 = vsel %vm834, %v735, 0
  %v905 = vsel %vm834, %v736, 0
  %v908 = vsel %vm834, %v737, 0
  %v911 = vsel %vm834, %v738, 0
  %v914 = vsel %vm834, %v739, 0
  %v917 = vsel %vm834, %v740, 0
  %v920 = vsel %vm834, %v741, 0
  %v923 = vsel %vm834, %v742, 0
  %v926 = vsel %vm834, %v743, 0
  %v929 = vsel %vm834, %v744, 0
  %v932 = vsel %vm834, %v745, 0
  %v935 = vsel %vm834, %v746, 0
  %v938 = vsel %vm834, %v747, 0
  %v941 = vsel %vm834, %v748, 0
  %v944 = vsel %vm834, %v749, 0
  %v947 = vsel %vm834, %v750, 0
  %v950 = vsel %vm834, %v751, 0
  %v953 = vsel %vm834, %v752, 0
  %v956 = vsel %vm834, %v753, 0
  %v959 = vsel %vm834, %v754, 0
  %v962 = vsel %vm834, %v755, 0
  %v965 = vsel %vm834, %v756, 0
  %v968 = vsel %vm834, %v757, 0
  %v971 = vsel %vm834, %v758, 0
  %v974 = vsel %vm834, %v759, 0
  %v977 = vsel %vm834, %v760, 0
  %v980 = vsel %vm834, %v761, 0
  %v983 = vsel %vm834, %v762, 0
  %v986 = vsel %vm834, %v763, 0
  %v989 = vsel %vm834, %v764, 0
  %v992 = vsel %vm834, %v765, 0
  %v995 = vsel %vm834, %v766, 0
  %v998 = vsel %vm834, %v767, 0
  %v1001 = vsel %vm834, %v768, 0
  %v1004 = vsel %vm834, %v769, 0
  %v1007 = vsel %vm834, %v770, 0
  %v1010 = vsel %vm834, %v771, 0
  %v1013 = vsel %vm834, %v772, 0
  %v1016 = vsel %vm834, %v773, 0
  %v1019 = vsel %vm834, %v774, 0
  %v1022 = vsel %vm834, %v775, 0
  %v1025 = vsel %vm834, %v776, 0
  %v1028 = vsel %vm834, %v777, 0
  %v1031 = vsel %vm834, %v778, 0
  %v1034 = vsel %vm834, %v779, 0
  %v1037 = vsel %vm834, %v780, 0
  %v1040 = vsel %vm834, %v781, 0
  %v1043 = vsel %vm834, %v782, 0
  %v1046 = vsel %vm834, %v783, 0
  %v1049 = vsel %vm834, %v784, 0
  %v1052 = vsel %vm834, %v785, 0
  %v1055 = vsel %vm834, %v786, 0
  %v1058 = vsel %vm834, %v787, 0
  %v1061 = vsel %vm834, %v788, 0
  %v1064 = vsel %vm834, %v789, 0
  %v1067 = vsel %vm834, %v790, 0
  %v1070 = vsel %vm834, %v791, 0
  %v1073 = vsel %vm834, %v792, 0
  %v1076 = vsel %vm834, %v793, 0
  %v1079 = vsel %vm834, %v794, 0
  %v1082 = vsel %vm834, %v795, 0
  %v1085 = vsel %vm834, %v796, 0
  %v1088 = vsel %vm834, %v797, 0
  %v1091 = vsel %vm834, %v798, 0
  %v1094 = vsel %vm834, %v799, 0
  %v1097 = vsel %vm834, %v800, 0
  %v1100 = vsel %vm834, %v801, 0
  %v1103 = vsel %vm834, %v802, 0
  %v1106 = vsel %vm834, %v803, 0
  %v1109 = vsel %vm834, %v804, 0
  %v1112 = vsel %vm834, %v805, 0
  %v1115 = vsel %vm834, %v806, 0
  %v1118 = vsel %vm834, %v807, 0
  %v1121 = vsel %vm834, %v808, 0
  %v1124 = vsel %vm834, %v809, 0
  %v1127 = vsel %vm834, %v810, 0
  %v1130 = vsel %vm834, %v811, 0
  %v1133 = vsel %vm834, %v812, 0
  %v1136 = vsel %vm834, %v813, 0
  %v1139 = vsel %vm834, %v814, 0
  %v1142 = vsel %vm834, %v815, 0
  %v1145 = vsel %vm834, %v816, 0
  %v1148 = vsel %vm834, %v817, 0
  %v1151 = vsel %vm834, %v818, 0
  %v1154 = vsel %vm834, %v819, 0
  %v1157 = vsel %vm834, %v820, 0
  %v1160 = vsel %vm834, %v821, 0
  %v1163 = vsel %vm834, %v822, 0
  %v1166 = vsel %vm834, %v823, 0
  %v1169 = vsel %vm834, %v824, 0
  %v1172 = vsel %vm834, %v825, 0
  %v1175 = vsel %vm834, %v826, 0
  %v1178 = vsel %vm834, %v827, 0
  %v1181 = vsel %vm834, %v828, 0
  %vm1183 = vcmask 1043456
  %vm1184 = vcmask 1044480
  %v1185 = vsel %vm1183, 4294967295, 65535
  %v1186 = vsel %vm1184, %v1185, 0
  %v1188 = vand.u32 %v833, %v1186
  %1190 = vmatprep.subr.bf16.mxu0 0
  %1191 = vmatpush1.bf16.msra.mxu0 %v1188
  %1192 = vmatprep.subr.bf16.mxu0 0
  %1193 = vmatpush1.bf16.msra.mxu0 0
  %1194 = vmatprep.subr.bf16.mxu0 0
  %1195 = vmatpush1.bf16.msra.mxu0 0
  %1196 = vmatprep.subr.bf16.mxu0 0
  %1197 = vmatpush1.bf16.msra.mxu0 0
  %1198 = vmatprep.subr.bf16.mxu0 0
  %1199 = vmatpush1.bf16.msra.mxu0 0
  %1200 = vmatprep.subr.bf16.mxu0 0
  %1201 = vmatpush1.bf16.msra.mxu0 0
  %1202 = vmatprep.subr.bf16.mxu0 0
  %1203 = vmatpush1.bf16.msra.mxu0 0
  %1204 = vmatprep.subr.bf16.mxu0 0
  %1205 = vmatpush1.bf16.msra.mxu0 0
  %1206 = vmatprep.subr.bf16.mxu0 0
  %1207 = vmatpush1.bf16.msra.mxu0 0
  %1208 = vmatprep.subr.bf16.mxu0 0
  %1209 = vmatpush1.bf16.msra.mxu0 0
  %1210 = vmatprep.subr.bf16.mxu0 0
  %1211 = vmatpush1.bf16.msra.mxu0 0
  %1212 = vmatprep.subr.bf16.mxu0 0
  %1213 = vmatpush1.bf16.msra.mxu0 0
  %1214 = vmatprep.subr.bf16.mxu0 0
  %1215 = vmatpush1.bf16.msra.mxu0 0
  %1216 = vmatprep.subr.bf16.mxu0 0
  %1217 = vmatpush1.bf16.msra.mxu0 0
  %1218 = vmatprep.subr.bf16.mxu0 0
  %1219 = vmatpush1.bf16.msra.mxu0 0
  %1220 = vmatprep.subr.bf16.mxu0 0
  %1221 = vmatpush1.bf16.msra.mxu0 0
  %1222 = vmatprep.mubr.bf16.mxu0 0
  %1223 = vmatmul.mubr.bf16.gmra.mrb[0].mxu0 %v836
  %v1224 = vpop.f32.mrb[0].mxu0
  %v1225 = vadd.f32 0.0, %v1224
  %v1226 = vpop.f32.mrb[0].mxu0
  %v1227 = vpop.f32.mrb[0].mxu0
  %v1228 = vadd.f32 0.0, %v1227
  %v1229 = vpop.f32.mrb[0].mxu0
  %1230 = vmatprep.mubr.bf16.mxu0 0
  %1231 = vmatmul.mubr.bf16.gmra.mrb[0].mxu0 %v839
  %v1232 = vpop.f32.mrb[0].mxu0
  %v1233 = vadd.f32 0.0, %v1232
  %v1234 = vpop.f32.mrb[0].mxu0
  %v1235 = vpop.f32.mrb[0].mxu0
  %v1236 = vadd.f32 0.0, %v1235
  %v1237 = vpop.f32.mrb[0].mxu0
  %1238 = vmatprep.mubr.bf16.mxu0 0
  %1239 = vmatmul.mubr.bf16.gmra.mrb[0].mxu0 %v842
  %v1240 = vpop.f32.mrb[0].mxu0
  %v1241 = vadd.f32 0.0, %v1240
  %v1242 = vpop.f32.mrb[0].mxu0
  %v1243 = vpop.f32.mrb[0].mxu0
  %v1244 = vadd.f32 0.0, %v1243
  %v1245 = vpop.f32.mrb[0].mxu0
  %1246 = vmatprep.mubr.bf16.mxu0 0
  %1247 = vmatmul.mubr.bf16.gmra.mrb[0].mxu0 %v845
  %v1248 = vpop.f32.mrb[0].mxu0
  %v1249 = vadd.f32 0.0, %v1248
  %v1250 = vpop.f32.mrb[0].mxu0
  %v1251 = vpop.f32.mrb[0].mxu0
  %v1252 = vadd.f32 0.0, %v1251
  %v1253 = vpop.f32.mrb[0].mxu0
  %1254 = vmatprep.mubr.bf16.mxu0 0
  %1255 = vmatmul.mubr.bf16.gmra.mrb[0].mxu0 %v848
  %v1256 = vpop.f32.mrb[0].mxu0
  %v1257 = vadd.f32 0.0, %v1256
  %v1258 = vpop.f32.mrb[0].mxu0
  %v1259 = vpop.f32.mrb[0].mxu0
  %v1260 = vadd.f32 0.0, %v1259
  %v1261 = vpop.f32.mrb[0].mxu0
  %1262 = vmatprep.mubr.bf16.mxu0 0
  %1263 = vmatmul.mubr.bf16.gmra.mrb[0].mxu0 %v851
  %v1264 = vpop.f32.mrb[0].mxu0
  %v1265 = vadd.f32 0.0, %v1264
  %v1266 = vpop.f32.mrb[0].mxu0
  %v1267 = vpop.f32.mrb[0].mxu0
  %v1268 = vadd.f32 0.0, %v1267
  %v1269 = vpop.f32.mrb[0].mxu0
  %1270 = vmatprep.mubr.bf16.mxu0 0
  %1271 = vmatmul.mubr.bf16.gmra.mrb[0].mxu0 %v854
  %v1272 = vpop.f32.mrb[0].mxu0
  %v1273 = vadd.f32 0.0, %v1272
  %v1274 = vpop.f32.mrb[0].mxu0
  %v1275 = vpop.f32.mrb[0].mxu0
  %v1276 = vadd.f32 0.0, %v1275
  %v1277 = vpop.f32.mrb[0].mxu0
  %1278 = vmatprep.mubr.bf16.mxu0 0
  %1279 = vmatmul.mubr.bf16.gmra.mrb[0].mxu0 %v857
  %v1280 = vpop.f32.mrb[0].mxu0
  %v1281 = vadd.f32 0.0, %v1280
  %v1282 = vpop.f32.mrb[0].mxu0
  %v1283 = vpop.f32.mrb[0].mxu0
  %v1284 = vadd.f32 0.0, %v1283
  %v1285 = vpop.f32.mrb[0].mxu0
  %1286 = vmatprep.mubr.bf16.mxu0 0
  %1287 = vmatmul.mubr.bf16.gmra.mrb[0].mxu0 %v860
  %v1288 = vpop.f32.mrb[0].mxu0
  %v1289 = vadd.f32 0.0, %v1288
  %v1290 = vpop.f32.mrb[0].mxu0
  %v1291 = vpop.f32.mrb[0].mxu0
  %v1292 = vadd.f32 0.0, %v1291
  %v1293 = vpop.f32.mrb[0].mxu0
  %1294 = vmatprep.mubr.bf16.mxu0 0
  %1295 = vmatmul.mubr.bf16.gmra.mrb[0].mxu0 %v863
  %v1296 = vpop.f32.mrb[0].mxu0
  %v1297 = vadd.f32 0.0, %v1296
  %v1298 = vpop.f32.mrb[0].mxu0
  %v1299 = vpop.f32.mrb[0].mxu0
  %v1300 = vadd.f32 0.0, %v1299
  %v1301 = vpop.f32.mrb[0].mxu0
  %1302 = vmatprep.mubr.bf16.mxu0 0
  %1303 = vmatmul.mubr.bf16.gmra.mrb[0].mxu0 %v866
  %v1304 = vpop.f32.mrb[0].mxu0
  %v1305 = vadd.f32 0.0, %v1304
  %v1306 = vpop.f32.mrb[0].mxu0
  %v1307 = vpop.f32.mrb[0].mxu0
  %v1308 = vadd.f32 0.0, %v1307
  %v1309 = vpop.f32.mrb[0].mxu0
  %1310 = vmatprep.mubr.bf16.mxu0 0
  %1311 = vmatmul.mubr.bf16.gmra.mrb[0].mxu0 %v869
  %v1312 = vpop.f32.mrb[0].mxu0
  %v1313 = vadd.f32 0.0, %v1312
  %v1314 = vpop.f32.mrb[0].mxu0
  %v1315 = vpop.f32.mrb[0].mxu0
  %v1316 = vadd.f32 0.0, %v1315
  %v1317 = vpop.f32.mrb[0].mxu0
  %1318 = vmatprep.mubr.bf16.mxu0 0
  %1319 = vmatmul.mubr.bf16.gmra.mrb[0].mxu0 %v872
  %v1320 = vpop.f32.mrb[0].mxu0
  %v1321 = vadd.f32 0.0, %v1320
  %v1322 = vpop.f32.mrb[0].mxu0
  %v1323 = vpop.f32.mrb[0].mxu0
  %v1324 = vadd.f32 0.0, %v1323
  %v1325 = vpop.f32.mrb[0].mxu0
  %1326 = vmatprep.mubr.bf16.mxu0 0
  %1327 = vmatmul.mubr.bf16.gmra.mrb[0].mxu0 %v875
  %v1328 = vpop.f32.mrb[0].mxu0
  %v1329 = vadd.f32 0.0, %v1328
  %v1330 = vpop.f32.mrb[0].mxu0
  %v1331 = vpop.f32.mrb[0].mxu0
  %v1332 = vadd.f32 0.0, %v1331
  %v1333 = vpop.f32.mrb[0].mxu0
  %1334 = vmatprep.mubr.bf16.mxu0 0
  %1335 = vmatmul.mubr.bf16.gmra.mrb[0].mxu0 %v878
  %v1336 = vpop.f32.mrb[0].mxu0
  %v1337 = vadd.f32 0.0, %v1336
  %v1338 = vpop.f32.mrb[0].mxu0
  %v1339 = vpop.f32.mrb[0].mxu0
  %v1340 = vadd.f32 0.0, %v1339
  %v1341 = vpop.f32.mrb[0].mxu0
  %1342 = vmatprep.mubr.bf16.mxu0 0
  %1343 = vmatmul.mubr.bf16.gmra.mrb[0].mxu0 %v881
  %v1344 = vpop.f32.mrb[0].mxu0
  %v1345 = vadd.f32 0.0, %v1344
  %v1346 = vpop.f32.mrb[0].mxu0
  %v1347 = vpop.f32.mrb[0].mxu0
  %v1348 = vadd.f32 0.0, %v1347
  %v1349 = vpop.f32.mrb[0].mxu0
  %1350 = vmatprep.mubr.bf16.mxu0 0
  %1351 = vmatmul.mubr.bf16.gmra.mrb[0].mxu0 %v884
  %v1352 = vpop.f32.mrb[0].mxu0
  %v1353 = vadd.f32 0.0, %v1352
  %v1354 = vpop.f32.mrb[0].mxu0
  %v1355 = vpop.f32.mrb[0].mxu0
  %v1356 = vadd.f32 0.0, %v1355
  %v1357 = vpop.f32.mrb[0].mxu0
  %1358 = vmatprep.mubr.bf16.mxu0 0
  %1359 = vmatmul.mubr.bf16.gmra.mrb[0].mxu0 %v887
  %v1360 = vpop.f32.mrb[0].mxu0
  %v1361 = vadd.f32 0.0, %v1360
  %v1362 = vpop.f32.mrb[0].mxu0
  %v1363 = vpop.f32.mrb[0].mxu0
  %v1364 = vadd.f32 0.0, %v1363
  %v1365 = vpop.f32.mrb[0].mxu0
  %1366 = vmatprep.mubr.bf16.mxu0 0
  %1367 = vmatmul.mubr.bf16.gmra.mrb[0].mxu0 %v890
  %v1368 = vpop.f32.mrb[0].mxu0
  %v1369 = vadd.f32 0.0, %v1368
  %v1370 = vpop.f32.mrb[0].mxu0
  %v1371 = vpop.f32.mrb[0].mxu0
  %v1372 = vadd.f32 0.0, %v1371
  %v1373 = vpop.f32.mrb[0].mxu0
  %1374 = vmatprep.mubr.bf16.mxu0 0
  %1375 = vmatmul.mubr.bf16.gmra.mrb[0].mxu0 %v893
  %v1376 = vpop.f32.mrb[0].mxu0
  %v1377 = vadd.f32 0.0, %v1376
  %v1378 = vpop.f32.mrb[0].mxu0
  %v1379 = vpop.f32.mrb[0].mxu0
  %v1380 = vadd.f32 0.0, %v1379
  %v1381 = vpop.f32.mrb[0].mxu0
  %1382 = vmatprep.mubr.bf16.mxu0 0
  %1383 = vmatmul.mubr.bf16.gmra.mrb[0].mxu0 %v896
  %v1384 = vpop.f32.mrb[0].mxu0
  %v1385 = vadd.f32 0.0, %v1384
  %v1386 = vpop.f32.mrb[0].mxu0
  %v1387 = vpop.f32.mrb[0].mxu0
  %v1388 = vadd.f32 0.0, %v1387
  %v1389 = vpop.f32.mrb[0].mxu0
  %1390 = vmatprep.mubr.bf16.mxu0 0
  %1391 = vmatmul.mubr.bf16.gmra.mrb[0].mxu0 %v899
  %v1392 = vpop.f32.mrb[0].mxu0
  %v1393 = vadd.f32 0.0, %v1392
  %v1394 = vpop.f32.mrb[0].mxu0
  %v1395 = vpop.f32.mrb[0].mxu0
  %v1396 = vadd.f32 0.0, %v1395
  %v1397 = vpop.f32.mrb[0].mxu0
  %1398 = vmatprep.mubr.bf16.mxu0 0
  %1399 = vmatmul.mubr.bf16.gmra.mrb[0].mxu0 %v902
  %v1400 = vpop.f32.mrb[0].mxu0
  %v1401 = vadd.f32 0.0, %v1400
  %v1402 = vpop.f32.mrb[0].mxu0
  %v1403 = vpop.f32.mrb[0].mxu0
  %v1404 = vadd.f32 0.0, %v1403
  %v1405 = vpop.f32.mrb[0].mxu0
  %1406 = vmatprep.mubr.bf16.mxu0 0
  %1407 = vmatmul.mubr.bf16.gmra.mrb[0].mxu0 %v905
  %v1408 = vpop.f32.mrb[0].mxu0
  %v1409 = vadd.f32 0.0, %v1408
  %v1410 = vpop.f32.mrb[0].mxu0
  %v1411 = vpop.f32.mrb[0].mxu0
  %v1412 = vadd.f32 0.0, %v1411
  %v1413 = vpop.f32.mrb[0].mxu0
  %1414 = vmatprep.mubr.bf16.mxu0 0
  %1415 = vmatmul.mubr.bf16.gmra.mrb[0].mxu0 %v908
  %v1416 = vpop.f32.mrb[0].mxu0
  %v1417 = vadd.f32 0.0, %v1416
  %v1418 = vpop.f32.mrb[0].mxu0
  %v1419 = vpop.f32.mrb[0].mxu0
  %v1420 = vadd.f32 0.0, %v1419
  %v1421 = vpop.f32.mrb[0].mxu0
  %1422 = vmatprep.mubr.bf16.mxu0 0
  %1423 = vmatmul.mubr.bf16.gmra.mrb[0].mxu0 %v911
  %v1424 = vpop.f32.mrb[0].mxu0
  %v1425 = vadd.f32 0.0, %v1424
  %v1426 = vpop.f32.mrb[0].mxu0
  %v1427 = vpop.f32.mrb[0].mxu0
  %v1428 = vadd.f32 0.0, %v1427
  %v1429 = vpop.f32.mrb[0].mxu0
  %1430 = vmatprep.mubr.bf16.mxu0 0
  %1431 = vmatmul.mubr.bf16.gmra.mrb[0].mxu0 %v914
  %v1432 = vpop.f32.mrb[0].mxu0
  %v1433 = vadd.f32 0.0, %v1432
  %v1434 = vpop.f32.mrb[0].mxu0
  %v1435 = vpop.f32.mrb[0].mxu0
  %v1436 = vadd.f32 0.0, %v1435
  %v1437 = vpop.f32.mrb[0].mxu0
  %1438 = vmatprep.mubr.bf16.mxu0 0
  %1439 = vmatmul.mubr.bf16.gmra.mrb[0].mxu0 %v917
  %v1440 = vpop.f32.mrb[0].mxu0
  %v1441 = vadd.f32 0.0, %v1440
  %v1442 = vpop.f32.mrb[0].mxu0
  %v1443 = vpop.f32.mrb[0].mxu0
  %v1444 = vadd.f32 0.0, %v1443
  %v1445 = vpop.f32.mrb[0].mxu0
  %1446 = vmatprep.mubr.bf16.mxu0 0
  %1447 = vmatmul.mubr.bf16.gmra.mrb[0].mxu0 %v920
  %v1448 = vpop.f32.mrb[0].mxu0
  %v1449 = vadd.f32 0.0, %v1448
  %v1450 = vpop.f32.mrb[0].mxu0
  %v1451 = vpop.f32.mrb[0].mxu0
  %v1452 = vadd.f32 0.0, %v1451
  %v1453 = vpop.f32.mrb[0].mxu0
  %1454 = vmatprep.mubr.bf16.mxu0 0
  %1455 = vmatmul.mubr.bf16.gmra.mrb[0].mxu0 %v923
  %v1456 = vpop.f32.mrb[0].mxu0
  %v1457 = vadd.f32 0.0, %v1456
  %v1458 = vpop.f32.mrb[0].mxu0
  %v1459 = vpop.f32.mrb[0].mxu0
  %v1460 = vadd.f32 0.0, %v1459
  %v1461 = vpop.f32.mrb[0].mxu0
  %1462 = vmatprep.mubr.bf16.mxu0 0
  %1463 = vmatmul.mubr.bf16.gmra.mrb[0].mxu0 %v926
  %v1464 = vpop.f32.mrb[0].mxu0
  %v1465 = vadd.f32 0.0, %v1464
  %v1466 = vpop.f32.mrb[0].mxu0
  %v1467 = vpop.f32.mrb[0].mxu0
  %v1468 = vadd.f32 0.0, %v1467
  %v1469 = vpop.f32.mrb[0].mxu0
  %1470 = vmatprep.mubr.bf16.mxu0 0
  %1471 = vmatmul.mubr.bf16.gmra.mrb[0].mxu0 %v929
  %v1472 = vpop.f32.mrb[0].mxu0
  %v1473 = vadd.f32 0.0, %v1472
  %v1474 = vpop.f32.mrb[0].mxu0
  %v1475 = vpop.f32.mrb[0].mxu0
  %v1476 = vadd.f32 0.0, %v1475
  %v1477 = vpop.f32.mrb[0].mxu0
  %1478 = vmatprep.mubr.bf16.mxu0 0
  %1479 = vmatmul.mubr.bf16.gmra.mrb[0].mxu0 %v932
  %v1480 = vpop.f32.mrb[0].mxu0
  %v1481 = vadd.f32 0.0, %v1480
  %v1482 = vpop.f32.mrb[0].mxu0
  %v1483 = vpop.f32.mrb[0].mxu0
  %v1484 = vadd.f32 0.0, %v1483
  %v1485 = vpop.f32.mrb[0].mxu0
  %1486 = vmatprep.mubr.bf16.mxu0 0
  %1487 = vmatmul.mubr.bf16.gmra.mrb[0].mxu0 %v935
  %v1488 = vpop.f32.mrb[0].mxu0
  %v1489 = vadd.f32 0.0, %v1488
  %v1490 = vpop.f32.mrb[0].mxu0
  %v1491 = vpop.f32.mrb[0].mxu0
  %v1492 = vadd.f32 0.0, %v1491
  %v1493 = vpop.f32.mrb[0].mxu0
  %1494 = vmatprep.mubr.bf16.mxu0 0
  %1495 = vmatmul.mubr.bf16.gmra.mrb[0].mxu0 %v938
  %v1496 = vpop.f32.mrb[0].mxu0
  %v1497 = vadd.f32 0.0, %v1496
  %v1498 = vpop.f32.mrb[0].mxu0
  %v1499 = vpop.f32.mrb[0].mxu0
  %v1500 = vadd.f32 0.0, %v1499
  %v1501 = vpop.f32.mrb[0].mxu0
  %1502 = vmatprep.mubr.bf16.mxu0 0
  %1503 = vmatmul.mubr.bf16.gmra.mrb[0].mxu0 %v941
  %v1504 = vpop.f32.mrb[0].mxu0
  %v1505 = vadd.f32 0.0, %v1504
  %v1506 = vpop.f32.mrb[0].mxu0
  %v1507 = vpop.f32.mrb[0].mxu0
  %v1508 = vadd.f32 0.0, %v1507
  %v1509 = vpop.f32.mrb[0].mxu0
  %1510 = vmatprep.mubr.bf16.mxu0 0
  %1511 = vmatmul.mubr.bf16.gmra.mrb[0].mxu0 %v944
  %v1512 = vpop.f32.mrb[0].mxu0
  %v1513 = vadd.f32 0.0, %v1512
  %v1514 = vpop.f32.mrb[0].mxu0
  %v1515 = vpop.f32.mrb[0].mxu0
  %v1516 = vadd.f32 0.0, %v1515
  %v1517 = vpop.f32.mrb[0].mxu0
  %1518 = vmatprep.mubr.bf16.mxu0 0
  %1519 = vmatmul.mubr.bf16.gmra.mrb[0].mxu0 %v947
  %v1520 = vpop.f32.mrb[0].mxu0
  %v1521 = vadd.f32 0.0, %v1520
  %v1522 = vpop.f32.mrb[0].mxu0
  %v1523 = vpop.f32.mrb[0].mxu0
  %v1524 = vadd.f32 0.0, %v1523
  %v1525 = vpop.f32.mrb[0].mxu0
  %1526 = vmatprep.mubr.bf16.mxu0 0
  %1527 = vmatmul.mubr.bf16.gmra.mrb[0].mxu0 %v950
  %v1528 = vpop.f32.mrb[0].mxu0
  %v1529 = vadd.f32 0.0, %v1528
  %v1530 = vpop.f32.mrb[0].mxu0
  %v1531 = vpop.f32.mrb[0].mxu0
  %v1532 = vadd.f32 0.0, %v1531
  %v1533 = vpop.f32.mrb[0].mxu0
  %1534 = vmatprep.mubr.bf16.mxu0 0
  %1535 = vmatmul.mubr.bf16.gmra.mrb[0].mxu0 %v953
  %v1536 = vpop.f32.mrb[0].mxu0
  %v1537 = vadd.f32 0.0, %v1536
  %v1538 = vpop.f32.mrb[0].mxu0
  %v1539 = vpop.f32.mrb[0].mxu0
  %v1540 = vadd.f32 0.0, %v1539
  %v1541 = vpop.f32.mrb[0].mxu0
  %1542 = vmatprep.mubr.bf16.mxu0 0
  %1543 = vmatmul.mubr.bf16.gmra.mrb[0].mxu0 %v956
  %v1544 = vpop.f32.mrb[0].mxu0
  %v1545 = vadd.f32 0.0, %v1544
  %v1546 = vpop.f32.mrb[0].mxu0
  %v1547 = vpop.f32.mrb[0].mxu0
  %v1548 = vadd.f32 0.0, %v1547
  %v1549 = vpop.f32.mrb[0].mxu0
  %1550 = vmatprep.mubr.bf16.mxu0 0
  %1551 = vmatmul.mubr.bf16.gmra.mrb[0].mxu0 %v959
  %v1552 = vpop.f32.mrb[0].mxu0
  %v1553 = vadd.f32 0.0, %v1552
  %v1554 = vpop.f32.mrb[0].mxu0
  %v1555 = vpop.f32.mrb[0].mxu0
  %v1556 = vadd.f32 0.0, %v1555
  %v1557 = vpop.f32.mrb[0].mxu0
  %1558 = vmatprep.mubr.bf16.mxu0 0
  %1559 = vmatmul.mubr.bf16.gmra.mrb[0].mxu0 %v962
  %v1560 = vpop.f32.mrb[0].mxu0
  %v1561 = vadd.f32 0.0, %v1560
  %v1562 = vpop.f32.mrb[0].mxu0
  %v1563 = vpop.f32.mrb[0].mxu0
  %v1564 = vadd.f32 0.0, %v1563
  %v1565 = vpop.f32.mrb[0].mxu0
  %1566 = vmatprep.mubr.bf16.mxu0 0
  %1567 = vmatmul.mubr.bf16.gmra.mrb[0].mxu0 %v965
  %v1568 = vpop.f32.mrb[0].mxu0
  %v1569 = vadd.f32 0.0, %v1568
  %v1570 = vpop.f32.mrb[0].mxu0
  %v1571 = vpop.f32.mrb[0].mxu0
  %v1572 = vadd.f32 0.0, %v1571
  %v1573 = vpop.f32.mrb[0].mxu0
  %1574 = vmatprep.mubr.bf16.mxu0 0
  %1575 = vmatmul.mubr.bf16.gmra.mrb[0].mxu0 %v968
  %v1576 = vpop.f32.mrb[0].mxu0
  %v1577 = vadd.f32 0.0, %v1576
  %v1578 = vpop.f32.mrb[0].mxu0
  %v1579 = vpop.f32.mrb[0].mxu0
  %v1580 = vadd.f32 0.0, %v1579
  %v1581 = vpop.f32.mrb[0].mxu0
  %1582 = vmatprep.mubr.bf16.mxu0 0
  %1583 = vmatmul.mubr.bf16.gmra.mrb[0].mxu0 %v971
  %v1584 = vpop.f32.mrb[0].mxu0
  %v1585 = vadd.f32 0.0, %v1584
  %v1586 = vpop.f32.mrb[0].mxu0
  %v1587 = vpop.f32.mrb[0].mxu0
  %v1588 = vadd.f32 0.0, %v1587
  %v1589 = vpop.f32.mrb[0].mxu0
  %1590 = vmatprep.mubr.bf16.mxu0 0
  %1591 = vmatmul.mubr.bf16.gmra.mrb[0].mxu0 %v974
  %v1592 = vpop.f32.mrb[0].mxu0
  %v1593 = vadd.f32 0.0, %v1592
  %v1594 = vpop.f32.mrb[0].mxu0
  %v1595 = vpop.f32.mrb[0].mxu0
  %v1596 = vadd.f32 0.0, %v1595
  %v1597 = vpop.f32.mrb[0].mxu0
  %1598 = vmatprep.mubr.bf16.mxu0 0
  %1599 = vmatmul.mubr.bf16.gmra.mrb[0].mxu0 %v977
  %v1600 = vpop.f32.mrb[0].mxu0
  %v1601 = vadd.f32 0.0, %v1600
  %v1602 = vpop.f32.mrb[0].mxu0
  %v1603 = vpop.f32.mrb[0].mxu0
  %v1604 = vadd.f32 0.0, %v1603
  %v1605 = vpop.f32.mrb[0].mxu0
  %1606 = vmatprep.mubr.bf16.mxu0 0
  %1607 = vmatmul.mubr.bf16.gmra.mrb[0].mxu0 %v980
  %v1608 = vpop.f32.mrb[0].mxu0
  %v1609 = vadd.f32 0.0, %v1608
  %v1610 = vpop.f32.mrb[0].mxu0
  %v1611 = vpop.f32.mrb[0].mxu0
  %v1612 = vadd.f32 0.0, %v1611
  %v1613 = vpop.f32.mrb[0].mxu0
  %1614 = vmatprep.mubr.bf16.mxu0 0
  %1615 = vmatmul.mubr.bf16.gmra.mrb[0].mxu0 %v983
  %v1616 = vpop.f32.mrb[0].mxu0
  %v1617 = vadd.f32 0.0, %v1616
  %v1618 = vpop.f32.mrb[0].mxu0
  %v1619 = vpop.f32.mrb[0].mxu0
  %v1620 = vadd.f32 0.0, %v1619
  %v1621 = vpop.f32.mrb[0].mxu0
  %1622 = vmatprep.mubr.bf16.mxu0 0
  %1623 = vmatmul.mubr.bf16.gmra.mrb[0].mxu0 %v986
  %v1624 = vpop.f32.mrb[0].mxu0
  %v1625 = vadd.f32 0.0, %v1624
  %v1626 = vpop.f32.mrb[0].mxu0
  %v1627 = vpop.f32.mrb[0].mxu0
  %v1628 = vadd.f32 0.0, %v1627
  %v1629 = vpop.f32.mrb[0].mxu0
  %1630 = vmatprep.mubr.bf16.mxu0 0
  %1631 = vmatmul.mubr.bf16.gmra.mrb[0].mxu0 %v989
  %v1632 = vpop.f32.mrb[0].mxu0
  %v1633 = vadd.f32 0.0, %v1632
  %v1634 = vpop.f32.mrb[0].mxu0
  %v1635 = vpop.f32.mrb[0].mxu0
  %v1636 = vadd.f32 0.0, %v1635
  %v1637 = vpop.f32.mrb[0].mxu0
  %1638 = vmatprep.mubr.bf16.mxu0 0
  %1639 = vmatmul.mubr.bf16.gmra.mrb[0].mxu0 %v992
  %v1640 = vpop.f32.mrb[0].mxu0
  %v1641 = vadd.f32 0.0, %v1640
  %v1642 = vpop.f32.mrb[0].mxu0
  %v1643 = vpop.f32.mrb[0].mxu0
  %v1644 = vadd.f32 0.0, %v1643
  %v1645 = vpop.f32.mrb[0].mxu0
  %1646 = vmatprep.mubr.bf16.mxu0 0
  %1647 = vmatmul.mubr.bf16.gmra.mrb[0].mxu0 %v995
  %v1648 = vpop.f32.mrb[0].mxu0
  %v1649 = vadd.f32 0.0, %v1648
  %v1650 = vpop.f32.mrb[0].mxu0
  %v1651 = vpop.f32.mrb[0].mxu0
  %v1652 = vadd.f32 0.0, %v1651
  %v1653 = vpop.f32.mrb[0].mxu0
  %1654 = vmatprep.mubr.bf16.mxu0 0
  %1655 = vmatmul.mubr.bf16.gmra.mrb[0].mxu0 %v998
  %v1656 = vpop.f32.mrb[0].mxu0
  %v1657 = vadd.f32 0.0, %v1656
  %v1658 = vpop.f32.mrb[0].mxu0
  %v1659 = vpop.f32.mrb[0].mxu0
  %v1660 = vadd.f32 0.0, %v1659
  %v1661 = vpop.f32.mrb[0].mxu0
  %1662 = vmatprep.mubr.bf16.mxu0 0
  %1663 = vmatmul.mubr.bf16.gmra.mrb[0].mxu0 %v1001
  %v1664 = vpop.f32.mrb[0].mxu0
  %v1665 = vadd.f32 0.0, %v1664
  %v1666 = vpop.f32.mrb[0].mxu0
  %v1667 = vpop.f32.mrb[0].mxu0
  %v1668 = vadd.f32 0.0, %v1667
  %v1669 = vpop.f32.mrb[0].mxu0
  %1670 = vmatprep.mubr.bf16.mxu0 0
  %1671 = vmatmul.mubr.bf16.gmra.mrb[0].mxu0 %v1004
  %v1672 = vpop.f32.mrb[0].mxu0
  %v1673 = vadd.f32 0.0, %v1672
  %v1674 = vpop.f32.mrb[0].mxu0
  %v1675 = vpop.f32.mrb[0].mxu0
  %v1676 = vadd.f32 0.0, %v1675
  %v1677 = vpop.f32.mrb[0].mxu0
  %1678 = vmatprep.mubr.bf16.mxu0 0
  %1679 = vmatmul.mubr.bf16.gmra.mrb[0].mxu0 %v1007
  %v1680 = vpop.f32.mrb[0].mxu0
  %v1681 = vadd.f32 0.0, %v1680
  %v1682 = vpop.f32.mrb[0].mxu0
  %v1683 = vpop.f32.mrb[0].mxu0
  %v1684 = vadd.f32 0.0, %v1683
  %v1685 = vpop.f32.mrb[0].mxu0
  %1686 = vmatprep.mubr.bf16.mxu0 0
  %1687 = vmatmul.mubr.bf16.gmra.mrb[0].mxu0 %v1010
  %v1688 = vpop.f32.mrb[0].mxu0
  %v1689 = vadd.f32 0.0, %v1688
  %v1690 = vpop.f32.mrb[0].mxu0
  %v1691 = vpop.f32.mrb[0].mxu0
  %v1692 = vadd.f32 0.0, %v1691
  %v1693 = vpop.f32.mrb[0].mxu0
  %1694 = vmatprep.mubr.bf16.mxu0 0
  %1695 = vmatmul.mubr.bf16.gmra.mrb[0].mxu0 %v1013
  %v1696 = vpop.f32.mrb[0].mxu0
  %v1697 = vadd.f32 0.0, %v1696
  %v1698 = vpop.f32.mrb[0].mxu0
  %v1699 = vpop.f32.mrb[0].mxu0
  %v1700 = vadd.f32 0.0, %v1699
  %v1701 = vpop.f32.mrb[0].mxu0
  %1702 = vmatprep.mubr.bf16.mxu0 0
  %1703 = vmatmul.mubr.bf16.gmra.mrb[0].mxu0 %v1016
  %v1704 = vpop.f32.mrb[0].mxu0
  %v1705 = vadd.f32 0.0, %v1704
  %v1706 = vpop.f32.mrb[0].mxu0
  %v1707 = vpop.f32.mrb[0].mxu0
  %v1708 = vadd.f32 0.0, %v1707
  %v1709 = vpop.f32.mrb[0].mxu0
  %1710 = vmatprep.mubr.bf16.mxu0 0
  %1711 = vmatmul.mubr.bf16.gmra.mrb[0].mxu0 %v1019
  %v1712 = vpop.f32.mrb[0].mxu0
  %v1713 = vadd.f32 0.0, %v1712
  %v1714 = vpop.f32.mrb[0].mxu0
  %v1715 = vpop.f32.mrb[0].mxu0
  %v1716 = vadd.f32 0.0, %v1715
  %v1717 = vpop.f32.mrb[0].mxu0
  %1718 = vmatprep.mubr.bf16.mxu0 0
  %1719 = vmatmul.mubr.bf16.gmra.mrb[0].mxu0 %v1022
  %v1720 = vpop.f32.mrb[0].mxu0
  %v1721 = vadd.f32 0.0, %v1720
  %v1722 = vpop.f32.mrb[0].mxu0
  %v1723 = vpop.f32.mrb[0].mxu0
  %v1724 = vadd.f32 0.0, %v1723
  %v1725 = vpop.f32.mrb[0].mxu0
  %1726 = vmatprep.mubr.bf16.mxu0 0
  %1727 = vmatmul.mubr.bf16.gmra.mrb[0].mxu0 %v1025
  %v1728 = vpop.f32.mrb[0].mxu0
  %v1729 = vadd.f32 0.0, %v1728
  %v1730 = vpop.f32.mrb[0].mxu0
  %v1731 = vpop.f32.mrb[0].mxu0
  %v1732 = vadd.f32 0.0, %v1731
  %v1733 = vpop.f32.mrb[0].mxu0
  %1734 = vmatprep.mubr.bf16.mxu0 0
  %1735 = vmatmul.mubr.bf16.gmra.mrb[0].mxu0 %v1028
  %v1736 = vpop.f32.mrb[0].mxu0
  %v1737 = vadd.f32 0.0, %v1736
  %v1738 = vpop.f32.mrb[0].mxu0
  %v1739 = vpop.f32.mrb[0].mxu0
  %v1740 = vadd.f32 0.0, %v1739
  %v1741 = vpop.f32.mrb[0].mxu0
  %1742 = vmatprep.mubr.bf16.mxu0 0
  %1743 = vmatmul.mubr.bf16.gmra.mrb[0].mxu0 %v1031
  %v1744 = vpop.f32.mrb[0].mxu0
  %v1745 = vadd.f32 0.0, %v1744
  %v1746 = vpop.f32.mrb[0].mxu0
  %v1747 = vpop.f32.mrb[0].mxu0
  %v1748 = vadd.f32 0.0, %v1747
  %v1749 = vpop.f32.mrb[0].mxu0
  %1750 = vmatprep.mubr.bf16.mxu0 0
  %1751 = vmatmul.mubr.bf16.gmra.mrb[0].mxu0 %v1034
  %v1752 = vpop.f32.mrb[0].mxu0
  %v1753 = vadd.f32 0.0, %v1752
  %v1754 = vpop.f32.mrb[0].mxu0
  %v1755 = vpop.f32.mrb[0].mxu0
  %v1756 = vadd.f32 0.0, %v1755
  %v1757 = vpop.f32.mrb[0].mxu0
  %1758 = vmatprep.mubr.bf16.mxu0 0
  %1759 = vmatmul.mubr.bf16.gmra.mrb[0].mxu0 %v1037
  %v1760 = vpop.f32.mrb[0].mxu0
  %v1761 = vadd.f32 0.0, %v1760
  %v1762 = vpop.f32.mrb[0].mxu0
  %v1763 = vpop.f32.mrb[0].mxu0
  %v1764 = vadd.f32 0.0, %v1763
  %v1765 = vpop.f32.mrb[0].mxu0
  %1766 = vmatprep.mubr.bf16.mxu0 0
  %1767 = vmatmul.mubr.bf16.gmra.mrb[0].mxu0 %v1040
  %v1768 = vpop.f32.mrb[0].mxu0
  %v1769 = vadd.f32 0.0, %v1768
  %v1770 = vpop.f32.mrb[0].mxu0
  %v1771 = vpop.f32.mrb[0].mxu0
  %v1772 = vadd.f32 0.0, %v1771
  %v1773 = vpop.f32.mrb[0].mxu0
  %1774 = vmatprep.mubr.bf16.mxu0 0
  %1775 = vmatmul.mubr.bf16.gmra.mrb[0].mxu0 %v1043
  %v1776 = vpop.f32.mrb[0].mxu0
  %v1777 = vadd.f32 0.0, %v1776
  %v1778 = vpop.f32.mrb[0].mxu0
  %v1779 = vpop.f32.mrb[0].mxu0
  %v1780 = vadd.f32 0.0, %v1779
  %v1781 = vpop.f32.mrb[0].mxu0
  %1782 = vmatprep.mubr.bf16.mxu0 0
  %1783 = vmatmul.mubr.bf16.gmra.mrb[0].mxu0 %v1046
  %v1784 = vpop.f32.mrb[0].mxu0
  %v1785 = vadd.f32 0.0, %v1784
  %v1786 = vpop.f32.mrb[0].mxu0
  %v1787 = vpop.f32.mrb[0].mxu0
  %v1788 = vadd.f32 0.0, %v1787
  %v1789 = vpop.f32.mrb[0].mxu0
  %1790 = vmatprep.mubr.bf16.mxu0 0
  %1791 = vmatmul.mubr.bf16.gmra.mrb[0].mxu0 %v1049
  %v1792 = vpop.f32.mrb[0].mxu0
  %v1793 = vadd.f32 0.0, %v1792
  %v1794 = vpop.f32.mrb[0].mxu0
  %v1795 = vpop.f32.mrb[0].mxu0
  %v1796 = vadd.f32 0.0, %v1795
  %v1797 = vpop.f32.mrb[0].mxu0
  %1798 = vmatprep.mubr.bf16.mxu0 0
  %1799 = vmatmul.mubr.bf16.gmra.mrb[0].mxu0 %v1052
  %v1800 = vpop.f32.mrb[0].mxu0
  %v1801 = vadd.f32 0.0, %v1800
  %v1802 = vpop.f32.mrb[0].mxu0
  %v1803 = vpop.f32.mrb[0].mxu0
  %v1804 = vadd.f32 0.0, %v1803
  %v1805 = vpop.f32.mrb[0].mxu0
  %1806 = vmatprep.mubr.bf16.mxu0 0
  %1807 = vmatmul.mubr.bf16.gmra.mrb[0].mxu0 %v1055
  %v1808 = vpop.f32.mrb[0].mxu0
  %v1809 = vadd.f32 0.0, %v1808
  %v1810 = vpop.f32.mrb[0].mxu0
  %v1811 = vpop.f32.mrb[0].mxu0
  %v1812 = vadd.f32 0.0, %v1811
  %v1813 = vpop.f32.mrb[0].mxu0
  %1814 = vmatprep.mubr.bf16.mxu0 0
  %1815 = vmatmul.mubr.bf16.gmra.mrb[0].mxu0 %v1058
  %v1816 = vpop.f32.mrb[0].mxu0
  %v1817 = vadd.f32 0.0, %v1816
  %v1818 = vpop.f32.mrb[0].mxu0
  %v1819 = vpop.f32.mrb[0].mxu0
  %v1820 = vadd.f32 0.0, %v1819
  %v1821 = vpop.f32.mrb[0].mxu0
  %1822 = vmatprep.mubr.bf16.mxu0 0
  %1823 = vmatmul.mubr.bf16.gmra.mrb[0].mxu0 %v1061
  %v1824 = vpop.f32.mrb[0].mxu0
  %v1825 = vadd.f32 0.0, %v1824
  %v1826 = vpop.f32.mrb[0].mxu0
  %v1827 = vpop.f32.mrb[0].mxu0
  %v1828 = vadd.f32 0.0, %v1827
  %v1829 = vpop.f32.mrb[0].mxu0
  %1830 = vmatprep.mubr.bf16.mxu0 0
  %1831 = vmatmul.mubr.bf16.gmra.mrb[0].mxu0 %v1064
  %v1832 = vpop.f32.mrb[0].mxu0
  %v1833 = vadd.f32 0.0, %v1832
  %v1834 = vpop.f32.mrb[0].mxu0
  %v1835 = vpop.f32.mrb[0].mxu0
  %v1836 = vadd.f32 0.0, %v1835
  %v1837 = vpop.f32.mrb[0].mxu0
  %1838 = vmatprep.mubr.bf16.mxu0 0
  %1839 = vmatmul.mubr.bf16.gmra.mrb[0].mxu0 %v1067
  %v1840 = vpop.f32.mrb[0].mxu0
  %v1841 = vadd.f32 0.0, %v1840
  %v1842 = vpop.f32.mrb[0].mxu0
  %v1843 = vpop.f32.mrb[0].mxu0
  %v1844 = vadd.f32 0.0, %v1843
  %v1845 = vpop.f32.mrb[0].mxu0
  %1846 = vmatprep.mubr.bf16.mxu0 0
  %1847 = vmatmul.mubr.bf16.gmra.mrb[0].mxu0 %v1070
  %v1848 = vpop.f32.mrb[0].mxu0
  %v1849 = vadd.f32 0.0, %v1848
  %v1850 = vpop.f32.mrb[0].mxu0
  %v1851 = vpop.f32.mrb[0].mxu0
  %v1852 = vadd.f32 0.0, %v1851
  %v1853 = vpop.f32.mrb[0].mxu0
  %1854 = vmatprep.mubr.bf16.mxu0 0
  %1855 = vmatmul.mubr.bf16.gmra.mrb[0].mxu0 %v1073
  %v1856 = vpop.f32.mrb[0].mxu0
  %v1857 = vadd.f32 0.0, %v1856
  %v1858 = vpop.f32.mrb[0].mxu0
  %v1859 = vpop.f32.mrb[0].mxu0
  %v1860 = vadd.f32 0.0, %v1859
  %v1861 = vpop.f32.mrb[0].mxu0
  %1862 = vmatprep.mubr.bf16.mxu0 0
  %1863 = vmatmul.mubr.bf16.gmra.mrb[0].mxu0 %v1076
  %v1864 = vpop.f32.mrb[0].mxu0
  %v1865 = vadd.f32 0.0, %v1864
  %v1866 = vpop.f32.mrb[0].mxu0
  %v1867 = vpop.f32.mrb[0].mxu0
  %v1868 = vadd.f32 0.0, %v1867
  %v1869 = vpop.f32.mrb[0].mxu0
  %1870 = vmatprep.mubr.bf16.mxu0 0
  %1871 = vmatmul.mubr.bf16.gmra.mrb[0].mxu0 %v1079
  %v1872 = vpop.f32.mrb[0].mxu0
  %v1873 = vadd.f32 0.0, %v1872
  %v1874 = vpop.f32.mrb[0].mxu0
  %v1875 = vpop.f32.mrb[0].mxu0
  %v1876 = vadd.f32 0.0, %v1875
  %v1877 = vpop.f32.mrb[0].mxu0
  %1878 = vmatprep.mubr.bf16.mxu0 0
  %1879 = vmatmul.mubr.bf16.gmra.mrb[0].mxu0 %v1082
  %v1880 = vpop.f32.mrb[0].mxu0
  %v1881 = vadd.f32 0.0, %v1880
  %v1882 = vpop.f32.mrb[0].mxu0
  %v1883 = vpop.f32.mrb[0].mxu0
  %v1884 = vadd.f32 0.0, %v1883
  %v1885 = vpop.f32.mrb[0].mxu0
  %1886 = vmatprep.mubr.bf16.mxu0 0
  %1887 = vmatmul.mubr.bf16.gmra.mrb[0].mxu0 %v1085
  %v1888 = vpop.f32.mrb[0].mxu0
  %v1889 = vadd.f32 0.0, %v1888
  %v1890 = vpop.f32.mrb[0].mxu0
  %v1891 = vpop.f32.mrb[0].mxu0
  %v1892 = vadd.f32 0.0, %v1891
  %v1893 = vpop.f32.mrb[0].mxu0
  %1894 = vmatprep.mubr.bf16.mxu0 0
  %1895 = vmatmul.mubr.bf16.gmra.mrb[0].mxu0 %v1088
  %v1896 = vpop.f32.mrb[0].mxu0
  %v1897 = vadd.f32 0.0, %v1896
  %v1898 = vpop.f32.mrb[0].mxu0
  %v1899 = vpop.f32.mrb[0].mxu0
  %v1900 = vadd.f32 0.0, %v1899
  %v1901 = vpop.f32.mrb[0].mxu0
  %1902 = vmatprep.mubr.bf16.mxu0 0
  %1903 = vmatmul.mubr.bf16.gmra.mrb[0].mxu0 %v1091
  %v1904 = vpop.f32.mrb[0].mxu0
  %v1905 = vadd.f32 0.0, %v1904
  %v1906 = vpop.f32.mrb[0].mxu0
  %v1907 = vpop.f32.mrb[0].mxu0
  %v1908 = vadd.f32 0.0, %v1907
  %v1909 = vpop.f32.mrb[0].mxu0
  %1910 = vmatprep.mubr.bf16.mxu0 0
  %1911 = vmatmul.mubr.bf16.gmra.mrb[0].mxu0 %v1094
  %v1912 = vpop.f32.mrb[0].mxu0
  %v1913 = vadd.f32 0.0, %v1912
  %v1914 = vpop.f32.mrb[0].mxu0
  %v1915 = vpop.f32.mrb[0].mxu0
  %v1916 = vadd.f32 0.0, %v1915
  %v1917 = vpop.f32.mrb[0].mxu0
  %1918 = vmatprep.mubr.bf16.mxu0 0
  %1919 = vmatmul.mubr.bf16.gmra.mrb[0].mxu0 %v1097
  %v1920 = vpop.f32.mrb[0].mxu0
  %v1921 = vadd.f32 0.0, %v1920
  %v1922 = vpop.f32.mrb[0].mxu0
  %v1923 = vpop.f32.mrb[0].mxu0
  %v1924 = vadd.f32 0.0, %v1923
  %v1925 = vpop.f32.mrb[0].mxu0
  %1926 = vmatprep.mubr.bf16.mxu0 0
  %1927 = vmatmul.mubr.bf16.gmra.mrb[0].mxu0 %v1100
  %v1928 = vpop.f32.mrb[0].mxu0
  %v1929 = vadd.f32 0.0, %v1928
  %v1930 = vpop.f32.mrb[0].mxu0
  %v1931 = vpop.f32.mrb[0].mxu0
  %v1932 = vadd.f32 0.0, %v1931
  %v1933 = vpop.f32.mrb[0].mxu0
  %1934 = vmatprep.mubr.bf16.mxu0 0
  %1935 = vmatmul.mubr.bf16.gmra.mrb[0].mxu0 %v1103
  %v1936 = vpop.f32.mrb[0].mxu0
  %v1937 = vadd.f32 0.0, %v1936
  %v1938 = vpop.f32.mrb[0].mxu0
  %v1939 = vpop.f32.mrb[0].mxu0
  %v1940 = vadd.f32 0.0, %v1939
  %v1941 = vpop.f32.mrb[0].mxu0
  %1942 = vmatprep.mubr.bf16.mxu0 0
  %1943 = vmatmul.mubr.bf16.gmra.mrb[0].mxu0 %v1106
  %v1944 = vpop.f32.mrb[0].mxu0
  %v1945 = vadd.f32 0.0, %v1944
  %v1946 = vpop.f32.mrb[0].mxu0
  %v1947 = vpop.f32.mrb[0].mxu0
  %v1948 = vadd.f32 0.0, %v1947
  %v1949 = vpop.f32.mrb[0].mxu0
  %1950 = vmatprep.mubr.bf16.mxu0 0
  %1951 = vmatmul.mubr.bf16.gmra.mrb[0].mxu0 %v1109
  %v1952 = vpop.f32.mrb[0].mxu0
  %v1953 = vadd.f32 0.0, %v1952
  %v1954 = vpop.f32.mrb[0].mxu0
  %v1955 = vpop.f32.mrb[0].mxu0
  %v1956 = vadd.f32 0.0, %v1955
  %v1957 = vpop.f32.mrb[0].mxu0
  %1958 = vmatprep.mubr.bf16.mxu0 0
  %1959 = vmatmul.mubr.bf16.gmra.mrb[0].mxu0 %v1112
  %v1960 = vpop.f32.mrb[0].mxu0
  %v1961 = vadd.f32 0.0, %v1960
  %v1962 = vpop.f32.mrb[0].mxu0
  %v1963 = vpop.f32.mrb[0].mxu0
  %v1964 = vadd.f32 0.0, %v1963
  %v1965 = vpop.f32.mrb[0].mxu0
  %1966 = vmatprep.mubr.bf16.mxu0 0
  %1967 = vmatmul.mubr.bf16.gmra.mrb[0].mxu0 %v1115
  %v1968 = vpop.f32.mrb[0].mxu0
  %v1969 = vadd.f32 0.0, %v1968
  %v1970 = vpop.f32.mrb[0].mxu0
  %v1971 = vpop.f32.mrb[0].mxu0
  %v1972 = vadd.f32 0.0, %v1971
  %v1973 = vpop.f32.mrb[0].mxu0
  %1974 = vmatprep.mubr.bf16.mxu0 0
  %1975 = vmatmul.mubr.bf16.gmra.mrb[0].mxu0 %v1118
  %v1976 = vpop.f32.mrb[0].mxu0
  %v1977 = vadd.f32 0.0, %v1976
  %v1978 = vpop.f32.mrb[0].mxu0
  %v1979 = vpop.f32.mrb[0].mxu0
  %v1980 = vadd.f32 0.0, %v1979
  %v1981 = vpop.f32.mrb[0].mxu0
  %1982 = vmatprep.mubr.bf16.mxu0 0
  %1983 = vmatmul.mubr.bf16.gmra.mrb[0].mxu0 %v1121
  %v1984 = vpop.f32.mrb[0].mxu0
  %v1985 = vadd.f32 0.0, %v1984
  %v1986 = vpop.f32.mrb[0].mxu0
  %v1987 = vpop.f32.mrb[0].mxu0
  %v1988 = vadd.f32 0.0, %v1987
  %v1989 = vpop.f32.mrb[0].mxu0
  %1990 = vmatprep.mubr.bf16.mxu0 0
  %1991 = vmatmul.mubr.bf16.gmra.mrb[0].mxu0 %v1124
  %v1992 = vpop.f32.mrb[0].mxu0
  %v1993 = vadd.f32 0.0, %v1992
  %v1994 = vpop.f32.mrb[0].mxu0
  %v1995 = vpop.f32.mrb[0].mxu0
  %v1996 = vadd.f32 0.0, %v1995
  %v1997 = vpop.f32.mrb[0].mxu0
  %1998 = vmatprep.mubr.bf16.mxu0 0
  %1999 = vmatmul.mubr.bf16.gmra.mrb[0].mxu0 %v1127
  %v2000 = vpop.f32.mrb[0].mxu0
  %v2001 = vadd.f32 0.0, %v2000
  %v2002 = vpop.f32.mrb[0].mxu0
  %v2003 = vpop.f32.mrb[0].mxu0
  %v2004 = vadd.f32 0.0, %v2003
  %v2005 = vpop.f32.mrb[0].mxu0
  %2006 = vmatprep.mubr.bf16.mxu0 0
  %2007 = vmatmul.mubr.bf16.gmra.mrb[0].mxu0 %v1130
  %v2008 = vpop.f32.mrb[0].mxu0
  %v2009 = vadd.f32 0.0, %v2008
  %v2010 = vpop.f32.mrb[0].mxu0
  %v2011 = vpop.f32.mrb[0].mxu0
  %v2012 = vadd.f32 0.0, %v2011
  %v2013 = vpop.f32.mrb[0].mxu0
  %2014 = vmatprep.mubr.bf16.mxu0 0
  %2015 = vmatmul.mubr.bf16.gmra.mrb[0].mxu0 %v1133
  %v2016 = vpop.f32.mrb[0].mxu0
  %v2017 = vadd.f32 0.0, %v2016
  %v2018 = vpop.f32.mrb[0].mxu0
  %v2019 = vpop.f32.mrb[0].mxu0
  %v2020 = vadd.f32 0.0, %v2019
  %v2021 = vpop.f32.mrb[0].mxu0
  %2022 = vmatprep.mubr.bf16.mxu0 0
  %2023 = vmatmul.mubr.bf16.gmra.mrb[0].mxu0 %v1136
  %v2024 = vpop.f32.mrb[0].mxu0
  %v2025 = vadd.f32 0.0, %v2024
  %v2026 = vpop.f32.mrb[0].mxu0
  %v2027 = vpop.f32.mrb[0].mxu0
  %v2028 = vadd.f32 0.0, %v2027
  %v2029 = vpop.f32.mrb[0].mxu0
  %2030 = vmatprep.mubr.bf16.mxu0 0
  %2031 = vmatmul.mubr.bf16.gmra.mrb[0].mxu0 %v1139
  %v2032 = vpop.f32.mrb[0].mxu0
  %v2033 = vadd.f32 0.0, %v2032
  %v2034 = vpop.f32.mrb[0].mxu0
  %v2035 = vpop.f32.mrb[0].mxu0
  %v2036 = vadd.f32 0.0, %v2035
  %v2037 = vpop.f32.mrb[0].mxu0
  %2038 = vmatprep.mubr.bf16.mxu0 0
  %2039 = vmatmul.mubr.bf16.gmra.mrb[0].mxu0 %v1142
  %v2040 = vpop.f32.mrb[0].mxu0
  %v2041 = vadd.f32 0.0, %v2040
  %v2042 = vpop.f32.mrb[0].mxu0
  %v2043 = vpop.f32.mrb[0].mxu0
  %v2044 = vadd.f32 0.0, %v2043
  %v2045 = vpop.f32.mrb[0].mxu0
  %2046 = vmatprep.mubr.bf16.mxu0 0
  %2047 = vmatmul.mubr.bf16.gmra.mrb[0].mxu0 %v1145
  %v2048 = vpop.f32.mrb[0].mxu0
  %v2049 = vadd.f32 0.0, %v2048
  %v2050 = vpop.f32.mrb[0].mxu0
  %v2051 = vpop.f32.mrb[0].mxu0
  %v2052 = vadd.f32 0.0, %v2051
  %v2053 = vpop.f32.mrb[0].mxu0
  %2054 = vmatprep.mubr.bf16.mxu0 0
  %2055 = vmatmul.mubr.bf16.gmra.mrb[0].mxu0 %v1148
  %v2056 = vpop.f32.mrb[0].mxu0
  %v2057 = vadd.f32 0.0, %v2056
  %v2058 = vpop.f32.mrb[0].mxu0
  %v2059 = vpop.f32.mrb[0].mxu0
  %v2060 = vadd.f32 0.0, %v2059
  %v2061 = vpop.f32.mrb[0].mxu0
  %2062 = vmatprep.mubr.bf16.mxu0 0
  %2063 = vmatmul.mubr.bf16.gmra.mrb[0].mxu0 %v1151
  %v2064 = vpop.f32.mrb[0].mxu0
  %v2065 = vadd.f32 0.0, %v2064
  %v2066 = vpop.f32.mrb[0].mxu0
  %v2067 = vpop.f32.mrb[0].mxu0
  %v2068 = vadd.f32 0.0, %v2067
  %v2069 = vpop.f32.mrb[0].mxu0
  %2070 = vmatprep.mubr.bf16.mxu0 0
  %2071 = vmatmul.mubr.bf16.gmra.mrb[0].mxu0 %v1154
  %v2072 = vpop.f32.mrb[0].mxu0
  %v2073 = vadd.f32 0.0, %v2072
  %v2074 = vpop.f32.mrb[0].mxu0
  %v2075 = vpop.f32.mrb[0].mxu0
  %v2076 = vadd.f32 0.0, %v2075
  %v2077 = vpop.f32.mrb[0].mxu0
  %2078 = vmatprep.mubr.bf16.mxu0 0
  %2079 = vmatmul.mubr.bf16.gmra.mrb[0].mxu0 %v1157
  %v2080 = vpop.f32.mrb[0].mxu0
  %v2081 = vadd.f32 0.0, %v2080
  %v2082 = vpop.f32.mrb[0].mxu0
  %v2083 = vpop.f32.mrb[0].mxu0
  %v2084 = vadd.f32 0.0, %v2083
  %v2085 = vpop.f32.mrb[0].mxu0
  %2086 = vmatprep.mubr.bf16.mxu0 0
  %2087 = vmatmul.mubr.bf16.gmra.mrb[0].mxu0 %v1160
  %v2088 = vpop.f32.mrb[0].mxu0
  %v2089 = vadd.f32 0.0, %v2088
  %v2090 = vpop.f32.mrb[0].mxu0
  %v2091 = vpop.f32.mrb[0].mxu0
  %v2092 = vadd.f32 0.0, %v2091
  %v2093 = vpop.f32.mrb[0].mxu0
  %2094 = vmatprep.mubr.bf16.mxu0 0
  %2095 = vmatmul.mubr.bf16.gmra.mrb[0].mxu0 %v1163
  %v2096 = vpop.f32.mrb[0].mxu0
  %v2097 = vadd.f32 0.0, %v2096
  %v2098 = vpop.f32.mrb[0].mxu0
  %v2099 = vpop.f32.mrb[0].mxu0
  %v2100 = vadd.f32 0.0, %v2099
  %v2101 = vpop.f32.mrb[0].mxu0
  %2102 = vmatprep.mubr.bf16.mxu0 0
  %2103 = vmatmul.mubr.bf16.gmra.mrb[0].mxu0 %v1166
  %v2104 = vpop.f32.mrb[0].mxu0
  %v2105 = vadd.f32 0.0, %v2104
  %v2106 = vpop.f32.mrb[0].mxu0
  %v2107 = vpop.f32.mrb[0].mxu0
  %v2108 = vadd.f32 0.0, %v2107
  %v2109 = vpop.f32.mrb[0].mxu0
  %2110 = vmatprep.mubr.bf16.mxu0 0
  %2111 = vmatmul.mubr.bf16.gmra.mrb[0].mxu0 %v1169
  %v2112 = vpop.f32.mrb[0].mxu0
  %v2113 = vadd.f32 0.0, %v2112
  %v2114 = vpop.f32.mrb[0].mxu0
  %v2115 = vpop.f32.mrb[0].mxu0
  %v2116 = vadd.f32 0.0, %v2115
  %v2117 = vpop.f32.mrb[0].mxu0
  %2118 = vmatprep.mubr.bf16.mxu0 0
  %2119 = vmatmul.mubr.bf16.gmra.mrb[0].mxu0 %v1172
  %v2120 = vpop.f32.mrb[0].mxu0
  %v2121 = vadd.f32 0.0, %v2120
  %v2122 = vpop.f32.mrb[0].mxu0
  %v2123 = vpop.f32.mrb[0].mxu0
  %v2124 = vadd.f32 0.0, %v2123
  %v2125 = vpop.f32.mrb[0].mxu0
  %2126 = vmatprep.mubr.bf16.mxu0 0
  %2127 = vmatmul.mubr.bf16.gmra.mrb[0].mxu0 %v1175
  %v2128 = vpop.f32.mrb[0].mxu0
  %v2129 = vadd.f32 0.0, %v2128
  %v2130 = vpop.f32.mrb[0].mxu0
  %v2131 = vpop.f32.mrb[0].mxu0
  %v2132 = vadd.f32 0.0, %v2131
  %v2133 = vpop.f32.mrb[0].mxu0
  %2134 = vmatprep.mubr.bf16.mxu0 0
  %2135 = vmatmul.mubr.bf16.gmra.mrb[0].mxu0 %v1178
  %v2136 = vpop.f32.mrb[0].mxu0
  %v2137 = vadd.f32 0.0, %v2136
  %v2138 = vpop.f32.mrb[0].mxu0
  %v2139 = vpop.f32.mrb[0].mxu0
  %v2140 = vadd.f32 0.0, %v2139
  %v2141 = vpop.f32.mrb[0].mxu0
  %2142 = vmatprep.mubr.bf16.mxu0 0
  %2143 = vmatmul.mubr.bf16.gmra.mrb[0].mxu0 %v1181
  %v2144 = vpop.f32.mrb[0].mxu0
  %v2145 = vadd.f32 0.0, %v2144
  %v2146 = vpop.f32.mrb[0].mxu0
  %v2147 = vpop.f32.mrb[0].mxu0
  %v2148 = vadd.f32 0.0, %v2147
  %v2149 = vpop.f32.mrb[0].mxu0
  %2150 = vdwg.mxu0
  %v2151 = vmax.f32 %v1225, %v1457
  %v2152 = vmax.f32 %v1228, %v1460
  %v2153 = vmax.f32 %v1233, %v1465
  %v2154 = vmax.f32 %v1236, %v1468
  %v2155 = vmax.f32 %v1241, %v1473
  %v2156 = vmax.f32 %v1244, %v1476
  %v2157 = vmax.f32 %v1249, %v1481
  %v2158 = vmax.f32 %v1252, %v1484
  %v2159 = vmax.f32 %v1257, %v1489
  %v2160 = vmax.f32 %v1260, %v1492
  %v2161 = vmax.f32 %v1265, %v1497
  %v2162 = vmax.f32 %v1268, %v1500
  %v2163 = vmax.f32 %v1273, %v1505
  %v2164 = vmax.f32 %v1276, %v1508
  %v2165 = vmax.f32 %v1281, %v1513
  %v2166 = vmax.f32 %v1284, %v1516
  %v2167 = vmax.f32 %v1289, %v1521
  %v2168 = vmax.f32 %v1292, %v1524
  %v2169 = vmax.f32 %v1297, %v1529
  %v2170 = vmax.f32 %v1300, %v1532
  %v2171 = vmax.f32 %v1305, %v1537
  %v2172 = vmax.f32 %v1308, %v1540
  %v2173 = vmax.f32 %v1313, %v1545
  %v2174 = vmax.f32 %v1316, %v1548
  %v2175 = vmax.f32 %v1321, %v1553
  %v2176 = vmax.f32 %v1324, %v1556
  %v2177 = vmax.f32 %v1329, %v1561
  %v2178 = vmax.f32 %v1332, %v1564
  %v2179 = vmax.f32 %v1337, %v1569
  %v2180 = vmax.f32 %v1340, %v1572
  %v2181 = vmax.f32 %v1345, %v1577
  %v2182 = vmax.f32 %v1348, %v1580
  %v2183 = vmax.f32 %v1353, %v1585
  %v2184 = vmax.f32 %v1356, %v1588
  %v2185 = vmax.f32 %v1361, %v1593
  %v2186 = vmax.f32 %v1364, %v1596
  %v2187 = vmax.f32 %v1369, %v1601
  %v2188 = vmax.f32 %v1372, %v1604
  %v2189 = vmax.f32 %v1377, %v1609
  %v2190 = vmax.f32 %v1380, %v1612
  %v2191 = vmax.f32 %v1385, %v1617
  %v2192 = vmax.f32 %v1388, %v1620
  %v2193 = vmax.f32 %v1393, %v1625
  %v2194 = vmax.f32 %v1396, %v1628
  %v2195 = vmax.f32 %v1401, %v1633
  %v2196 = vmax.f32 %v1404, %v1636
  %v2197 = vmax.f32 %v1409, %v1641
  %v2198 = vmax.f32 %v1412, %v1644
  %v2199 = vmax.f32 %v1417, %v1649
  %v2200 = vmax.f32 %v1420, %v1652
  %v2201 = vmax.f32 %v1425, %v1657
  %v2202 = vmax.f32 %v1428, %v1660
  %v2203 = vmax.f32 %v1433, %v1665
  %v2204 = vmax.f32 %v1436, %v1668
  %v2205 = vmax.f32 %v1441, %v1673
  %v2206 = vmax.f32 %v1444, %v1676
  %v2207 = vmax.f32 %v1449, %v1681
  %v2208 = vmax.f32 %v1452, %v1684
  %v2209 = vmax.f32 %v1689, %v1921
  %v2210 = vmax.f32 %v1692, %v1924
  %v2211 = vmax.f32 %v1697, %v1929
  %v2212 = vmax.f32 %v1700, %v1932
  %v2213 = vmax.f32 %v1705, %v1937
  %v2214 = vmax.f32 %v1708, %v1940
  %v2215 = vmax.f32 %v1713, %v1945
  %v2216 = vmax.f32 %v1716, %v1948
  %v2217 = vmax.f32 %v1721, %v1953
  %v2218 = vmax.f32 %v1724, %v1956
  %v2219 = vmax.f32 %v1729, %v1961
  %v2220 = vmax.f32 %v1732, %v1964
  %v2221 = vmax.f32 %v1737, %v1969
  %v2222 = vmax.f32 %v1740, %v1972
  %v2223 = vmax.f32 %v1745, %v1977
  %v2224 = vmax.f32 %v1748, %v1980
  %v2225 = vmax.f32 %v1753, %v1985
  %v2226 = vmax.f32 %v1756, %v1988
  %v2227 = vmax.f32 %v1761, %v1993
  %v2228 = vmax.f32 %v1764, %v1996
  %v2229 = vmax.f32 %v1769, %v2001
  %v2230 = vmax.f32 %v1772, %v2004
  %v2231 = vmax.f32 %v1777, %v2009
  %v2232 = vmax.f32 %v1780, %v2012
  %v2233 = vmax.f32 %v1785, %v2017
  %v2234 = vmax.f32 %v1788, %v2020
  %v2235 = vmax.f32 %v1793, %v2025
  %v2236 = vmax.f32 %v1796, %v2028
  %v2237 = vmax.f32 %v1801, %v2033
  %v2238 = vmax.f32 %v1804, %v2036
  %v2239 = vmax.f32 %v1809, %v2041
  %v2240 = vmax.f32 %v1812, %v2044
  %v2241 = vmax.f32 %v1817, %v2049
  %v2242 = vmax.f32 %v1820, %v2052
  %v2243 = vmax.f32 %v1825, %v2057
  %v2244 = vmax.f32 %v1828, %v2060
  %v2245 = vmax.f32 %v1833, %v2065
  %v2246 = vmax.f32 %v1836, %v2068
  %v2247 = vmax.f32 %v1841, %v2073
  %v2248 = vmax.f32 %v1844, %v2076
  %v2249 = vmax.f32 %v1849, %v2081
  %v2250 = vmax.f32 %v1852, %v2084
  %v2251 = vmax.f32 %v1857, %v2089
  %v2252 = vmax.f32 %v1860, %v2092
  %v2253 = vmax.f32 %v1865, %v2097
  %v2254 = vmax.f32 %v1868, %v2100
  %v2255 = vmax.f32 %v1873, %v2105
  %v2256 = vmax.f32 %v1876, %v2108
  %v2257 = vmax.f32 %v1881, %v2113
  %v2258 = vmax.f32 %v1884, %v2116
  %v2259 = vmax.f32 %v1889, %v2121
  %v2260 = vmax.f32 %v1892, %v2124
  %v2261 = vmax.f32 %v1897, %v2129
  %v2262 = vmax.f32 %v1900, %v2132
  %v2263 = vmax.f32 %v1905, %v2137
  %v2264 = vmax.f32 %v1908, %v2140
  %v2265 = vmax.f32 %v1913, %v2145
  %v2266 = vmax.f32 %v1916, %v2148
  %v2267 = vmax.f32 %v2151, %v2209
  %v2268 = vmax.f32 %v2152, %v2210
  %v2269 = vmax.f32 %v2153, %v2211
  %v2270 = vmax.f32 %v2154, %v2212
  %v2271 = vmax.f32 %v2155, %v2213
  %v2272 = vmax.f32 %v2156, %v2214
  %v2273 = vmax.f32 %v2157, %v2215
  %v2274 = vmax.f32 %v2158, %v2216
  %v2275 = vmax.f32 %v2159, %v2217
  %v2276 = vmax.f32 %v2160, %v2218
  %v2277 = vmax.f32 %v2161, %v2219
  %v2278 = vmax.f32 %v2162, %v2220
  %v2279 = vmax.f32 %v2163, %v2221
  %v2280 = vmax.f32 %v2164, %v2222
  %v2281 = vmax.f32 %v2165, %v2223
  %v2282 = vmax.f32 %v2166, %v2224
  %v2283 = vmax.f32 %v2167, %v2225
  %v2284 = vmax.f32 %v2168, %v2226
  %v2285 = vmax.f32 %v2169, %v2227
  %v2286 = vmax.f32 %v2170, %v2228
  %v2287 = vmax.f32 %v2171, %v2229
  %v2288 = vmax.f32 %v2172, %v2230
  %v2289 = vmax.f32 %v2173, %v2231
  %v2290 = vmax.f32 %v2174, %v2232
  %v2291 = vmax.f32 %v2175, %v2233
  %v2292 = vmax.f32 %v2176, %v2234
  %v2293 = vmax.f32 %v2177, %v2235
  %v2294 = vmax.f32 %v2178, %v2236
  %v2295 = vmax.f32 %v2179, %v2237
  %v2296 = vmax.f32 %v2180, %v2238
  %v2297 = vmax.f32 %v2181, %v2239
  %v2298 = vmax.f32 %v2182, %v2240
  %v2299 = vmax.f32 %v2183, %v2241
  %v2300 = vmax.f32 %v2184, %v2242
  %v2301 = vmax.f32 %v2185, %v2243
  %v2302 = vmax.f32 %v2186, %v2244
  %v2303 = vmax.f32 %v2187, %v2245
  %v2304 = vmax.f32 %v2188, %v2246
  %v2305 = vmax.f32 %v2189, %v2247
  %v2306 = vmax.f32 %v2190, %v2248
  %v2307 = vmax.f32 %v2191, %v2249
  %v2308 = vmax.f32 %v2192, %v2250
  %v2309 = vmax.f32 %v2193, %v2251
  %v2310 = vmax.f32 %v2194, %v2252
  %v2311 = vmax.f32 %v2195, %v2253
  %v2312 = vmax.f32 %v2196, %v2254
  %v2313 = vmax.f32 %v2197, %v2255
  %v2314 = vmax.f32 %v2198, %v2256
  %v2315 = vmax.f32 %v2199, %v2257
  %v2316 = vmax.f32 %v2200, %v2258
  %v2317 = vmax.f32 %v2201, %v2259
  %v2318 = vmax.f32 %v2202, %v2260
  %v2319 = vmax.f32 %v2203, %v2261
  %v2320 = vmax.f32 %v2204, %v2262
  %v2321 = vmax.f32 %v2205, %v2263
  %v2322 = vmax.f32 %v2206, %v2264
  %v2323 = vmax.f32 %v2207, %v2265
  %v2324 = vmax.f32 %v2208, %v2266
  %v2325 = vld [vmem:[%s2] sm:$0x1]
  %v2326 = vlaneseq
  %v2327 = vshrl.u32 %v2326, 7
  %v2328 = vsub.s32 0, %v2327
  %v2329 = vrot.slane %v2325, %v2328
  %v2330 = vadd.f32 %v2267, %v2329
  %v2331 = vadd.f32 %v2268, %v2329
  %v2332 = vadd.f32 %v2269, %v2329
  %v2333 = vadd.f32 %v2270, %v2329
  %v2334 = vadd.f32 %v2271, %v2329
  %v2335 = vadd.f32 %v2272, %v2329
  %v2336 = vadd.f32 %v2273, %v2329
  %v2337 = vadd.f32 %v2274, %v2329
  %v2338 = vadd.f32 %v2275, %v2329
  %v2339 = vadd.f32 %v2276, %v2329
  %v2340 = vadd.f32 %v2277, %v2329
  %v2341 = vadd.f32 %v2278, %v2329
  %v2342 = vadd.f32 %v2279, %v2329
  %v2343 = vadd.f32 %v2280, %v2329
  %v2344 = vadd.f32 %v2281, %v2329
  %v2345 = vadd.f32 %v2282, %v2329
  %v2346 = vadd.f32 %v2283, %v2329
  %v2347 = vadd.f32 %v2284, %v2329
  %v2348 = vadd.f32 %v2285, %v2329
  %v2349 = vadd.f32 %v2286, %v2329
  %v2350 = vadd.f32 %v2287, %v2329
  %v2351 = vadd.f32 %v2288, %v2329
  %v2352 = vadd.f32 %v2289, %v2329
  %v2353 = vadd.f32 %v2290, %v2329
  %v2354 = vadd.f32 %v2291, %v2329
  %v2355 = vadd.f32 %v2292, %v2329
  %v2356 = vadd.f32 %v2293, %v2329
  %v2357 = vadd.f32 %v2294, %v2329
  %v2358 = vadd.f32 %v2295, %v2329
  %v2359 = vadd.f32 %v2296, %v2329
  %v2360 = vadd.f32 %v2297, %v2329
  %v2361 = vadd.f32 %v2298, %v2329
  %v2362 = vadd.f32 %v2299, %v2329
  %v2363 = vadd.f32 %v2300, %v2329
  %v2364 = vadd.f32 %v2301, %v2329
  %v2365 = vadd.f32 %v2302, %v2329
  %v2366 = vadd.f32 %v2303, %v2329
  %v2367 = vadd.f32 %v2304, %v2329
  %v2368 = vadd.f32 %v2305, %v2329
  %v2369 = vadd.f32 %v2306, %v2329
  %v2370 = vadd.f32 %v2307, %v2329
  %v2371 = vadd.f32 %v2308, %v2329
  %v2372 = vadd.f32 %v2309, %v2329
  %v2373 = vadd.f32 %v2310, %v2329
  %v2374 = vadd.f32 %v2311, %v2329
  %v2375 = vadd.f32 %v2312, %v2329
  %v2376 = vadd.f32 %v2313, %v2329
  %v2377 = vadd.f32 %v2314, %v2329
  %v2378 = vadd.f32 %v2315, %v2329
  %v2379 = vadd.f32 %v2316, %v2329
  %v2380 = vadd.f32 %v2317, %v2329
  %v2381 = vadd.f32 %v2318, %v2329
  %v2382 = vadd.f32 %v2319, %v2329
  %v2383 = vadd.f32 %v2320, %v2329
  %v2384 = vadd.f32 %v2321, %v2329
  %v2385 = vadd.f32 %v2322, %v2329
  %v2386 = vadd.f32 %v2323, %v2329
  %v2387 = vadd.f32 %v2324, %v2329
  %v2388 = vmax.f32 %v2330, 0.0
  %v2389 = vmax.f32 %v2331, 0.0
  %v2390 = vmax.f32 %v2332, 0.0
  %v2391 = vmax.f32 %v2333, 0.0
  %v2392 = vmax.f32 %v2334, 0.0
  %v2393 = vmax.f32 %v2335, 0.0
  %v2394 = vmax.f32 %v2336, 0.0
  %v2395 = vmax.f32 %v2337, 0.0
  %v2396 = vmax.f32 %v2338, 0.0
  %v2397 = vmax.f32 %v2339, 0.0
  %v2398 = vmax.f32 %v2340, 0.0
  %v2399 = vmax.f32 %v2341, 0.0
  %v2400 = vmax.f32 %v2342, 0.0
  %v2401 = vmax.f32 %v2343, 0.0
  %v2402 = vmax.f32 %v2344, 0.0
  %v2403 = vmax.f32 %v2345, 0.0
  %v2404 = vmax.f32 %v2346, 0.0
  %v2405 = vmax.f32 %v2347, 0.0
  %v2406 = vmax.f32 %v2348, 0.0
  %v2407 = vmax.f32 %v2349, 0.0
  %v2408 = vmax.f32 %v2350, 0.0
  %v2409 = vmax.f32 %v2351, 0.0
  %v2410 = vmax.f32 %v2352, 0.0
  %v2411 = vmax.f32 %v2353, 0.0
  %v2412 = vmax.f32 %v2354, 0.0
  %v2413 = vmax.f32 %v2355, 0.0
  %v2414 = vmax.f32 %v2356, 0.0
  %v2415 = vmax.f32 %v2357, 0.0
  %v2416 = vmax.f32 %v2358, 0.0
  %v2417 = vmax.f32 %v2359, 0.0
  %v2418 = vmax.f32 %v2360, 0.0
  %v2419 = vmax.f32 %v2361, 0.0
  %v2420 = vmax.f32 %v2362, 0.0
  %v2421 = vmax.f32 %v2363, 0.0
  %v2422 = vmax.f32 %v2364, 0.0
  %v2423 = vmax.f32 %v2365, 0.0
  %v2424 = vmax.f32 %v2366, 0.0
  %v2425 = vmax.f32 %v2367, 0.0
  %v2426 = vmax.f32 %v2368, 0.0
  %v2427 = vmax.f32 %v2369, 0.0
  %v2428 = vmax.f32 %v2370, 0.0
  %v2429 = vmax.f32 %v2371, 0.0
  %v2430 = vmax.f32 %v2372, 0.0
  %v2431 = vmax.f32 %v2373, 0.0
  %v2432 = vmax.f32 %v2374, 0.0
  %v2433 = vmax.f32 %v2375, 0.0
  %v2434 = vmax.f32 %v2376, 0.0
  %v2435 = vmax.f32 %v2377, 0.0
  %v2436 = vmax.f32 %v2378, 0.0
  %v2437 = vmax.f32 %v2379, 0.0
  %v2438 = vmax.f32 %v2380, 0.0
  %v2439 = vmax.f32 %v2381, 0.0
  %v2440 = vmax.f32 %v2382, 0.0
  %v2441 = vmax.f32 %v2383, 0.0
  %v2442 = vmax.f32 %v2384, 0.0
  %v2443 = vmax.f32 %v2385, 0.0
  %v2444 = vmax.f32 %v2386, 0.0
  %v2445 = vmax.f32 %v2387, 0.0
  %v2446 = vld [vmem:[%s2 + $0x1] sm:$0x1]
  %v2447 = vlaneseq
  %v2448 = vshrl.u32 %v2447, 7
  %v2449 = vsub.s32 0, %v2448
  %v2450 = vrot.slane %v2446, %v2449
  %v2451 = vmul.f32 %v2388, %v2450
  %v2452 = vmul.f32 %v2389, %v2450
  %v2453 = vmul.f32 %v2390, %v2450
  %v2454 = vmul.f32 %v2391, %v2450
  %v2455 = vmul.f32 %v2392, %v2450
  %v2456 = vmul.f32 %v2393, %v2450
  %v2457 = vmul.f32 %v2394, %v2450
  %v2458 = vmul.f32 %v2395, %v2450
  %v2459 = vmul.f32 %v2396, %v2450
  %v2460 = vmul.f32 %v2397, %v2450
  %v2461 = vmul.f32 %v2398, %v2450
  %v2462 = vmul.f32 %v2399, %v2450
  %v2463 = vmul.f32 %v2400, %v2450
  %v2464 = vmul.f32 %v2401, %v2450
  %v2465 = vmul.f32 %v2402, %v2450
  %v2466 = vmul.f32 %v2403, %v2450
  %v2467 = vmul.f32 %v2404, %v2450
  %v2468 = vmul.f32 %v2405, %v2450
  %v2469 = vmul.f32 %v2406, %v2450
  %v2470 = vmul.f32 %v2407, %v2450
  %v2471 = vmul.f32 %v2408, %v2450
  %v2472 = vmul.f32 %v2409, %v2450
  %v2473 = vmul.f32 %v2410, %v2450
  %v2474 = vmul.f32 %v2411, %v2450
  %v2475 = vmul.f32 %v2412, %v2450
  %v2476 = vmul.f32 %v2413, %v2450
  %v2477 = vmul.f32 %v2414, %v2450
  %v2478 = vmul.f32 %v2415, %v2450
  %v2479 = vmul.f32 %v2416, %v2450
  %v2480 = vmul.f32 %v2417, %v2450
  %v2481 = vmul.f32 %v2418, %v2450
  %v2482 = vmul.f32 %v2419, %v2450
  %v2483 = vmul.f32 %v2420, %v2450
  %v2484 = vmul.f32 %v2421, %v2450
  %v2485 = vmul.f32 %v2422, %v2450
  %v2486 = vmul.f32 %v2423, %v2450
  %v2487 = vmul.f32 %v2424, %v2450
  %v2488 = vmul.f32 %v2425, %v2450
  %v2489 = vmul.f32 %v2426, %v2450
  %v2490 = vmul.f32 %v2427, %v2450
  %v2491 = vmul.f32 %v2428, %v2450
  %v2492 = vmul.f32 %v2429, %v2450
  %v2493 = vmul.f32 %v2430, %v2450
  %v2494 = vmul.f32 %v2431, %v2450
  %v2495 = vmul.f32 %v2432, %v2450
  %v2496 = vmul.f32 %v2433, %v2450
  %v2497 = vmul.f32 %v2434, %v2450
  %v2498 = vmul.f32 %v2435, %v2450
  %v2499 = vmul.f32 %v2436, %v2450
  %v2500 = vmul.f32 %v2437, %v2450
  %v2501 = vmul.f32 %v2438, %v2450
  %v2502 = vmul.f32 %v2439, %v2450
  %v2503 = vmul.f32 %v2440, %v2450
  %v2504 = vmul.f32 %v2441, %v2450
  %v2505 = vmul.f32 %v2442, %v2450
  %v2506 = vmul.f32 %v2443, %v2450
  %v2507 = vmul.f32 %v2444, %v2450
  %v2508 = vmul.f32 %v2445, %v2450
  %v2509 = vld [vmem:[%s2 + $0x2] sm:$0x1]
  %v2510 = vlaneseq
  %v2511 = vshrl.u32 %v2510, 7
  %v2512 = vsub.s32 0, %v2511
  %v2513 = vrot.slane %v2509, %v2512
  %v2514 = vadd.f32 %v2451, %v2513
  %v2515 = vadd.f32 %v2452, %v2513
  %v2516 = vadd.f32 %v2453, %v2513
  %v2517 = vadd.f32 %v2454, %v2513
  %v2518 = vadd.f32 %v2455, %v2513
  %v2519 = vadd.f32 %v2456, %v2513
  %v2520 = vadd.f32 %v2457, %v2513
  %v2521 = vadd.f32 %v2458, %v2513
  %v2522 = vadd.f32 %v2459, %v2513
  %v2523 = vadd.f32 %v2460, %v2513
  %v2524 = vadd.f32 %v2461, %v2513
  %v2525 = vadd.f32 %v2462, %v2513
  %v2526 = vadd.f32 %v2463, %v2513
  %v2527 = vadd.f32 %v2464, %v2513
  %v2528 = vadd.f32 %v2465, %v2513
  %v2529 = vadd.f32 %v2466, %v2513
  %v2530 = vadd.f32 %v2467, %v2513
  %v2531 = vadd.f32 %v2468, %v2513
  %v2532 = vadd.f32 %v2469, %v2513
  %v2533 = vadd.f32 %v2470, %v2513
  %v2534 = vadd.f32 %v2471, %v2513
  %v2535 = vadd.f32 %v2472, %v2513
  %v2536 = vadd.f32 %v2473, %v2513
  %v2537 = vadd.f32 %v2474, %v2513
  %v2538 = vadd.f32 %v2475, %v2513
  %v2539 = vadd.f32 %v2476, %v2513
  %v2540 = vadd.f32 %v2477, %v2513
  %v2541 = vadd.f32 %v2478, %v2513
  %v2542 = vadd.f32 %v2479, %v2513
  %v2543 = vadd.f32 %v2480, %v2513
  %v2544 = vadd.f32 %v2481, %v2513
  %v2545 = vadd.f32 %v2482, %v2513
  %v2546 = vadd.f32 %v2483, %v2513
  %v2547 = vadd.f32 %v2484, %v2513
  %v2548 = vadd.f32 %v2485, %v2513
  %v2549 = vadd.f32 %v2486, %v2513
  %v2550 = vadd.f32 %v2487, %v2513
  %v2551 = vadd.f32 %v2488, %v2513
  %v2552 = vadd.f32 %v2489, %v2513
  %v2553 = vadd.f32 %v2490, %v2513
  %v2554 = vadd.f32 %v2491, %v2513
  %v2555 = vadd.f32 %v2492, %v2513
  %v2556 = vadd.f32 %v2493, %v2513
  %v2557 = vadd.f32 %v2494, %v2513
  %v2558 = vadd.f32 %v2495, %v2513
  %v2559 = vadd.f32 %v2496, %v2513
  %v2560 = vadd.f32 %v2497, %v2513
  %v2561 = vadd.f32 %v2498, %v2513
  %v2562 = vadd.f32 %v2499, %v2513
  %v2563 = vadd.f32 %v2500, %v2513
  %v2564 = vadd.f32 %v2501, %v2513
  %v2565 = vadd.f32 %v2502, %v2513
  %v2566 = vadd.f32 %v2503, %v2513
  %v2567 = vadd.f32 %v2504, %v2513
  %v2568 = vadd.f32 %v2505, %v2513
  %v2569 = vadd.f32 %v2506, %v2513
  %v2570 = vadd.f32 %v2507, %v2513
  %v2571 = vadd.f32 %v2508, %v2513
  %v2572 = vpack.c.bf16 %v2515, %v2514
  %v2573 = vpack.c.bf16 %v2517, %v2516
  %v2574 = vpack.c.bf16 %v2519, %v2518
  %v2575 = vpack.c.bf16 %v2521, %v2520
  %v2576 = vpack.c.bf16 %v2523, %v2522
  %v2577 = vpack.c.bf16 %v2525, %v2524
  %v2578 = vpack.c.bf16 %v2527, %v2526
  %v2579 = vpack.c.bf16 %v2529, %v2528
  %v2580 = vpack.c.bf16 %v2531, %v2530
  %v2581 = vpack.c.bf16 %v2533, %v2532
  %v2582 = vpack.c.bf16 %v2535, %v2534
  %v2583 = vpack.c.bf16 %v2537, %v2536
  %v2584 = vpack.c.bf16 %v2539, %v2538
  %v2585 = vpack.c.bf16 %v2541, %v2540
  %v2586 = vpack.c.bf16 %v2543, %v2542
  %v2587 = vpack.c.bf16 %v2545, %v2544
  %v2588 = vpack.c.bf16 %v2547, %v2546
  %v2589 = vpack.c.bf16 %v2549, %v2548
  %v2590 = vpack.c.bf16 %v2551, %v2550
  %v2591 = vpack.c.bf16 %v2553, %v2552
  %v2592 = vpack.c.bf16 %v2555, %v2554
  %v2593 = vpack.c.bf16 %v2557, %v2556
  %v2594 = vpack.c.bf16 %v2559, %v2558
  %v2595 = vpack.c.bf16 %v2561, %v2560
  %v2596 = vpack.c.bf16 %v2563, %v2562
  %v2597 = vpack.c.bf16 %v2565, %v2564
  %v2598 = vpack.c.bf16 %v2567, %v2566
  %v2599 = vpack.c.bf16 %v2569, %v2568
  %v2600 = vpack.c.bf16 %v2571, %v2570
  %v2630 = vunpack.c.l.b16 %v2572
  %v2631 = vunpack.c.h.b16 %v2572
  %v2632 = vunpack.c.l.b16 %v2573
  %v2633 = vunpack.c.h.b16 %v2573
  %v2634 = vunpack.c.l.b16 %v2574
  %v2635 = vunpack.c.h.b16 %v2574
  %v2636 = vunpack.c.l.b16 %v2575
  %v2637 = vunpack.c.h.b16 %v2575
  %v2638 = vunpack.c.l.b16 %v2576
  %v2639 = vunpack.c.h.b16 %v2576
  %v2640 = vunpack.c.l.b16 %v2577
  %v2641 = vunpack.c.h.b16 %v2577
  %v2642 = vunpack.c.l.b16 %v2578
  %v2643 = vunpack.c.h.b16 %v2578
  %v2644 = vunpack.c.l.b16 %v2579
  %v2645 = vunpack.c.h.b16 %v2579
  %v2646 = vunpack.c.l.b16 %v2580
  %v2647 = vunpack.c.h.b16 %v2580
  %v2648 = vunpack.c.l.b16 %v2581
  %v2649 = vunpack.c.h.b16 %v2581
  %v2650 = vunpack.c.l.b16 %v2582
  %v2651 = vunpack.c.h.b16 %v2582
  %v2652 = vunpack.c.l.b16 %v2583
  %v2653 = vunpack.c.h.b16 %v2583
  %v2654 = vunpack.c.l.b16 %v2584
  %v2655 = vunpack.c.h.b16 %v2584
  %v2656 = vunpack.c.l.b16 %v2585
  %v2657 = vunpack.c.h.b16 %v2585
  %v2658 = vunpack.c.l.b16 %v2586
  %v2659 = vunpack.c.h.b16 %v2586
  %v2660 = vunpack.c.l.b16 %v2587
  %v2661 = vunpack.c.h.b16 %v2587
  %v2662 = vunpack.c.l.b16 %v2588
  %v2663 = vunpack.c.h.b16 %v2588
  %v2664 = vunpack.c.l.b16 %v2589
  %v2665 = vunpack.c.h.b16 %v2589
  %v2666 = vunpack.c.l.b16 %v2590
  %v2667 = vunpack.c.h.b16 %v2590
  %v2668 = vunpack.c.l.b16 %v2591
  %v2669 = vunpack.c.h.b16 %v2591
  %v2670 = vunpack.c.l.b16 %v2592
  %v2671 = vunpack.c.h.b16 %v2592
  %v2672 = vunpack.c.l.b16 %v2593
  %v2673 = vunpack.c.h.b16 %v2593
  %v2674 = vunpack.c.l.b16 %v2594
  %v2675 = vunpack.c.h.b16 %v2594
  %v2676 = vunpack.c.l.b16 %v2595
  %v2677 = vunpack.c.h.b16 %v2595
  %v2678 = vunpack.c.l.b16 %v2596
  %v2679 = vunpack.c.h.b16 %v2596
  %v2680 = vunpack.c.l.b16 %v2597
  %v2681 = vunpack.c.h.b16 %v2597
  %v2682 = vunpack.c.l.b16 %v2598
  %v2683 = vunpack.c.h.b16 %v2598
  %v2684 = vunpack.c.l.b16 %v2599
  %v2685 = vunpack.c.h.b16 %v2599
  %v2686 = vunpack.c.l.b16 %v2600
  %v2687 = vunpack.c.h.b16 %v2600
  %v2688 = vpack.c.b16 %v2630, %v2630
  %v2689 = vpack.c.b16 %v2631, %v2631
  %v2690 = vpack.c.b16 %v2632, %v2632
  %v2691 = vpack.c.b16 %v2633, %v2633
  %v2692 = vpack.c.b16 %v2634, %v2634
  %v2693 = vpack.c.b16 %v2635, %v2635
  %v2694 = vpack.c.b16 %v2636, %v2636
  %v2695 = vpack.c.b16 %v2637, %v2637
  %v2696 = vpack.c.b16 %v2638, %v2638
  %v2697 = vpack.c.b16 %v2639, %v2639
  %v2698 = vpack.c.b16 %v2640, %v2640
  %v2699 = vpack.c.b16 %v2641, %v2641
  %v2700 = vpack.c.b16 %v2642, %v2642
  %v2701 = vpack.c.b16 %v2643, %v2643
  %v2702 = vpack.c.b16 %v2644, %v2644
  %v2703 = vpack.c.b16 %v2645, %v2645
  %v2704 = vpack.c.b16 %v2646, %v2646
  %v2705 = vpack.c.b16 %v2647, %v2647
  %v2706 = vpack.c.b16 %v2648, %v2648
  %v2707 = vpack.c.b16 %v2649, %v2649
  %v2708 = vpack.c.b16 %v2650, %v2650
  %v2709 = vpack.c.b16 %v2651, %v2651
  %v2710 = vpack.c.b16 %v2652, %v2652
  %v2711 = vpack.c.b16 %v2653, %v2653
  %v2712 = vpack.c.b16 %v2654, %v2654
  %v2713 = vpack.c.b16 %v2655, %v2655
  %v2714 = vpack.c.b16 %v2656, %v2656
  %v2715 = vpack.c.b16 %v2657, %v2657
  %v2716 = vpack.c.b16 %v2658, %v2658
  %v2717 = vpack.c.b16 %v2659, %v2659
  %v2718 = vpack.c.b16 %v2660, %v2660
  %v2719 = vpack.c.b16 %v2661, %v2661
  %v2720 = vpack.c.b16 %v2662, %v2662
  %v2721 = vpack.c.b16 %v2663, %v2663
  %v2722 = vpack.c.b16 %v2664, %v2664
  %v2723 = vpack.c.b16 %v2665, %v2665
  %v2724 = vpack.c.b16 %v2666, %v2666
  %v2725 = vpack.c.b16 %v2667, %v2667
  %v2726 = vpack.c.b16 %v2668, %v2668
  %v2727 = vpack.c.b16 %v2669, %v2669
  %v2728 = vpack.c.b16 %v2670, %v2670
  %v2729 = vpack.c.b16 %v2671, %v2671
  %v2730 = vpack.c.b16 %v2672, %v2672
  %v2731 = vpack.c.b16 %v2673, %v2673
  %v2732 = vpack.c.b16 %v2674, %v2674
  %v2733 = vpack.c.b16 %v2675, %v2675
  %v2734 = vpack.c.b16 %v2676, %v2676
  %v2735 = vpack.c.b16 %v2677, %v2677
  %v2736 = vpack.c.b16 %v2678, %v2678
  %v2737 = vpack.c.b16 %v2679, %v2679
  %v2738 = vpack.c.b16 %v2680, %v2680
  %v2739 = vpack.c.b16 %v2681, %v2681
  %v2740 = vpack.c.b16 %v2682, %v2682
  %v2741 = vpack.c.b16 %v2683, %v2683
  %v2742 = vpack.c.b16 %v2684, %v2684
  %v2743 = vpack.c.b16 %v2685, %v2685
  %v2744 = vpack.c.b16 %v2686, %v2686
  %v2745 = vpack.c.b16 %v2687, %v2687
  %vm2804 = vcmask 257024
  %2805 = vst.msk [vmem:[%s3] sm:$0xf] %vm2804, %v2688
  %2806 = vst.msk [vmem:[%s3 + $0x4] sm:$0xf] %vm2804, %v2689
  %2807 = vst.msk [vmem:[%s3 + $0x8] sm:$0xf] %vm2804, %v2690
  %2808 = vst.msk [vmem:[%s3 + $0xc] sm:$0xf] %vm2804, %v2691
  %2809 = vst.msk [vmem:[%s3 + $0x10] sm:$0xf] %vm2804, %v2692
  %2810 = vst.msk [vmem:[%s3 + $0x14] sm:$0xf] %vm2804, %v2693
  %2811 = vst.msk [vmem:[%s3 + $0x18] sm:$0xf] %vm2804, %v2694
  %2812 = vst.msk [vmem:[%s3 + $0x1c] sm:$0xf] %vm2804, %v2695
  %2813 = vst.msk [vmem:[%s3 + $0x20] sm:$0xf] %vm2804, %v2696
  %2814 = vst.msk [vmem:[%s3 + $0x24] sm:$0xf] %vm2804, %v2697
  %2815 = vst.msk [vmem:[%s3 + $0x28] sm:$0xf] %vm2804, %v2698
  %2816 = vst.msk [vmem:[%s3 + $0x2c] sm:$0xf] %vm2804, %v2699
  %2817 = vst.msk [vmem:[%s3 + $0x30] sm:$0xf] %vm2804, %v2700
  %2818 = vst.msk [vmem:[%s3 + $0x34] sm:$0xf] %vm2804, %v2701
  %2819 = vst.msk [vmem:[%s3 + $0x38] sm:$0xf] %vm2804, %v2702
  %2820 = vst.msk [vmem:[%s3 + $0x3c] sm:$0xf] %vm2804, %v2703
  %2821 = vst.msk [vmem:[%s3 + $0x40] sm:$0xf] %vm2804, %v2704
  %2822 = vst.msk [vmem:[%s3 + $0x44] sm:$0xf] %vm2804, %v2705
  %2823 = vst.msk [vmem:[%s3 + $0x48] sm:$0xf] %vm2804, %v2706
  %2824 = vst.msk [vmem:[%s3 + $0x4c] sm:$0xf] %vm2804, %v2707
  %2825 = vst.msk [vmem:[%s3 + $0x50] sm:$0xf] %vm2804, %v2708
  %2826 = vst.msk [vmem:[%s3 + $0x54] sm:$0xf] %vm2804, %v2709
  %2827 = vst.msk [vmem:[%s3 + $0x58] sm:$0xf] %vm2804, %v2710
  %2828 = vst.msk [vmem:[%s3 + $0x5c] sm:$0xf] %vm2804, %v2711
  %2829 = vst.msk [vmem:[%s3 + $0x60] sm:$0xf] %vm2804, %v2712
  %2830 = vst.msk [vmem:[%s3 + $0x64] sm:$0xf] %vm2804, %v2713
  %2831 = vst.msk [vmem:[%s3 + $0x68] sm:$0xf] %vm2804, %v2714
  %2832 = vst.msk [vmem:[%s3 + $0x6c] sm:$0xf] %vm2804, %v2715
  %2833 = vst.msk [vmem:[%s3 + $0x70] sm:$0xf] %vm2804, %v2716
  %2834 = vst.msk [vmem:[%s3 + $0x74] sm:$0xf] %vm2804, %v2717
  %2835 = vst.msk [vmem:[%s3 + $0x78] sm:$0xf] %vm2804, %v2718
  %2836 = vst.msk [vmem:[%s3 + $0x7c] sm:$0xf] %vm2804, %v2719
  %2837 = vst.msk [vmem:[%s3 + $0x80] sm:$0xf] %vm2804, %v2720
  %2838 = vst.msk [vmem:[%s3 + $0x84] sm:$0xf] %vm2804, %v2721
  %2839 = vst.msk [vmem:[%s3 + $0x88] sm:$0xf] %vm2804, %v2722
  %2840 = vst.msk [vmem:[%s3 + $0x8c] sm:$0xf] %vm2804, %v2723
  %2841 = vst.msk [vmem:[%s3 + $0x90] sm:$0xf] %vm2804, %v2724
  %2842 = vst.msk [vmem:[%s3 + $0x94] sm:$0xf] %vm2804, %v2725
  %2843 = vst.msk [vmem:[%s3 + $0x98] sm:$0xf] %vm2804, %v2726
  %2844 = vst.msk [vmem:[%s3 + $0x9c] sm:$0xf] %vm2804, %v2727
  %2845 = vst.msk [vmem:[%s3 + $0xa0] sm:$0xf] %vm2804, %v2728
  %2846 = vst.msk [vmem:[%s3 + $0xa4] sm:$0xf] %vm2804, %v2729
  %2847 = vst.msk [vmem:[%s3 + $0xa8] sm:$0xf] %vm2804, %v2730
  %2848 = vst.msk [vmem:[%s3 + $0xac] sm:$0xf] %vm2804, %v2731
  %2849 = vst.msk [vmem:[%s3 + $0xb0] sm:$0xf] %vm2804, %v2732
  %2850 = vst.msk [vmem:[%s3 + $0xb4] sm:$0xf] %vm2804, %v2733
  %2851 = vst.msk [vmem:[%s3 + $0xb8] sm:$0xf] %vm2804, %v2734
  %2852 = vst.msk [vmem:[%s3 + $0xbc] sm:$0xf] %vm2804, %v2735
  %2853 = vst.msk [vmem:[%s3 + $0xc0] sm:$0xf] %vm2804, %v2736
  %2854 = vst.msk [vmem:[%s3 + $0xc4] sm:$0xf] %vm2804, %v2737
  %2855 = vst.msk [vmem:[%s3 + $0xc8] sm:$0xf] %vm2804, %v2738
  %2856 = vst.msk [vmem:[%s3 + $0xcc] sm:$0xf] %vm2804, %v2739
  %2857 = vst.msk [vmem:[%s3 + $0xd0] sm:$0xf] %vm2804, %v2740
  %2858 = vst.msk [vmem:[%s3 + $0xd4] sm:$0xf] %vm2804, %v2741
  %2859 = vst.msk [vmem:[%s3 + $0xd8] sm:$0xf] %vm2804, %v2742
  %2860 = vst.msk [vmem:[%s3 + $0xdc] sm:$0xf] %vm2804, %v2743
  %2861 = vst.msk [vmem:[%s3 + $0xe0] sm:$0xf] %vm2804, %v2744
  %2862 = vst.msk [vmem:[%s3 + $0xe4] sm:$0xf] %vm2804, %v2745
  // Predicated region
  $region14: #{model_forward.4} parent=0 // pred_check
    _
  $region15: #{model_forward.4} parent=0 // pred_check_branch
    %2864 = sbr.rel (0) target = $region17
  $region16: #{model_forward.4} parent=0 // pred_region
    _
  $region17: #{model_forward.4} parent=0 // pred_fallthru
    _
  // Predicated region
  $region18: #{model_forward.4} parent=0 // pred_check
    _
  $region19: #{model_forward.4} parent=0 // pred_check_branch
    %2866 = sbr.rel (0) target = $region21
  $region20: #{model_forward.4} parent=0 // pred_region
    _
  $region21: #{model_forward.4} parent=0 // pred_fallthru
    _

// kernel: model_forward.6
$region0: #{model_forward.6}
  #allocation0 [shape = 'u32[]', space=smem, size = 0x4, offset = 0x4, fixed_abs, tag = 'smem constant byte address 0x4 - core index']
  #allocation1 [shape = 'u32[144,128]{1,0:T(1,128)}', space=vmem, size = 0x12000, scoped, tag = 'internal scratch']
  %s0 = inlined_call_operand.vmem [shape: bf16[128,64], index: 0, kind: input, shape index: {}]
  %s1 = inlined_call_operand.vmem [shape: bf16[64,128], index: 1, kind: input, shape index: {}]
  %s2 = inlined_call_operand.vmem [shape: f32[3,128], index: 2, kind: input, shape index: {}]
  %s3 = inlined_call_operand.vmem [shape: bf16[32,128], index: 3, kind: output, shape index: {}]
  %s4 = sld [smem:[#allocation0]]
  $region22: #{model_forward.6} parent=0
    _
  %s6 = ssub.s32 1, %s4
  %s7 = scalar_select 0, %s6, %s4
  // Predicated region
  $region2: #{model_forward.6} parent=0 // pred_check
    _
  $region3: #{model_forward.6} parent=0 // pred_check_branch
    %9 = sbr.rel (0) target = $region5
  $region4: #{model_forward.6} parent=0 // pred_region
    _
  $region5: #{model_forward.6} parent=0 // pred_fallthru
    _
  // Predicated region
  $region6: #{model_forward.6} parent=0 // pred_check
    _
  $region7: #{model_forward.6} parent=0 // pred_check_branch
    %11 = sbr.rel (0) target = $region9
  $region8: #{model_forward.6} parent=0 // pred_region
    _
  $region9: #{model_forward.6} parent=0 // pred_fallthru
    _
  // Predicated region
  $region10: #{model_forward.6} parent=0 // pred_check
    _
  $region11: #{model_forward.6} parent=0 // pred_check_branch
    %13 = sbr.rel (0) target = $region13
  $region12: #{model_forward.6} parent=0 // pred_region
    _
  $region13: #{model_forward.6} parent=0 // pred_fallthru
    _
  %v15 = vld [vmem:[%s0] sm:$0xf]
  %v16 = vld [vmem:[%s0 + $0x4] sm:$0xf]
  %v17 = vld [vmem:[%s0 + $0x8] sm:$0xf]
  %v18 = vld [vmem:[%s0 + $0xc] sm:$0xf]
  %v19 = vld [vmem:[%s0 + $0x10] sm:$0xf]
  %v20 = vld [vmem:[%s0 + $0x14] sm:$0xf]
  %v21 = vld [vmem:[%s0 + $0x18] sm:$0xf]
  %v22 = vld [vmem:[%s0 + $0x1c] sm:$0xf]
  %v23 = vld [vmem:[%s0 + $0x20] sm:$0xf]
  %v24 = vld [vmem:[%s0 + $0x24] sm:$0xf]
  %v25 = vld [vmem:[%s0 + $0x28] sm:$0xf]
  %v26 = vld [vmem:[%s0 + $0x2c] sm:$0xf]
  %v27 = vld [vmem:[%s0 + $0x30] sm:$0xf]
  %v28 = vld [vmem:[%s0 + $0x34] sm:$0xf]
  %v29 = vld [vmem:[%s0 + $0x38] sm:$0xf]
  %v30 = vld [vmem:[%s0 + $0x3c] sm:$0xf]
  %v31 = vld [vmem:[%s1] sm:$0xf]
  %v32 = vld [vmem:[%s1 + $0x4] sm:$0xf]
  %v33 = vld [vmem:[%s1 + $0x8] sm:$0xf]
  %v34 = vld [vmem:[%s1 + $0xc] sm:$0xf]
  %v35 = vld [vmem:[%s1 + $0x10] sm:$0xf]
  %v36 = vld [vmem:[%s1 + $0x14] sm:$0xf]
  %v37 = vld [vmem:[%s1 + $0x18] sm:$0xf]
  %v38 = vld [vmem:[%s1 + $0x1c] sm:$0xf]
  %v55 = vunpack.c.l.b16 %v15
  %v56 = vunpack.c.l.b16 %v16
  %v57 = vunpack.c.l.b16 %v17
  %v58 = vunpack.c.l.b16 %v18
  %v59 = vunpack.c.l.b16 %v19
  %v60 = vunpack.c.l.b16 %v20
  %v61 = vunpack.c.l.b16 %v21
  %v62 = vunpack.c.l.b16 %v22
  %v63 = vunpack.c.l.b16 %v23
  %v64 = vunpack.c.l.b16 %v24
  %v65 = vunpack.c.l.b16 %v25
  %v66 = vunpack.c.l.b16 %v26
  %v67 = vunpack.c.l.b16 %v27
  %v68 = vunpack.c.l.b16 %v28
  %v69 = vunpack.c.l.b16 %v29
  %v70 = vunpack.c.l.b16 %v30
  %v71 = vpack.c.b16 %v56, %v55
  %v72 = vpack.c.b16 %v58, %v57
  %v73 = vpack.c.b16 %v60, %v59
  %v74 = vpack.c.b16 %v62, %v61
  %v75 = vpack.c.b16 %v64, %v63
  %v76 = vpack.c.b16 %v66, %v65
  %v77 = vpack.c.b16 %v68, %v67
  %v78 = vpack.c.b16 %v70, %v69
  %v87 = vunpack.c.l.b16 %v31
  %v88 = vunpack.c.l.b16 %v32
  %v89 = vunpack.c.l.b16 %v33
  %v90 = vunpack.c.l.b16 %v34
  %v91 = vunpack.c.l.b16 %v35
  %v92 = vunpack.c.l.b16 %v36
  %v93 = vunpack.c.l.b16 %v37
  %v94 = vunpack.c.l.b16 %v38
  %v95 = vpack.c.b16 %v88, %v87
  %v96 = vpack.c.b16 %v90, %v89
  %v97 = vpack.c.b16 %v92, %v91
  %v98 = vpack.c.b16 %v94, %v93
  %vm103 = vcmask 523264
  %v105 = vsel %vm103, %v71, 0
  %v108 = vsel %vm103, %v72, 0
  %v111 = vsel %vm103, %v73, 0
  %v114 = vsel %vm103, %v74, 0
  %v117 = vsel %vm103, %v75, 0
  %v120 = vsel %vm103, %v76, 0
  %v123 = vsel %vm103, %v77, 0
  %v126 = vsel %vm103, %v78, 0
  %128 = vmatprep.subr.bf16.mxu0 0
  %129 = vmatpush1.bf16.msra.mxu0 %v95
  %130 = vmatprep.subr.bf16.mxu0 0
  %131 = vmatpush1.bf16.msra.mxu0 %v96
  %132 = vmatprep.subr.bf16.mxu0 0
  %133 = vmatpush1.bf16.msra.mxu0 %v97
  %134 = vmatprep.subr.bf16.mxu0 0
  %135 = vmatpush1.bf16.msra.mxu0 %v98
  %136 = vmatprep.subr.bf16.mxu0 0
  %137 = vmatpush1.bf16.msra.mxu0 0
  %138 = vmatprep.subr.bf16.mxu0 0
  %139 = vmatpush1.bf16.msra.mxu0 0
  %140 = vmatprep.subr.bf16.mxu0 0
  %141 = vmatpush1.bf16.msra.mxu0 0
  %142 = vmatprep.subr.bf16.mxu0 0
  %143 = vmatpush1.bf16.msra.mxu0 0
  %144 = vmatprep.subr.bf16.mxu0 0
  %145 = vmatpush1.bf16.msra.mxu0 0
  %146 = vmatprep.subr.bf16.mxu0 0
  %147 = vmatpush1.bf16.msra.mxu0 0
  %148 = vmatprep.subr.bf16.mxu0 0
  %149 = vmatpush1.bf16.msra.mxu0 0
  %150 = vmatprep.subr.bf16.mxu0 0
  %151 = vmatpush1.bf16.msra.mxu0 0
  %152 = vmatprep.subr.bf16.mxu0 0
  %153 = vmatpush1.bf16.msra.mxu0 0
  %154 = vmatprep.subr.bf16.mxu0 0
  %155 = vmatpush1.bf16.msra.mxu0 0
  %156 = vmatprep.subr.bf16.mxu0 0
  %157 = vmatpush1.bf16.msra.mxu0 0
  %158 = vmatprep.subr.bf16.mxu0 0
  %159 = vmatpush1.bf16.msra.mxu0 0
  %160 = vmatprep.mubr.bf16.mxu0 0
  %161 = vmatmul.mubr.bf16.gmra.mrb[0].mxu0 %v105
  %v162 = vpop.f32.mrb[0].mxu0
  %v163 = vadd.f32 0.0, %v162
  %v164 = vpop.f32.mrb[0].mxu0
  %v165 = vpop.f32.mrb[0].mxu0
  %v166 = vadd.f32 0.0, %v165
  %v167 = vpop.f32.mrb[0].mxu0
  %168 = vmatprep.mubr.bf16.mxu0 0
  %169 = vmatmul.mubr.bf16.gmra.mrb[0].mxu0 %v108
  %v170 = vpop.f32.mrb[0].mxu0
  %v171 = vadd.f32 0.0, %v170
  %v172 = vpop.f32.mrb[0].mxu0
  %v173 = vpop.f32.mrb[0].mxu0
  %v174 = vadd.f32 0.0, %v173
  %v175 = vpop.f32.mrb[0].mxu0
  %176 = vmatprep.mubr.bf16.mxu0 0
  %177 = vmatmul.mubr.bf16.gmra.mrb[0].mxu0 %v111
  %v178 = vpop.f32.mrb[0].mxu0
  %v179 = vadd.f32 0.0, %v178
  %v180 = vpop.f32.mrb[0].mxu0
  %v181 = vpop.f32.mrb[0].mxu0
  %v182 = vadd.f32 0.0, %v181
  %v183 = vpop.f32.mrb[0].mxu0
  %184 = vmatprep.mubr.bf16.mxu0 0
  %185 = vmatmul.mubr.bf16.gmra.mrb[0].mxu0 %v114
  %v186 = vpop.f32.mrb[0].mxu0
  %v187 = vadd.f32 0.0, %v186
  %v188 = vpop.f32.mrb[0].mxu0
  %v189 = vpop.f32.mrb[0].mxu0
  %v190 = vadd.f32 0.0, %v189
  %v191 = vpop.f32.mrb[0].mxu0
  %192 = vmatprep.mubr.bf16.mxu0 0
  %193 = vmatmul.mubr.bf16.gmra.mrb[0].mxu0 %v117
  %v194 = vpop.f32.mrb[0].mxu0
  %v195 = vadd.f32 0.0, %v194
  %v196 = vpop.f32.mrb[0].mxu0
  %v197 = vpop.f32.mrb[0].mxu0
  %v198 = vadd.f32 0.0, %v197
  %v199 = vpop.f32.mrb[0].mxu0
  %200 = vmatprep.mubr.bf16.mxu0 0
  %201 = vmatmul.mubr.bf16.gmra.mrb[0].mxu0 %v120
  %v202 = vpop.f32.mrb[0].mxu0
  %v203 = vadd.f32 0.0, %v202
  %v204 = vpop.f32.mrb[0].mxu0
  %v205 = vpop.f32.mrb[0].mxu0
  %v206 = vadd.f32 0.0, %v205
  %v207 = vpop.f32.mrb[0].mxu0
  %208 = vmatprep.mubr.bf16.mxu0 0
  %209 = vmatmul.mubr.bf16.gmra.mrb[0].mxu0 %v123
  %v210 = vpop.f32.mrb[0].mxu0
  %v211 = vadd.f32 0.0, %v210
  %v212 = vpop.f32.mrb[0].mxu0
  %v213 = vpop.f32.mrb[0].mxu0
  %v214 = vadd.f32 0.0, %v213
  %v215 = vpop.f32.mrb[0].mxu0
  %216 = vmatprep.mubr.bf16.mxu0 0
  %217 = vmatmul.mubr.bf16.gmra.mrb[0].mxu0 %v126
  %v218 = vpop.f32.mrb[0].mxu0
  %v219 = vadd.f32 0.0, %v218
  %v220 = vpop.f32.mrb[0].mxu0
  %v221 = vpop.f32.mrb[0].mxu0
  %v222 = vadd.f32 0.0, %v221
  %v223 = vpop.f32.mrb[0].mxu0
  %224 = vdwg.mxu0
  %v225 = vmax.f32 %v163, %v179
  %v226 = vmax.f32 %v166, %v182
  %v227 = vmax.f32 %v171, %v187
  %v228 = vmax.f32 %v174, %v190
  %v229 = vmax.f32 %v195, %v211
  %v230 = vmax.f32 %v198, %v214
  %v231 = vmax.f32 %v203, %v219
  %v232 = vmax.f32 %v206, %v222
  %v233 = vmax.f32 %v225, %v229
  %v234 = vmax.f32 %v226, %v230
  %v235 = vmax.f32 %v227, %v231
  %v236 = vmax.f32 %v228, %v232
  %v237 = vld [vmem:[%s2] sm:$0x1]
  %v238 = vlaneseq
  %v239 = vshrl.u32 %v238, 7
  %v240 = vsub.s32 0, %v239
  %v241 = vrot.slane %v237, %v240
  %v242 = vadd.f32 %v233, %v241
  %v243 = vadd.f32 %v234, %v241
  %v244 = vadd.f32 %v235, %v241
  %v245 = vadd.f32 %v236, %v241
  %v246 = vmax.f32 %v242, 0.0
  %v247 = vmax.f32 %v243, 0.0
  %v248 = vmax.f32 %v244, 0.0
  %v249 = vmax.f32 %v245, 0.0
  %v250 = vld [vmem:[%s2 + $0x1] sm:$0x1]
  %v251 = vlaneseq
  %v252 = vshrl.u32 %v251, 7
  %v253 = vsub.s32 0, %v252
  %v254 = vrot.slane %v250, %v253
  %v255 = vmul.f32 %v246, %v254
  %v256 = vmul.f32 %v247, %v254
  %v257 = vmul.f32 %v248, %v254
  %v258 = vmul.f32 %v249, %v254
  %v259 = vld [vmem:[%s2 + $0x2] sm:$0x1]
  %v260 = vlaneseq
  %v261 = vshrl.u32 %v260, 7
  %v262 = vsub.s32 0, %v261
  %v263 = vrot.slane %v259, %v262
  %v264 = vadd.f32 %v255, %v263
  %v265 = vadd.f32 %v256, %v263
  %v266 = vadd.f32 %v257, %v263
  %v267 = vadd.f32 %v258, %v263
  %v268 = vpack.c.bf16 %v265, %v264
  %v269 = vpack.c.bf16 %v267, %v266
  %v272 = vunpack.c.l.b16 %v268
  %v273 = vunpack.c.h.b16 %v268
  %v274 = vunpack.c.l.b16 %v269
  %v275 = vunpack.c.h.b16 %v269
  %v276 = vpack.c.b16 %v272, %v272
  %v277 = vpack.c.b16 %v273, %v273
  %v278 = vpack.c.b16 %v274, %v274
  %v279 = vpack.c.b16 %v275, %v275
  %284 = vst [vmem:[%s3] sm:$0xf] %v276
  %285 = vst [vmem:[%s3 + $0x4] sm:$0xf] %v277
  %286 = vst [vmem:[%s3 + $0x8] sm:$0xf] %v278
  %287 = vst [vmem:[%s3 + $0xc] sm:$0xf] %v279
  // Predicated region
  $region14: #{model_forward.6} parent=0 // pred_check
    _
  $region15: #{model_forward.6} parent=0 // pred_check_branch
    %289 = sbr.rel (0) target = $region17
  $region16: #{model_forward.6} parent=0 // pred_region
    _
  $region17: #{model_forward.6} parent=0 // pred_fallthru
    _
  // Predicated region
  $region18: #{model_forward.6} parent=0 // pred_check
    _
  $region19: #{model_forward.6} parent=0 // pred_check_branch
    %291 = sbr.rel (0) target = $region21
  $region20: #{model_forward.6} parent=0 // pred_region
    _
  $region21: #{model_forward.6} parent=0 // pred_fallthru
    _

// kernel: model_forward.5
$region0: #{model_forward.5}
  #allocation0 [shape = 'u32[]', space=smem, size = 0x4, offset = 0x4, fixed_abs, tag = 'smem constant byte address 0x4 - core index']
  #allocation1 [shape = 'u32[144,128]{1,0:T(1,128)}', space=vmem, size = 0x12000, scoped, tag = 'internal scratch']
  %s0 = inlined_call_operand.vmem [shape: bf16[320,800], index: 0, kind: input, shape index: {}]
  %s1 = inlined_call_operand.vmem [shape: bf16[800,64], index: 1, kind: input, shape index: {}]
  %s2 = inlined_call_operand.vmem [shape: f32[3,64], index: 2, kind: input, shape index: {}]
  %s3 = inlined_call_operand.vmem [shape: bf16[80,64], index: 3, kind: output, shape index: {}]
  %s4 = sld [smem:[#allocation0]]
  $region22: #{model_forward.5} parent=0
    _
  %s6 = ssub.s32 1, %s4
  %s7 = scalar_select 0, %s6, %s4
  // Predicated region
  $region2: #{model_forward.5} parent=0 // pred_check
    _
  $region3: #{model_forward.5} parent=0 // pred_check_branch
    %9 = sbr.rel (0) target = $region5
  $region4: #{model_forward.5} parent=0 // pred_region
    _
  $region5: #{model_forward.5} parent=0 // pred_fallthru
    _
  // Predicated region
  $region6: #{model_forward.5} parent=0 // pred_check
    _
  $region7: #{model_forward.5} parent=0 // pred_check_branch
    %11 = sbr.rel (0) target = $region9
  $region8: #{model_forward.5} parent=0 // pred_region
    _
  $region9: #{model_forward.5} parent=0 // pred_fallthru
    _
  // Predicated region
  $region10: #{model_forward.5} parent=0 // pred_check
    _
  $region11: #{model_forward.5} parent=0 // pred_check_branch
    %13 = sbr.rel (0) target = $region13
  $region12: #{model_forward.5} parent=0 // pred_region
    _
  $region13: #{model_forward.5} parent=0 // pred_fallthru
    _
  %v15 = vld [vmem:[%s0] sm:$0xff]
  %v16 = vld [vmem:[%s0 + $0x8] sm:$0xff]
  %v17 = vld [vmem:[%s0 + $0x10] sm:$0xff]
  %v18 = vld [vmem:[%s0 + $0x18] sm:$0xf]
  %v19 = vld [vmem:[%s0 + $0x1c] sm:$0xff]
  %v20 = vld [vmem:[%s0 + $0x24] sm:$0xff]
  %v21 = vld [vmem:[%s0 + $0x2c] sm:$0xff]
  %v22 = vld [vmem:[%s0 + $0x34] sm:$0xf]
  %v23 = vld [vmem:[%s0 + $0x38] sm:$0xff]
  %v24 = vld [vmem:[%s0 + $0x40] sm:$0xff]
  %v25 = vld [vmem:[%s0 + $0x48] sm:$0xff]
  %v26 = vld [vmem:[%s0 + $0x50] sm:$0xf]
  %v27 = vld [vmem:[%s0 + $0x54] sm:$0xff]
  %v28 = vld [vmem:[%s0 + $0x5c] sm:$0xff]
  %v29 = vld [vmem:[%s0 + $0x64] sm:$0xff]
  %v30 = vld [vmem:[%s0 + $0x6c] sm:$0xf]
  %v31 = vld [vmem:[%s0 + $0x70] sm:$0xff]
  %v32 = vld [vmem:[%s0 + $0x78] sm:$0xff]
  %v33 = vld [vmem:[%s0 + $0x80] sm:$0xff]
  %v34 = vld [vmem:[%s0 + $0x88] sm:$0xf]
  %v35 = vld [vmem:[%s0 + $0x8c] sm:$0xff]
  %v36 = vld [vmem:[%s0 + $0x94] sm:$0xff]
  %v37 = vld [vmem:[%s0 + $0x9c] sm:$0xff]
  %v38 = vld [vmem:[%s0 + $0xa4] sm:$0xf]
  %v39 = vld [vmem:[%s0 + $0xa8] sm:$0xff]
  %v40 = vld [vmem:[%s0 + $0xb0] sm:$0xff]
  %v41 = vld [vmem:[%s0 + $0xb8] sm:$0xff]
  %v42 = vld [vmem:[%s0 + $0xc0] sm:$0xf]
  %v43 = vld [vmem:[%s0 + $0xc4] sm:$0xff]
  %v44 = vld [vmem:[%s0 + $0xcc] sm:$0xff]
  %v45 = vld [vmem:[%s0 + $0xd4] sm:$0xff]
  %v46 = vld [vmem:[%s0 + $0xdc] sm:$0xf]
  %v47 = vld [vmem:[%s0 + $0xe0] sm:$0xff]
  %v48 = vld [vmem:[%s0 + $0xe8] sm:$0xff]
  %v49 = vld [vmem:[%s0 + $0xf0] sm:$0xff]
  %v50 = vld [vmem:[%s0 + $0xf8] sm:$0xf]
  %v51 = vld [vmem:[%s0 + $0xfc] sm:$0xff]
  %v52 = vld [vmem:[%s0 + $0x104] sm:$0xff]
  %v53 = vld [vmem:[%s0 + $0x10c] sm:$0xff]
  %v54 = vld [vmem:[%s0 + $0x114] sm:$0xf]
  %v55 = vld [vmem:[%s0 + $0x118] sm:$0xff]
  %v56 = vld [vmem:[%s0 + $0x120] sm:$0xff]
  %v57 = vld [vmem:[%s0 + $0x128] sm:$0xff]
  %v58 = vld [vmem:[%s0 + $0x130] sm:$0xf]
  %v59 = vld [vmem:[%s0 + $0x134] sm:$0xff]
  %v60 = vld [vmem:[%s0 + $0x13c] sm:$0xff]
  %v61 = vld [vmem:[%s0 + $0x144] sm:$0xff]
  %v62 = vld [vmem:[%s0 + $0x14c] sm:$0xf]
  %v63 = vld [vmem:[%s0 + $0x150] sm:$0xff]
  %v64 = vld [vmem:[%s0 + $0x158] sm:$0xff]
  %v65 = vld [vmem:[%s0 + $0x160] sm:$0xff]
  %v66 = vld [vmem:[%s0 + $0x168] sm:$0xf]
  %v67 = vld [vmem:[%s0 + $0x16c] sm:$0xff]
  %v68 = vld [vmem:[%s0 + $0x174] sm:$0xff]
  %v69 = vld [vmem:[%s0 + $0x17c] sm:$0xff]
  %v70 = vld [vmem:[%s0 + $0x184] sm:$0xf]
  %v71 = vld [vmem:[%s0 + $0x188] sm:$0xff]
  %v72 = vld [vmem:[%s0 + $0x190] sm:$0xff]
  %v73 = vld [vmem:[%s0 + $0x198] sm:$0xff]
  %v74 = vld [vmem:[%s0 + $0x1a0] sm:$0xf]
  %v75 = vld [vmem:[%s0 + $0x1a4] sm:$0xff]
  %v76 = vld [vmem:[%s0 + $0x1ac] sm:$0xff]
  %v77 = vld [vmem:[%s0 + $0x1b4] sm:$0xff]
  %v78 = vld [vmem:[%s0 + $0x1bc] sm:$0xf]
  %v79 = vld [vmem:[%s0 + $0x1c0] sm:$0xff]
  %v80 = vld [vmem:[%s0 + $0x1c8] sm:$0xff]
  %v81 = vld [vmem:[%s0 + $0x1d0] sm:$0xff]
  %v82 = vld [vmem:[%s0 + $0x1d8] sm:$0xf]
  %v83 = vld [vmem:[%s0 + $0x1dc] sm:$0xff]
  %v84 = vld [vmem:[%s0 + $0x1e4] sm:$0xff]
  %v85 = vld [vmem:[%s0 + $0x1ec] sm:$0xff]
  %v86 = vld [vmem:[%s0 + $0x1f4] sm:$0xf]
  %v87 = vld [vmem:[%s0 + $0x1f8] sm:$0xff]
  %v88 = vld [vmem:[%s0 + $0x200] sm:$0xff]
  %v89 = vld [vmem:[%s0 + $0x208] sm:$0xff]
  %v90 = vld [vmem:[%s0 + $0x210] sm:$0xf]
  %v91 = vld [vmem:[%s0 + $0x214] sm:$0xff]
  %v92 = vld [vmem:[%s0 + $0x21c] sm:$0xff]
  %v93 = vld [vmem:[%s0 + $0x224] sm:$0xff]
  %v94 = vld [vmem:[%s0 + $0x22c] sm:$0xf]
  %v95 = vld [vmem:[%s0 + $0x230] sm:$0xff]
  %v96 = vld [vmem:[%s0 + $0x238] sm:$0xff]
  %v97 = vld [vmem:[%s0 + $0x240] sm:$0xff]
  %v98 = vld [vmem:[%s0 + $0x248] sm:$0xf]
  %v99 = vld [vmem:[%s0 + $0x24c] sm:$0xff]
  %v100 = vld [vmem:[%s0 + $0x254] sm:$0xff]
  %v101 = vld [vmem:[%s0 + $0x25c] sm:$0xff]
  %v102 = vld [vmem:[%s0 + $0x264] sm:$0xf]
  %v103 = vld [vmem:[%s0 + $0x268] sm:$0xff]
  %v104 = vld [vmem:[%s0 + $0x270] sm:$0xff]
  %v105 = vld [vmem:[%s0 + $0x278] sm:$0xff]
  %v106 = vld [vmem:[%s0 + $0x280] sm:$0xf]
  %v107 = vld [vmem:[%s0 + $0x284] sm:$0xff]
  %v108 = vld [vmem:[%s0 + $0x28c] sm:$0xff]
  %v109 = vld [vmem:[%s0 + $0x294] sm:$0xff]
  %v110 = vld [vmem:[%s0 + $0x29c] sm:$0xf]
  %v111 = vld [vmem:[%s0 + $0x2a0] sm:$0xff]
  %v112 = vld [vmem:[%s0 + $0x2a8] sm:$0xff]
  %v113 = vld [vmem:[%s0 + $0x2b0] sm:$0xff]
  %v114 = vld [vmem:[%s0 + $0x2b8] sm:$0xf]
  %v115 = vld [vmem:[%s0 + $0x2bc] sm:$0xff]
  %v116 = vld [vmem:[%s0 + $0x2c4] sm:$0xff]
  %v117 = vld [vmem:[%s0 + $0x2cc] sm:$0xff]
  %v118 = vld [vmem:[%s0 + $0x2d4] sm:$0xf]
  %v119 = vld [vmem:[%s0 + $0x2d8] sm:$0xff]
  %v120 = vld [vmem:[%s0 + $0x2e0] sm:$0xff]
  %v121 = vld [vmem:[%s0 + $0x2e8] sm:$0xff]
  %v122 = vld [vmem:[%s0 + $0x2f0] sm:$0xf]
  %v123 = vld [vmem:[%s0 + $0x2f4] sm:$0xff]
  %v124 = vld [vmem:[%s0 + $0x2fc] sm:$0xff]
  %v125 = vld [vmem:[%s0 + $0x304] sm:$0xff]
  %v126 = vld [vmem:[%s0 + $0x30c] sm:$0xf]
  %v127 = vld [vmem:[%s0 + $0x310] sm:$0xff]
  %v128 = vld [vmem:[%s0 + $0x318] sm:$0xff]
  %v129 = vld [vmem:[%s0 + $0x320] sm:$0xff]
  %v130 = vld [vmem:[%s0 + $0x328] sm:$0xf]
  %v131 = vld [vmem:[%s0 + $0x32c] sm:$0xff]
  %v132 = vld [vmem:[%s0 + $0x334] sm:$0xff]
  %v133 = vld [vmem:[%s0 + $0x33c] sm:$0xff]
  %v134 = vld [vmem:[%s0 + $0x344] sm:$0xf]
  %v135 = vld [vmem:[%s0 + $0x348] sm:$0xff]
  %v136 = vld [vmem:[%s0 + $0x350] sm:$0xff]
  %v137 = vld [vmem:[%s0 + $0x358] sm:$0xff]
  %v138 = vld [vmem:[%s0 + $0x360] sm:$0xf]
  %v139 = vld [vmem:[%s0 + $0x364] sm:$0xff]
  %v140 = vld [vmem:[%s0 + $0x36c] sm:$0xff]
  %v141 = vld [vmem:[%s0 + $0x374] sm:$0xff]
  %v142 = vld [vmem:[%s0 + $0x37c] sm:$0xf]
  %v143 = vld [vmem:[%s0 + $0x380] sm:$0xff]
  %v144 = vld [vmem:[%s0 + $0x388] sm:$0xff]
  %v145 = vld [vmem:[%s0 + $0x390] sm:$0xff]
  %v146 = vld [vmem:[%s0 + $0x398] sm:$0xf]
  %v147 = vld [vmem:[%s0 + $0x39c] sm:$0xff]
  %v148 = vld [vmem:[%s0 + $0x3a4] sm:$0xff]
  %v149 = vld [vmem:[%s0 + $0x3ac] sm:$0xff]
  %v150 = vld [vmem:[%s0 + $0x3b4] sm:$0xf]
  %v151 = vld [vmem:[%s0 + $0x3b8] sm:$0xff]
  %v152 = vld [vmem:[%s0 + $0x3c0] sm:$0xff]
  %v153 = vld [vmem:[%s0 + $0x3c8] sm:$0xff]
  %v154 = vld [vmem:[%s0 + $0x3d0] sm:$0xf]
  %v155 = vld [vmem:[%s0 + $0x3d4] sm:$0xff]
  %v156 = vld [vmem:[%s0 + $0x3dc] sm:$0xff]
  %v157 = vld [vmem:[%s0 + $0x3e4] sm:$0xff]
  %v158 = vld [vmem:[%s0 + $0x3ec] sm:$0xf]
  %v159 = vld [vmem:[%s0 + $0x3f0] sm:$0xff]
  %v160 = vld [vmem:[%s0 + $0x3f8] sm:$0xff]
  %v161 = vld [vmem:[%s0 + $0x400] sm:$0xff]
  %v162 = vld [vmem:[%s0 + $0x408] sm:$0xf]
  %v163 = vld [vmem:[%s0 + $0x40c] sm:$0xff]
  %v164 = vld [vmem:[%s0 + $0x414] sm:$0xff]
  %v165 = vld [vmem:[%s0 + $0x41c] sm:$0xff]
  %v166 = vld [vmem:[%s0 + $0x424] sm:$0xf]
  %v167 = vld [vmem:[%s0 + $0x428] sm:$0xff]
  %v168 = vld [vmem:[%s0 + $0x430] sm:$0xff]
  %v169 = vld [vmem:[%s0 + $0x438] sm:$0xff]
  %v170 = vld [vmem:[%s0 + $0x440] sm:$0xf]
  %v171 = vld [vmem:[%s0 + $0x444] sm:$0xff]
  %v172 = vld [vmem:[%s0 + $0x44c] sm:$0xff]
  %v173 = vld [vmem:[%s0 + $0x454] sm:$0xff]
  %v174 = vld [vmem:[%s0 + $0x45c] sm:$0xf]
  %v175 = vld [vmem:[%s1] sm:$0xf]
  %v176 = vld [vmem:[%s1 + $0x4] sm:$0xf]
  %v177 = vld [vmem:[%s1 + $0x8] sm:$0xf]
  %v178 = vld [vmem:[%s1 + $0xc] sm:$0xf]
  %v179 = vld [vmem:[%s1 + $0x10] sm:$0xf]
  %v180 = vld [vmem:[%s1 + $0x14] sm:$0xf]
  %v181 = vld [vmem:[%s1 + $0x18] sm:$0xf]
  %v182 = vld [vmem:[%s1 + $0x1c] sm:$0xf]
  %v183 = vld [vmem:[%s1 + $0x20] sm:$0xf]
  %v184 = vld [vmem:[%s1 + $0x24] sm:$0xf]
  %v185 = vld [vmem:[%s1 + $0x28] sm:$0xf]
  %v186 = vld [vmem:[%s1 + $0x2c] sm:$0xf]
  %v187 = vld [vmem:[%s1 + $0x30] sm:$0xf]
  %v188 = vld [vmem:[%s1 + $0x34] sm:$0xf]
  %v189 = vld [vmem:[%s1 + $0x38] sm:$0xf]
  %v190 = vld [vmem:[%s1 + $0x3c] sm:$0xf]
  %v191 = vld [vmem:[%s1 + $0x40] sm:$0xf]
  %v192 = vld [vmem:[%s1 + $0x44] sm:$0xf]
  %v193 = vld [vmem:[%s1 + $0x48] sm:$0xf]
  %v194 = vld [vmem:[%s1 + $0x4c] sm:$0xf]
  %v195 = vld [vmem:[%s1 + $0x50] sm:$0xf]
  %v196 = vld [vmem:[%s1 + $0x54] sm:$0xf]
  %v197 = vld [vmem:[%s1 + $0x58] sm:$0xf]
  %v198 = vld [vmem:[%s1 + $0x5c] sm:$0xf]
  %v199 = vld [vmem:[%s1 + $0x60] sm:$0xf]
  %v200 = vld [vmem:[%s1 + $0x64] sm:$0xf]
  %v201 = vld [vmem:[%s1 + $0x68] sm:$0xf]
  %v202 = vld [vmem:[%s1 + $0x6c] sm:$0xf]
  %v203 = vld [vmem:[%s1 + $0x70] sm:$0xf]
  %v204 = vld [vmem:[%s1 + $0x74] sm:$0xf]
  %v205 = vld [vmem:[%s1 + $0x78] sm:$0xf]
  %v206 = vld [vmem:[%s1 + $0x7c] sm:$0xf]
  %v207 = vld [vmem:[%s1 + $0x80] sm:$0xf]
  %v208 = vld [vmem:[%s1 + $0x84] sm:$0xf]
  %v209 = vld [vmem:[%s1 + $0x88] sm:$0xf]
  %v210 = vld [vmem:[%s1 + $0x8c] sm:$0xf]
  %v211 = vld [vmem:[%s1 + $0x90] sm:$0xf]
  %v212 = vld [vmem:[%s1 + $0x94] sm:$0xf]
  %v213 = vld [vmem:[%s1 + $0x98] sm:$0xf]
  %v214 = vld [vmem:[%s1 + $0x9c] sm:$0xf]
  %v215 = vld [vmem:[%s1 + $0xa0] sm:$0xf]
  %v216 = vld [vmem:[%s1 + $0xa4] sm:$0xf]
  %v217 = vld [vmem:[%s1 + $0xa8] sm:$0xf]
  %v218 = vld [vmem:[%s1 + $0xac] sm:$0xf]
  %v219 = vld [vmem:[%s1 + $0xb0] sm:$0xf]
  %v220 = vld [vmem:[%s1 + $0xb4] sm:$0xf]
  %v221 = vld [vmem:[%s1 + $0xb8] sm:$0xf]
  %v222 = vld [vmem:[%s1 + $0xbc] sm:$0xf]
  %v223 = vld [vmem:[%s1 + $0xc0] sm:$0xf]
  %v224 = vld [vmem:[%s1 + $0xc4] sm:$0xf]
  %v225 = vld [vmem:[%s1 + $0xc8] sm:$0xf]
  %v226 = vld [vmem:[%s1 + $0xcc] sm:$0xf]
  %v227 = vld [vmem:[%s1 + $0xd0] sm:$0xf]
  %v228 = vld [vmem:[%s1 + $0xd4] sm:$0xf]
  %v229 = vld [vmem:[%s1 + $0xd8] sm:$0xf]
  %v230 = vld [vmem:[%s1 + $0xdc] sm:$0xf]
  %v231 = vld [vmem:[%s1 + $0xe0] sm:$0xf]
  %v232 = vld [vmem:[%s1 + $0xe4] sm:$0xf]
  %v233 = vld [vmem:[%s1 + $0xe8] sm:$0xf]
  %v234 = vld [vmem:[%s1 + $0xec] sm:$0xf]
  %v235 = vld [vmem:[%s1 + $0xf0] sm:$0xf]
  %v236 = vld [vmem:[%s1 + $0xf4] sm:$0xf]
  %v237 = vld [vmem:[%s1 + $0xf8] sm:$0xf]
  %v238 = vld [vmem:[%s1 + $0xfc] sm:$0xf]
  %v239 = vld [vmem:[%s1 + $0x100] sm:$0xf]
  %v240 = vld [vmem:[%s1 + $0x104] sm:$0xf]
  %v241 = vld [vmem:[%s1 + $0x108] sm:$0xf]
  %v242 = vld [vmem:[%s1 + $0x10c] sm:$0xf]
  %v243 = vld [vmem:[%s1 + $0x110] sm:$0xf]
  %v244 = vld [vmem:[%s1 + $0x114] sm:$0xf]
  %v245 = vld [vmem:[%s1 + $0x118] sm:$0xf]
  %v246 = vld [vmem:[%s1 + $0x11c] sm:$0xf]
  %v247 = vld [vmem:[%s1 + $0x120] sm:$0xf]
  %v248 = vld [vmem:[%s1 + $0x124] sm:$0xf]
  %v249 = vld [vmem:[%s1 + $0x128] sm:$0xf]
  %v250 = vld [vmem:[%s1 + $0x12c] sm:$0xf]
  %v251 = vld [vmem:[%s1 + $0x130] sm:$0xf]
  %v252 = vld [vmem:[%s1 + $0x134] sm:$0xf]
  %v253 = vld [vmem:[%s1 + $0x138] sm:$0xf]
  %v254 = vld [vmem:[%s1 + $0x13c] sm:$0xf]
  %v255 = vld [vmem:[%s1 + $0x140] sm:$0xf]
  %v256 = vld [vmem:[%s1 + $0x144] sm:$0xf]
  %v257 = vld [vmem:[%s1 + $0x148] sm:$0xf]
  %v258 = vld [vmem:[%s1 + $0x14c] sm:$0xf]
  %v259 = vld [vmem:[%s1 + $0x150] sm:$0xf]
  %v260 = vld [vmem:[%s1 + $0x154] sm:$0xf]
  %v261 = vld [vmem:[%s1 + $0x158] sm:$0xf]
  %v262 = vld [vmem:[%s1 + $0x15c] sm:$0xf]
  %v263 = vld [vmem:[%s1 + $0x160] sm:$0xf]
  %v264 = vld [vmem:[%s1 + $0x164] sm:$0xf]
  %v265 = vld [vmem:[%s1 + $0x168] sm:$0xf]
  %v266 = vld [vmem:[%s1 + $0x16c] sm:$0xf]
  %v267 = vld [vmem:[%s1 + $0x170] sm:$0xf]
  %v268 = vld [vmem:[%s1 + $0x174] sm:$0xf]
  %v269 = vld [vmem:[%s1 + $0x178] sm:$0xf]
  %v270 = vld [vmem:[%s1 + $0x17c] sm:$0xf]
  %v271 = vld [vmem:[%s1 + $0x180] sm:$0xf]
  %v272 = vld [vmem:[%s1 + $0x184] sm:$0xf]
  %v273 = vld [vmem:[%s1 + $0x188] sm:$0xf]
  %v274 = vld [vmem:[%s1 + $0x18c] sm:$0xf]
  %v435 = vunpack.c.l.b16 %v15
  %v436 = vunpack.c.h.b16 %v15
  %v437 = vunpack.c.l.b16 %v16
  %v438 = vunpack.c.h.b16 %v16
  %v439 = vunpack.c.l.b16 %v17
  %v440 = vunpack.c.h.b16 %v17
  %v441 = vunpack.c.l.b16 %v18
  %v442 = vunpack.c.l.b16 %v19
  %v443 = vunpack.c.h.b16 %v19
  %v444 = vunpack.c.l.b16 %v20
  %v445 = vunpack.c.h.b16 %v20
  %v446 = vunpack.c.l.b16 %v21
  %v447 = vunpack.c.h.b16 %v21
  %v448 = vunpack.c.l.b16 %v22
  %v449 = vunpack.c.l.b16 %v23
  %v450 = vunpack.c.h.b16 %v23
  %v451 = vunpack.c.l.b16 %v24
  %v452 = vunpack.c.h.b16 %v24
  %v453 = vunpack.c.l.b16 %v25
  %v454 = vunpack.c.h.b16 %v25
  %v455 = vunpack.c.l.b16 %v26
  %v456 = vunpack.c.l.b16 %v27
  %v457 = vunpack.c.h.b16 %v27
  %v458 = vunpack.c.l.b16 %v28
  %v459 = vunpack.c.h.b16 %v28
  %v460 = vunpack.c.l.b16 %v29
  %v461 = vunpack.c.h.b16 %v29
  %v462 = vunpack.c.l.b16 %v30
  %v463 = vunpack.c.l.b16 %v31
  %v464 = vunpack.c.h.b16 %v31
  %v465 = vunpack.c.l.b16 %v32
  %v466 = vunpack.c.h.b16 %v32
  %v467 = vunpack.c.l.b16 %v33
  %v468 = vunpack.c.h.b16 %v33
  %v469 = vunpack.c.l.b16 %v34
  %v470 = vunpack.c.l.b16 %v35
  %v471 = vunpack.c.h.b16 %v35
  %v472 = vunpack.c.l.b16 %v36
  %v473 = vunpack.c.h.b16 %v36
  %v474 = vunpack.c.l.b16 %v37
  %v475 = vunpack.c.h.b16 %v37
  %v476 = vunpack.c.l.b16 %v38
  %v477 = vunpack.c.l.b16 %v39
  %v478 = vunpack.c.h.b16 %v39
  %v479 = vunpack.c.l.b16 %v40
  %v480 = vunpack.c.h.b16 %v40
  %v481 = vunpack.c.l.b16 %v41
  %v482 = vunpack.c.h.b16 %v41
  %v483 = vunpack.c.l.b16 %v42
  %v484 = vunpack.c.l.b16 %v43
  %v485 = vunpack.c.h.b16 %v43
  %v486 = vunpack.c.l.b16 %v44
  %v487 = vunpack.c.h.b16 %v44
  %v488 = vunpack.c.l.b16 %v45
  %v489 = vunpack.c.h.b16 %v45
  %v490 = vunpack.c.l.b16 %v46
  %v491 = vunpack.c.l.b16 %v47
  %v492 = vunpack.c.h.b16 %v47
  %v493 = vunpack.c.l.b16 %v48
  %v494 = vunpack.c.h.b16 %v48
  %v495 = vunpack.c.l.b16 %v49
  %v496 = vunpack.c.h.b16 %v49
  %v497 = vunpack.c.l.b16 %v50
  %v498 = vunpack.c.l.b16 %v51
  %v499 = vunpack.c.h.b16 %v51
  %v500 = vunpack.c.l.b16 %v52
  %v501 = vunpack.c.h.b16 %v52
  %v502 = vunpack.c.l.b16 %v53
  %v503 = vunpack.c.h.b16 %v53
  %v504 = vunpack.c.l.b16 %v54
  %v505 = vunpack.c.l.b16 %v55
  %v506 = vunpack.c.h.b16 %v55
  %v507 = vunpack.c.l.b16 %v56
  %v508 = vunpack.c.h.b16 %v56
  %v509 = vunpack.c.l.b16 %v57
  %v510 = vunpack.c.h.b16 %v57
  %v511 = vunpack.c.l.b16 %v58
  %v512 = vunpack.c.l.b16 %v59
  %v513 = vunpack.c.h.b16 %v59
  %v514 = vunpack.c.l.b16 %v60
  %v515 = vunpack.c.h.b16 %v60
  %v516 = vunpack.c.l.b16 %v61
  %v517 = vunpack.c.h.b16 %v61
  %v518 = vunpack.c.l.b16 %v62
  %v519 = vunpack.c.l.b16 %v63
  %v520 = vunpack.c.h.b16 %v63
  %v521 = vunpack.c.l.b16 %v64
  %v522 = vunpack.c.h.b16 %v64
  %v523 = vunpack.c.l.b16 %v65
  %v524 = vunpack.c.h.b16 %v65
  %v525 = vunpack.c.l.b16 %v66
  %v526 = vunpack.c.l.b16 %v67
  %v527 = vunpack.c.h.b16 %v67
  %v528 = vunpack.c.l.b16 %v68
  %v529 = vunpack.c.h.b16 %v68
  %v530 = vunpack.c.l.b16 %v69
  %v531 = vunpack.c.h.b16 %v69
  %v532 = vunpack.c.l.b16 %v70
  %v533 = vunpack.c.l.b16 %v71
  %v534 = vunpack.c.h.b16 %v71
  %v535 = vunpack.c.l.b16 %v72
  %v536 = vunpack.c.h.b16 %v72
  %v537 = vunpack.c.l.b16 %v73
  %v538 = vunpack.c.h.b16 %v73
  %v539 = vunpack.c.l.b16 %v74
  %v540 = vunpack.c.l.b16 %v75
  %v541 = vunpack.c.h.b16 %v75
  %v542 = vunpack.c.l.b16 %v76
  %v543 = vunpack.c.h.b16 %v76
  %v544 = vunpack.c.l.b16 %v77
  %v545 = vunpack.c.h.b16 %v77
  %v546 = vunpack.c.l.b16 %v78
  %v547 = vunpack.c.l.b16 %v79
  %v548 = vunpack.c.h.b16 %v79
  %v549 = vunpack.c.l.b16 %v80
  %v550 = vunpack.c.h.b16 %v80
  %v551 = vunpack.c.l.b16 %v81
  %v552 = vunpack.c.h.b16 %v81
  %v553 = vunpack.c.l.b16 %v82
  %v554 = vunpack.c.l.b16 %v83
  %v555 = vunpack.c.h.b16 %v83
  %v556 = vunpack.c.l.b16 %v84
  %v557 = vunpack.c.h.b16 %v84
  %v558 = vunpack.c.l.b16 %v85
  %v559 = vunpack.c.h.b16 %v85
  %v560 = vunpack.c.l.b16 %v86
  %v561 = vunpack.c.l.b16 %v87
  %v562 = vunpack.c.h.b16 %v87
  %v563 = vunpack.c.l.b16 %v88
  %v564 = vunpack.c.h.b16 %v88
  %v565 = vunpack.c.l.b16 %v89
  %v566 = vunpack.c.h.b16 %v89
  %v567 = vunpack.c.l.b16 %v90
  %v568 = vunpack.c.l.b16 %v91
  %v569 = vunpack.c.h.b16 %v91
  %v570 = vunpack.c.l.b16 %v92
  %v571 = vunpack.c.h.b16 %v92
  %v572 = vunpack.c.l.b16 %v93
  %v573 = vunpack.c.h.b16 %v93
  %v574 = vunpack.c.l.b16 %v94
  %v575 = vunpack.c.l.b16 %v95
  %v576 = vunpack.c.h.b16 %v95
  %v577 = vunpack.c.l.b16 %v96
  %v578 = vunpack.c.h.b16 %v96
  %v579 = vunpack.c.l.b16 %v97
  %v580 = vunpack.c.h.b16 %v97
  %v581 = vunpack.c.l.b16 %v98
  %v582 = vunpack.c.l.b16 %v99
  %v583 = vunpack.c.h.b16 %v99
  %v584 = vunpack.c.l.b16 %v100
  %v585 = vunpack.c.h.b16 %v100
  %v586 = vunpack.c.l.b16 %v101
  %v587 = vunpack.c.h.b16 %v101
  %v588 = vunpack.c.l.b16 %v102
  %v589 = vunpack.c.l.b16 %v103
  %v590 = vunpack.c.h.b16 %v103
  %v591 = vunpack.c.l.b16 %v104
  %v592 = vunpack.c.h.b16 %v104
  %v593 = vunpack.c.l.b16 %v105
  %v594 = vunpack.c.h.b16 %v105
  %v595 = vunpack.c.l.b16 %v106
  %v596 = vunpack.c.l.b16 %v107
  %v597 = vunpack.c.h.b16 %v107
  %v598 = vunpack.c.l.b16 %v108
  %v599 = vunpack.c.h.b16 %v108
  %v600 = vunpack.c.l.b16 %v109
  %v601 = vunpack.c.h.b16 %v109
  %v602 = vunpack.c.l.b16 %v110
  %v603 = vunpack.c.l.b16 %v111
  %v604 = vunpack.c.h.b16 %v111
  %v605 = vunpack.c.l.b16 %v112
  %v606 = vunpack.c.h.b16 %v112
  %v607 = vunpack.c.l.b16 %v113
  %v608 = vunpack.c.h.b16 %v113
  %v609 = vunpack.c.l.b16 %v114
  %v610 = vunpack.c.l.b16 %v115
  %v611 = vunpack.c.h.b16 %v115
  %v612 = vunpack.c.l.b16 %v116
  %v613 = vunpack.c.h.b16 %v116
  %v614 = vunpack.c.l.b16 %v117
  %v615 = vunpack.c.h.b16 %v117
  %v616 = vunpack.c.l.b16 %v118
  %v617 = vunpack.c.l.b16 %v119
  %v618 = vunpack.c.h.b16 %v119
  %v619 = vunpack.c.l.b16 %v120
  %v620 = vunpack.c.h.b16 %v120
  %v621 = vunpack.c.l.b16 %v121
  %v622 = vunpack.c.h.b16 %v121
  %v623 = vunpack.c.l.b16 %v122
  %v624 = vunpack.c.l.b16 %v123
  %v625 = vunpack.c.h.b16 %v123
  %v626 = vunpack.c.l.b16 %v124
  %v627 = vunpack.c.h.b16 %v124
  %v628 = vunpack.c.l.b16 %v125
  %v629 = vunpack.c.h.b16 %v125
  %v630 = vunpack.c.l.b16 %v126
  %v631 = vunpack.c.l.b16 %v127
  %v632 = vunpack.c.h.b16 %v127
  %v633 = vunpack.c.l.b16 %v128
  %v634 = vunpack.c.h.b16 %v128
  %v635 = vunpack.c.l.b16 %v129
  %v636 = vunpack.c.h.b16 %v129
  %v637 = vunpack.c.l.b16 %v130
  %v638 = vunpack.c.l.b16 %v131
  %v639 = vunpack.c.h.b16 %v131
  %v640 = vunpack.c.l.b16 %v132
  %v641 = vunpack.c.h.b16 %v132
  %v642 = vunpack.c.l.b16 %v133
  %v643 = vunpack.c.h.b16 %v133
  %v644 = vunpack.c.l.b16 %v134
  %v645 = vunpack.c.l.b16 %v135
  %v646 = vunpack.c.h.b16 %v135
  %v647 = vunpack.c.l.b16 %v136
  %v648 = vunpack.c.h.b16 %v136
  %v649 = vunpack.c.l.b16 %v137
  %v650 = vunpack.c.h.b16 %v137
  %v651 = vunpack.c.l.b16 %v138
  %v652 = vunpack.c.l.b16 %v139
  %v653 = vunpack.c.h.b16 %v139
  %v654 = vunpack.c.l.b16 %v140
  %v655 = vunpack.c.h.b16 %v140
  %v656 = vunpack.c.l.b16 %v141
  %v657 = vunpack.c.h.b16 %v141
  %v658 = vunpack.c.l.b16 %v142
  %v659 = vunpack.c.l.b16 %v143
  %v660 = vunpack.c.h.b16 %v143
  %v661 = vunpack.c.l.b16 %v144
  %v662 = vunpack.c.h.b16 %v144
  %v663 = vunpack.c.l.b16 %v145
  %v664 = vunpack.c.h.b16 %v145
  %v665 = vunpack.c.l.b16 %v146
  %v666 = vunpack.c.l.b16 %v147
  %v667 = vunpack.c.h.b16 %v147
  %v668 = vunpack.c.l.b16 %v148
  %v669 = vunpack.c.h.b16 %v148
  %v670 = vunpack.c.l.b16 %v149
  %v671 = vunpack.c.h.b16 %v149
  %v672 = vunpack.c.l.b16 %v150
  %v673 = vunpack.c.l.b16 %v151
  %v674 = vunpack.c.h.b16 %v151
  %v675 = vunpack.c.l.b16 %v152
  %v676 = vunpack.c.h.b16 %v152
  %v677 = vunpack.c.l.b16 %v153
  %v678 = vunpack.c.h.b16 %v153
  %v679 = vunpack.c.l.b16 %v154
  %v680 = vunpack.c.l.b16 %v155
  %v681 = vunpack.c.h.b16 %v155
  %v682 = vunpack.c.l.b16 %v156
  %v683 = vunpack.c.h.b16 %v156
  %v684 = vunpack.c.l.b16 %v157
  %v685 = vunpack.c.h.b16 %v157
  %v686 = vunpack.c.l.b16 %v158
  %v687 = vunpack.c.l.b16 %v159
  %v688 = vunpack.c.h.b16 %v159
  %v689 = vunpack.c.l.b16 %v160
  %v690 = vunpack.c.h.b16 %v160
  %v691 = vunpack.c.l.b16 %v161
  %v692 = vunpack.c.h.b16 %v161
  %v693 = vunpack.c.l.b16 %v162
  %v694 = vunpack.c.l.b16 %v163
  %v695 = vunpack.c.h.b16 %v163
  %v696 = vunpack.c.l.b16 %v164
  %v697 = vunpack.c.h.b16 %v164
  %v698 = vunpack.c.l.b16 %v165
  %v699 = vunpack.c.h.b16 %v165
  %v700 = vunpack.c.l.b16 %v166
  %v701 = vunpack.c.l.b16 %v167
  %v702 = vunpack.c.h.b16 %v167
  %v703 = vunpack.c.l.b16 %v168
  %v704 = vunpack.c.h.b16 %v168
  %v705 = vunpack.c.l.b16 %v169
  %v706 = vunpack.c.h.b16 %v169
  %v707 = vunpack.c.l.b16 %v170
  %v708 = vunpack.c.l.b16 %v171
  %v709 = vunpack.c.h.b16 %v171
  %v710 = vunpack.c.l.b16 %v172
  %v711 = vunpack.c.h.b16 %v172
  %v712 = vunpack.c.l.b16 %v173
  %v713 = vunpack.c.h.b16 %v173
  %v714 = vunpack.c.l.b16 %v174
  %v715 = vpack.c.b16 %v442, %v435
  %v716 = vpack.c.b16 %v443, %v436
  %v717 = vpack.c.b16 %v444, %v437
  %v718 = vpack.c.b16 %v445, %v438
  %v719 = vpack.c.b16 %v446, %v439
  %v720 = vpack.c.b16 %v447, %v440
  %v721 = vpack.c.b16 %v448, %v441
  %v722 = vpack.c.b16 %v456, %v449
  %v723 = vpack.c.b16 %v457, %v450
  %v724 = vpack.c.b16 %v458, %v451
  %v725 = vpack.c.b16 %v459, %v452
  %v726 = vpack.c.b16 %v460, %v453
  %v727 = vpack.c.b16 %v461, %v454
  %v728 = vpack.c.b16 %v462, %v455
  %v729 = vpack.c.b16 %v470, %v463
  %v730 = vpack.c.b16 %v471, %v464
  %v731 = vpack.c.b16 %v472, %v465
  %v732 = vpack.c.b16 %v473, %v466
  %v733 = vpack.c.b16 %v474, %v467
  %v734 = vpack.c.b16 %v475, %v468
  %v735 = vpack.c.b16 %v476, %v469
  %v736 = vpack.c.b16 %v484, %v477
  %v737 = vpack.c.b16 %v485, %v478
  %v738 = vpack.c.b16 %v486, %v479
  %v739 = vpack.c.b16 %v487, %v480
  %v740 = vpack.c.b16 %v488, %v481
  %v741 = vpack.c.b16 %v489, %v482
  %v742 = vpack.c.b16 %v490, %v483
  %v743 = vpack.c.b16 %v498, %v491
  %v744 = vpack.c.b16 %v499, %v492
  %v745 = vpack.c.b16 %v500, %v493
  %v746 = vpack.c.b16 %v501, %v494
  %v747 = vpack.c.b16 %v502, %v495
  %v748 = vpack.c.b16 %v503, %v496
  %v749 = vpack.c.b16 %v504, %v497
  %v750 = vpack.c.b16 %v512, %v505
  %v751 = vpack.c.b16 %v513, %v506
  %v752 = vpack.c.b16 %v514, %v507
  %v753 = vpack.c.b16 %v515, %v508
  %v754 = vpack.c.b16 %v516, %v509
  %v755 = vpack.c.b16 %v517, %v510
  %v756 = vpack.c.b16 %v518, %v511
  %v757 = vpack.c.b16 %v526, %v519
  %v758 = vpack.c.b16 %v527, %v520
  %v759 = vpack.c.b16 %v528, %v521
  %v760 = vpack.c.b16 %v529, %v522
  %v761 = vpack.c.b16 %v530, %v523
  %v762 = vpack.c.b16 %v531, %v524
  %v763 = vpack.c.b16 %v532, %v525
  %v764 = vpack.c.b16 %v540, %v533
  %v765 = vpack.c.b16 %v541, %v534
  %v766 = vpack.c.b16 %v542, %v535
  %v767 = vpack.c.b16 %v543, %v536
  %v768 = vpack.c.b16 %v544, %v537
  %v769 = vpack.c.b16 %v545, %v538
  %v770 = vpack.c.b16 %v546, %v539
  %v771 = vpack.c.b16 %v554, %v547
  %v772 = vpack.c.b16 %v555, %v548
  %v773 = vpack.c.b16 %v556, %v549
  %v774 = vpack.c.b16 %v557, %v550
  %v775 = vpack.c.b16 %v558, %v551
  %v776 = vpack.c.b16 %v559, %v552
  %v777 = vpack.c.b16 %v560, %v553
  %v778 = vpack.c.b16 %v568, %v561
  %v779 = vpack.c.b16 %v569, %v562
  %v780 = vpack.c.b16 %v570, %v563
  %v781 = vpack.c.b16 %v571, %v564
  %v782 = vpack.c.b16 %v572, %v565
  %v783 = vpack.c.b16 %v573, %v566
  %v784 = vpack.c.b16 %v574, %v567
  %v785 = vpack.c.b16 %v582, %v575
  %v786 = vpack.c.b16 %v583, %v576
  %v787 = vpack.c.b16 %v584, %v577
  %v788 = vpack.c.b16 %v585, %v578
  %v789 = vpack.c.b16 %v586, %v579
  %v790 = vpack.c.b16 %v587, %v580
  %v791 = vpack.c.b16 %v588, %v581
  %v792 = vpack.c.b16 %v596, %v589
  %v793 = vpack.c.b16 %v597, %v590
  %v794 = vpack.c.b16 %v598, %v591
  %v795 = vpack.c.b16 %v599, %v592
  %v796 = vpack.c.b16 %v600, %v593
  %v797 = vpack.c.b16 %v601, %v594
  %v798 = vpack.c.b16 %v602, %v595
  %v799 = vpack.c.b16 %v610, %v603
  %v800 = vpack.c.b16 %v611, %v604
  %v801 = vpack.c.b16 %v612, %v605
  %v802 = vpack.c.b16 %v613, %v606
  %v803 = vpack.c.b16 %v614, %v607
  %v804 = vpack.c.b16 %v615, %v608
  %v805 = vpack.c.b16 %v616, %v609
  %v806 = vpack.c.b16 %v624, %v617
  %v807 = vpack.c.b16 %v625, %v618
  %v808 = vpack.c.b16 %v626, %v619
  %v809 = vpack.c.b16 %v627, %v620
  %v810 = vpack.c.b16 %v628, %v621
  %v811 = vpack.c.b16 %v629, %v622
  %v812 = vpack.c.b16 %v630, %v623
  %v813 = vpack.c.b16 %v638, %v631
  %v814 = vpack.c.b16 %v639, %v632
  %v815 = vpack.c.b16 %v640, %v633
  %v816 = vpack.c.b16 %v641, %v634
  %v817 = vpack.c.b16 %v642, %v635
  %v818 = vpack.c.b16 %v643, %v636
  %v819 = vpack.c.b16 %v644, %v637
  %v820 = vpack.c.b16 %v652, %v645
  %v821 = vpack.c.b16 %v653, %v646
  %v822 = vpack.c.b16 %v654, %v647
  %v823 = vpack.c.b16 %v655, %v648
  %v824 = vpack.c.b16 %v656, %v649
  %v825 = vpack.c.b16 %v657, %v650
  %v826 = vpack.c.b16 %v658, %v651
  %v827 = vpack.c.b16 %v666, %v659
  %v828 = vpack.c.b16 %v667, %v660
  %v829 = vpack.c.b16 %v668, %v661
  %v830 = vpack.c.b16 %v669, %v662
  %v831 = vpack.c.b16 %v670, %v663
  %v832 = vpack.c.b16 %v671, %v664
  %v833 = vpack.c.b16 %v672, %v665
  %v834 = vpack.c.b16 %v680, %v673
  %v835 = vpack.c.b16 %v681, %v674
  %v836 = vpack.c.b16 %v682, %v675
  %v837 = vpack.c.b16 %v683, %v676
  %v838 = vpack.c.b16 %v684, %v677
  %v839 = vpack.c.b16 %v685, %v678
  %v840 = vpack.c.b16 %v686, %v679
  %v841 = vpack.c.b16 %v694, %v687
  %v842 = vpack.c.b16 %v695, %v688
  %v843 = vpack.c.b16 %v696, %v689
  %v844 = vpack.c.b16 %v697, %v690
  %v845 = vpack.c.b16 %v698, %v691
  %v846 = vpack.c.b16 %v699, %v692
  %v847 = vpack.c.b16 %v700, %v693
  %v848 = vpack.c.b16 %v708, %v701
  %v849 = vpack.c.b16 %v709, %v702
  %v850 = vpack.c.b16 %v710, %v703
  %v851 = vpack.c.b16 %v711, %v704
  %v852 = vpack.c.b16 %v712, %v705
  %v853 = vpack.c.b16 %v713, %v706
  %v854 = vpack.c.b16 %v714, %v707
  %v1075 = vunpack.c.l.b16 %v175
  %v1076 = vunpack.c.l.b16 %v176
  %v1077 = vunpack.c.l.b16 %v177
  %v1078 = vunpack.c.l.b16 %v178
  %v1079 = vunpack.c.l.b16 %v179
  %v1080 = vunpack.c.l.b16 %v180
  %v1081 = vunpack.c.l.b16 %v181
  %v1082 = vunpack.c.l.b16 %v182
  %v1083 = vunpack.c.l.b16 %v183
  %v1084 = vunpack.c.l.b16 %v184
  %v1085 = vunpack.c.l.b16 %v185
  %v1086 = vunpack.c.l.b16 %v186
  %v1087 = vunpack.c.l.b16 %v187
  %v1088 = vunpack.c.l.b16 %v188
  %v1089 = vunpack.c.l.b16 %v189
  %v1090 = vunpack.c.l.b16 %v190
  %v1091 = vunpack.c.l.b16 %v191
  %v1092 = vunpack.c.l.b16 %v192
  %v1093 = vunpack.c.l.b16 %v193
  %v1094 = vunpack.c.l.b16 %v194
  %v1095 = vunpack.c.l.b16 %v195
  %v1096 = vunpack.c.l.b16 %v196
  %v1097 = vunpack.c.l.b16 %v197
  %v1098 = vunpack.c.l.b16 %v198
  %v1099 = vunpack.c.l.b16 %v199
  %v1100 = vunpack.c.l.b16 %v200
  %v1101 = vunpack.c.l.b16 %v201
  %v1102 = vunpack.c.l.b16 %v202
  %v1103 = vunpack.c.l.b16 %v203
  %v1104 = vunpack.c.l.b16 %v204
  %v1105 = vunpack.c.l.b16 %v205
  %v1106 = vunpack.c.l.b16 %v206
  %v1107 = vunpack.c.l.b16 %v207
  %v1108 = vunpack.c.l.b16 %v208
  %v1109 = vunpack.c.l.b16 %v209
  %v1110 = vunpack.c.l.b16 %v210
  %v1111 = vunpack.c.l.b16 %v211
  %v1112 = vunpack.c.l.b16 %v212
  %v1113 = vunpack.c.l.b16 %v213
  %v1114 = vunpack.c.l.b16 %v214
  %v1115 = vunpack.c.l.b16 %v215
  %v1116 = vunpack.c.l.b16 %v216
  %v1117 = vunpack.c.l.b16 %v217
  %v1118 = vunpack.c.l.b16 %v218
  %v1119 = vunpack.c.l.b16 %v219
  %v1120 = vunpack.c.l.b16 %v220
  %v1121 = vunpack.c.l.b16 %v221
  %v1122 = vunpack.c.l.b16 %v222
  %v1123 = vunpack.c.l.b16 %v223
  %v1124 = vunpack.c.l.b16 %v224
  %v1125 = vunpack.c.l.b16 %v225
  %v1126 = vunpack.c.l.b16 %v226
  %v1127 = vunpack.c.l.b16 %v227
  %v1128 = vunpack.c.l.b16 %v228
  %v1129 = vunpack.c.l.b16 %v229
  %v1130 = vunpack.c.l.b16 %v230
  %v1131 = vunpack.c.l.b16 %v231
  %v1132 = vunpack.c.l.b16 %v232
  %v1133 = vunpack.c.l.b16 %v233
  %v1134 = vunpack.c.l.b16 %v234
  %v1135 = vunpack.c.l.b16 %v235
  %v1136 = vunpack.c.l.b16 %v236
  %v1137 = vunpack.c.l.b16 %v237
  %v1138 = vunpack.c.l.b16 %v238
  %v1139 = vunpack.c.l.b16 %v239
  %v1140 = vunpack.c.l.b16 %v240
  %v1141 = vunpack.c.l.b16 %v241
  %v1142 = vunpack.c.l.b16 %v242
  %v1143 = vunpack.c.l.b16 %v243
  %v1144 = vunpack.c.l.b16 %v244
  %v1145 = vunpack.c.l.b16 %v245
  %v1146 = vunpack.c.l.b16 %v246
  %v1147 = vunpack.c.l.b16 %v247
  %v1148 = vunpack.c.l.b16 %v248
  %v1149 = vunpack.c.l.b16 %v249
  %v1150 = vunpack.c.l.b16 %v250
  %v1151 = vunpack.c.l.b16 %v251
  %v1152 = vunpack.c.l.b16 %v252
  %v1153 = vunpack.c.l.b16 %v253
  %v1154 = vunpack.c.l.b16 %v254
  %v1155 = vunpack.c.l.b16 %v255
  %v1156 = vunpack.c.l.b16 %v256
  %v1157 = vunpack.c.l.b16 %v257
  %v1158 = vunpack.c.l.b16 %v258
  %v1159 = vunpack.c.l.b16 %v259
  %v1160 = vunpack.c.l.b16 %v260
  %v1161 = vunpack.c.l.b16 %v261
  %v1162 = vunpack.c.l.b16 %v262
  %v1163 = vunpack.c.l.b16 %v263
  %v1164 = vunpack.c.l.b16 %v264
  %v1165 = vunpack.c.l.b16 %v265
  %v1166 = vunpack.c.l.b16 %v266
  %v1167 = vunpack.c.l.b16 %v267
  %v1168 = vunpack.c.l.b16 %v268
  %v1169 = vunpack.c.l.b16 %v269
  %v1170 = vunpack.c.l.b16 %v270
  %v1171 = vunpack.c.l.b16 %v271
  %v1172 = vunpack.c.l.b16 %v272
  %v1173 = vunpack.c.l.b16 %v273
  %v1174 = vunpack.c.l.b16 %v274
  %v1175 = vpack.c.b16 %v1076, %v1075
  %v1176 = vpack.c.b16 %v1078, %v1077
  %v1177 = vpack.c.b16 %v1080, %v1079
  %v1178 = vpack.c.b16 %v1082, %v1081
  %v1179 = vpack.c.b16 %v1084, %v1083
  %v1180 = vpack.c.b16 %v1086, %v1085
  %v1181 = vpack.c.b16 %v1088, %v1087
  %v1182 = vpack.c.b16 %v1090, %v1089
  %v1183 = vpack.c.b16 %v1092, %v1091
  %v1184 = vpack.c.b16 %v1094, %v1093
  %v1185 = vpack.c.b16 %v1096, %v1095
  %v1186 = vpack.c.b16 %v1098, %v1097
  %v1187 = vpack.c.b16 %v1100, %v1099
  %v1188 = vpack.c.b16 %v1102, %v1101
  %v1189 = vpack.c.b16 %v1104, %v1103
  %v1190 = vpack.c.b16 %v1106, %v1105
  %v1191 = vpack.c.b16 %v1108, %v1107
  %v1192 = vpack.c.b16 %v1110, %v1109
  %v1193 = vpack.c.b16 %v1112, %v1111
  %v1194 = vpack.c.b16 %v1114, %v1113
  %v1195 = vpack.c.b16 %v1116, %v1115
  %v1196 = vpack.c.b16 %v1118, %v1117
  %v1197 = vpack.c.b16 %v1120, %v1119
  %v1198 = vpack.c.b16 %v1122, %v1121
  %v1199 = vpack.c.b16 %v1124, %v1123
  %v1200 = vpack.c.b16 %v1126, %v1125
  %v1201 = vpack.c.b16 %v1128, %v1127
  %v1202 = vpack.c.b16 %v1130, %v1129
  %v1203 = vpack.c.b16 %v1132, %v1131
  %v1204 = vpack.c.b16 %v1134, %v1133
  %v1205 = vpack.c.b16 %v1136, %v1135
  %v1206 = vpack.c.b16 %v1138, %v1137
  %v1207 = vpack.c.b16 %v1140, %v1139
  %v1208 = vpack.c.b16 %v1142, %v1141
  %v1209 = vpack.c.b16 %v1144, %v1143
  %v1210 = vpack.c.b16 %v1146, %v1145
  %v1211 = vpack.c.b16 %v1148, %v1147
  %v1212 = vpack.c.b16 %v1150, %v1149
  %v1213 = vpack.c.b16 %v1152, %v1151
  %v1214 = vpack.c.b16 %v1154, %v1153
  %v1215 = vpack.c.b16 %v1156, %v1155
  %v1216 = vpack.c.b16 %v1158, %v1157
  %v1217 = vpack.c.b16 %v1160, %v1159
  %v1218 = vpack.c.b16 %v1162, %v1161
  %v1219 = vpack.c.b16 %v1164, %v1163
  %v1220 = vpack.c.b16 %v1166, %v1165
  %v1221 = vpack.c.b16 %v1168, %v1167
  %v1222 = vpack.c.b16 %v1170, %v1169
  %v1223 = vpack.c.b16 %v1172, %v1171
  %v1224 = vpack.c.b16 %v1174, %v1173
  %vm1275 = vcmask 261120
  %v1277 = vsel %vm1275, %v721, 0
  %v1280 = vsel %vm1275, %v728, 0
  %v1283 = vsel %vm1275, %v735, 0
  %v1286 = vsel %vm1275, %v742, 0
  %v1289 = vsel %vm1275, %v749, 0
  %v1292 = vsel %vm1275, %v756, 0
  %v1295 = vsel %vm1275, %v763, 0
  %v1298 = vsel %vm1275, %v770, 0
  %v1301 = vsel %vm1275, %v777, 0
  %v1304 = vsel %vm1275, %v784, 0
  %v1307 = vsel %vm1275, %v791, 0
  %v1310 = vsel %vm1275, %v798, 0
  %v1313 = vsel %vm1275, %v805, 0
  %v1316 = vsel %vm1275, %v812, 0
  %v1319 = vsel %vm1275, %v819, 0
  %v1322 = vsel %vm1275, %v826, 0
  %v1325 = vsel %vm1275, %v833, 0
  %v1328 = vsel %vm1275, %v840, 0
  %v1331 = vsel %vm1275, %v847, 0
  %v1334 = vsel %vm1275, %v854, 0
  %1336 = vmatprep.subr.bf16.mxu0 0
  %1337 = vmatpush1.bf16.msra.mxu0 %v1175
  %1338 = vmatprep.subr.bf16.mxu0 0
  %1339 = vmatpush1.bf16.msra.mxu0 %v1176
  %1340 = vmatprep.subr.bf16.mxu0 0
  %1341 = vmatpush1.bf16.msra.mxu0 %v1177
  %1342 = vmatprep.subr.bf16.mxu0 0
  %1343 = vmatpush1.bf16.msra.mxu0 %v1178
  %1344 = vmatprep.subr.bf16.mxu0 0
  %1345 = vmatpush1.bf16.msra.mxu0 %v1179
  %1346 = vmatprep.subr.bf16.mxu0 0
  %1347 = vmatpush1.bf16.msra.mxu0 %v1180
  %1348 = vmatprep.subr.bf16.mxu0 0
  %1349 = vmatpush1.bf16.msra.mxu0 %v1181
  %1350 = vmatprep.subr.bf16.mxu0 0
  %1351 = vmatpush1.bf16.msra.mxu0 %v1182
  %1352 = vmatprep.subr.bf16.mxu0 0
  %1353 = vmatpush1.bf16.msra.mxu0 %v1183
  %1354 = vmatprep.subr.bf16.mxu0 0
  %1355 = vmatpush1.bf16.msra.mxu0 %v1184
  %1356 = vmatprep.subr.bf16.mxu0 0
  %1357 = vmatpush1.bf16.msra.mxu0 %v1185
  %1358 = vmatprep.subr.bf16.mxu0 0
  %1359 = vmatpush1.bf16.msra.mxu0 %v1186
  %1360 = vmatprep.subr.bf16.mxu0 0
  %1361 = vmatpush1.bf16.msra.mxu0 %v1187
  %1362 = vmatprep.subr.bf16.mxu0 0
  %1363 = vmatpush1.bf16.msra.mxu0 %v1188
  %1364 = vmatprep.subr.bf16.mxu0 0
  %1365 = vmatpush1.bf16.msra.mxu0 %v1189
  %1366 = vmatprep.subr.bf16.mxu0 0
  %1367 = vmatpush1.bf16.msra.mxu0 %v1190
  %1368 = vmatprep.mubr.bf16.mxu0 %v716
  %1369 = vmatmul.mubr.bf16.gmra.mrb[0].mxu0 %v715
  %v1370 = vpop.f32.mrb[0].mxu0
  %v1371 = vadd.f32 0.0, %v1370
  %v1372 = vpop.f32.mrb[0].mxu0
  %v1373 = vpop.f32.mrb[0].mxu0
  %v1374 = vadd.f32 0.0, %v1373
  %v1375 = vpop.f32.mrb[0].mxu0
  %1376 = vmatprep.mubr.bf16.mxu0 %v723
  %1377 = vmatmul.mubr.bf16.gmra.mrb[0].mxu0 %v722
  %v1378 = vpop.f32.mrb[0].mxu0
  %v1379 = vadd.f32 0.0, %v1378
  %v1380 = vpop.f32.mrb[0].mxu0
  %v1381 = vpop.f32.mrb[0].mxu0
  %v1382 = vadd.f32 0.0, %v1381
  %v1383 = vpop.f32.mrb[0].mxu0
  %1384 = vmatprep.mubr.bf16.mxu0 %v730
  %1385 = vmatmul.mubr.bf16.gmra.mrb[0].mxu0 %v729
  %v1386 = vpop.f32.mrb[0].mxu0
  %v1387 = vadd.f32 0.0, %v1386
  %v1388 = vpop.f32.mrb[0].mxu0
  %v1389 = vpop.f32.mrb[0].mxu0
  %v1390 = vadd.f32 0.0, %v1389
  %v1391 = vpop.f32.mrb[0].mxu0
  %1392 = vmatprep.mubr.bf16.mxu0 %v737
  %1393 = vmatmul.mubr.bf16.gmra.mrb[0].mxu0 %v736
  %v1394 = vpop.f32.mrb[0].mxu0
  %v1395 = vadd.f32 0.0, %v1394
  %v1396 = vpop.f32.mrb[0].mxu0
  %v1397 = vpop.f32.mrb[0].mxu0
  %v1398 = vadd.f32 0.0, %v1397
  %v1399 = vpop.f32.mrb[0].mxu0
  %1400 = vmatprep.mubr.bf16.mxu0 %v744
  %1401 = vmatmul.mubr.bf16.gmra.mrb[0].mxu0 %v743
  %v1402 = vpop.f32.mrb[0].mxu0
  %v1403 = vadd.f32 0.0, %v1402
  %v1404 = vpop.f32.mrb[0].mxu0
  %v1405 = vpop.f32.mrb[0].mxu0
  %v1406 = vadd.f32 0.0, %v1405
  %v1407 = vpop.f32.mrb[0].mxu0
  %1408 = vmatprep.mubr.bf16.mxu0 %v751
  %1409 = vmatmul.mubr.bf16.gmra.mrb[0].mxu0 %v750
  %v1410 = vpop.f32.mrb[0].mxu0
  %v1411 = vadd.f32 0.0, %v1410
  %v1412 = vpop.f32.mrb[0].mxu0
  %v1413 = vpop.f32.mrb[0].mxu0
  %v1414 = vadd.f32 0.0, %v1413
  %v1415 = vpop.f32.mrb[0].mxu0
  %1416 = vmatprep.mubr.bf16.mxu0 %v758
  %1417 = vmatmul.mubr.bf16.gmra.mrb[0].mxu0 %v757
  %v1418 = vpop.f32.mrb[0].mxu0
  %v1419 = vadd.f32 0.0, %v1418
  %v1420 = vpop.f32.mrb[0].mxu0
  %v1421 = vpop.f32.mrb[0].mxu0
  %v1422 = vadd.f32 0.0, %v1421
  %v1423 = vpop.f32.mrb[0].mxu0
  %1424 = vmatprep.mubr.bf16.mxu0 %v765
  %1425 = vmatmul.mubr.bf16.gmra.mrb[0].mxu0 %v764
  %v1426 = vpop.f32.mrb[0].mxu0
  %v1427 = vadd.f32 0.0, %v1426
  %v1428 = vpop.f32.mrb[0].mxu0
  %v1429 = vpop.f32.mrb[0].mxu0
  %v1430 = vadd.f32 0.0, %v1429
  %v1431 = vpop.f32.mrb[0].mxu0
  %1432 = vmatprep.mubr.bf16.mxu0 %v772
  %1433 = vmatmul.mubr.bf16.gmra.mrb[0].mxu0 %v771
  %v1434 = vpop.f32.mrb[0].mxu0
  %v1435 = vadd.f32 0.0, %v1434
  %v1436 = vpop.f32.mrb[0].mxu0
  %v1437 = vpop.f32.mrb[0].mxu0
  %v1438 = vadd.f32 0.0, %v1437
  %v1439 = vpop.f32.mrb[0].mxu0
  %1440 = vmatprep.mubr.bf16.mxu0 %v779
  %1441 = vmatmul.mubr.bf16.gmra.mrb[0].mxu0 %v778
  %v1442 = vpop.f32.mrb[0].mxu0
  %v1443 = vadd.f32 0.0, %v1442
  %v1444 = vpop.f32.mrb[0].mxu0
  %v1445 = vpop.f32.mrb[0].mxu0
  %v1446 = vadd.f32 0.0, %v1445
  %v1447 = vpop.f32.mrb[0].mxu0
  %1448 = vmatprep.mubr.bf16.mxu0 %v786
  %1449 = vmatmul.mubr.bf16.gmra.mrb[0].mxu0 %v785
  %v1450 = vpop.f32.mrb[0].mxu0
  %v1451 = vadd.f32 0.0, %v1450
  %v1452 = vpop.f32.mrb[0].mxu0
  %v1453 = vpop.f32.mrb[0].mxu0
  %v1454 = vadd.f32 0.0, %v1453
  %v1455 = vpop.f32.mrb[0].mxu0
  %1456 = vmatprep.mubr.bf16.mxu0 %v793
  %1457 = vmatmul.mubr.bf16.gmra.mrb[0].mxu0 %v792
  %v1458 = vpop.f32.mrb[0].mxu0
  %v1459 = vadd.f32 0.0, %v1458
  %v1460 = vpop.f32.mrb[0].mxu0
  %v1461 = vpop.f32.mrb[0].mxu0
  %v1462 = vadd.f32 0.0, %v1461
  %v1463 = vpop.f32.mrb[0].mxu0
  %1464 = vmatprep.mubr.bf16.mxu0 %v800
  %1465 = vmatmul.mubr.bf16.gmra.mrb[0].mxu0 %v799
  %v1466 = vpop.f32.mrb[0].mxu0
  %v1467 = vadd.f32 0.0, %v1466
  %v1468 = vpop.f32.mrb[0].mxu0
  %v1469 = vpop.f32.mrb[0].mxu0
  %v1470 = vadd.f32 0.0, %v1469
  %v1471 = vpop.f32.mrb[0].mxu0
  %1472 = vmatprep.mubr.bf16.mxu0 %v807
  %1473 = vmatmul.mubr.bf16.gmra.mrb[0].mxu0 %v806
  %v1474 = vpop.f32.mrb[0].mxu0
  %v1475 = vadd.f32 0.0, %v1474
  %v1476 = vpop.f32.mrb[0].mxu0
  %v1477 = vpop.f32.mrb[0].mxu0
  %v1478 = vadd.f32 0.0, %v1477
  %v1479 = vpop.f32.mrb[0].mxu0
  %1480 = vmatprep.mubr.bf16.mxu0 %v814
  %1481 = vmatmul.mubr.bf16.gmra.mrb[0].mxu0 %v813
  %v1482 = vpop.f32.mrb[0].mxu0
  %v1483 = vadd.f32 0.0, %v1482
  %v1484 = vpop.f32.mrb[0].mxu0
  %v1485 = vpop.f32.mrb[0].mxu0
  %v1486 = vadd.f32 0.0, %v1485
  %v1487 = vpop.f32.mrb[0].mxu0
  %1488 = vmatprep.mubr.bf16.mxu0 %v821
  %1489 = vmatmul.mubr.bf16.gmra.mrb[0].mxu0 %v820
  %v1490 = vpop.f32.mrb[0].mxu0
  %v1491 = vadd.f32 0.0, %v1490
  %v1492 = vpop.f32.mrb[0].mxu0
  %v1493 = vpop.f32.mrb[0].mxu0
  %v1494 = vadd.f32 0.0, %v1493
  %v1495 = vpop.f32.mrb[0].mxu0
  %1496 = vmatprep.mubr.bf16.mxu0 %v828
  %1497 = vmatmul.mubr.bf16.gmra.mrb[0].mxu0 %v827
  %v1498 = vpop.f32.mrb[0].mxu0
  %v1499 = vadd.f32 0.0, %v1498
  %v1500 = vpop.f32.mrb[0].mxu0
  %v1501 = vpop.f32.mrb[0].mxu0
  %v1502 = vadd.f32 0.0, %v1501
  %v1503 = vpop.f32.mrb[0].mxu0
  %1504 = vmatprep.mubr.bf16.mxu0 %v835
  %1505 = vmatmul.mubr.bf16.gmra.mrb[0].mxu0 %v834
  %v1506 = vpop.f32.mrb[0].mxu0
  %v1507 = vadd.f32 0.0, %v1506
  %v1508 = vpop.f32.mrb[0].mxu0
  %v1509 = vpop.f32.mrb[0].mxu0
  %v1510 = vadd.f32 0.0, %v1509
  %v1511 = vpop.f32.mrb[0].mxu0
  %1512 = vmatprep.mubr.bf16.mxu0 %v842
  %1513 = vmatmul.mubr.bf16.gmra.mrb[0].mxu0 %v841
  %v1514 = vpop.f32.mrb[0].mxu0
  %v1515 = vadd.f32 0.0, %v1514
  %v1516 = vpop.f32.mrb[0].mxu0
  %v1517 = vpop.f32.mrb[0].mxu0
  %v1518 = vadd.f32 0.0, %v1517
  %v1519 = vpop.f32.mrb[0].mxu0
  %1520 = vmatprep.mubr.bf16.mxu0 %v849
  %1521 = vmatmul.mubr.bf16.gmra.mrb[0].mxu0 %v848
  %v1522 = vpop.f32.mrb[0].mxu0
  %v1523 = vadd.f32 0.0, %v1522
  %v1524 = vpop.f32.mrb[0].mxu0
  %v1525 = vpop.f32.mrb[0].mxu0
  %v1526 = vadd.f32 0.0, %v1525
  %v1527 = vpop.f32.mrb[0].mxu0
  %1528 = vdwg.mxu0
  %1529 = vmatprep.subr.bf16.mxu0 0
  %1530 = vmatpush1.bf16.msra.mxu0 %v1191
  %1531 = vmatprep.subr.bf16.mxu0 0
  %1532 = vmatpush1.bf16.msra.mxu0 %v1192
  %1533 = vmatprep.subr.bf16.mxu0 0
  %1534 = vmatpush1.bf16.msra.mxu0 %v1193
  %1535 = vmatprep.subr.bf16.mxu0 0
  %1536 = vmatpush1.bf16.msra.mxu0 %v1194
  %1537 = vmatprep.subr.bf16.mxu0 0
  %1538 = vmatpush1.bf16.msra.mxu0 %v1195
  %1539 = vmatprep.subr.bf16.mxu0 0
  %1540 = vmatpush1.bf16.msra.mxu0 %v1196
  %1541 = vmatprep.subr.bf16.mxu0 0
  %1542 = vmatpush1.bf16.msra.mxu0 %v1197
  %1543 = vmatprep.subr.bf16.mxu0 0
  %1544 = vmatpush1.bf16.msra.mxu0 %v1198
  %1545 = vmatprep.subr.bf16.mxu0 0
  %1546 = vmatpush1.bf16.msra.mxu0 %v1199
  %1547 = vmatprep.subr.bf16.mxu0 0
  %1548 = vmatpush1.bf16.msra.mxu0 %v1200
  %1549 = vmatprep.subr.bf16.mxu0 0
  %1550 = vmatpush1.bf16.msra.mxu0 %v1201
  %1551 = vmatprep.subr.bf16.mxu0 0
  %1552 = vmatpush1.bf16.msra.mxu0 %v1202
  %1553 = vmatprep.subr.bf16.mxu0 0
  %1554 = vmatpush1.bf16.msra.mxu0 %v1203
  %1555 = vmatprep.subr.bf16.mxu0 0
  %1556 = vmatpush1.bf16.msra.mxu0 %v1204
  %1557 = vmatprep.subr.bf16.mxu0 0
  %1558 = vmatpush1.bf16.msra.mxu0 %v1205
  %1559 = vmatprep.subr.bf16.mxu0 0
  %1560 = vmatpush1.bf16.msra.mxu0 %v1206
  %1561 = vmatprep.mubr.bf16.mxu0 %v718
  %1562 = vmatmul.mubr.bf16.gmra.mrb[0].mxu0 %v717
  %v1563 = vpop.f32.mrb[0].mxu0
  %v1564 = vadd.f32 %v1371, %v1563
  %v1565 = vpop.f32.mrb[0].mxu0
  %v1566 = vpop.f32.mrb[0].mxu0
  %v1567 = vadd.f32 %v1374, %v1566
  %v1568 = vpop.f32.mrb[0].mxu0
  %1569 = vmatprep.mubr.bf16.mxu0 %v725
  %1570 = vmatmul.mubr.bf16.gmra.mrb[0].mxu0 %v724
  %v1571 = vpop.f32.mrb[0].mxu0
  %v1572 = vadd.f32 %v1379, %v1571
  %v1573 = vpop.f32.mrb[0].mxu0
  %v1574 = vpop.f32.mrb[0].mxu0
  %v1575 = vadd.f32 %v1382, %v1574
  %v1576 = vpop.f32.mrb[0].mxu0
  %1577 = vmatprep.mubr.bf16.mxu0 %v732
  %1578 = vmatmul.mubr.bf16.gmra.mrb[0].mxu0 %v731
  %v1579 = vpop.f32.mrb[0].mxu0
  %v1580 = vadd.f32 %v1387, %v1579
  %v1581 = vpop.f32.mrb[0].mxu0
  %v1582 = vpop.f32.mrb[0].mxu0
  %v1583 = vadd.f32 %v1390, %v1582
  %v1584 = vpop.f32.mrb[0].mxu0
  %1585 = vmatprep.mubr.bf16.mxu0 %v739
  %1586 = vmatmul.mubr.bf16.gmra.mrb[0].mxu0 %v738
  %v1587 = vpop.f32.mrb[0].mxu0
  %v1588 = vadd.f32 %v1395, %v1587
  %v1589 = vpop.f32.mrb[0].mxu0
  %v1590 = vpop.f32.mrb[0].mxu0
  %v1591 = vadd.f32 %v1398, %v1590
  %v1592 = vpop.f32.mrb[0].mxu0
  %1593 = vmatprep.mubr.bf16.mxu0 %v746
  %1594 = vmatmul.mubr.bf16.gmra.mrb[0].mxu0 %v745
  %v1595 = vpop.f32.mrb[0].mxu0
  %v1596 = vadd.f32 %v1403, %v1595
  %v1597 = vpop.f32.mrb[0].mxu0
  %v1598 = vpop.f32.mrb[0].mxu0
  %v1599 = vadd.f32 %v1406, %v1598
  %v1600 = vpop.f32.mrb[0].mxu0
  %1601 = vmatprep.mubr.bf16.mxu0 %v753
  %1602 = vmatmul.mubr.bf16.gmra.mrb[0].mxu0 %v752
  %v1603 = vpop.f32.mrb[0].mxu0
  %v1604 = vadd.f32 %v1411, %v1603
  %v1605 = vpop.f32.mrb[0].mxu0
  %v1606 = vpop.f32.mrb[0].mxu0
  %v1607 = vadd.f32 %v1414, %v1606
  %v1608 = vpop.f32.mrb[0].mxu0
  %1609 = vmatprep.mubr.bf16.mxu0 %v760
  %1610 = vmatmul.mubr.bf16.gmra.mrb[0].mxu0 %v759
  %v1611 = vpop.f32.mrb[0].mxu0
  %v1612 = vadd.f32 %v1419, %v1611
  %v1613 = vpop.f32.mrb[0].mxu0
  %v1614 = vpop.f32.mrb[0].mxu0
  %v1615 = vadd.f32 %v1422, %v1614
  %v1616 = vpop.f32.mrb[0].mxu0
  %1617 = vmatprep.mubr.bf16.mxu0 %v767
  %1618 = vmatmul.mubr.bf16.gmra.mrb[0].mxu0 %v766
  %v1619 = vpop.f32.mrb[0].mxu0
  %v1620 = vadd.f32 %v1427, %v1619
  %v1621 = vpop.f32.mrb[0].mxu0
  %v1622 = vpop.f32.mrb[0].mxu0
  %v1623 = vadd.f32 %v1430, %v1622
  %v1624 = vpop.f32.mrb[0].mxu0
  %1625 = vmatprep.mubr.bf16.mxu0 %v774
  %1626 = vmatmul.mubr.bf16.gmra.mrb[0].mxu0 %v773
  %v1627 = vpop.f32.mrb[0].mxu0
  %v1628 = vadd.f32 %v1435, %v1627
  %v1629 = vpop.f32.mrb[0].mxu0
  %v1630 = vpop.f32.mrb[0].mxu0
  %v1631 = vadd.f32 %v1438, %v1630
  %v1632 = vpop.f32.mrb[0].mxu0
  %1633 = vmatprep.mubr.bf16.mxu0 %v781
  %1634 = vmatmul.mubr.bf16.gmra.mrb[0].mxu0 %v780
  %v1635 = vpop.f32.mrb[0].mxu0
  %v1636 = vadd.f32 %v1443, %v1635
  %v1637 = vpop.f32.mrb[0].mxu0
  %v1638 = vpop.f32.mrb[0].mxu0
  %v1639 = vadd.f32 %v1446, %v1638
  %v1640 = vpop.f32.mrb[0].mxu0
  %1641 = vmatprep.mubr.bf16.mxu0 %v788
  %1642 = vmatmul.mubr.bf16.gmra.mrb[0].mxu0 %v787
  %v1643 = vpop.f32.mrb[0].mxu0
  %v1644 = vadd.f32 %v1451, %v1643
  %v1645 = vpop.f32.mrb[0].mxu0
  %v1646 = vpop.f32.mrb[0].mxu0
  %v1647 = vadd.f32 %v1454, %v1646
  %v1648 = vpop.f32.mrb[0].mxu0
  %1649 = vmatprep.mubr.bf16.mxu0 %v795
  %1650 = vmatmul.mubr.bf16.gmra.mrb[0].mxu0 %v794
  %v1651 = vpop.f32.mrb[0].mxu0
  %v1652 = vadd.f32 %v1459, %v1651
  %v1653 = vpop.f32.mrb[0].mxu0
  %v1654 = vpop.f32.mrb[0].mxu0
  %v1655 = vadd.f32 %v1462, %v1654
  %v1656 = vpop.f32.mrb[0].mxu0
  %1657 = vmatprep.mubr.bf16.mxu0 %v802
  %1658 = vmatmul.mubr.bf16.gmra.mrb[0].mxu0 %v801
  %v1659 = vpop.f32.mrb[0].mxu0
  %v1660 = vadd.f32 %v1467, %v1659
  %v1661 = vpop.f32.mrb[0].mxu0
  %v1662 = vpop.f32.mrb[0].mxu0
  %v1663 = vadd.f32 %v1470, %v1662
  %v1664 = vpop.f32.mrb[0].mxu0
  %1665 = vmatprep.mubr.bf16.mxu0 %v809
  %1666 = vmatmul.mubr.bf16.gmra.mrb[0].mxu0 %v808
  %v1667 = vpop.f32.mrb[0].mxu0
  %v1668 = vadd.f32 %v1475, %v1667
  %v1669 = vpop.f32.mrb[0].mxu0
  %v1670 = vpop.f32.mrb[0].mxu0
  %v1671 = vadd.f32 %v1478, %v1670
  %v1672 = vpop.f32.mrb[0].mxu0
  %1673 = vmatprep.mubr.bf16.mxu0 %v816
  %1674 = vmatmul.mubr.bf16.gmra.mrb[0].mxu0 %v815
  %v1675 = vpop.f32.mrb[0].mxu0
  %v1676 = vadd.f32 %v1483, %v1675
  %v1677 = vpop.f32.mrb[0].mxu0
  %v1678 = vpop.f32.mrb[0].mxu0
  %v1679 = vadd.f32 %v1486, %v1678
  %v1680 = vpop.f32.mrb[0].mxu0
  %1681 = vmatprep.mubr.bf16.mxu0 %v823
  %1682 = vmatmul.mubr.bf16.gmra.mrb[0].mxu0 %v822
  %v1683 = vpop.f32.mrb[0].mxu0
  %v1684 = vadd.f32 %v1491, %v1683
  %v1685 = vpop.f32.mrb[0].mxu0
  %v1686 = vpop.f32.mrb[0].mxu0
  %v1687 = vadd.f32 %v1494, %v1686
  %v1688 = vpop.f32.mrb[0].mxu0
  %1689 = vmatprep.mubr.bf16.mxu0 %v830
  %1690 = vmatmul.mubr.bf16.gmra.mrb[0].mxu0 %v829
  %v1691 = vpop.f32.mrb[0].mxu0
  %v1692 = vadd.f32 %v1499, %v1691
  %v1693 = vpop.f32.mrb[0].mxu0
  %v1694 = vpop.f32.mrb[0].mxu0
  %v1695 = vadd.f32 %v1502, %v1694
  %v1696 = vpop.f32.mrb[0].mxu0
  %1697 = vmatprep.mubr.bf16.mxu0 %v837
  %1698 = vmatmul.mubr.bf16.gmra.mrb[0].mxu0 %v836
  %v1699 = vpop.f32.mrb[0].mxu0
  %v1700 = vadd.f32 %v1507, %v1699
  %v1701 = vpop.f32.mrb[0].mxu0
  %v1702 = vpop.f32.mrb[0].mxu0
  %v1703 = vadd.f32 %v1510, %v1702
  %v1704 = vpop.f32.mrb[0].mxu0
  %1705 = vmatprep.mubr.bf16.mxu0 %v844
  %1706 = vmatmul.mubr.bf16.gmra.mrb[0].mxu0 %v843
  %v1707 = vpop.f32.mrb[0].mxu0
  %v1708 = vadd.f32 %v1515, %v1707
  %v1709 = vpop.f32.mrb[0].mxu0
  %v1710 = vpop.f32.mrb[0].mxu0
  %v1711 = vadd.f32 %v1518, %v1710
  %v1712 = vpop.f32.mrb[0].mxu0
  %1713 = vmatprep.mubr.bf16.mxu0 %v851
  %1714 = vmatmul.mubr.bf16.gmra.mrb[0].mxu0 %v850
  %v1715 = vpop.f32.mrb[0].mxu0
  %v1716 = vadd.f32 %v1523, %v1715
  %v1717 = vpop.f32.mrb[0].mxu0
  %v1718 = vpop.f32.mrb[0].mxu0
  %v1719 = vadd.f32 %v1526, %v1718
  %v1720 = vpop.f32.mrb[0].mxu0
  %1721 = vdwg.mxu0
  %1722 = vmatprep.subr.bf16.mxu0 0
  %1723 = vmatpush1.bf16.msra.mxu0 %v1207
  %1724 = vmatprep.subr.bf16.mxu0 0
  %1725 = vmatpush1.bf16.msra.mxu0 %v1208
  %1726 = vmatprep.subr.bf16.mxu0 0
  %1727 = vmatpush1.bf16.msra.mxu0 %v1209
  %1728 = vmatprep.subr.bf16.mxu0 0
  %1729 = vmatpush1.bf16.msra.mxu0 %v1210
  %1730 = vmatprep.subr.bf16.mxu0 0
  %1731 = vmatpush1.bf16.msra.mxu0 %v1211
  %1732 = vmatprep.subr.bf16.mxu0 0
  %1733 = vmatpush1.bf16.msra.mxu0 %v1212
  %1734 = vmatprep.subr.bf16.mxu0 0
  %1735 = vmatpush1.bf16.msra.mxu0 %v1213
  %1736 = vmatprep.subr.bf16.mxu0 0
  %1737 = vmatpush1.bf16.msra.mxu0 %v1214
  %1738 = vmatprep.subr.bf16.mxu0 0
  %1739 = vmatpush1.bf16.msra.mxu0 %v1215
  %1740 = vmatprep.subr.bf16.mxu0 0
  %1741 = vmatpush1.bf16.msra.mxu0 %v1216
  %1742 = vmatprep.subr.bf16.mxu0 0
  %1743 = vmatpush1.bf16.msra.mxu0 %v1217
  %1744 = vmatprep.subr.bf16.mxu0 0
  %1745 = vmatpush1.bf16.msra.mxu0 %v1218
  %1746 = vmatprep.subr.bf16.mxu0 0
  %1747 = vmatpush1.bf16.msra.mxu0 %v1219
  %1748 = vmatprep.subr.bf16.mxu0 0
  %1749 = vmatpush1.bf16.msra.mxu0 %v1220
  %1750 = vmatprep.subr.bf16.mxu0 0
  %1751 = vmatpush1.bf16.msra.mxu0 %v1221
  %1752 = vmatprep.subr.bf16.mxu0 0
  %1753 = vmatpush1.bf16.msra.mxu0 %v1222
  %1754 = vmatprep.mubr.bf16.mxu0 %v720
  %1755 = vmatmul.mubr.bf16.gmra.mrb[0].mxu0 %v719
  %v1756 = vpop.f32.mrb[0].mxu0
  %v1757 = vadd.f32 %v1564, %v1756
  %v1758 = vpop.f32.mrb[0].mxu0
  %v1759 = vpop.f32.mrb[0].mxu0
  %v1760 = vadd.f32 %v1567, %v1759
  %v1761 = vpop.f32.mrb[0].mxu0
  %1762 = vmatprep.mubr.bf16.mxu0 %v727
  %1763 = vmatmul.mubr.bf16.gmra.mrb[0].mxu0 %v726
  %v1764 = vpop.f32.mrb[0].mxu0
  %v1765 = vadd.f32 %v1572, %v1764
  %v1766 = vpop.f32.mrb[0].mxu0
  %v1767 = vpop.f32.mrb[0].mxu0
  %v1768 = vadd.f32 %v1575, %v1767
  %v1769 = vpop.f32.mrb[0].mxu0
  %1770 = vmatprep.mubr.bf16.mxu0 %v734
  %1771 = vmatmul.mubr.bf16.gmra.mrb[0].mxu0 %v733
  %v1772 = vpop.f32.mrb[0].mxu0
  %v1773 = vadd.f32 %v1580, %v1772
  %v1774 = vpop.f32.mrb[0].mxu0
  %v1775 = vpop.f32.mrb[0].mxu0
  %v1776 = vadd.f32 %v1583, %v1775
  %v1777 = vpop.f32.mrb[0].mxu0
  %1778 = vmatprep.mubr.bf16.mxu0 %v741
  %1779 = vmatmul.mubr.bf16.gmra.mrb[0].mxu0 %v740
  %v1780 = vpop.f32.mrb[0].mxu0
  %v1781 = vadd.f32 %v1588, %v1780
  %v1782 = vpop.f32.mrb[0].mxu0
  %v1783 = vpop.f32.mrb[0].mxu0
  %v1784 = vadd.f32 %v1591, %v1783
  %v1785 = vpop.f32.mrb[0].mxu0
  %1786 = vmatprep.mubr.bf16.mxu0 %v748
  %1787 = vmatmul.mubr.bf16.gmra.mrb[0].mxu0 %v747
  %v1788 = vpop.f32.mrb[0].mxu0
  %v1789 = vadd.f32 %v1596, %v1788
  %v1790 = vpop.f32.mrb[0].mxu0
  %v1791 = vpop.f32.mrb[0].mxu0
  %v1792 = vadd.f32 %v1599, %v1791
  %v1793 = vpop.f32.mrb[0].mxu0
  %1794 = vmatprep.mubr.bf16.mxu0 %v755
  %1795 = vmatmul.mubr.bf16.gmra.mrb[0].mxu0 %v754
  %v1796 = vpop.f32.mrb[0].mxu0
  %v1797 = vadd.f32 %v1604, %v1796
  %v1798 = vpop.f32.mrb[0].mxu0
  %v1799 = vpop.f32.mrb[0].mxu0
  %v1800 = vadd.f32 %v1607, %v1799
  %v1801 = vpop.f32.mrb[0].mxu0
  %1802 = vmatprep.mubr.bf16.mxu0 %v762
  %1803 = vmatmul.mubr.bf16.gmra.mrb[0].mxu0 %v761
  %v1804 = vpop.f32.mrb[0].mxu0
  %v1805 = vadd.f32 %v1612, %v1804
  %v1806 = vpop.f32.mrb[0].mxu0
  %v1807 = vpop.f32.mrb[0].mxu0
  %v1808 = vadd.f32 %v1615, %v1807
  %v1809 = vpop.f32.mrb[0].mxu0
  %1810 = vmatprep.mubr.bf16.mxu0 %v769
  %1811 = vmatmul.mubr.bf16.gmra.mrb[0].mxu0 %v768
  %v1812 = vpop.f32.mrb[0].mxu0
  %v1813 = vadd.f32 %v1620, %v1812
  %v1814 = vpop.f32.mrb[0].mxu0
  %v1815 = vpop.f32.mrb[0].mxu0
  %v1816 = vadd.f32 %v1623, %v1815
  %v1817 = vpop.f32.mrb[0].mxu0
  %1818 = vmatprep.mubr.bf16.mxu0 %v776
  %1819 = vmatmul.mubr.bf16.gmra.mrb[0].mxu0 %v775
  %v1820 = vpop.f32.mrb[0].mxu0
  %v1821 = vadd.f32 %v1628, %v1820
  %v1822 = vpop.f32.mrb[0].mxu0
  %v1823 = vpop.f32.mrb[0].mxu0
  %v1824 = vadd.f32 %v1631, %v1823
  %v1825 = vpop.f32.mrb[0].mxu0
  %1826 = vmatprep.mubr.bf16.mxu0 %v783
  %1827 = vmatmul.mubr.bf16.gmra.mrb[0].mxu0 %v782
  %v1828 = vpop.f32.mrb[0].mxu0
  %v1829 = vadd.f32 %v1636, %v1828
  %v1830 = vpop.f32.mrb[0].mxu0
  %v1831 = vpop.f32.mrb[0].mxu0
  %v1832 = vadd.f32 %v1639, %v1831
  %v1833 = vpop.f32.mrb[0].mxu0
  %1834 = vmatprep.mubr.bf16.mxu0 %v790
  %1835 = vmatmul.mubr.bf16.gmra.mrb[0].mxu0 %v789
  %v1836 = vpop.f32.mrb[0].mxu0
  %v1837 = vadd.f32 %v1644, %v1836
  %v1838 = vpop.f32.mrb[0].mxu0
  %v1839 = vpop.f32.mrb[0].mxu0
  %v1840 = vadd.f32 %v1647, %v1839
  %v1841 = vpop.f32.mrb[0].mxu0
  %1842 = vmatprep.mubr.bf16.mxu0 %v797
  %1843 = vmatmul.mubr.bf16.gmra.mrb[0].mxu0 %v796
  %v1844 = vpop.f32.mrb[0].mxu0
  %v1845 = vadd.f32 %v1652, %v1844
  %v1846 = vpop.f32.mrb[0].mxu0
  %v1847 = vpop.f32.mrb[0].mxu0
  %v1848 = vadd.f32 %v1655, %v1847
  %v1849 = vpop.f32.mrb[0].mxu0
  %1850 = vmatprep.mubr.bf16.mxu0 %v804
  %1851 = vmatmul.mubr.bf16.gmra.mrb[0].mxu0 %v803
  %v1852 = vpop.f32.mrb[0].mxu0
  %v1853 = vadd.f32 %v1660, %v1852
  %v1854 = vpop.f32.mrb[0].mxu0
  %v1855 = vpop.f32.mrb[0].mxu0
  %v1856 = vadd.f32 %v1663, %v1855
  %v1857 = vpop.f32.mrb[0].mxu0
  %1858 = vmatprep.mubr.bf16.mxu0 %v811
  %1859 = vmatmul.mubr.bf16.gmra.mrb[0].mxu0 %v810
  %v1860 = vpop.f32.mrb[0].mxu0
  %v1861 = vadd.f32 %v1668, %v1860
  %v1862 = vpop.f32.mrb[0].mxu0
  %v1863 = vpop.f32.mrb[0].mxu0
  %v1864 = vadd.f32 %v1671, %v1863
  %v1865 = vpop.f32.mrb[0].mxu0
  %1866 = vmatprep.mubr.bf16.mxu0 %v818
  %1867 = vmatmul.mubr.bf16.gmra.mrb[0].mxu0 %v817
  %v1868 = vpop.f32.mrb[0].mxu0
  %v1869 = vadd.f32 %v1676, %v1868
  %v1870 = vpop.f32.mrb[0].mxu0
  %v1871 = vpop.f32.mrb[0].mxu0
  %v1872 = vadd.f32 %v1679, %v1871
  %v1873 = vpop.f32.mrb[0].mxu0
  %1874 = vmatprep.mubr.bf16.mxu0 %v825
  %1875 = vmatmul.mubr.bf16.gmra.mrb[0].mxu0 %v824
  %v1876 = vpop.f32.mrb[0].mxu0
  %v1877 = vadd.f32 %v1684, %v1876
  %v1878 = vpop.f32.mrb[0].mxu0
  %v1879 = vpop.f32.mrb[0].mxu0
  %v1880 = vadd.f32 %v1687, %v1879
  %v1881 = vpop.f32.mrb[0].mxu0
  %1882 = vmatprep.mubr.bf16.mxu0 %v832
  %1883 = vmatmul.mubr.bf16.gmra.mrb[0].mxu0 %v831
  %v1884 = vpop.f32.mrb[0].mxu0
  %v1885 = vadd.f32 %v1692, %v1884
  %v1886 = vpop.f32.mrb[0].mxu0
  %v1887 = vpop.f32.mrb[0].mxu0
  %v1888 = vadd.f32 %v1695, %v1887
  %v1889 = vpop.f32.mrb[0].mxu0
  %1890 = vmatprep.mubr.bf16.mxu0 %v839
  %1891 = vmatmul.mubr.bf16.gmra.mrb[0].mxu0 %v838
  %v1892 = vpop.f32.mrb[0].mxu0
  %v1893 = vadd.f32 %v1700, %v1892
  %v1894 = vpop.f32.mrb[0].mxu0
  %v1895 = vpop.f32.mrb[0].mxu0
  %v1896 = vadd.f32 %v1703, %v1895
  %v1897 = vpop.f32.mrb[0].mxu0
  %1898 = vmatprep.mubr.bf16.mxu0 %v846
  %1899 = vmatmul.mubr.bf16.gmra.mrb[0].mxu0 %v845
  %v1900 = vpop.f32.mrb[0].mxu0
  %v1901 = vadd.f32 %v1708, %v1900
  %v1902 = vpop.f32.mrb[0].mxu0
  %v1903 = vpop.f32.mrb[0].mxu0
  %v1904 = vadd.f32 %v1711, %v1903
  %v1905 = vpop.f32.mrb[0].mxu0
  %1906 = vmatprep.mubr.bf16.mxu0 %v853
  %1907 = vmatmul.mubr.bf16.gmra.mrb[0].mxu0 %v852
  %v1908 = vpop.f32.mrb[0].mxu0
  %v1909 = vadd.f32 %v1716, %v1908
  %v1910 = vpop.f32.mrb[0].mxu0
  %v1911 = vpop.f32.mrb[0].mxu0
  %v1912 = vadd.f32 %v1719, %v1911
  %v1913 = vpop.f32.mrb[0].mxu0
  %1914 = vdwg.mxu0
  %1915 = vmatprep.subr.bf16.mxu0 0
  %1916 = vmatpush1.bf16.msra.mxu0 %v1223
  %1917 = vmatprep.subr.bf16.mxu0 0
  %1918 = vmatpush1.bf16.msra.mxu0 %v1224
  %1919 = vmatprep.subr.bf16.mxu0 0
  %1920 = vmatpush1.bf16.msra.mxu0 0
  %1921 = vmatprep.subr.bf16.mxu0 0
  %1922 = vmatpush1.bf16.msra.mxu0 0
  %1923 = vmatprep.subr.bf16.mxu0 0
  %1924 = vmatpush1.bf16.msra.mxu0 0
  %1925 = vmatprep.subr.bf16.mxu0 0
  %1926 = vmatpush1.bf16.msra.mxu0 0
  %1927 = vmatprep.subr.bf16.mxu0 0
  %1928 = vmatpush1.bf16.msra.mxu0 0
  %1929 = vmatprep.subr.bf16.mxu0 0
  %1930 = vmatpush1.bf16.msra.mxu0 0
  %1931 = vmatprep.subr.bf16.mxu0 0
  %1932 = vmatpush1.bf16.msra.mxu0 0
  %1933 = vmatprep.subr.bf16.mxu0 0
  %1934 = vmatpush1.bf16.msra.mxu0 0
  %1935 = vmatprep.subr.bf16.mxu0 0
  %1936 = vmatpush1.bf16.msra.mxu0 0
  %1937 = vmatprep.subr.bf16.mxu0 0
  %1938 = vmatpush1.bf16.msra.mxu0 0
  %1939 = vmatprep.subr.bf16.mxu0 0
  %1940 = vmatpush1.bf16.msra.mxu0 0
  %1941 = vmatprep.subr.bf16.mxu0 0
  %1942 = vmatpush1.bf16.msra.mxu0 0
  %1943 = vmatprep.subr.bf16.mxu0 0
  %1944 = vmatpush1.bf16.msra.mxu0 0
  %1945 = vmatprep.subr.bf16.mxu0 0
  %1946 = vmatpush1.bf16.msra.mxu0 0
  %1947 = vmatprep.mubr.bf16.mxu0 0
  %1948 = vmatmul.mubr.bf16.gmra.mrb[0].mxu0 %v1277
  %v1949 = vpop.f32.mrb[0].mxu0
  %v1950 = vadd.f32 %v1757, %v1949
  %v1951 = vpop.f32.mrb[0].mxu0
  %v1952 = vpop.f32.mrb[0].mxu0
  %v1953 = vadd.f32 %v1760, %v1952
  %v1954 = vpop.f32.mrb[0].mxu0
  %1955 = vmatprep.mubr.bf16.mxu0 0
  %1956 = vmatmul.mubr.bf16.gmra.mrb[0].mxu0 %v1280
  %v1957 = vpop.f32.mrb[0].mxu0
  %v1958 = vadd.f32 %v1765, %v1957
  %v1959 = vpop.f32.mrb[0].mxu0
  %v1960 = vpop.f32.mrb[0].mxu0
  %v1961 = vadd.f32 %v1768, %v1960
  %v1962 = vpop.f32.mrb[0].mxu0
  %1963 = vmatprep.mubr.bf16.mxu0 0
  %1964 = vmatmul.mubr.bf16.gmra.mrb[0].mxu0 %v1283
  %v1965 = vpop.f32.mrb[0].mxu0
  %v1966 = vadd.f32 %v1773, %v1965
  %v1967 = vpop.f32.mrb[0].mxu0
  %v1968 = vpop.f32.mrb[0].mxu0
  %v1969 = vadd.f32 %v1776, %v1968
  %v1970 = vpop.f32.mrb[0].mxu0
  %1971 = vmatprep.mubr.bf16.mxu0 0
  %1972 = vmatmul.mubr.bf16.gmra.mrb[0].mxu0 %v1286
  %v1973 = vpop.f32.mrb[0].mxu0
  %v1974 = vadd.f32 %v1781, %v1973
  %v1975 = vpop.f32.mrb[0].mxu0
  %v1976 = vpop.f32.mrb[0].mxu0
  %v1977 = vadd.f32 %v1784, %v1976
  %v1978 = vpop.f32.mrb[0].mxu0
  %1979 = vmatprep.mubr.bf16.mxu0 0
  %1980 = vmatmul.mubr.bf16.gmra.mrb[0].mxu0 %v1289
  %v1981 = vpop.f32.mrb[0].mxu0
  %v1982 = vadd.f32 %v1789, %v1981
  %v1983 = vpop.f32.mrb[0].mxu0
  %v1984 = vpop.f32.mrb[0].mxu0
  %v1985 = vadd.f32 %v1792, %v1984
  %v1986 = vpop.f32.mrb[0].mxu0
  %1987 = vmatprep.mubr.bf16.mxu0 0
  %1988 = vmatmul.mubr.bf16.gmra.mrb[0].mxu0 %v1292
  %v1989 = vpop.f32.mrb[0].mxu0
  %v1990 = vadd.f32 %v1797, %v1989
  %v1991 = vpop.f32.mrb[0].mxu0
  %v1992 = vpop.f32.mrb[0].mxu0
  %v1993 = vadd.f32 %v1800, %v1992
  %v1994 = vpop.f32.mrb[0].mxu0
  %1995 = vmatprep.mubr.bf16.mxu0 0
  %1996 = vmatmul.mubr.bf16.gmra.mrb[0].mxu0 %v1295
  %v1997 = vpop.f32.mrb[0].mxu0
  %v1998 = vadd.f32 %v1805, %v1997
  %v1999 = vpop.f32.mrb[0].mxu0
  %v2000 = vpop.f32.mrb[0].mxu0
  %v2001 = vadd.f32 %v1808, %v2000
  %v2002 = vpop.f32.mrb[0].mxu0
  %2003 = vmatprep.mubr.bf16.mxu0 0
  %2004 = vmatmul.mubr.bf16.gmra.mrb[0].mxu0 %v1298
  %v2005 = vpop.f32.mrb[0].mxu0
  %v2006 = vadd.f32 %v1813, %v2005
  %v2007 = vpop.f32.mrb[0].mxu0
  %v2008 = vpop.f32.mrb[0].mxu0
  %v2009 = vadd.f32 %v1816, %v2008
  %v2010 = vpop.f32.mrb[0].mxu0
  %2011 = vmatprep.mubr.bf16.mxu0 0
  %2012 = vmatmul.mubr.bf16.gmra.mrb[0].mxu0 %v1301
  %v2013 = vpop.f32.mrb[0].mxu0
  %v2014 = vadd.f32 %v1821, %v2013
  %v2015 = vpop.f32.mrb[0].mxu0
  %v2016 = vpop.f32.mrb[0].mxu0
  %v2017 = vadd.f32 %v1824, %v2016
  %v2018 = vpop.f32.mrb[0].mxu0
  %2019 = vmatprep.mubr.bf16.mxu0 0
  %2020 = vmatmul.mubr.bf16.gmra.mrb[0].mxu0 %v1304
  %v2021 = vpop.f32.mrb[0].mxu0
  %v2022 = vadd.f32 %v1829, %v2021
  %v2023 = vpop.f32.mrb[0].mxu0
  %v2024 = vpop.f32.mrb[0].mxu0
  %v2025 = vadd.f32 %v1832, %v2024
  %v2026 = vpop.f32.mrb[0].mxu0
  %2027 = vmatprep.mubr.bf16.mxu0 0
  %2028 = vmatmul.mubr.bf16.gmra.mrb[0].mxu0 %v1307
  %v2029 = vpop.f32.mrb[0].mxu0
  %v2030 = vadd.f32 %v1837, %v2029
  %v2031 = vpop.f32.mrb[0].mxu0
  %v2032 = vpop.f32.mrb[0].mxu0
  %v2033 = vadd.f32 %v1840, %v2032
  %v2034 = vpop.f32.mrb[0].mxu0
  %2035 = vmatprep.mubr.bf16.mxu0 0
  %2036 = vmatmul.mubr.bf16.gmra.mrb[0].mxu0 %v1310
  %v2037 = vpop.f32.mrb[0].mxu0
  %v2038 = vadd.f32 %v1845, %v2037
  %v2039 = vpop.f32.mrb[0].mxu0
  %v2040 = vpop.f32.mrb[0].mxu0
  %v2041 = vadd.f32 %v1848, %v2040
  %v2042 = vpop.f32.mrb[0].mxu0
  %2043 = vmatprep.mubr.bf16.mxu0 0
  %2044 = vmatmul.mubr.bf16.gmra.mrb[0].mxu0 %v1313
  %v2045 = vpop.f32.mrb[0].mxu0
  %v2046 = vadd.f32 %v1853, %v2045
  %v2047 = vpop.f32.mrb[0].mxu0
  %v2048 = vpop.f32.mrb[0].mxu0
  %v2049 = vadd.f32 %v1856, %v2048
  %v2050 = vpop.f32.mrb[0].mxu0
  %2051 = vmatprep.mubr.bf16.mxu0 0
  %2052 = vmatmul.mubr.bf16.gmra.mrb[0].mxu0 %v1316
  %v2053 = vpop.f32.mrb[0].mxu0
  %v2054 = vadd.f32 %v1861, %v2053
  %v2055 = vpop.f32.mrb[0].mxu0
  %v2056 = vpop.f32.mrb[0].mxu0
  %v2057 = vadd.f32 %v1864, %v2056
  %v2058 = vpop.f32.mrb[0].mxu0
  %2059 = vmatprep.mubr.bf16.mxu0 0
  %2060 = vmatmul.mubr.bf16.gmra.mrb[0].mxu0 %v1319
  %v2061 = vpop.f32.mrb[0].mxu0
  %v2062 = vadd.f32 %v1869, %v2061
  %v2063 = vpop.f32.mrb[0].mxu0
  %v2064 = vpop.f32.mrb[0].mxu0
  %v2065 = vadd.f32 %v1872, %v2064
  %v2066 = vpop.f32.mrb[0].mxu0
  %2067 = vmatprep.mubr.bf16.mxu0 0
  %2068 = vmatmul.mubr.bf16.gmra.mrb[0].mxu0 %v1322
  %v2069 = vpop.f32.mrb[0].mxu0
  %v2070 = vadd.f32 %v1877, %v2069
  %v2071 = vpop.f32.mrb[0].mxu0
  %v2072 = vpop.f32.mrb[0].mxu0
  %v2073 = vadd.f32 %v1880, %v2072
  %v2074 = vpop.f32.mrb[0].mxu0
  %2075 = vmatprep.mubr.bf16.mxu0 0
  %2076 = vmatmul.mubr.bf16.gmra.mrb[0].mxu0 %v1325
  %v2077 = vpop.f32.mrb[0].mxu0
  %v2078 = vadd.f32 %v1885, %v2077
  %v2079 = vpop.f32.mrb[0].mxu0
  %v2080 = vpop.f32.mrb[0].mxu0
  %v2081 = vadd.f32 %v1888, %v2080
  %v2082 = vpop.f32.mrb[0].mxu0
  %2083 = vmatprep.mubr.bf16.mxu0 0
  %2084 = vmatmul.mubr.bf16.gmra.mrb[0].mxu0 %v1328
  %v2085 = vpop.f32.mrb[0].mxu0
  %v2086 = vadd.f32 %v1893, %v2085
  %v2087 = vpop.f32.mrb[0].mxu0
  %v2088 = vpop.f32.mrb[0].mxu0
  %v2089 = vadd.f32 %v1896, %v2088
  %v2090 = vpop.f32.mrb[0].mxu0
  %2091 = vmatprep.mubr.bf16.mxu0 0
  %2092 = vmatmul.mubr.bf16.gmra.mrb[0].mxu0 %v1331
  %v2093 = vpop.f32.mrb[0].mxu0
  %v2094 = vadd.f32 %v1901, %v2093
  %v2095 = vpop.f32.mrb[0].mxu0
  %v2096 = vpop.f32.mrb[0].mxu0
  %v2097 = vadd.f32 %v1904, %v2096
  %v2098 = vpop.f32.mrb[0].mxu0
  %2099 = vmatprep.mubr.bf16.mxu0 0
  %2100 = vmatmul.mubr.bf16.gmra.mrb[0].mxu0 %v1334
  %v2101 = vpop.f32.mrb[0].mxu0
  %v2102 = vadd.f32 %v1909, %v2101
  %v2103 = vpop.f32.mrb[0].mxu0
  %v2104 = vpop.f32.mrb[0].mxu0
  %v2105 = vadd.f32 %v1912, %v2104
  %v2106 = vpop.f32.mrb[0].mxu0
  %2107 = vdwg.mxu0
  %v2108 = vmax.f32 %v1950, %v1990
  %v2109 = vmax.f32 %v1953, %v1993
  %v2110 = vmax.f32 %v1958, %v1998
  %v2111 = vmax.f32 %v1961, %v2001
  %v2112 = vmax.f32 %v1966, %v2006
  %v2113 = vmax.f32 %v1969, %v2009
  %v2114 = vmax.f32 %v1974, %v2014
  %v2115 = vmax.f32 %v1977, %v2017
  %v2116 = vmax.f32 %v1982, %v2022
  %v2117 = vmax.f32 %v1985, %v2025
  %v2118 = vmax.f32 %v2030, %v2070
  %v2119 = vmax.f32 %v2033, %v2073
  %v2120 = vmax.f32 %v2038, %v2078
  %v2121 = vmax.f32 %v2041, %v2081
  %v2122 = vmax.f32 %v2046, %v2086
  %v2123 = vmax.f32 %v2049, %v2089
  %v2124 = vmax.f32 %v2054, %v2094
  %v2125 = vmax.f32 %v2057, %v2097
  %v2126 = vmax.f32 %v2062, %v2102
  %v2127 = vmax.f32 %v2065, %v2105
  %v2128 = vmax.f32 %v2108, %v2118
  %v2129 = vmax.f32 %v2109, %v2119
  %v2130 = vmax.f32 %v2110, %v2120
  %v2131 = vmax.f32 %v2111, %v2121
  %v2132 = vmax.f32 %v2112, %v2122
  %v2133 = vmax.f32 %v2113, %v2123
  %v2134 = vmax.f32 %v2114, %v2124
  %v2135 = vmax.f32 %v2115, %v2125
  %v2136 = vmax.f32 %v2116, %v2126
  %v2137 = vmax.f32 %v2117, %v2127
  %v2138 = vld [vmem:[%s2] sm:$0x1]
  %v2139 = vlaneseq
  %v2140 = vshrl.u32 %v2139, 7
  %v2141 = vsub.s32 0, %v2140
  %v2142 = vrot.slane %v2138, %v2141
  %v2143 = vadd.f32 %v2128, %v2142
  %v2144 = vadd.f32 %v2129, %v2142
  %v2145 = vadd.f32 %v2130, %v2142
  %v2146 = vadd.f32 %v2131, %v2142
  %v2147 = vadd.f32 %v2132, %v2142
  %v2148 = vadd.f32 %v2133, %v2142
  %v2149 = vadd.f32 %v2134, %v2142
  %v2150 = vadd.f32 %v2135, %v2142
  %v2151 = vadd.f32 %v2136, %v2142
  %v2152 = vadd.f32 %v2137, %v2142
  %v2153 = vmax.f32 %v2143, 0.0
  %v2154 = vmax.f32 %v2144, 0.0
  %v2155 = vmax.f32 %v2145, 0.0
  %v2156 = vmax.f32 %v2146, 0.0
  %v2157 = vmax.f32 %v2147, 0.0
  %v2158 = vmax.f32 %v2148, 0.0
  %v2159 = vmax.f32 %v2149, 0.0
  %v2160 = vmax.f32 %v2150, 0.0
  %v2161 = vmax.f32 %v2151, 0.0
  %v2162 = vmax.f32 %v2152, 0.0
  %v2163 = vld [vmem:[%s2 + $0x1] sm:$0x1]
  %v2164 = vlaneseq
  %v2165 = vshrl.u32 %v2164, 7
  %v2166 = vsub.s32 0, %v2165
  %v2167 = vrot.slane %v2163, %v2166
  %v2168 = vmul.f32 %v2153, %v2167
  %v2169 = vmul.f32 %v2154, %v2167
  %v2170 = vmul.f32 %v2155, %v2167
  %v2171 = vmul.f32 %v2156, %v2167
  %v2172 = vmul.f32 %v2157, %v2167
  %v2173 = vmul.f32 %v2158, %v2167
  %v2174 = vmul.f32 %v2159, %v2167
  %v2175 = vmul.f32 %v2160, %v2167
  %v2176 = vmul.f32 %v2161, %v2167
  %v2177 = vmul.f32 %v2162, %v2167
  %v2178 = vld [vmem:[%s2 + $0x2] sm:$0x1]
  %v2179 = vlaneseq
  %v2180 = vshrl.u32 %v2179, 7
  %v2181 = vsub.s32 0, %v2180
  %v2182 = vrot.slane %v2178, %v2181
  %v2183 = vadd.f32 %v2168, %v2182
  %v2184 = vadd.f32 %v2169, %v2182
  %v2185 = vadd.f32 %v2170, %v2182
  %v2186 = vadd.f32 %v2171, %v2182
  %v2187 = vadd.f32 %v2172, %v2182
  %v2188 = vadd.f32 %v2173, %v2182
  %v2189 = vadd.f32 %v2174, %v2182
  %v2190 = vadd.f32 %v2175, %v2182
  %v2191 = vadd.f32 %v2176, %v2182
  %v2192 = vadd.f32 %v2177, %v2182
  %v2193 = vpack.c.bf16 %v2184, %v2183
  %v2194 = vpack.c.bf16 %v2186, %v2185
  %v2195 = vpack.c.bf16 %v2188, %v2187
  %v2196 = vpack.c.bf16 %v2190, %v2189
  %v2197 = vpack.c.bf16 %v2192, %v2191
  %v2203 = vunpack.c.l.b16 %v2193
  %v2204 = vunpack.c.h.b16 %v2193
  %v2205 = vunpack.c.l.b16 %v2194
  %v2206 = vunpack.c.h.b16 %v2194
  %v2207 = vunpack.c.l.b16 %v2195
  %v2208 = vunpack.c.h.b16 %v2195
  %v2209 = vunpack.c.l.b16 %v2196
  %v2210 = vunpack.c.h.b16 %v2196
  %v2211 = vunpack.c.l.b16 %v2197
  %v2212 = vunpack.c.h.b16 %v2197
  %v2213 = vpack.c.b16 %v2203, %v2203
  %v2214 = vpack.c.b16 %v2204, %v2204
  %v2215 = vpack.c.b16 %v2205, %v2205
  %v2216 = vpack.c.b16 %v2206, %v2206
  %v2217 = vpack.c.b16 %v2207, %v2207
  %v2218 = vpack.c.b16 %v2208, %v2208
  %v2219 = vpack.c.b16 %v2209, %v2209
  %v2220 = vpack.c.b16 %v2210, %v2210
  %v2221 = vpack.c.b16 %v2211, %v2211
  %v2222 = vpack.c.b16 %v2212, %v2212
  %vm2233 = vcmask 519168
  %2234 = vst.msk [vmem:[%s3] sm:$0xf] %vm2233, %v2213
  %2235 = vst.msk [vmem:[%s3 + $0x4] sm:$0xf] %vm2233, %v2214
  %2236 = vst.msk [vmem:[%s3 + $0x8] sm:$0xf] %vm2233, %v2215
  %2237 = vst.msk [vmem:[%s3 + $0xc] sm:$0xf] %vm2233, %v2216
  %2238 = vst.msk [vmem:[%s3 + $0x10] sm:$0xf] %vm2233, %v2217
  %2239 = vst.msk [vmem:[%s3 + $0x14] sm:$0xf] %vm2233, %v2218
  %2240 = vst.msk [vmem:[%s3 + $0x18] sm:$0xf] %vm2233, %v2219
  %2241 = vst.msk [vmem:[%s3 + $0x1c] sm:$0xf] %vm2233, %v2220
  %2242 = vst.msk [vmem:[%s3 + $0x20] sm:$0xf] %vm2233, %v2221
  %2243 = vst.msk [vmem:[%s3 + $0x24] sm:$0xf] %vm2233, %v2222
  // Predicated region
  $region14: #{model_forward.5} parent=0 // pred_check
    _
  $region15: #{model_forward.5} parent=0 // pred_check_branch
    %2245 = sbr.rel (0) target = $region17
  $region16: #{model_forward.5} parent=0 // pred_region
    _
  $region17: #{model_forward.5} parent=0 // pred_fallthru
    _
  // Predicated region
  $region18: #{model_forward.5} parent=0 // pred_check
    _
  $region19: #{model_forward.5} parent=0 // pred_check_branch
    %2247 = sbr.rel (0) target = $region21
  $region20: #{model_forward.5} parent=0 // pred_region
    _
  $region21: #{model_forward.5} parent=0 // pred_fallthru
    _

// kernel: model_forward.7
$region0: #{model_forward.7}
  #allocation0 [shape = 'u32[]', space=smem, size = 0x4, offset = 0x4, fixed_abs, tag = 'smem constant byte address 0x4 - core index']
  #allocation1 [shape = 'u32[144,128]{1,0:T(1,128)}', space=vmem, size = 0x12000, scoped, tag = 'internal scratch']
  %s0 = inlined_call_operand.vmem [shape: bf16[16,2048], index: 0, kind: input, shape index: {}]
  %s1 = inlined_call_operand.vmem [shape: bf16[2048,512], index: 1, kind: input, shape index: {}]
  %s2 = inlined_call_operand.vmem [shape: f32[1,512], index: 2, kind: input, shape index: {}]
  %s3 = inlined_call_operand.vmem [shape: bf16[512,128], index: 3, kind: input, shape index: {}]
  %s4 = inlined_call_operand.vmem [shape: f32[1,128], index: 4, kind: input, shape index: {}]
  %s5 = inlined_call_operand.vmem [shape: bf16[128,128], index: 5, kind: input, shape index: {}]
  %s6 = inlined_call_operand.vmem [shape: f32[1,128], index: 6, kind: input, shape index: {}]
  %s7 = inlined_call_operand.vmem [shape: f32[16,128], index: 7, kind: output, shape index: {}]
  %s8 = sld [smem:[#allocation0]]
  $region38: #{model_forward.7} parent=0
    _
  %s10 = ssub.s32 1, %s8
  %s11 = scalar_select 0, %s10, %s8
  // Predicated region
  $region2: #{model_forward.7} parent=0 // pred_check
    _
  $region3: #{model_forward.7} parent=0 // pred_check_branch
    %13 = sbr.rel (0) target = $region5
  $region4: #{model_forward.7} parent=0 // pred_region
    _
  $region5: #{model_forward.7} parent=0 // pred_fallthru
    _
  // Predicated region
  $region6: #{model_forward.7} parent=0 // pred_check
    _
  $region7: #{model_forward.7} parent=0 // pred_check_branch
    %15 = sbr.rel (0) target = $region9
  $region8: #{model_forward.7} parent=0 // pred_region
    _
  $region9: #{model_forward.7} parent=0 // pred_fallthru
    _
  // Predicated region
  $region10: #{model_forward.7} parent=0 // pred_check
    _
  $region11: #{model_forward.7} parent=0 // pred_check_branch
    %17 = sbr.rel (0) target = $region13
  $region12: #{model_forward.7} parent=0 // pred_region
    _
  $region13: #{model_forward.7} parent=0 // pred_fallthru
    _
  // Predicated region
  $region14: #{model_forward.7} parent=0 // pred_check
    _
  $region15: #{model_forward.7} parent=0 // pred_check_branch
    %19 = sbr.rel (0) target = $region17
  $region16: #{model_forward.7} parent=0 // pred_region
    _
  $region17: #{model_forward.7} parent=0 // pred_fallthru
    _
  // Predicated region
  $region18: #{model_forward.7} parent=0 // pred_check
    _
  $region19: #{model_forward.7} parent=0 // pred_check_branch
    %21 = sbr.rel (0) target = $region21
  $region20: #{model_forward.7} parent=0 // pred_region
    _
  $region21: #{model_forward.7} parent=0 // pred_fallthru
    _
  // Predicated region
  $region22: #{model_forward.7} parent=0 // pred_check
    _
  $region23: #{model_forward.7} parent=0 // pred_check_branch
    %23 = sbr.rel (0) target = $region25
  $region24: #{model_forward.7} parent=0 // pred_region
    _
  $region25: #{model_forward.7} parent=0 // pred_fallthru
    _
  // Predicated region
  $region26: #{model_forward.7} parent=0 // pred_check
    _
  $region27: #{model_forward.7} parent=0 // pred_check_branch
    %25 = sbr.rel (0) target = $region29
  $region28: #{model_forward.7} parent=0 // pred_region
    _
  $region29: #{model_forward.7} parent=0 // pred_fallthru
    _
  %v27 = vld [vmem:[%s0] sm:$0xff]
  %v28 = vld [vmem:[%s0 + $0x8] sm:$0xff]
  %v29 = vld [vmem:[%s0 + $0x10] sm:$0xff]
  %v30 = vld [vmem:[%s0 + $0x18] sm:$0xff]
  %v31 = vld [vmem:[%s0 + $0x20] sm:$0xff]
  %v32 = vld [vmem:[%s0 + $0x28] sm:$0xff]
  %v33 = vld [vmem:[%s0 + $0x30] sm:$0xff]
  %v34 = vld [vmem:[%s0 + $0x38] sm:$0xff]
  %v35 = vld [vmem:[%s0 + $0x40] sm:$0xff]
  %v36 = vld [vmem:[%s0 + $0x48] sm:$0xff]
  %v37 = vld [vmem:[%s0 + $0x50] sm:$0xff]
  %v38 = vld [vmem:[%s0 + $0x58] sm:$0xff]
  %v39 = vld [vmem:[%s0 + $0x60] sm:$0xff]
  %v40 = vld [vmem:[%s0 + $0x68] sm:$0xff]
  %v41 = vld [vmem:[%s0 + $0x70] sm:$0xff]
  %v42 = vld [vmem:[%s0 + $0x78] sm:$0xff]
  %v43 = vld [vmem:[%s1] sm:$0xff]
  %v44 = vld [vmem:[%s1 + $0x8] sm:$0xff]
  %v45 = vld [vmem:[%s1 + $0x10] sm:$0xff]
  %v46 = vld [vmem:[%s1 + $0x18] sm:$0xff]
  %v47 = vld [vmem:[%s1 + $0x20] sm:$0xff]
  %v48 = vld [vmem:[%s1 + $0x28] sm:$0xff]
  %v49 = vld [vmem:[%s1 + $0x30] sm:$0xff]
  %v50 = vld [vmem:[%s1 + $0x38] sm:$0xff]
  %v51 = vld [vmem:[%s1 + $0x40] sm:$0xff]
  %v52 = vld [vmem:[%s1 + $0x48] sm:$0xff]
  %v53 = vld [vmem:[%s1 + $0x50] sm:$0xff]
  %v54 = vld [vmem:[%s1 + $0x58] sm:$0xff]
  %v55 = vld [vmem:[%s1 + $0x60] sm:$0xff]
  %v56 = vld [vmem:[%s1 + $0x68] sm:$0xff]
  %v57 = vld [vmem:[%s1 + $0x70] sm:$0xff]
  %v58 = vld [vmem:[%s1 + $0x78] sm:$0xff]
  %v59 = vld [vmem:[%s1 + $0x80] sm:$0xff]
  %v60 = vld [vmem:[%s1 + $0x88] sm:$0xff]
  %v61 = vld [vmem:[%s1 + $0x90] sm:$0xff]
  %v62 = vld [vmem:[%s1 + $0x98] sm:$0xff]
  %v63 = vld [vmem:[%s1 + $0xa0] sm:$0xff]
  %v64 = vld [vmem:[%s1 + $0xa8] sm:$0xff]
  %v65 = vld [vmem:[%s1 + $0xb0] sm:$0xff]
  %v66 = vld [vmem:[%s1 + $0xb8] sm:$0xff]
  %v67 = vld [vmem:[%s1 + $0xc0] sm:$0xff]
  %v68 = vld [vmem:[%s1 + $0xc8] sm:$0xff]
  %v69 = vld [vmem:[%s1 + $0xd0] sm:$0xff]
  %v70 = vld [vmem:[%s1 + $0xd8] sm:$0xff]
  %v71 = vld [vmem:[%s1 + $0xe0] sm:$0xff]
  %v72 = vld [vmem:[%s1 + $0xe8] sm:$0xff]
  %v73 = vld [vmem:[%s1 + $0xf0] sm:$0xff]
  %v74 = vld [vmem:[%s1 + $0xf8] sm:$0xff]
  %v75 = vld [vmem:[%s1 + $0x100] sm:$0xff]
  %v76 = vld [vmem:[%s1 + $0x108] sm:$0xff]
  %v77 = vld [vmem:[%s1 + $0x110] sm:$0xff]
  %v78 = vld [vmem:[%s1 + $0x118] sm:$0xff]
  %v79 = vld [vmem:[%s1 + $0x120] sm:$0xff]
  %v80 = vld [vmem:[%s1 + $0x128] sm:$0xff]
  %v81 = vld [vmem:[%s1 + $0x130] sm:$0xff]
  %v82 = vld [vmem:[%s1 + $0x138] sm:$0xff]
  %v83 = vld [vmem:[%s1 + $0x140] sm:$0xff]
  %v84 = vld [vmem:[%s1 + $0x148] sm:$0xff]
  %v85 = vld [vmem:[%s1 + $0x150] sm:$0xff]
  %v86 = vld [vmem:[%s1 + $0x158] sm:$0xff]
  %v87 = vld [vmem:[%s1 + $0x160] sm:$0xff]
  %v88 = vld [vmem:[%s1 + $0x168] sm:$0xff]
  %v89 = vld [vmem:[%s1 + $0x170] sm:$0xff]
  %v90 = vld [vmem:[%s1 + $0x178] sm:$0xff]
  %v91 = vld [vmem:[%s1 + $0x180] sm:$0xff]
  %v92 = vld [vmem:[%s1 + $0x188] sm:$0xff]
  %v93 = vld [vmem:[%s1 + $0x190] sm:$0xff]
  %v94 = vld [vmem:[%s1 + $0x198] sm:$0xff]
  %v95 = vld [vmem:[%s1 + $0x1a0] sm:$0xff]
  %v96 = vld [vmem:[%s1 + $0x1a8] sm:$0xff]
  %v97 = vld [vmem:[%s1 + $0x1b0] sm:$0xff]
  %v98 = vld [vmem:[%s1 + $0x1b8] sm:$0xff]
  %v99 = vld [vmem:[%s1 + $0x1c0] sm:$0xff]
  %v100 = vld [vmem:[%s1 + $0x1c8] sm:$0xff]
  %v101 = vld [vmem:[%s1 + $0x1d0] sm:$0xff]
  %v102 = vld [vmem:[%s1 + $0x1d8] sm:$0xff]
  %v103 = vld [vmem:[%s1 + $0x1e0] sm:$0xff]
  %v104 = vld [vmem:[%s1 + $0x1e8] sm:$0xff]
  %v105 = vld [vmem:[%s1 + $0x1f0] sm:$0xff]
  %v106 = vld [vmem:[%s1 + $0x1f8] sm:$0xff]
  %v107 = vld [vmem:[%s1 + $0x200] sm:$0xff]
  %v108 = vld [vmem:[%s1 + $0x208] sm:$0xff]
  %v109 = vld [vmem:[%s1 + $0x210] sm:$0xff]
  %v110 = vld [vmem:[%s1 + $0x218] sm:$0xff]
  %v111 = vld [vmem:[%s1 + $0x220] sm:$0xff]
  %v112 = vld [vmem:[%s1 + $0x228] sm:$0xff]
  %v113 = vld [vmem:[%s1 + $0x230] sm:$0xff]
  %v114 = vld [vmem:[%s1 + $0x238] sm:$0xff]
  %v115 = vld [vmem:[%s1 + $0x240] sm:$0xff]
  %v116 = vld [vmem:[%s1 + $0x248] sm:$0xff]
  %v117 = vld [vmem:[%s1 + $0x250] sm:$0xff]
  %v118 = vld [vmem:[%s1 + $0x258] sm:$0xff]
  %v119 = vld [vmem:[%s1 + $0x260] sm:$0xff]
  %v120 = vld [vmem:[%s1 + $0x268] sm:$0xff]
  %v121 = vld [vmem:[%s1 + $0x270] sm:$0xff]
  %v122 = vld [vmem:[%s1 + $0x278] sm:$0xff]
  %v123 = vld [vmem:[%s1 + $0x280] sm:$0xff]
  %v124 = vld [vmem:[%s1 + $0x288] sm:$0xff]
  %v125 = vld [vmem:[%s1 + $0x290] sm:$0xff]
  %v126 = vld [vmem:[%s1 + $0x298] sm:$0xff]
  %v127 = vld [vmem:[%s1 + $0x2a0] sm:$0xff]
  %v128 = vld [vmem:[%s1 + $0x2a8] sm:$0xff]
  %v129 = vld [vmem:[%s1 + $0x2b0] sm:$0xff]
  %v130 = vld [vmem:[%s1 + $0x2b8] sm:$0xff]
  %v131 = vld [vmem:[%s1 + $0x2c0] sm:$0xff]
  %v132 = vld [vmem:[%s1 + $0x2c8] sm:$0xff]
  %v133 = vld [vmem:[%s1 + $0x2d0] sm:$0xff]
  %v134 = vld [vmem:[%s1 + $0x2d8] sm:$0xff]
  %v135 = vld [vmem:[%s1 + $0x2e0] sm:$0xff]
  %v136 = vld [vmem:[%s1 + $0x2e8] sm:$0xff]
  %v137 = vld [vmem:[%s1 + $0x2f0] sm:$0xff]
  %v138 = vld [vmem:[%s1 + $0x2f8] sm:$0xff]
  %v139 = vld [vmem:[%s1 + $0x300] sm:$0xff]
  %v140 = vld [vmem:[%s1 + $0x308] sm:$0xff]
  %v141 = vld [vmem:[%s1 + $0x310] sm:$0xff]
  %v142 = vld [vmem:[%s1 + $0x318] sm:$0xff]
  %v143 = vld [vmem:[%s1 + $0x320] sm:$0xff]
  %v144 = vld [vmem:[%s1 + $0x328] sm:$0xff]
  %v145 = vld [vmem:[%s1 + $0x330] sm:$0xff]
  %v146 = vld [vmem:[%s1 + $0x338] sm:$0xff]
  %v147 = vld [vmem:[%s1 + $0x340] sm:$0xff]
  %v148 = vld [vmem:[%s1 + $0x348] sm:$0xff]
  %v149 = vld [vmem:[%s1 + $0x350] sm:$0xff]
  %v150 = vld [vmem:[%s1 + $0x358] sm:$0xff]
  %v151 = vld [vmem:[%s1 + $0x360] sm:$0xff]
  %v152 = vld [vmem:[%s1 + $0x368] sm:$0xff]
  %v153 = vld [vmem:[%s1 + $0x370] sm:$0xff]
  %v154 = vld [vmem:[%s1 + $0x378] sm:$0xff]
  %v155 = vld [vmem:[%s1 + $0x380] sm:$0xff]
  %v156 = vld [vmem:[%s1 + $0x388] sm:$0xff]
  %v157 = vld [vmem:[%s1 + $0x390] sm:$0xff]
  %v158 = vld [vmem:[%s1 + $0x398] sm:$0xff]
  %v159 = vld [vmem:[%s1 + $0x3a0] sm:$0xff]
  %v160 = vld [vmem:[%s1 + $0x3a8] sm:$0xff]
  %v161 = vld [vmem:[%s1 + $0x3b0] sm:$0xff]
  %v162 = vld [vmem:[%s1 + $0x3b8] sm:$0xff]
  %v163 = vld [vmem:[%s1 + $0x3c0] sm:$0xff]
  %v164 = vld [vmem:[%s1 + $0x3c8] sm:$0xff]
  %v165 = vld [vmem:[%s1 + $0x3d0] sm:$0xff]
  %v166 = vld [vmem:[%s1 + $0x3d8] sm:$0xff]
  %v167 = vld [vmem:[%s1 + $0x3e0] sm:$0xff]
  %v168 = vld [vmem:[%s1 + $0x3e8] sm:$0xff]
  %v169 = vld [vmem:[%s1 + $0x3f0] sm:$0xff]
  %v170 = vld [vmem:[%s1 + $0x3f8] sm:$0xff]
  %v171 = vld [vmem:[%s1 + $0x400] sm:$0xff]
  %v172 = vld [vmem:[%s1 + $0x408] sm:$0xff]
  %v173 = vld [vmem:[%s1 + $0x410] sm:$0xff]
  %v174 = vld [vmem:[%s1 + $0x418] sm:$0xff]
  %v175 = vld [vmem:[%s1 + $0x420] sm:$0xff]
  %v176 = vld [vmem:[%s1 + $0x428] sm:$0xff]
  %v177 = vld [vmem:[%s1 + $0x430] sm:$0xff]
  %v178 = vld [vmem:[%s1 + $0x438] sm:$0xff]
  %v179 = vld [vmem:[%s1 + $0x440] sm:$0xff]
  %v180 = vld [vmem:[%s1 + $0x448] sm:$0xff]
  %v181 = vld [vmem:[%s1 + $0x450] sm:$0xff]
  %v182 = vld [vmem:[%s1 + $0x458] sm:$0xff]
  %v183 = vld [vmem:[%s1 + $0x460] sm:$0xff]
  %v184 = vld [vmem:[%s1 + $0x468] sm:$0xff]
  %v185 = vld [vmem:[%s1 + $0x470] sm:$0xff]
  %v186 = vld [vmem:[%s1 + $0x478] sm:$0xff]
  %v187 = vld [vmem:[%s1 + $0x480] sm:$0xff]
  %v188 = vld [vmem:[%s1 + $0x488] sm:$0xff]
  %v189 = vld [vmem:[%s1 + $0x490] sm:$0xff]
  %v190 = vld [vmem:[%s1 + $0x498] sm:$0xff]
  %v191 = vld [vmem:[%s1 + $0x4a0] sm:$0xff]
  %v192 = vld [vmem:[%s1 + $0x4a8] sm:$0xff]
  %v193 = vld [vmem:[%s1 + $0x4b0] sm:$0xff]
  %v194 = vld [vmem:[%s1 + $0x4b8] sm:$0xff]
  %v195 = vld [vmem:[%s1 + $0x4c0] sm:$0xff]
  %v196 = vld [vmem:[%s1 + $0x4c8] sm:$0xff]
  %v197 = vld [vmem:[%s1 + $0x4d0] sm:$0xff]
  %v198 = vld [vmem:[%s1 + $0x4d8] sm:$0xff]
  %v199 = vld [vmem:[%s1 + $0x4e0] sm:$0xff]
  %v200 = vld [vmem:[%s1 + $0x4e8] sm:$0xff]
  %v201 = vld [vmem:[%s1 + $0x4f0] sm:$0xff]
  %v202 = vld [vmem:[%s1 + $0x4f8] sm:$0xff]
  %v203 = vld [vmem:[%s1 + $0x500] sm:$0xff]
  %v204 = vld [vmem:[%s1 + $0x508] sm:$0xff]
  %v205 = vld [vmem:[%s1 + $0x510] sm:$0xff]
  %v206 = vld [vmem:[%s1 + $0x518] sm:$0xff]
  %v207 = vld [vmem:[%s1 + $0x520] sm:$0xff]
  %v208 = vld [vmem:[%s1 + $0x528] sm:$0xff]
  %v209 = vld [vmem:[%s1 + $0x530] sm:$0xff]
  %v210 = vld [vmem:[%s1 + $0x538] sm:$0xff]
  %v211 = vld [vmem:[%s1 + $0x540] sm:$0xff]
  %v212 = vld [vmem:[%s1 + $0x548] sm:$0xff]
  %v213 = vld [vmem:[%s1 + $0x550] sm:$0xff]
  %v214 = vld [vmem:[%s1 + $0x558] sm:$0xff]
  %v215 = vld [vmem:[%s1 + $0x560] sm:$0xff]
  %v216 = vld [vmem:[%s1 + $0x568] sm:$0xff]
  %v217 = vld [vmem:[%s1 + $0x570] sm:$0xff]
  %v218 = vld [vmem:[%s1 + $0x578] sm:$0xff]
  %v219 = vld [vmem:[%s1 + $0x580] sm:$0xff]
  %v220 = vld [vmem:[%s1 + $0x588] sm:$0xff]
  %v221 = vld [vmem:[%s1 + $0x590] sm:$0xff]
  %v222 = vld [vmem:[%s1 + $0x598] sm:$0xff]
  %v223 = vld [vmem:[%s1 + $0x5a0] sm:$0xff]
  %v224 = vld [vmem:[%s1 + $0x5a8] sm:$0xff]
  %v225 = vld [vmem:[%s1 + $0x5b0] sm:$0xff]
  %v226 = vld [vmem:[%s1 + $0x5b8] sm:$0xff]
  %v227 = vld [vmem:[%s1 + $0x5c0] sm:$0xff]
  %v228 = vld [vmem:[%s1 + $0x5c8] sm:$0xff]
  %v229 = vld [vmem:[%s1 + $0x5d0] sm:$0xff]
  %v230 = vld [vmem:[%s1 + $0x5d8] sm:$0xff]
  %v231 = vld [vmem:[%s1 + $0x5e0] sm:$0xff]
  %v232 = vld [vmem:[%s1 + $0x5e8] sm:$0xff]
  %v233 = vld [vmem:[%s1 + $0x5f0] sm:$0xff]
  %v234 = vld [vmem:[%s1 + $0x5f8] sm:$0xff]
  %v235 = vld [vmem:[%s1 + $0x600] sm:$0xff]
  %v236 = vld [vmem:[%s1 + $0x608] sm:$0xff]
  %v237 = vld [vmem:[%s1 + $0x610] sm:$0xff]
  %v238 = vld [vmem:[%s1 + $0x618] sm:$0xff]
  %v239 = vld [vmem:[%s1 + $0x620] sm:$0xff]
  %v240 = vld [vmem:[%s1 + $0x628] sm:$0xff]
  %v241 = vld [vmem:[%s1 + $0x630] sm:$0xff]
  %v242 = vld [vmem:[%s1 + $0x638] sm:$0xff]
  %v243 = vld [vmem:[%s1 + $0x640] sm:$0xff]
  %v244 = vld [vmem:[%s1 + $0x648] sm:$0xff]
  %v245 = vld [vmem:[%s1 + $0x650] sm:$0xff]
  %v246 = vld [vmem:[%s1 + $0x658] sm:$0xff]
  %v247 = vld [vmem:[%s1 + $0x660] sm:$0xff]
  %v248 = vld [vmem:[%s1 + $0x668] sm:$0xff]
  %v249 = vld [vmem:[%s1 + $0x670] sm:$0xff]
  %v250 = vld [vmem:[%s1 + $0x678] sm:$0xff]
  %v251 = vld [vmem:[%s1 + $0x680] sm:$0xff]
  %v252 = vld [vmem:[%s1 + $0x688] sm:$0xff]
  %v253 = vld [vmem:[%s1 + $0x690] sm:$0xff]
  %v254 = vld [vmem:[%s1 + $0x698] sm:$0xff]
  %v255 = vld [vmem:[%s1 + $0x6a0] sm:$0xff]
  %v256 = vld [vmem:[%s1 + $0x6a8] sm:$0xff]
  %v257 = vld [vmem:[%s1 + $0x6b0] sm:$0xff]
  %v258 = vld [vmem:[%s1 + $0x6b8] sm:$0xff]
  %v259 = vld [vmem:[%s1 + $0x6c0] sm:$0xff]
  %v260 = vld [vmem:[%s1 + $0x6c8] sm:$0xff]
  %v261 = vld [vmem:[%s1 + $0x6d0] sm:$0xff]
  %v262 = vld [vmem:[%s1 + $0x6d8] sm:$0xff]
  %v263 = vld [vmem:[%s1 + $0x6e0] sm:$0xff]
  %v264 = vld [vmem:[%s1 + $0x6e8] sm:$0xff]
  %v265 = vld [vmem:[%s1 + $0x6f0] sm:$0xff]
  %v266 = vld [vmem:[%s1 + $0x6f8] sm:$0xff]
  %v267 = vld [vmem:[%s1 + $0x700] sm:$0xff]
  %v268 = vld [vmem:[%s1 + $0x708] sm:$0xff]
  %v269 = vld [vmem:[%s1 + $0x710] sm:$0xff]
  %v270 = vld [vmem:[%s1 + $0x718] sm:$0xff]
  %v271 = vld [vmem:[%s1 + $0x720] sm:$0xff]
  %v272 = vld [vmem:[%s1 + $0x728] sm:$0xff]
  %v273 = vld [vmem:[%s1 + $0x730] sm:$0xff]
  %v274 = vld [vmem:[%s1 + $0x738] sm:$0xff]
  %v275 = vld [vmem:[%s1 + $0x740] sm:$0xff]
  %v276 = vld [vmem:[%s1 + $0x748] sm:$0xff]
  %v277 = vld [vmem:[%s1 + $0x750] sm:$0xff]
  %v278 = vld [vmem:[%s1 + $0x758] sm:$0xff]
  %v279 = vld [vmem:[%s1 + $0x760] sm:$0xff]
  %v280 = vld [vmem:[%s1 + $0x768] sm:$0xff]
  %v281 = vld [vmem:[%s1 + $0x770] sm:$0xff]
  %v282 = vld [vmem:[%s1 + $0x778] sm:$0xff]
  %v283 = vld [vmem:[%s1 + $0x780] sm:$0xff]
  %v284 = vld [vmem:[%s1 + $0x788] sm:$0xff]
  %v285 = vld [vmem:[%s1 + $0x790] sm:$0xff]
  %v286 = vld [vmem:[%s1 + $0x798] sm:$0xff]
  %v287 = vld [vmem:[%s1 + $0x7a0] sm:$0xff]
  %v288 = vld [vmem:[%s1 + $0x7a8] sm:$0xff]
  %v289 = vld [vmem:[%s1 + $0x7b0] sm:$0xff]
  %v290 = vld [vmem:[%s1 + $0x7b8] sm:$0xff]
  %v291 = vld [vmem:[%s1 + $0x7c0] sm:$0xff]
  %v292 = vld [vmem:[%s1 + $0x7c8] sm:$0xff]
  %v293 = vld [vmem:[%s1 + $0x7d0] sm:$0xff]
  %v294 = vld [vmem:[%s1 + $0x7d8] sm:$0xff]
  %v295 = vld [vmem:[%s1 + $0x7e0] sm:$0xff]
  %v296 = vld [vmem:[%s1 + $0x7e8] sm:$0xff]
  %v297 = vld [vmem:[%s1 + $0x7f0] sm:$0xff]
  %v298 = vld [vmem:[%s1 + $0x7f8] sm:$0xff]
  %v299 = vld [vmem:[%s1 + $0x800] sm:$0xff]
  %v300 = vld [vmem:[%s1 + $0x808] sm:$0xff]
  %v301 = vld [vmem:[%s1 + $0x810] sm:$0xff]
  %v302 = vld [vmem:[%s1 + $0x818] sm:$0xff]
  %v303 = vld [vmem:[%s1 + $0x820] sm:$0xff]
  %v304 = vld [vmem:[%s1 + $0x828] sm:$0xff]
  %v305 = vld [vmem:[%s1 + $0x830] sm:$0xff]
  %v306 = vld [vmem:[%s1 + $0x838] sm:$0xff]
  %v307 = vld [vmem:[%s1 + $0x840] sm:$0xff]
  %v308 = vld [vmem:[%s1 + $0x848] sm:$0xff]
  %v309 = vld [vmem:[%s1 + $0x850] sm:$0xff]
  %v310 = vld [vmem:[%s1 + $0x858] sm:$0xff]
  %v311 = vld [vmem:[%s1 + $0x860] sm:$0xff]
  %v312 = vld [vmem:[%s1 + $0x868] sm:$0xff]
  %v313 = vld [vmem:[%s1 + $0x870] sm:$0xff]
  %v314 = vld [vmem:[%s1 + $0x878] sm:$0xff]
  %v315 = vld [vmem:[%s1 + $0x880] sm:$0xff]
  %v316 = vld [vmem:[%s1 + $0x888] sm:$0xff]
  %v317 = vld [vmem:[%s1 + $0x890] sm:$0xff]
  %v318 = vld [vmem:[%s1 + $0x898] sm:$0xff]
  %v319 = vld [vmem:[%s1 + $0x8a0] sm:$0xff]
  %v320 = vld [vmem:[%s1 + $0x8a8] sm:$0xff]
  %v321 = vld [vmem:[%s1 + $0x8b0] sm:$0xff]
  %v322 = vld [vmem:[%s1 + $0x8b8] sm:$0xff]
  %v323 = vld [vmem:[%s1 + $0x8c0] sm:$0xff]
  %v324 = vld [vmem:[%s1 + $0x8c8] sm:$0xff]
  %v325 = vld [vmem:[%s1 + $0x8d0] sm:$0xff]
  %v326 = vld [vmem:[%s1 + $0x8d8] sm:$0xff]
  %v327 = vld [vmem:[%s1 + $0x8e0] sm:$0xff]
  %v328 = vld [vmem:[%s1 + $0x8e8] sm:$0xff]
  %v329 = vld [vmem:[%s1 + $0x8f0] sm:$0xff]
  %v330 = vld [vmem:[%s1 + $0x8f8] sm:$0xff]
  %v331 = vld [vmem:[%s1 + $0x900] sm:$0xff]
  %v332 = vld [vmem:[%s1 + $0x908] sm:$0xff]
  %v333 = vld [vmem:[%s1 + $0x910] sm:$0xff]
  %v334 = vld [vmem:[%s1 + $0x918] sm:$0xff]
  %v335 = vld [vmem:[%s1 + $0x920] sm:$0xff]
  %v336 = vld [vmem:[%s1 + $0x928] sm:$0xff]
  %v337 = vld [vmem:[%s1 + $0x930] sm:$0xff]
  %v338 = vld [vmem:[%s1 + $0x938] sm:$0xff]
  %v339 = vld [vmem:[%s1 + $0x940] sm:$0xff]
  %v340 = vld [vmem:[%s1 + $0x948] sm:$0xff]
  %v341 = vld [vmem:[%s1 + $0x950] sm:$0xff]
  %v342 = vld [vmem:[%s1 + $0x958] sm:$0xff]
  %v343 = vld [vmem:[%s1 + $0x960] sm:$0xff]
  %v344 = vld [vmem:[%s1 + $0x968] sm:$0xff]
  %v345 = vld [vmem:[%s1 + $0x970] sm:$0xff]
  %v346 = vld [vmem:[%s1 + $0x978] sm:$0xff]
  %v347 = vld [vmem:[%s1 + $0x980] sm:$0xff]
  %v348 = vld [vmem:[%s1 + $0x988] sm:$0xff]
  %v349 = vld [vmem:[%s1 + $0x990] sm:$0xff]
  %v350 = vld [vmem:[%s1 + $0x998] sm:$0xff]
  %v351 = vld [vmem:[%s1 + $0x9a0] sm:$0xff]
  %v352 = vld [vmem:[%s1 + $0x9a8] sm:$0xff]
  %v353 = vld [vmem:[%s1 + $0x9b0] sm:$0xff]
  %v354 = vld [vmem:[%s1 + $0x9b8] sm:$0xff]
  %v355 = vld [vmem:[%s1 + $0x9c0] sm:$0xff]
  %v356 = vld [vmem:[%s1 + $0x9c8] sm:$0xff]
  %v357 = vld [vmem:[%s1 + $0x9d0] sm:$0xff]
  %v358 = vld [vmem:[%s1 + $0x9d8] sm:$0xff]
  %v359 = vld [vmem:[%s1 + $0x9e0] sm:$0xff]
  %v360 = vld [vmem:[%s1 + $0x9e8] sm:$0xff]
  %v361 = vld [vmem:[%s1 + $0x9f0] sm:$0xff]
  %v362 = vld [vmem:[%s1 + $0x9f8] sm:$0xff]
  %v363 = vld [vmem:[%s1 + $0xa00] sm:$0xff]
  %v364 = vld [vmem:[%s1 + $0xa08] sm:$0xff]
  %v365 = vld [vmem:[%s1 + $0xa10] sm:$0xff]
  %v366 = vld [vmem:[%s1 + $0xa18] sm:$0xff]
  %v367 = vld [vmem:[%s1 + $0xa20] sm:$0xff]
  %v368 = vld [vmem:[%s1 + $0xa28] sm:$0xff]
  %v369 = vld [vmem:[%s1 + $0xa30] sm:$0xff]
  %v370 = vld [vmem:[%s1 + $0xa38] sm:$0xff]
  %v371 = vld [vmem:[%s1 + $0xa40] sm:$0xff]
  %v372 = vld [vmem:[%s1 + $0xa48] sm:$0xff]
  %v373 = vld [vmem:[%s1 + $0xa50] sm:$0xff]
  %v374 = vld [vmem:[%s1 + $0xa58] sm:$0xff]
  %v375 = vld [vmem:[%s1 + $0xa60] sm:$0xff]
  %v376 = vld [vmem:[%s1 + $0xa68] sm:$0xff]
  %v377 = vld [vmem:[%s1 + $0xa70] sm:$0xff]
  %v378 = vld [vmem:[%s1 + $0xa78] sm:$0xff]
  %v379 = vld [vmem:[%s1 + $0xa80] sm:$0xff]
  %v380 = vld [vmem:[%s1 + $0xa88] sm:$0xff]
  %v381 = vld [vmem:[%s1 + $0xa90] sm:$0xff]
  %v382 = vld [vmem:[%s1 + $0xa98] sm:$0xff]
  %v383 = vld [vmem:[%s1 + $0xaa0] sm:$0xff]
  %v384 = vld [vmem:[%s1 + $0xaa8] sm:$0xff]
  %v385 = vld [vmem:[%s1 + $0xab0] sm:$0xff]
  %v386 = vld [vmem:[%s1 + $0xab8] sm:$0xff]
  %v387 = vld [vmem:[%s1 + $0xac0] sm:$0xff]
  %v388 = vld [vmem:[%s1 + $0xac8] sm:$0xff]
  %v389 = vld [vmem:[%s1 + $0xad0] sm:$0xff]
  %v390 = vld [vmem:[%s1 + $0xad8] sm:$0xff]
  %v391 = vld [vmem:[%s1 + $0xae0] sm:$0xff]
  %v392 = vld [vmem:[%s1 + $0xae8] sm:$0xff]
  %v393 = vld [vmem:[%s1 + $0xaf0] sm:$0xff]
  %v394 = vld [vmem:[%s1 + $0xaf8] sm:$0xff]
  %v395 = vld [vmem:[%s1 + $0xb00] sm:$0xff]
  %v396 = vld [vmem:[%s1 + $0xb08] sm:$0xff]
  %v397 = vld [vmem:[%s1 + $0xb10] sm:$0xff]
  %v398 = vld [vmem:[%s1 + $0xb18] sm:$0xff]
  %v399 = vld [vmem:[%s1 + $0xb20] sm:$0xff]
  %v400 = vld [vmem:[%s1 + $0xb28] sm:$0xff]
  %v401 = vld [vmem:[%s1 + $0xb30] sm:$0xff]
  %v402 = vld [vmem:[%s1 + $0xb38] sm:$0xff]
  %v403 = vld [vmem:[%s1 + $0xb40] sm:$0xff]
  %v404 = vld [vmem:[%s1 + $0xb48] sm:$0xff]
  %v405 = vld [vmem:[%s1 + $0xb50] sm:$0xff]
  %v406 = vld [vmem:[%s1 + $0xb58] sm:$0xff]
  %v407 = vld [vmem:[%s1 + $0xb60] sm:$0xff]
  %v408 = vld [vmem:[%s1 + $0xb68] sm:$0xff]
  %v409 = vld [vmem:[%s1 + $0xb70] sm:$0xff]
  %v410 = vld [vmem:[%s1 + $0xb78] sm:$0xff]
  %v411 = vld [vmem:[%s1 + $0xb80] sm:$0xff]
  %v412 = vld [vmem:[%s1 + $0xb88] sm:$0xff]
  %v413 = vld [vmem:[%s1 + $0xb90] sm:$0xff]
  %v414 = vld [vmem:[%s1 + $0xb98] sm:$0xff]
  %v415 = vld [vmem:[%s1 + $0xba0] sm:$0xff]
  %v416 = vld [vmem:[%s1 + $0xba8] sm:$0xff]
  %v417 = vld [vmem:[%s1 + $0xbb0] sm:$0xff]
  %v418 = vld [vmem:[%s1 + $0xbb8] sm:$0xff]
  %v419 = vld [vmem:[%s1 + $0xbc0] sm:$0xff]
  %v420 = vld [vmem:[%s1 + $0xbc8] sm:$0xff]
  %v421 = vld [vmem:[%s1 + $0xbd0] sm:$0xff]
  %v422 = vld [vmem:[%s1 + $0xbd8] sm:$0xff]
  %v423 = vld [vmem:[%s1 + $0xbe0] sm:$0xff]
  %v424 = vld [vmem:[%s1 + $0xbe8] sm:$0xff]
  %v425 = vld [vmem:[%s1 + $0xbf0] sm:$0xff]
  %v426 = vld [vmem:[%s1 + $0xbf8] sm:$0xff]
  %v427 = vld [vmem:[%s1 + $0xc00] sm:$0xff]
  %v428 = vld [vmem:[%s1 + $0xc08] sm:$0xff]
  %v429 = vld [vmem:[%s1 + $0xc10] sm:$0xff]
  %v430 = vld [vmem:[%s1 + $0xc18] sm:$0xff]
  %v431 = vld [vmem:[%s1 + $0xc20] sm:$0xff]
  %v432 = vld [vmem:[%s1 + $0xc28] sm:$0xff]
  %v433 = vld [vmem:[%s1 + $0xc30] sm:$0xff]
  %v434 = vld [vmem:[%s1 + $0xc38] sm:$0xff]
  %v435 = vld [vmem:[%s1 + $0xc40] sm:$0xff]
  %v436 = vld [vmem:[%s1 + $0xc48] sm:$0xff]
  %v437 = vld [vmem:[%s1 + $0xc50] sm:$0xff]
  %v438 = vld [vmem:[%s1 + $0xc58] sm:$0xff]
  %v439 = vld [vmem:[%s1 + $0xc60] sm:$0xff]
  %v440 = vld [vmem:[%s1 + $0xc68] sm:$0xff]
  %v441 = vld [vmem:[%s1 + $0xc70] sm:$0xff]
  %v442 = vld [vmem:[%s1 + $0xc78] sm:$0xff]
  %v443 = vld [vmem:[%s1 + $0xc80] sm:$0xff]
  %v444 = vld [vmem:[%s1 + $0xc88] sm:$0xff]
  %v445 = vld [vmem:[%s1 + $0xc90] sm:$0xff]
  %v446 = vld [vmem:[%s1 + $0xc98] sm:$0xff]
  %v447 = vld [vmem:[%s1 + $0xca0] sm:$0xff]
  %v448 = vld [vmem:[%s1 + $0xca8] sm:$0xff]
  %v449 = vld [vmem:[%s1 + $0xcb0] sm:$0xff]
  %v450 = vld [vmem:[%s1 + $0xcb8] sm:$0xff]
  %v451 = vld [vmem:[%s1 + $0xcc0] sm:$0xff]
  %v452 = vld [vmem:[%s1 + $0xcc8] sm:$0xff]
  %v453 = vld [vmem:[%s1 + $0xcd0] sm:$0xff]
  %v454 = vld [vmem:[%s1 + $0xcd8] sm:$0xff]
  %v455 = vld [vmem:[%s1 + $0xce0] sm:$0xff]
  %v456 = vld [vmem:[%s1 + $0xce8] sm:$0xff]
  %v457 = vld [vmem:[%s1 + $0xcf0] sm:$0xff]
  %v458 = vld [vmem:[%s1 + $0xcf8] sm:$0xff]
  %v459 = vld [vmem:[%s1 + $0xd00] sm:$0xff]
  %v460 = vld [vmem:[%s1 + $0xd08] sm:$0xff]
  %v461 = vld [vmem:[%s1 + $0xd10] sm:$0xff]
  %v462 = vld [vmem:[%s1 + $0xd18] sm:$0xff]
  %v463 = vld [vmem:[%s1 + $0xd20] sm:$0xff]
  %v464 = vld [vmem:[%s1 + $0xd28] sm:$0xff]
  %v465 = vld [vmem:[%s1 + $0xd30] sm:$0xff]
  %v466 = vld [vmem:[%s1 + $0xd38] sm:$0xff]
  %v467 = vld [vmem:[%s1 + $0xd40] sm:$0xff]
  %v468 = vld [vmem:[%s1 + $0xd48] sm:$0xff]
  %v469 = vld [vmem:[%s1 + $0xd50] sm:$0xff]
  %v470 = vld [vmem:[%s1 + $0xd58] sm:$0xff]
  %v471 = vld [vmem:[%s1 + $0xd60] sm:$0xff]
  %v472 = vld [vmem:[%s1 + $0xd68] sm:$0xff]
  %v473 = vld [vmem:[%s1 + $0xd70] sm:$0xff]
  %v474 = vld [vmem:[%s1 + $0xd78] sm:$0xff]
  %v475 = vld [vmem:[%s1 + $0xd80] sm:$0xff]
  %v476 = vld [vmem:[%s1 + $0xd88] sm:$0xff]
  %v477 = vld [vmem:[%s1 + $0xd90] sm:$0xff]
  %v478 = vld [vmem:[%s1 + $0xd98] sm:$0xff]
  %v479 = vld [vmem:[%s1 + $0xda0] sm:$0xff]
  %v480 = vld [vmem:[%s1 + $0xda8] sm:$0xff]
  %v481 = vld [vmem:[%s1 + $0xdb0] sm:$0xff]
  %v482 = vld [vmem:[%s1 + $0xdb8] sm:$0xff]
  %v483 = vld [vmem:[%s1 + $0xdc0] sm:$0xff]
  %v484 = vld [vmem:[%s1 + $0xdc8] sm:$0xff]
  %v485 = vld [vmem:[%s1 + $0xdd0] sm:$0xff]
  %v486 = vld [vmem:[%s1 + $0xdd8] sm:$0xff]
  %v487 = vld [vmem:[%s1 + $0xde0] sm:$0xff]
  %v488 = vld [vmem:[%s1 + $0xde8] sm:$0xff]
  %v489 = vld [vmem:[%s1 + $0xdf0] sm:$0xff]
  %v490 = vld [vmem:[%s1 + $0xdf8] sm:$0xff]
  %v491 = vld [vmem:[%s1 + $0xe00] sm:$0xff]
  %v492 = vld [vmem:[%s1 + $0xe08] sm:$0xff]
  %v493 = vld [vmem:[%s1 + $0xe10] sm:$0xff]
  %v494 = vld [vmem:[%s1 + $0xe18] sm:$0xff]
  %v495 = vld [vmem:[%s1 + $0xe20] sm:$0xff]
  %v496 = vld [vmem:[%s1 + $0xe28] sm:$0xff]
  %v497 = vld [vmem:[%s1 + $0xe30] sm:$0xff]
  %v498 = vld [vmem:[%s1 + $0xe38] sm:$0xff]
  %v499 = vld [vmem:[%s1 + $0xe40] sm:$0xff]
  %v500 = vld [vmem:[%s1 + $0xe48] sm:$0xff]
  %v501 = vld [vmem:[%s1 + $0xe50] sm:$0xff]
  %v502 = vld [vmem:[%s1 + $0xe58] sm:$0xff]
  %v503 = vld [vmem:[%s1 + $0xe60] sm:$0xff]
  %v504 = vld [vmem:[%s1 + $0xe68] sm:$0xff]
  %v505 = vld [vmem:[%s1 + $0xe70] sm:$0xff]
  %v506 = vld [vmem:[%s1 + $0xe78] sm:$0xff]
  %v507 = vld [vmem:[%s1 + $0xe80] sm:$0xff]
  %v508 = vld [vmem:[%s1 + $0xe88] sm:$0xff]
  %v509 = vld [vmem:[%s1 + $0xe90] sm:$0xff]
  %v510 = vld [vmem:[%s1 + $0xe98] sm:$0xff]
  %v511 = vld [vmem:[%s1 + $0xea0] sm:$0xff]
  %v512 = vld [vmem:[%s1 + $0xea8] sm:$0xff]
  %v513 = vld [vmem:[%s1 + $0xeb0] sm:$0xff]
  %v514 = vld [vmem:[%s1 + $0xeb8] sm:$0xff]
  %v515 = vld [vmem:[%s1 + $0xec0] sm:$0xff]
  %v516 = vld [vmem:[%s1 + $0xec8] sm:$0xff]
  %v517 = vld [vmem:[%s1 + $0xed0] sm:$0xff]
  %v518 = vld [vmem:[%s1 + $0xed8] sm:$0xff]
  %v519 = vld [vmem:[%s1 + $0xee0] sm:$0xff]
  %v520 = vld [vmem:[%s1 + $0xee8] sm:$0xff]
  %v521 = vld [vmem:[%s1 + $0xef0] sm:$0xff]
  %v522 = vld [vmem:[%s1 + $0xef8] sm:$0xff]
  %v523 = vld [vmem:[%s1 + $0xf00] sm:$0xff]
  %v524 = vld [vmem:[%s1 + $0xf08] sm:$0xff]
  %v525 = vld [vmem:[%s1 + $0xf10] sm:$0xff]
  %v526 = vld [vmem:[%s1 + $0xf18] sm:$0xff]
  %v527 = vld [vmem:[%s1 + $0xf20] sm:$0xff]
  %v528 = vld [vmem:[%s1 + $0xf28] sm:$0xff]
  %v529 = vld [vmem:[%s1 + $0xf30] sm:$0xff]
  %v530 = vld [vmem:[%s1 + $0xf38] sm:$0xff]
  %v531 = vld [vmem:[%s1 + $0xf40] sm:$0xff]
  %v532 = vld [vmem:[%s1 + $0xf48] sm:$0xff]
  %v533 = vld [vmem:[%s1 + $0xf50] sm:$0xff]
  %v534 = vld [vmem:[%s1 + $0xf58] sm:$0xff]
  %v535 = vld [vmem:[%s1 + $0xf60] sm:$0xff]
  %v536 = vld [vmem:[%s1 + $0xf68] sm:$0xff]
  %v537 = vld [vmem:[%s1 + $0xf70] sm:$0xff]
  %v538 = vld [vmem:[%s1 + $0xf78] sm:$0xff]
  %v539 = vld [vmem:[%s1 + $0xf80] sm:$0xff]
  %v540 = vld [vmem:[%s1 + $0xf88] sm:$0xff]
  %v541 = vld [vmem:[%s1 + $0xf90] sm:$0xff]
  %v542 = vld [vmem:[%s1 + $0xf98] sm:$0xff]
  %v543 = vld [vmem:[%s1 + $0xfa0] sm:$0xff]
  %v544 = vld [vmem:[%s1 + $0xfa8] sm:$0xff]
  %v545 = vld [vmem:[%s1 + $0xfb0] sm:$0xff]
  %v546 = vld [vmem:[%s1 + $0xfb8] sm:$0xff]
  %v547 = vld [vmem:[%s1 + $0xfc0] sm:$0xff]
  %v548 = vld [vmem:[%s1 + $0xfc8] sm:$0xff]
  %v549 = vld [vmem:[%s1 + $0xfd0] sm:$0xff]
  %v550 = vld [vmem:[%s1 + $0xfd8] sm:$0xff]
  %v551 = vld [vmem:[%s1 + $0xfe0] sm:$0xff]
  %v552 = vld [vmem:[%s1 + $0xfe8] sm:$0xff]
  %v553 = vld [vmem:[%s1 + $0xff0] sm:$0xff]
  %v554 = vld [vmem:[%s1 + $0xff8] sm:$0xff]
  %v555 = vld [vmem:[%s2] sm:$0xf]
  %v557 = vlaneseq
  %v558 = vshrl.u32 %v557, 7
  %v559 = vsub.s32 0, %v558
  %v560 = vrot.slane %v555, %v559
  %v561 = vlaneseq
  %v562 = vshrl.u32 %v561, 7
  %v563 = vsub.s32 1, %v562
  %v564 = vrot.slane %v555, %v563
  %v565 = vlaneseq
  %v566 = vshrl.u32 %v565, 7
  %v567 = vsub.s32 2, %v566
  %v568 = vrot.slane %v555, %v567
  %v569 = vlaneseq
  %v570 = vshrl.u32 %v569, 7
  %v571 = vsub.s32 3, %v570
  %v572 = vrot.slane %v555, %v571
  %v593 = vunpack.c.l.b16 %v27
  %v594 = vunpack.c.h.b16 %v27
  %v595 = vunpack.c.l.b16 %v28
  %v596 = vunpack.c.h.b16 %v28
  %v597 = vunpack.c.l.b16 %v29
  %v598 = vunpack.c.h.b16 %v29
  %v599 = vunpack.c.l.b16 %v30
  %v600 = vunpack.c.h.b16 %v30
  %v601 = vunpack.c.l.b16 %v31
  %v602 = vunpack.c.h.b16 %v31
  %v603 = vunpack.c.l.b16 %v32
  %v604 = vunpack.c.h.b16 %v32
  %v605 = vunpack.c.l.b16 %v33
  %v606 = vunpack.c.h.b16 %v33
  %v607 = vunpack.c.l.b16 %v34
  %v608 = vunpack.c.h.b16 %v34
  %v609 = vunpack.c.l.b16 %v35
  %v610 = vunpack.c.h.b16 %v35
  %v611 = vunpack.c.l.b16 %v36
  %v612 = vunpack.c.h.b16 %v36
  %v613 = vunpack.c.l.b16 %v37
  %v614 = vunpack.c.h.b16 %v37
  %v615 = vunpack.c.l.b16 %v38
  %v616 = vunpack.c.h.b16 %v38
  %v617 = vunpack.c.l.b16 %v39
  %v618 = vunpack.c.h.b16 %v39
  %v619 = vunpack.c.l.b16 %v40
  %v620 = vunpack.c.h.b16 %v40
  %v621 = vunpack.c.l.b16 %v41
  %v622 = vunpack.c.h.b16 %v41
  %v623 = vunpack.c.l.b16 %v42
  %v624 = vunpack.c.h.b16 %v42
  %v625 = vpack.c.b16 %v609, %v593
  %v626 = vpack.c.b16 %v610, %v594
  %v627 = vpack.c.b16 %v611, %v595
  %v628 = vpack.c.b16 %v612, %v596
  %v629 = vpack.c.b16 %v613, %v597
  %v630 = vpack.c.b16 %v614, %v598
  %v631 = vpack.c.b16 %v615, %v599
  %v632 = vpack.c.b16 %v616, %v600
  %v633 = vpack.c.b16 %v617, %v601
  %v634 = vpack.c.b16 %v618, %v602
  %v635 = vpack.c.b16 %v619, %v603
  %v636 = vpack.c.b16 %v620, %v604
  %v637 = vpack.c.b16 %v621, %v605
  %v638 = vpack.c.b16 %v622, %v606
  %v639 = vpack.c.b16 %v623, %v607
  %v640 = vpack.c.b16 %v624, %v608
  %v1169 = vunpack.c.l.b16 %v43
  %v1170 = vunpack.c.h.b16 %v43
  %v1171 = vunpack.c.l.b16 %v44
  %v1172 = vunpack.c.h.b16 %v44
  %v1173 = vunpack.c.l.b16 %v45
  %v1174 = vunpack.c.h.b16 %v45
  %v1175 = vunpack.c.l.b16 %v46
  %v1176 = vunpack.c.h.b16 %v46
  %v1177 = vunpack.c.l.b16 %v47
  %v1178 = vunpack.c.h.b16 %v47
  %v1179 = vunpack.c.l.b16 %v48
  %v1180 = vunpack.c.h.b16 %v48
  %v1181 = vunpack.c.l.b16 %v49
  %v1182 = vunpack.c.h.b16 %v49
  %v1183 = vunpack.c.l.b16 %v50
  %v1184 = vunpack.c.h.b16 %v50
  %v1185 = vunpack.c.l.b16 %v51
  %v1186 = vunpack.c.h.b16 %v51
  %v1187 = vunpack.c.l.b16 %v52
  %v1188 = vunpack.c.h.b16 %v52
  %v1189 = vunpack.c.l.b16 %v53
  %v1190 = vunpack.c.h.b16 %v53
  %v1191 = vunpack.c.l.b16 %v54
  %v1192 = vunpack.c.h.b16 %v54
  %v1193 = vunpack.c.l.b16 %v55
  %v1194 = vunpack.c.h.b16 %v55
  %v1195 = vunpack.c.l.b16 %v56
  %v1196 = vunpack.c.h.b16 %v56
  %v1197 = vunpack.c.l.b16 %v57
  %v1198 = vunpack.c.h.b16 %v57
  %v1199 = vunpack.c.l.b16 %v58
  %v1200 = vunpack.c.h.b16 %v58
  %v1201 = vunpack.c.l.b16 %v59
  %v1202 = vunpack.c.h.b16 %v59
  %v1203 = vunpack.c.l.b16 %v60
  %v1204 = vunpack.c.h.b16 %v60
  %v1205 = vunpack.c.l.b16 %v61
  %v1206 = vunpack.c.h.b16 %v61
  %v1207 = vunpack.c.l.b16 %v62
  %v1208 = vunpack.c.h.b16 %v62
  %v1209 = vunpack.c.l.b16 %v63
  %v1210 = vunpack.c.h.b16 %v63
  %v1211 = vunpack.c.l.b16 %v64
  %v1212 = vunpack.c.h.b16 %v64
  %v1213 = vunpack.c.l.b16 %v65
  %v1214 = vunpack.c.h.b16 %v65
  %v1215 = vunpack.c.l.b16 %v66
  %v1216 = vunpack.c.h.b16 %v66
  %v1217 = vunpack.c.l.b16 %v67
  %v1218 = vunpack.c.h.b16 %v67
  %v1219 = vunpack.c.l.b16 %v68
  %v1220 = vunpack.c.h.b16 %v68
  %v1221 = vunpack.c.l.b16 %v69
  %v1222 = vunpack.c.h.b16 %v69
  %v1223 = vunpack.c.l.b16 %v70
  %v1224 = vunpack.c.h.b16 %v70
  %v1225 = vunpack.c.l.b16 %v71
  %v1226 = vunpack.c.h.b16 %v71
  %v1227 = vunpack.c.l.b16 %v72
  %v1228 = vunpack.c.h.b16 %v72
  %v1229 = vunpack.c.l.b16 %v73
  %v1230 = vunpack.c.h.b16 %v73
  %v1231 = vunpack.c.l.b16 %v74
  %v1232 = vunpack.c.h.b16 %v74
  %v1233 = vunpack.c.l.b16 %v75
  %v1234 = vunpack.c.h.b16 %v75
  %v1235 = vunpack.c.l.b16 %v76
  %v1236 = vunpack.c.h.b16 %v76
  %v1237 = vunpack.c.l.b16 %v77
  %v1238 = vunpack.c.h.b16 %v77
  %v1239 = vunpack.c.l.b16 %v78
  %v1240 = vunpack.c.h.b16 %v78
  %v1241 = vunpack.c.l.b16 %v79
  %v1242 = vunpack.c.h.b16 %v79
  %v1243 = vunpack.c.l.b16 %v80
  %v1244 = vunpack.c.h.b16 %v80
  %v1245 = vunpack.c.l.b16 %v81
  %v1246 = vunpack.c.h.b16 %v81
  %v1247 = vunpack.c.l.b16 %v82
  %v1248 = vunpack.c.h.b16 %v82
  %v1249 = vunpack.c.l.b16 %v83
  %v1250 = vunpack.c.h.b16 %v83
  %v1251 = vunpack.c.l.b16 %v84
  %v1252 = vunpack.c.h.b16 %v84
  %v1253 = vunpack.c.l.b16 %v85
  %v1254 = vunpack.c.h.b16 %v85
  %v1255 = vunpack.c.l.b16 %v86
  %v1256 = vunpack.c.h.b16 %v86
  %v1257 = vunpack.c.l.b16 %v87
  %v1258 = vunpack.c.h.b16 %v87
  %v1259 = vunpack.c.l.b16 %v88
  %v1260 = vunpack.c.h.b16 %v88
  %v1261 = vunpack.c.l.b16 %v89
  %v1262 = vunpack.c.h.b16 %v89
  %v1263 = vunpack.c.l.b16 %v90
  %v1264 = vunpack.c.h.b16 %v90
  %v1265 = vunpack.c.l.b16 %v91
  %v1266 = vunpack.c.h.b16 %v91
  %v1267 = vunpack.c.l.b16 %v92
  %v1268 = vunpack.c.h.b16 %v92
  %v1269 = vunpack.c.l.b16 %v93
  %v1270 = vunpack.c.h.b16 %v93
  %v1271 = vunpack.c.l.b16 %v94
  %v1272 = vunpack.c.h.b16 %v94
  %v1273 = vunpack.c.l.b16 %v95
  %v1274 = vunpack.c.h.b16 %v95
  %v1275 = vunpack.c.l.b16 %v96
  %v1276 = vunpack.c.h.b16 %v96
  %v1277 = vunpack.c.l.b16 %v97
  %v1278 = vunpack.c.h.b16 %v97
  %v1279 = vunpack.c.l.b16 %v98
  %v1280 = vunpack.c.h.b16 %v98
  %v1281 = vunpack.c.l.b16 %v99
  %v1282 = vunpack.c.h.b16 %v99
  %v1283 = vunpack.c.l.b16 %v100
  %v1284 = vunpack.c.h.b16 %v100
  %v1285 = vunpack.c.l.b16 %v101
  %v1286 = vunpack.c.h.b16 %v101
  %v1287 = vunpack.c.l.b16 %v102
  %v1288 = vunpack.c.h.b16 %v102
  %v1289 = vunpack.c.l.b16 %v103
  %v1290 = vunpack.c.h.b16 %v103
  %v1291 = vunpack.c.l.b16 %v104
  %v1292 = vunpack.c.h.b16 %v104
  %v1293 = vunpack.c.l.b16 %v105
  %v1294 = vunpack.c.h.b16 %v105
  %v1295 = vunpack.c.l.b16 %v106
  %v1296 = vunpack.c.h.b16 %v106
  %v1297 = vunpack.c.l.b16 %v107
  %v1298 = vunpack.c.h.b16 %v107
  %v1299 = vunpack.c.l.b16 %v108
  %v1300 = vunpack.c.h.b16 %v108
  %v1301 = vunpack.c.l.b16 %v109
  %v1302 = vunpack.c.h.b16 %v109
  %v1303 = vunpack.c.l.b16 %v110
  %v1304 = vunpack.c.h.b16 %v110
  %v1305 = vunpack.c.l.b16 %v111
  %v1306 = vunpack.c.h.b16 %v111
  %v1307 = vunpack.c.l.b16 %v112
  %v1308 = vunpack.c.h.b16 %v112
  %v1309 = vunpack.c.l.b16 %v113
  %v1310 = vunpack.c.h.b16 %v113
  %v1311 = vunpack.c.l.b16 %v114
  %v1312 = vunpack.c.h.b16 %v114
  %v1313 = vunpack.c.l.b16 %v115
  %v1314 = vunpack.c.h.b16 %v115
  %v1315 = vunpack.c.l.b16 %v116
  %v1316 = vunpack.c.h.b16 %v116
  %v1317 = vunpack.c.l.b16 %v117
  %v1318 = vunpack.c.h.b16 %v117
  %v1319 = vunpack.c.l.b16 %v118
  %v1320 = vunpack.c.h.b16 %v118
  %v1321 = vunpack.c.l.b16 %v119
  %v1322 = vunpack.c.h.b16 %v119
  %v1323 = vunpack.c.l.b16 %v120
  %v1324 = vunpack.c.h.b16 %v120
  %v1325 = vunpack.c.l.b16 %v121
  %v1326 = vunpack.c.h.b16 %v121
  %v1327 = vunpack.c.l.b16 %v122
  %v1328 = vunpack.c.h.b16 %v122
  %v1329 = vunpack.c.l.b16 %v123
  %v1330 = vunpack.c.h.b16 %v123
  %v1331 = vunpack.c.l.b16 %v124
  %v1332 = vunpack.c.h.b16 %v124
  %v1333 = vunpack.c.l.b16 %v125
  %v1334 = vunpack.c.h.b16 %v125
  %v1335 = vunpack.c.l.b16 %v126
  %v1336 = vunpack.c.h.b16 %v126
  %v1337 = vunpack.c.l.b16 %v127
  %v1338 = vunpack.c.h.b16 %v127
  %v1339 = vunpack.c.l.b16 %v128
  %v1340 = vunpack.c.h.b16 %v128
  %v1341 = vunpack.c.l.b16 %v129
  %v1342 = vunpack.c.h.b16 %v129
  %v1343 = vunpack.c.l.b16 %v130
  %v1344 = vunpack.c.h.b16 %v130
  %v1345 = vunpack.c.l.b16 %v131
  %v1346 = vunpack.c.h.b16 %v131
  %v1347 = vunpack.c.l.b16 %v132
  %v1348 = vunpack.c.h.b16 %v132
  %v1349 = vunpack.c.l.b16 %v133
  %v1350 = vunpack.c.h.b16 %v133
  %v1351 = vunpack.c.l.b16 %v134
  %v1352 = vunpack.c.h.b16 %v134
  %v1353 = vunpack.c.l.b16 %v135
  %v1354 = vunpack.c.h.b16 %v135
  %v1355 = vunpack.c.l.b16 %v136
  %v1356 = vunpack.c.h.b16 %v136
  %v1357 = vunpack.c.l.b16 %v137
  %v1358 = vunpack.c.h.b16 %v137
  %v1359 = vunpack.c.l.b16 %v138
  %v1360 = vunpack.c.h.b16 %v138
  %v1361 = vunpack.c.l.b16 %v139
  %v1362 = vunpack.c.h.b16 %v139
  %v1363 = vunpack.c.l.b16 %v140
  %v1364 = vunpack.c.h.b16 %v140
  %v1365 = vunpack.c.l.b16 %v141
  %v1366 = vunpack.c.h.b16 %v141
  %v1367 = vunpack.c.l.b16 %v142
  %v1368 = vunpack.c.h.b16 %v142
  %v1369 = vunpack.c.l.b16 %v143
  %v1370 = vunpack.c.h.b16 %v143
  %v1371 = vunpack.c.l.b16 %v144
  %v1372 = vunpack.c.h.b16 %v144
  %v1373 = vunpack.c.l.b16 %v145
  %v1374 = vunpack.c.h.b16 %v145
  %v1375 = vunpack.c.l.b16 %v146
  %v1376 = vunpack.c.h.b16 %v146
  %v1377 = vunpack.c.l.b16 %v147
  %v1378 = vunpack.c.h.b16 %v147
  %v1379 = vunpack.c.l.b16 %v148
  %v1380 = vunpack.c.h.b16 %v148
  %v1381 = vunpack.c.l.b16 %v149
  %v1382 = vunpack.c.h.b16 %v149
  %v1383 = vunpack.c.l.b16 %v150
  %v1384 = vunpack.c.h.b16 %v150
  %v1385 = vunpack.c.l.b16 %v151
  %v1386 = vunpack.c.h.b16 %v151
  %v1387 = vunpack.c.l.b16 %v152
  %v1388 = vunpack.c.h.b16 %v152
  %v1389 = vunpack.c.l.b16 %v153
  %v1390 = vunpack.c.h.b16 %v153
  %v1391 = vunpack.c.l.b16 %v154
  %v1392 = vunpack.c.h.b16 %v154
  %v1393 = vunpack.c.l.b16 %v155
  %v1394 = vunpack.c.h.b16 %v155
  %v1395 = vunpack.c.l.b16 %v156
  %v1396 = vunpack.c.h.b16 %v156
  %v1397 = vunpack.c.l.b16 %v157
  %v1398 = vunpack.c.h.b16 %v157
  %v1399 = vunpack.c.l.b16 %v158
  %v1400 = vunpack.c.h.b16 %v158
  %v1401 = vunpack.c.l.b16 %v159
  %v1402 = vunpack.c.h.b16 %v159
  %v1403 = vunpack.c.l.b16 %v160
  %v1404 = vunpack.c.h.b16 %v160
  %v1405 = vunpack.c.l.b16 %v161
  %v1406 = vunpack.c.h.b16 %v161
  %v1407 = vunpack.c.l.b16 %v162
  %v1408 = vunpack.c.h.b16 %v162
  %v1409 = vunpack.c.l.b16 %v163
  %v1410 = vunpack.c.h.b16 %v163
  %v1411 = vunpack.c.l.b16 %v164
  %v1412 = vunpack.c.h.b16 %v164
  %v1413 = vunpack.c.l.b16 %v165
  %v1414 = vunpack.c.h.b16 %v165
  %v1415 = vunpack.c.l.b16 %v166
  %v1416 = vunpack.c.h.b16 %v166
  %v1417 = vunpack.c.l.b16 %v167
  %v1418 = vunpack.c.h.b16 %v167
  %v1419 = vunpack.c.l.b16 %v168
  %v1420 = vunpack.c.h.b16 %v168
  %v1421 = vunpack.c.l.b16 %v169
  %v1422 = vunpack.c.h.b16 %v169
  %v1423 = vunpack.c.l.b16 %v170
  %v1424 = vunpack.c.h.b16 %v170
  %v1425 = vunpack.c.l.b16 %v171
  %v1426 = vunpack.c.h.b16 %v171
  %v1427 = vunpack.c.l.b16 %v172
  %v1428 = vunpack.c.h.b16 %v172
  %v1429 = vunpack.c.l.b16 %v173
  %v1430 = vunpack.c.h.b16 %v173
  %v1431 = vunpack.c.l.b16 %v174
  %v1432 = vunpack.c.h.b16 %v174
  %v1433 = vunpack.c.l.b16 %v175
  %v1434 = vunpack.c.h.b16 %v175
  %v1435 = vunpack.c.l.b16 %v176
  %v1436 = vunpack.c.h.b16 %v176
  %v1437 = vunpack.c.l.b16 %v177
  %v1438 = vunpack.c.h.b16 %v177
  %v1439 = vunpack.c.l.b16 %v178
  %v1440 = vunpack.c.h.b16 %v178
  %v1441 = vunpack.c.l.b16 %v179
  %v1442 = vunpack.c.h.b16 %v179
  %v1443 = vunpack.c.l.b16 %v180
  %v1444 = vunpack.c.h.b16 %v180
  %v1445 = vunpack.c.l.b16 %v181
  %v1446 = vunpack.c.h.b16 %v181
  %v1447 = vunpack.c.l.b16 %v182
  %v1448 = vunpack.c.h.b16 %v182
  %v1449 = vunpack.c.l.b16 %v183
  %v1450 = vunpack.c.h.b16 %v183
  %v1451 = vunpack.c.l.b16 %v184
  %v1452 = vunpack.c.h.b16 %v184
  %v1453 = vunpack.c.l.b16 %v185
  %v1454 = vunpack.c.h.b16 %v185
  %v1455 = vunpack.c.l.b16 %v186
  %v1456 = vunpack.c.h.b16 %v186
  %v1457 = vunpack.c.l.b16 %v187
  %v1458 = vunpack.c.h.b16 %v187
  %v1459 = vunpack.c.l.b16 %v188
  %v1460 = vunpack.c.h.b16 %v188
  %v1461 = vunpack.c.l.b16 %v189
  %v1462 = vunpack.c.h.b16 %v189
  %v1463 = vunpack.c.l.b16 %v190
  %v1464 = vunpack.c.h.b16 %v190
  %v1465 = vunpack.c.l.b16 %v191
  %v1466 = vunpack.c.h.b16 %v191
  %v1467 = vunpack.c.l.b16 %v192
  %v1468 = vunpack.c.h.b16 %v192
  %v1469 = vunpack.c.l.b16 %v193
  %v1470 = vunpack.c.h.b16 %v193
  %v1471 = vunpack.c.l.b16 %v194
  %v1472 = vunpack.c.h.b16 %v194
  %v1473 = vunpack.c.l.b16 %v195
  %v1474 = vunpack.c.h.b16 %v195
  %v1475 = vunpack.c.l.b16 %v196
  %v1476 = vunpack.c.h.b16 %v196
  %v1477 = vunpack.c.l.b16 %v197
  %v1478 = vunpack.c.h.b16 %v197
  %v1479 = vunpack.c.l.b16 %v198
  %v1480 = vunpack.c.h.b16 %v198
  %v1481 = vunpack.c.l.b16 %v199
  %v1482 = vunpack.c.h.b16 %v199
  %v1483 = vunpack.c.l.b16 %v200
  %v1484 = vunpack.c.h.b16 %v200
  %v1485 = vunpack.c.l.b16 %v201
  %v1486 = vunpack.c.h.b16 %v201
  %v1487 = vunpack.c.l.b16 %v202
  %v1488 = vunpack.c.h.b16 %v202
  %v1489 = vunpack.c.l.b16 %v203
  %v1490 = vunpack.c.h.b16 %v203
  %v1491 = vunpack.c.l.b16 %v204
  %v1492 = vunpack.c.h.b16 %v204
  %v1493 = vunpack.c.l.b16 %v205
  %v1494 = vunpack.c.h.b16 %v205
  %v1495 = vunpack.c.l.b16 %v206
  %v1496 = vunpack.c.h.b16 %v206
  %v1497 = vunpack.c.l.b16 %v207
  %v1498 = vunpack.c.h.b16 %v207
  %v1499 = vunpack.c.l.b16 %v208
  %v1500 = vunpack.c.h.b16 %v208
  %v1501 = vunpack.c.l.b16 %v209
  %v1502 = vunpack.c.h.b16 %v209
  %v1503 = vunpack.c.l.b16 %v210
  %v1504 = vunpack.c.h.b16 %v210
  %v1505 = vunpack.c.l.b16 %v211
  %v1506 = vunpack.c.h.b16 %v211
  %v1507 = vunpack.c.l.b16 %v212
  %v1508 = vunpack.c.h.b16 %v212
  %v1509 = vunpack.c.l.b16 %v213
  %v1510 = vunpack.c.h.b16 %v213
  %v1511 = vunpack.c.l.b16 %v214
  %v1512 = vunpack.c.h.b16 %v214
  %v1513 = vunpack.c.l.b16 %v215
  %v1514 = vunpack.c.h.b16 %v215
  %v1515 = vunpack.c.l.b16 %v216
  %v1516 = vunpack.c.h.b16 %v216
  %v1517 = vunpack.c.l.b16 %v217
  %v1518 = vunpack.c.h.b16 %v217
  %v1519 = vunpack.c.l.b16 %v218
  %v1520 = vunpack.c.h.b16 %v218
  %v1521 = vunpack.c.l.b16 %v219
  %v1522 = vunpack.c.h.b16 %v219
  %v1523 = vunpack.c.l.b16 %v220
  %v1524 = vunpack.c.h.b16 %v220
  %v1525 = vunpack.c.l.b16 %v221
  %v1526 = vunpack.c.h.b16 %v221
  %v1527 = vunpack.c.l.b16 %v222
  %v1528 = vunpack.c.h.b16 %v222
  %v1529 = vunpack.c.l.b16 %v223
  %v1530 = vunpack.c.h.b16 %v223
  %v1531 = vunpack.c.l.b16 %v224
  %v1532 = vunpack.c.h.b16 %v224
  %v1533 = vunpack.c.l.b16 %v225
  %v1534 = vunpack.c.h.b16 %v225
  %v1535 = vunpack.c.l.b16 %v226
  %v1536 = vunpack.c.h.b16 %v226
  %v1537 = vunpack.c.l.b16 %v227
  %v1538 = vunpack.c.h.b16 %v227
  %v1539 = vunpack.c.l.b16 %v228
  %v1540 = vunpack.c.h.b16 %v228
  %v1541 = vunpack.c.l.b16 %v229
  %v1542 = vunpack.c.h.b16 %v229
  %v1543 = vunpack.c.l.b16 %v230
  %v1544 = vunpack.c.h.b16 %v230
  %v1545 = vunpack.c.l.b16 %v231
  %v1546 = vunpack.c.h.b16 %v231
  %v1547 = vunpack.c.l.b16 %v232
  %v1548 = vunpack.c.h.b16 %v232
  %v1549 = vunpack.c.l.b16 %v233
  %v1550 = vunpack.c.h.b16 %v233
  %v1551 = vunpack.c.l.b16 %v234
  %v1552 = vunpack.c.h.b16 %v234
  %v1553 = vunpack.c.l.b16 %v235
  %v1554 = vunpack.c.h.b16 %v235
  %v1555 = vunpack.c.l.b16 %v236
  %v1556 = vunpack.c.h.b16 %v236
  %v1557 = vunpack.c.l.b16 %v237
  %v1558 = vunpack.c.h.b16 %v237
  %v1559 = vunpack.c.l.b16 %v238
  %v1560 = vunpack.c.h.b16 %v238
  %v1561 = vunpack.c.l.b16 %v239
  %v1562 = vunpack.c.h.b16 %v239
  %v1563 = vunpack.c.l.b16 %v240
  %v1564 = vunpack.c.h.b16 %v240
  %v1565 = vunpack.c.l.b16 %v241
  %v1566 = vunpack.c.h.b16 %v241
  %v1567 = vunpack.c.l.b16 %v242
  %v1568 = vunpack.c.h.b16 %v242
  %v1569 = vunpack.c.l.b16 %v243
  %v1570 = vunpack.c.h.b16 %v243
  %v1571 = vunpack.c.l.b16 %v244
  %v1572 = vunpack.c.h.b16 %v244
  %v1573 = vunpack.c.l.b16 %v245
  %v1574 = vunpack.c.h.b16 %v245
  %v1575 = vunpack.c.l.b16 %v246
  %v1576 = vunpack.c.h.b16 %v246
  %v1577 = vunpack.c.l.b16 %v247
  %v1578 = vunpack.c.h.b16 %v247
  %v1579 = vunpack.c.l.b16 %v248
  %v1580 = vunpack.c.h.b16 %v248
  %v1581 = vunpack.c.l.b16 %v249
  %v1582 = vunpack.c.h.b16 %v249
  %v1583 = vunpack.c.l.b16 %v250
  %v1584 = vunpack.c.h.b16 %v250
  %v1585 = vunpack.c.l.b16 %v251
  %v1586 = vunpack.c.h.b16 %v251
  %v1587 = vunpack.c.l.b16 %v252
  %v1588 = vunpack.c.h.b16 %v252
  %v1589 = vunpack.c.l.b16 %v253
  %v1590 = vunpack.c.h.b16 %v253
  %v1591 = vunpack.c.l.b16 %v254
  %v1592 = vunpack.c.h.b16 %v254
  %v1593 = vunpack.c.l.b16 %v255
  %v1594 = vunpack.c.h.b16 %v255
  %v1595 = vunpack.c.l.b16 %v256
  %v1596 = vunpack.c.h.b16 %v256
  %v1597 = vunpack.c.l.b16 %v257
  %v1598 = vunpack.c.h.b16 %v257
  %v1599 = vunpack.c.l.b16 %v258
  %v1600 = vunpack.c.h.b16 %v258
  %v1601 = vunpack.c.l.b16 %v259
  %v1602 = vunpack.c.h.b16 %v259
  %v1603 = vunpack.c.l.b16 %v260
  %v1604 = vunpack.c.h.b16 %v260
  %v1605 = vunpack.c.l.b16 %v261
  %v1606 = vunpack.c.h.b16 %v261
  %v1607 = vunpack.c.l.b16 %v262
  %v1608 = vunpack.c.h.b16 %v262
  %v1609 = vunpack.c.l.b16 %v263
  %v1610 = vunpack.c.h.b16 %v263
  %v1611 = vunpack.c.l.b16 %v264
  %v1612 = vunpack.c.h.b16 %v264
  %v1613 = vunpack.c.l.b16 %v265
  %v1614 = vunpack.c.h.b16 %v265
  %v1615 = vunpack.c.l.b16 %v266
  %v1616 = vunpack.c.h.b16 %v266
  %v1617 = vunpack.c.l.b16 %v267
  %v1618 = vunpack.c.h.b16 %v267
  %v1619 = vunpack.c.l.b16 %v268
  %v1620 = vunpack.c.h.b16 %v268
  %v1621 = vunpack.c.l.b16 %v269
  %v1622 = vunpack.c.h.b16 %v269
  %v1623 = vunpack.c.l.b16 %v270
  %v1624 = vunpack.c.h.b16 %v270
  %v1625 = vunpack.c.l.b16 %v271
  %v1626 = vunpack.c.h.b16 %v271
  %v1627 = vunpack.c.l.b16 %v272
  %v1628 = vunpack.c.h.b16 %v272
  %v1629 = vunpack.c.l.b16 %v273
  %v1630 = vunpack.c.h.b16 %v273
  %v1631 = vunpack.c.l.b16 %v274
  %v1632 = vunpack.c.h.b16 %v274
  %v1633 = vunpack.c.l.b16 %v275
  %v1634 = vunpack.c.h.b16 %v275
  %v1635 = vunpack.c.l.b16 %v276
  %v1636 = vunpack.c.h.b16 %v276
  %v1637 = vunpack.c.l.b16 %v277
  %v1638 = vunpack.c.h.b16 %v277
  %v1639 = vunpack.c.l.b16 %v278
  %v1640 = vunpack.c.h.b16 %v278
  %v1641 = vunpack.c.l.b16 %v279
  %v1642 = vunpack.c.h.b16 %v279
  %v1643 = vunpack.c.l.b16 %v280
  %v1644 = vunpack.c.h.b16 %v280
  %v1645 = vunpack.c.l.b16 %v281
  %v1646 = vunpack.c.h.b16 %v281
  %v1647 = vunpack.c.l.b16 %v282
  %v1648 = vunpack.c.h.b16 %v282
  %v1649 = vunpack.c.l.b16 %v283
  %v1650 = vunpack.c.h.b16 %v283
  %v1651 = vunpack.c.l.b16 %v284
  %v1652 = vunpack.c.h.b16 %v284
  %v1653 = vunpack.c.l.b16 %v285
  %v1654 = vunpack.c.h.b16 %v285
  %v1655 = vunpack.c.l.b16 %v286
  %v1656 = vunpack.c.h.b16 %v286
  %v1657 = vunpack.c.l.b16 %v287
  %v1658 = vunpack.c.h.b16 %v287
  %v1659 = vunpack.c.l.b16 %v288
  %v1660 = vunpack.c.h.b16 %v288
  %v1661 = vunpack.c.l.b16 %v289
  %v1662 = vunpack.c.h.b16 %v289
  %v1663 = vunpack.c.l.b16 %v290
  %v1664 = vunpack.c.h.b16 %v290
  %v1665 = vunpack.c.l.b16 %v291
  %v1666 = vunpack.c.h.b16 %v291
  %v1667 = vunpack.c.l.b16 %v292
  %v1668 = vunpack.c.h.b16 %v292
  %v1669 = vunpack.c.l.b16 %v293
  %v1670 = vunpack.c.h.b16 %v293
  %v1671 = vunpack.c.l.b16 %v294
  %v1672 = vunpack.c.h.b16 %v294
  %v1673 = vunpack.c.l.b16 %v295
  %v1674 = vunpack.c.h.b16 %v295
  %v1675 = vunpack.c.l.b16 %v296
  %v1676 = vunpack.c.h.b16 %v296
  %v1677 = vunpack.c.l.b16 %v297
  %v1678 = vunpack.c.h.b16 %v297
  %v1679 = vunpack.c.l.b16 %v298
  %v1680 = vunpack.c.h.b16 %v298
  %v1681 = vunpack.c.l.b16 %v299
  %v1682 = vunpack.c.h.b16 %v299
  %v1683 = vunpack.c.l.b16 %v300
  %v1684 = vunpack.c.h.b16 %v300
  %v1685 = vunpack.c.l.b16 %v301
  %v1686 = vunpack.c.h.b16 %v301
  %v1687 = vunpack.c.l.b16 %v302
  %v1688 = vunpack.c.h.b16 %v302
  %v1689 = vunpack.c.l.b16 %v303
  %v1690 = vunpack.c.h.b16 %v303
  %v1691 = vunpack.c.l.b16 %v304
  %v1692 = vunpack.c.h.b16 %v304
  %v1693 = vunpack.c.l.b16 %v305
  %v1694 = vunpack.c.h.b16 %v305
  %v1695 = vunpack.c.l.b16 %v306
  %v1696 = vunpack.c.h.b16 %v306
  %v1697 = vunpack.c.l.b16 %v307
  %v1698 = vunpack.c.h.b16 %v307
  %v1699 = vunpack.c.l.b16 %v308
  %v1700 = vunpack.c.h.b16 %v308
  %v1701 = vunpack.c.l.b16 %v309
  %v1702 = vunpack.c.h.b16 %v309
  %v1703 = vunpack.c.l.b16 %v310
  %v1704 = vunpack.c.h.b16 %v310
  %v1705 = vunpack.c.l.b16 %v311
  %v1706 = vunpack.c.h.b16 %v311
  %v1707 = vunpack.c.l.b16 %v312
  %v1708 = vunpack.c.h.b16 %v312
  %v1709 = vunpack.c.l.b16 %v313
  %v1710 = vunpack.c.h.b16 %v313
  %v1711 = vunpack.c.l.b16 %v314
  %v1712 = vunpack.c.h.b16 %v314
  %v1713 = vunpack.c.l.b16 %v315
  %v1714 = vunpack.c.h.b16 %v315
  %v1715 = vunpack.c.l.b16 %v316
  %v1716 = vunpack.c.h.b16 %v316
  %v1717 = vunpack.c.l.b16 %v317
  %v1718 = vunpack.c.h.b16 %v317
  %v1719 = vunpack.c.l.b16 %v318
  %v1720 = vunpack.c.h.b16 %v318
  %v1721 = vunpack.c.l.b16 %v319
  %v1722 = vunpack.c.h.b16 %v319
  %v1723 = vunpack.c.l.b16 %v320
  %v1724 = vunpack.c.h.b16 %v320
  %v1725 = vunpack.c.l.b16 %v321
  %v1726 = vunpack.c.h.b16 %v321
  %v1727 = vunpack.c.l.b16 %v322
  %v1728 = vunpack.c.h.b16 %v322
  %v1729 = vunpack.c.l.b16 %v323
  %v1730 = vunpack.c.h.b16 %v323
  %v1731 = vunpack.c.l.b16 %v324
  %v1732 = vunpack.c.h.b16 %v324
  %v1733 = vunpack.c.l.b16 %v325
  %v1734 = vunpack.c.h.b16 %v325
  %v1735 = vunpack.c.l.b16 %v326
  %v1736 = vunpack.c.h.b16 %v326
  %v1737 = vunpack.c.l.b16 %v327
  %v1738 = vunpack.c.h.b16 %v327
  %v1739 = vunpack.c.l.b16 %v328
  %v1740 = vunpack.c.h.b16 %v328
  %v1741 = vunpack.c.l.b16 %v329
  %v1742 = vunpack.c.h.b16 %v329
  %v1743 = vunpack.c.l.b16 %v330
  %v1744 = vunpack.c.h.b16 %v330
  %v1745 = vunpack.c.l.b16 %v331
  %v1746 = vunpack.c.h.b16 %v331
  %v1747 = vunpack.c.l.b16 %v332
  %v1748 = vunpack.c.h.b16 %v332
  %v1749 = vunpack.c.l.b16 %v333
  %v1750 = vunpack.c.h.b16 %v333
  %v1751 = vunpack.c.l.b16 %v334
  %v1752 = vunpack.c.h.b16 %v334
  %v1753 = vunpack.c.l.b16 %v335
  %v1754 = vunpack.c.h.b16 %v335
  %v1755 = vunpack.c.l.b16 %v336
  %v1756 = vunpack.c.h.b16 %v336
  %v1757 = vunpack.c.l.b16 %v337
  %v1758 = vunpack.c.h.b16 %v337
  %v1759 = vunpack.c.l.b16 %v338
  %v1760 = vunpack.c.h.b16 %v338
  %v1761 = vunpack.c.l.b16 %v339
  %v1762 = vunpack.c.h.b16 %v339
  %v1763 = vunpack.c.l.b16 %v340
  %v1764 = vunpack.c.h.b16 %v340
  %v1765 = vunpack.c.l.b16 %v341
  %v1766 = vunpack.c.h.b16 %v341
  %v1767 = vunpack.c.l.b16 %v342
  %v1768 = vunpack.c.h.b16 %v342
  %v1769 = vunpack.c.l.b16 %v343
  %v1770 = vunpack.c.h.b16 %v343
  %v1771 = vunpack.c.l.b16 %v344
  %v1772 = vunpack.c.h.b16 %v344
  %v1773 = vunpack.c.l.b16 %v345
  %v1774 = vunpack.c.h.b16 %v345
  %v1775 = vunpack.c.l.b16 %v346
  %v1776 = vunpack.c.h.b16 %v346
  %v1777 = vunpack.c.l.b16 %v347
  %v1778 = vunpack.c.h.b16 %v347
  %v1779 = vunpack.c.l.b16 %v348
  %v1780 = vunpack.c.h.b16 %v348
  %v1781 = vunpack.c.l.b16 %v349
  %v1782 = vunpack.c.h.b16 %v349
  %v1783 = vunpack.c.l.b16 %v350
  %v1784 = vunpack.c.h.b16 %v350
  %v1785 = vunpack.c.l.b16 %v351
  %v1786 = vunpack.c.h.b16 %v351
  %v1787 = vunpack.c.l.b16 %v352
  %v1788 = vunpack.c.h.b16 %v352
  %v1789 = vunpack.c.l.b16 %v353
  %v1790 = vunpack.c.h.b16 %v353
  %v1791 = vunpack.c.l.b16 %v354
  %v1792 = vunpack.c.h.b16 %v354
  %v1793 = vunpack.c.l.b16 %v355
  %v1794 = vunpack.c.h.b16 %v355
  %v1795 = vunpack.c.l.b16 %v356
  %v1796 = vunpack.c.h.b16 %v356
  %v1797 = vunpack.c.l.b16 %v357
  %v1798 = vunpack.c.h.b16 %v357
  %v1799 = vunpack.c.l.b16 %v358
  %v1800 = vunpack.c.h.b16 %v358
  %v1801 = vunpack.c.l.b16 %v359
  %v1802 = vunpack.c.h.b16 %v359
  %v1803 = vunpack.c.l.b16 %v360
  %v1804 = vunpack.c.h.b16 %v360
  %v1805 = vunpack.c.l.b16 %v361
  %v1806 = vunpack.c.h.b16 %v361
  %v1807 = vunpack.c.l.b16 %v362
  %v1808 = vunpack.c.h.b16 %v362
  %v1809 = vunpack.c.l.b16 %v363
  %v1810 = vunpack.c.h.b16 %v363
  %v1811 = vunpack.c.l.b16 %v364
  %v1812 = vunpack.c.h.b16 %v364
  %v1813 = vunpack.c.l.b16 %v365
  %v1814 = vunpack.c.h.b16 %v365
  %v1815 = vunpack.c.l.b16 %v366
  %v1816 = vunpack.c.h.b16 %v366
  %v1817 = vunpack.c.l.b16 %v367
  %v1818 = vunpack.c.h.b16 %v367
  %v1819 = vunpack.c.l.b16 %v368
  %v1820 = vunpack.c.h.b16 %v368
  %v1821 = vunpack.c.l.b16 %v369
  %v1822 = vunpack.c.h.b16 %v369
  %v1823 = vunpack.c.l.b16 %v370
  %v1824 = vunpack.c.h.b16 %v370
  %v1825 = vunpack.c.l.b16 %v371
  %v1826 = vunpack.c.h.b16 %v371
  %v1827 = vunpack.c.l.b16 %v372
  %v1828 = vunpack.c.h.b16 %v372
  %v1829 = vunpack.c.l.b16 %v373
  %v1830 = vunpack.c.h.b16 %v373
  %v1831 = vunpack.c.l.b16 %v374
  %v1832 = vunpack.c.h.b16 %v374
  %v1833 = vunpack.c.l.b16 %v375
  %v1834 = vunpack.c.h.b16 %v375
  %v1835 = vunpack.c.l.b16 %v376
  %v1836 = vunpack.c.h.b16 %v376
  %v1837 = vunpack.c.l.b16 %v377
  %v1838 = vunpack.c.h.b16 %v377
  %v1839 = vunpack.c.l.b16 %v378
  %v1840 = vunpack.c.h.b16 %v378
  %v1841 = vunpack.c.l.b16 %v379
  %v1842 = vunpack.c.h.b16 %v379
  %v1843 = vunpack.c.l.b16 %v380
  %v1844 = vunpack.c.h.b16 %v380
  %v1845 = vunpack.c.l.b16 %v381
  %v1846 = vunpack.c.h.b16 %v381
  %v1847 = vunpack.c.l.b16 %v382
  %v1848 = vunpack.c.h.b16 %v382
  %v1849 = vunpack.c.l.b16 %v383
  %v1850 = vunpack.c.h.b16 %v383
  %v1851 = vunpack.c.l.b16 %v384
  %v1852 = vunpack.c.h.b16 %v384
  %v1853 = vunpack.c.l.b16 %v385
  %v1854 = vunpack.c.h.b16 %v385
  %v1855 = vunpack.c.l.b16 %v386
  %v1856 = vunpack.c.h.b16 %v386
  %v1857 = vunpack.c.l.b16 %v387
  %v1858 = vunpack.c.h.b16 %v387
  %v1859 = vunpack.c.l.b16 %v388
  %v1860 = vunpack.c.h.b16 %v388
  %v1861 = vunpack.c.l.b16 %v389
  %v1862 = vunpack.c.h.b16 %v389
  %v1863 = vunpack.c.l.b16 %v390
  %v1864 = vunpack.c.h.b16 %v390
  %v1865 = vunpack.c.l.b16 %v391
  %v1866 = vunpack.c.h.b16 %v391
  %v1867 = vunpack.c.l.b16 %v392
  %v1868 = vunpack.c.h.b16 %v392
  %v1869 = vunpack.c.l.b16 %v393
  %v1870 = vunpack.c.h.b16 %v393
  %v1871 = vunpack.c.l.b16 %v394
  %v1872 = vunpack.c.h.b16 %v394
  %v1873 = vunpack.c.l.b16 %v395
  %v1874 = vunpack.c.h.b16 %v395
  %v1875 = vunpack.c.l.b16 %v396
  %v1876 = vunpack.c.h.b16 %v396
  %v1877 = vunpack.c.l.b16 %v397
  %v1878 = vunpack.c.h.b16 %v397
  %v1879 = vunpack.c.l.b16 %v398
  %v1880 = vunpack.c.h.b16 %v398
  %v1881 = vunpack.c.l.b16 %v399
  %v1882 = vunpack.c.h.b16 %v399
  %v1883 = vunpack.c.l.b16 %v400
  %v1884 = vunpack.c.h.b16 %v400
  %v1885 = vunpack.c.l.b16 %v401
  %v1886 = vunpack.c.h.b16 %v401
  %v1887 = vunpack.c.l.b16 %v402
  %v1888 = vunpack.c.h.b16 %v402
  %v1889 = vunpack.c.l.b16 %v403
  %v1890 = vunpack.c.h.b16 %v403
  %v1891 = vunpack.c.l.b16 %v404
  %v1892 = vunpack.c.h.b16 %v404
  %v1893 = vunpack.c.l.b16 %v405
  %v1894 = vunpack.c.h.b16 %v405
  %v1895 = vunpack.c.l.b16 %v406
  %v1896 = vunpack.c.h.b16 %v406
  %v1897 = vunpack.c.l.b16 %v407
  %v1898 = vunpack.c.h.b16 %v407
  %v1899 = vunpack.c.l.b16 %v408
  %v1900 = vunpack.c.h.b16 %v408
  %v1901 = vunpack.c.l.b16 %v409
  %v1902 = vunpack.c.h.b16 %v409
  %v1903 = vunpack.c.l.b16 %v410
  %v1904 = vunpack.c.h.b16 %v410
  %v1905 = vunpack.c.l.b16 %v411
  %v1906 = vunpack.c.h.b16 %v411
  %v1907 = vunpack.c.l.b16 %v412
  %v1908 = vunpack.c.h.b16 %v412
  %v1909 = vunpack.c.l.b16 %v413
  %v1910 = vunpack.c.h.b16 %v413
  %v1911 = vunpack.c.l.b16 %v414
  %v1912 = vunpack.c.h.b16 %v414
  %v1913 = vunpack.c.l.b16 %v415
  %v1914 = vunpack.c.h.b16 %v415
  %v1915 = vunpack.c.l.b16 %v416
  %v1916 = vunpack.c.h.b16 %v416
  %v1917 = vunpack.c.l.b16 %v417
  %v1918 = vunpack.c.h.b16 %v417
  %v1919 = vunpack.c.l.b16 %v418
  %v1920 = vunpack.c.h.b16 %v418
  %v1921 = vunpack.c.l.b16 %v419
  %v1922 = vunpack.c.h.b16 %v419
  %v1923 = vunpack.c.l.b16 %v420
  %v1924 = vunpack.c.h.b16 %v420
  %v1925 = vunpack.c.l.b16 %v421
  %v1926 = vunpack.c.h.b16 %v421
  %v1927 = vunpack.c.l.b16 %v422
  %v1928 = vunpack.c.h.b16 %v422
  %v1929 = vunpack.c.l.b16 %v423
  %v1930 = vunpack.c.h.b16 %v423
  %v1931 = vunpack.c.l.b16 %v424
  %v1932 = vunpack.c.h.b16 %v424
  %v1933 = vunpack.c.l.b16 %v425
  %v1934 = vunpack.c.h.b16 %v425
  %v1935 = vunpack.c.l.b16 %v426
  %v1936 = vunpack.c.h.b16 %v426
  %v1937 = vunpack.c.l.b16 %v427
  %v1938 = vunpack.c.h.b16 %v427
  %v1939 = vunpack.c.l.b16 %v428
  %v1940 = vunpack.c.h.b16 %v428
  %v1941 = vunpack.c.l.b16 %v429
  %v1942 = vunpack.c.h.b16 %v429
  %v1943 = vunpack.c.l.b16 %v430
  %v1944 = vunpack.c.h.b16 %v430
  %v1945 = vunpack.c.l.b16 %v431
  %v1946 = vunpack.c.h.b16 %v431
  %v1947 = vunpack.c.l.b16 %v432
  %v1948 = vunpack.c.h.b16 %v432
  %v1949 = vunpack.c.l.b16 %v433
  %v1950 = vunpack.c.h.b16 %v433
  %v1951 = vunpack.c.l.b16 %v434
  %v1952 = vunpack.c.h.b16 %v434
  %v1953 = vunpack.c.l.b16 %v435
  %v1954 = vunpack.c.h.b16 %v435
  %v1955 = vunpack.c.l.b16 %v436
  %v1956 = vunpack.c.h.b16 %v436
  %v1957 = vunpack.c.l.b16 %v437
  %v1958 = vunpack.c.h.b16 %v437
  %v1959 = vunpack.c.l.b16 %v438
  %v1960 = vunpack.c.h.b16 %v438
  %v1961 = vunpack.c.l.b16 %v439
  %v1962 = vunpack.c.h.b16 %v439
  %v1963 = vunpack.c.l.b16 %v440
  %v1964 = vunpack.c.h.b16 %v440
  %v1965 = vunpack.c.l.b16 %v441
  %v1966 = vunpack.c.h.b16 %v441
  %v1967 = vunpack.c.l.b16 %v442
  %v1968 = vunpack.c.h.b16 %v442
  %v1969 = vunpack.c.l.b16 %v443
  %v1970 = vunpack.c.h.b16 %v443
  %v1971 = vunpack.c.l.b16 %v444
  %v1972 = vunpack.c.h.b16 %v444
  %v1973 = vunpack.c.l.b16 %v445
  %v1974 = vunpack.c.h.b16 %v445
  %v1975 = vunpack.c.l.b16 %v446
  %v1976 = vunpack.c.h.b16 %v446
  %v1977 = vunpack.c.l.b16 %v447
  %v1978 = vunpack.c.h.b16 %v447
  %v1979 = vunpack.c.l.b16 %v448
  %v1980 = vunpack.c.h.b16 %v448
  %v1981 = vunpack.c.l.b16 %v449
  %v1982 = vunpack.c.h.b16 %v449
  %v1983 = vunpack.c.l.b16 %v450
  %v1984 = vunpack.c.h.b16 %v450
  %v1985 = vunpack.c.l.b16 %v451
  %v1986 = vunpack.c.h.b16 %v451
  %v1987 = vunpack.c.l.b16 %v452
  %v1988 = vunpack.c.h.b16 %v452
  %v1989 = vunpack.c.l.b16 %v453
  %v1990 = vunpack.c.h.b16 %v453
  %v1991 = vunpack.c.l.b16 %v454
  %v1992 = vunpack.c.h.b16 %v454
  %v1993 = vunpack.c.l.b16 %v455
  %v1994 = vunpack.c.h.b16 %v455
  %v1995 = vunpack.c.l.b16 %v456
  %v1996 = vunpack.c.h.b16 %v456
  %v1997 = vunpack.c.l.b16 %v457
  %v1998 = vunpack.c.h.b16 %v457
  %v1999 = vunpack.c.l.b16 %v458
  %v2000 = vunpack.c.h.b16 %v458
  %v2001 = vunpack.c.l.b16 %v459
  %v2002 = vunpack.c.h.b16 %v459
  %v2003 = vunpack.c.l.b16 %v460
  %v2004 = vunpack.c.h.b16 %v460
  %v2005 = vunpack.c.l.b16 %v461
  %v2006 = vunpack.c.h.b16 %v461
  %v2007 = vunpack.c.l.b16 %v462
  %v2008 = vunpack.c.h.b16 %v462
  %v2009 = vunpack.c.l.b16 %v463
  %v2010 = vunpack.c.h.b16 %v463
  %v2011 = vunpack.c.l.b16 %v464
  %v2012 = vunpack.c.h.b16 %v464
  %v2013 = vunpack.c.l.b16 %v465
  %v2014 = vunpack.c.h.b16 %v465
  %v2015 = vunpack.c.l.b16 %v466
  %v2016 = vunpack.c.h.b16 %v466
  %v2017 = vunpack.c.l.b16 %v467
  %v2018 = vunpack.c.h.b16 %v467
  %v2019 = vunpack.c.l.b16 %v468
  %v2020 = vunpack.c.h.b16 %v468
  %v2021 = vunpack.c.l.b16 %v469
  %v2022 = vunpack.c.h.b16 %v469
  %v2023 = vunpack.c.l.b16 %v470
  %v2024 = vunpack.c.h.b16 %v470
  %v2025 = vunpack.c.l.b16 %v471
  %v2026 = vunpack.c.h.b16 %v471
  %v2027 = vunpack.c.l.b16 %v472
  %v2028 = vunpack.c.h.b16 %v472
  %v2029 = vunpack.c.l.b16 %v473
  %v2030 = vunpack.c.h.b16 %v473
  %v2031 = vunpack.c.l.b16 %v474
  %v2032 = vunpack.c.h.b16 %v474
  %v2033 = vunpack.c.l.b16 %v475
  %v2034 = vunpack.c.h.b16 %v475
  %v2035 = vunpack.c.l.b16 %v476
  %v2036 = vunpack.c.h.b16 %v476
  %v2037 = vunpack.c.l.b16 %v477
  %v2038 = vunpack.c.h.b16 %v477
  %v2039 = vunpack.c.l.b16 %v478
  %v2040 = vunpack.c.h.b16 %v478
  %v2041 = vunpack.c.l.b16 %v479
  %v2042 = vunpack.c.h.b16 %v479
  %v2043 = vunpack.c.l.b16 %v480
  %v2044 = vunpack.c.h.b16 %v480
  %v2045 = vunpack.c.l.b16 %v481
  %v2046 = vunpack.c.h.b16 %v481
  %v2047 = vunpack.c.l.b16 %v482
  %v2048 = vunpack.c.h.b16 %v482
  %v2049 = vunpack.c.l.b16 %v483
  %v2050 = vunpack.c.h.b16 %v483
  %v2051 = vunpack.c.l.b16 %v484
  %v2052 = vunpack.c.h.b16 %v484
  %v2053 = vunpack.c.l.b16 %v485
  %v2054 = vunpack.c.h.b16 %v485
  %v2055 = vunpack.c.l.b16 %v486
  %v2056 = vunpack.c.h.b16 %v486
  %v2057 = vunpack.c.l.b16 %v487
  %v2058 = vunpack.c.h.b16 %v487
  %v2059 = vunpack.c.l.b16 %v488
  %v2060 = vunpack.c.h.b16 %v488
  %v2061 = vunpack.c.l.b16 %v489
  %v2062 = vunpack.c.h.b16 %v489
  %v2063 = vunpack.c.l.b16 %v490
  %v2064 = vunpack.c.h.b16 %v490
  %v2065 = vunpack.c.l.b16 %v491
  %v2066 = vunpack.c.h.b16 %v491
  %v2067 = vunpack.c.l.b16 %v492
  %v2068 = vunpack.c.h.b16 %v492
  %v2069 = vunpack.c.l.b16 %v493
  %v2070 = vunpack.c.h.b16 %v493
  %v2071 = vunpack.c.l.b16 %v494
  %v2072 = vunpack.c.h.b16 %v494
  %v2073 = vunpack.c.l.b16 %v495
  %v2074 = vunpack.c.h.b16 %v495
  %v2075 = vunpack.c.l.b16 %v496
  %v2076 = vunpack.c.h.b16 %v496
  %v2077 = vunpack.c.l.b16 %v497
  %v2078 = vunpack.c.h.b16 %v497
  %v2079 = vunpack.c.l.b16 %v498
  %v2080 = vunpack.c.h.b16 %v498
  %v2081 = vunpack.c.l.b16 %v499
  %v2082 = vunpack.c.h.b16 %v499
  %v2083 = vunpack.c.l.b16 %v500
  %v2084 = vunpack.c.h.b16 %v500
  %v2085 = vunpack.c.l.b16 %v501
  %v2086 = vunpack.c.h.b16 %v501
  %v2087 = vunpack.c.l.b16 %v502
  %v2088 = vunpack.c.h.b16 %v502
  %v2089 = vunpack.c.l.b16 %v503
  %v2090 = vunpack.c.h.b16 %v503
  %v2091 = vunpack.c.l.b16 %v504
  %v2092 = vunpack.c.h.b16 %v504
  %v2093 = vunpack.c.l.b16 %v505
  %v2094 = vunpack.c.h.b16 %v505
  %v2095 = vunpack.c.l.b16 %v506
  %v2096 = vunpack.c.h.b16 %v506
  %v2097 = vunpack.c.l.b16 %v507
  %v2098 = vunpack.c.h.b16 %v507
  %v2099 = vunpack.c.l.b16 %v508
  %v2100 = vunpack.c.h.b16 %v508
  %v2101 = vunpack.c.l.b16 %v509
  %v2102 = vunpack.c.h.b16 %v509
  %v2103 = vunpack.c.l.b16 %v510
  %v2104 = vunpack.c.h.b16 %v510
  %v2105 = vunpack.c.l.b16 %v511
  %v2106 = vunpack.c.h.b16 %v511
  %v2107 = vunpack.c.l.b16 %v512
  %v2108 = vunpack.c.h.b16 %v512
  %v2109 = vunpack.c.l.b16 %v513
  %v2110 = vunpack.c.h.b16 %v513
  %v2111 = vunpack.c.l.b16 %v514
  %v2112 = vunpack.c.h.b16 %v514
  %v2113 = vunpack.c.l.b16 %v515
  %v2114 = vunpack.c.h.b16 %v515
  %v2115 = vunpack.c.l.b16 %v516
  %v2116 = vunpack.c.h.b16 %v516
  %v2117 = vunpack.c.l.b16 %v517
  %v2118 = vunpack.c.h.b16 %v517
  %v2119 = vunpack.c.l.b16 %v518
  %v2120 = vunpack.c.h.b16 %v518
  %v2121 = vunpack.c.l.b16 %v519
  %v2122 = vunpack.c.h.b16 %v519
  %v2123 = vunpack.c.l.b16 %v520
  %v2124 = vunpack.c.h.b16 %v520
  %v2125 = vunpack.c.l.b16 %v521
  %v2126 = vunpack.c.h.b16 %v521
  %v2127 = vunpack.c.l.b16 %v522
  %v2128 = vunpack.c.h.b16 %v522
  %v2129 = vunpack.c.l.b16 %v523
  %v2130 = vunpack.c.h.b16 %v523
  %v2131 = vunpack.c.l.b16 %v524
  %v2132 = vunpack.c.h.b16 %v524
  %v2133 = vunpack.c.l.b16 %v525
  %v2134 = vunpack.c.h.b16 %v525
  %v2135 = vunpack.c.l.b16 %v526
  %v2136 = vunpack.c.h.b16 %v526
  %v2137 = vunpack.c.l.b16 %v527
  %v2138 = vunpack.c.h.b16 %v527
  %v2139 = vunpack.c.l.b16 %v528
  %v2140 = vunpack.c.h.b16 %v528
  %v2141 = vunpack.c.l.b16 %v529
  %v2142 = vunpack.c.h.b16 %v529
  %v2143 = vunpack.c.l.b16 %v530
  %v2144 = vunpack.c.h.b16 %v530
  %v2145 = vunpack.c.l.b16 %v531
  %v2146 = vunpack.c.h.b16 %v531
  %v2147 = vunpack.c.l.b16 %v532
  %v2148 = vunpack.c.h.b16 %v532
  %v2149 = vunpack.c.l.b16 %v533
  %v2150 = vunpack.c.h.b16 %v533
  %v2151 = vunpack.c.l.b16 %v534
  %v2152 = vunpack.c.h.b16 %v534
  %v2153 = vunpack.c.l.b16 %v535
  %v2154 = vunpack.c.h.b16 %v535
  %v2155 = vunpack.c.l.b16 %v536
  %v2156 = vunpack.c.h.b16 %v536
  %v2157 = vunpack.c.l.b16 %v537
  %v2158 = vunpack.c.h.b16 %v537
  %v2159 = vunpack.c.l.b16 %v538
  %v2160 = vunpack.c.h.b16 %v538
  %v2161 = vunpack.c.l.b16 %v539
  %v2162 = vunpack.c.h.b16 %v539
  %v2163 = vunpack.c.l.b16 %v540
  %v2164 = vunpack.c.h.b16 %v540
  %v2165 = vunpack.c.l.b16 %v541
  %v2166 = vunpack.c.h.b16 %v541
  %v2167 = vunpack.c.l.b16 %v542
  %v2168 = vunpack.c.h.b16 %v542
  %v2169 = vunpack.c.l.b16 %v543
  %v2170 = vunpack.c.h.b16 %v543
  %v2171 = vunpack.c.l.b16 %v544
  %v2172 = vunpack.c.h.b16 %v544
  %v2173 = vunpack.c.l.b16 %v545
  %v2174 = vunpack.c.h.b16 %v545
  %v2175 = vunpack.c.l.b16 %v546
  %v2176 = vunpack.c.h.b16 %v546
  %v2177 = vunpack.c.l.b16 %v547
  %v2178 = vunpack.c.h.b16 %v547
  %v2179 = vunpack.c.l.b16 %v548
  %v2180 = vunpack.c.h.b16 %v548
  %v2181 = vunpack.c.l.b16 %v549
  %v2182 = vunpack.c.h.b16 %v549
  %v2183 = vunpack.c.l.b16 %v550
  %v2184 = vunpack.c.h.b16 %v550
  %v2185 = vunpack.c.l.b16 %v551
  %v2186 = vunpack.c.h.b16 %v551
  %v2187 = vunpack.c.l.b16 %v552
  %v2188 = vunpack.c.h.b16 %v552
  %v2189 = vunpack.c.l.b16 %v553
  %v2190 = vunpack.c.h.b16 %v553
  %v2191 = vunpack.c.l.b16 %v554
  %v2192 = vunpack.c.h.b16 %v554
  %v2193 = vpack.c.b16 %v1173, %v1169
  %v2194 = vpack.c.b16 %v1174, %v1170
  %v2195 = vpack.c.b16 %v1175, %v1171
  %v2196 = vpack.c.b16 %v1176, %v1172
  %v2197 = vpack.c.b16 %v1181, %v1177
  %v2198 = vpack.c.b16 %v1182, %v1178
  %v2199 = vpack.c.b16 %v1183, %v1179
  %v2200 = vpack.c.b16 %v1184, %v1180
  %v2201 = vpack.c.b16 %v1189, %v1185
  %v2202 = vpack.c.b16 %v1190, %v1186
  %v2203 = vpack.c.b16 %v1191, %v1187
  %v2204 = vpack.c.b16 %v1192, %v1188
  %v2205 = vpack.c.b16 %v1197, %v1193
  %v2206 = vpack.c.b16 %v1198, %v1194
  %v2207 = vpack.c.b16 %v1199, %v1195
  %v2208 = vpack.c.b16 %v1200, %v1196
  %v2209 = vpack.c.b16 %v1205, %v1201
  %v2210 = vpack.c.b16 %v1206, %v1202
  %v2211 = vpack.c.b16 %v1207, %v1203
  %v2212 = vpack.c.b16 %v1208, %v1204
  %v2213 = vpack.c.b16 %v1213, %v1209
  %v2214 = vpack.c.b16 %v1214, %v1210
  %v2215 = vpack.c.b16 %v1215, %v1211
  %v2216 = vpack.c.b16 %v1216, %v1212
  %v2217 = vpack.c.b16 %v1221, %v1217
  %v2218 = vpack.c.b16 %v1222, %v1218
  %v2219 = vpack.c.b16 %v1223, %v1219
  %v2220 = vpack.c.b16 %v1224, %v1220
  %v2221 = vpack.c.b16 %v1229, %v1225
  %v2222 = vpack.c.b16 %v1230, %v1226
  %v2223 = vpack.c.b16 %v1231, %v1227
  %v2224 = vpack.c.b16 %v1232, %v1228
  %v2225 = vpack.c.b16 %v1237, %v1233
  %v2226 = vpack.c.b16 %v1238, %v1234
  %v2227 = vpack.c.b16 %v1239, %v1235
  %v2228 = vpack.c.b16 %v1240, %v1236
  %v2229 = vpack.c.b16 %v1245, %v1241
  %v2230 = vpack.c.b16 %v1246, %v1242
  %v2231 = vpack.c.b16 %v1247, %v1243
  %v2232 = vpack.c.b16 %v1248, %v1244
  %v2233 = vpack.c.b16 %v1253, %v1249
  %v2234 = vpack.c.b16 %v1254, %v1250
  %v2235 = vpack.c.b16 %v1255, %v1251
  %v2236 = vpack.c.b16 %v1256, %v1252
  %v2237 = vpack.c.b16 %v1261, %v1257
  %v2238 = vpack.c.b16 %v1262, %v1258
  %v2239 = vpack.c.b16 %v1263, %v1259
  %v2240 = vpack.c.b16 %v1264, %v1260
  %v2241 = vpack.c.b16 %v1269, %v1265
  %v2242 = vpack.c.b16 %v1270, %v1266
  %v2243 = vpack.c.b16 %v1271, %v1267
  %v2244 = vpack.c.b16 %v1272, %v1268
  %v2245 = vpack.c.b16 %v1277, %v1273
  %v2246 = vpack.c.b16 %v1278, %v1274
  %v2247 = vpack.c.b16 %v1279, %v1275
  %v2248 = vpack.c.b16 %v1280, %v1276
  %v2249 = vpack.c.b16 %v1285, %v1281
  %v2250 = vpack.c.b16 %v1286, %v1282
  %v2251 = vpack.c.b16 %v1287, %v1283
  %v2252 = vpack.c.b16 %v1288, %v1284
  %v2253 = vpack.c.b16 %v1293, %v1289
  %v2254 = vpack.c.b16 %v1294, %v1290
  %v2255 = vpack.c.b16 %v1295, %v1291
  %v2256 = vpack.c.b16 %v1296, %v1292
  %v2257 = vpack.c.b16 %v1301, %v1297
  %v2258 = vpack.c.b16 %v1302, %v1298
  %v2259 = vpack.c.b16 %v1303, %v1299
  %v2260 = vpack.c.b16 %v1304, %v1300
  %v2261 = vpack.c.b16 %v1309, %v1305
  %v2262 = vpack.c.b16 %v1310, %v1306
  %v2263 = vpack.c.b16 %v1311, %v1307
  %v2264 = vpack.c.b16 %v1312, %v1308
  %v2265 = vpack.c.b16 %v1317, %v1313
  %v2266 = vpack.c.b16 %v1318, %v1314
  %v2267 = vpack.c.b16 %v1319, %v1315
  %v2268 = vpack.c.b16 %v1320, %v1316
  %v2269 = vpack.c.b16 %v1325, %v1321
  %v2270 = vpack.c.b16 %v1326, %v1322
  %v2271 = vpack.c.b16 %v1327, %v1323
  %v2272 = vpack.c.b16 %v1328, %v1324
  %v2273 = vpack.c.b16 %v1333, %v1329
  %v2274 = vpack.c.b16 %v1334, %v1330
  %v2275 = vpack.c.b16 %v1335, %v1331
  %v2276 = vpack.c.b16 %v1336, %v1332
  %v2277 = vpack.c.b16 %v1341, %v1337
  %v2278 = vpack.c.b16 %v1342, %v1338
  %v2279 = vpack.c.b16 %v1343, %v1339
  %v2280 = vpack.c.b16 %v1344, %v1340
  %v2281 = vpack.c.b16 %v1349, %v1345
  %v2282 = vpack.c.b16 %v1350, %v1346
  %v2283 = vpack.c.b16 %v1351, %v1347
  %v2284 = vpack.c.b16 %v1352, %v1348
  %v2285 = vpack.c.b16 %v1357, %v1353
  %v2286 = vpack.c.b16 %v1358, %v1354
  %v2287 = vpack.c.b16 %v1359, %v1355
  %v2288 = vpack.c.b16 %v1360, %v1356
  %v2289 = vpack.c.b16 %v1365, %v1361
  %v2290 = vpack.c.b16 %v1366, %v1362
  %v2291 = vpack.c.b16 %v1367, %v1363
  %v2292 = vpack.c.b16 %v1368, %v1364
  %v2293 = vpack.c.b16 %v1373, %v1369
  %v2294 = vpack.c.b16 %v1374, %v1370
  %v2295 = vpack.c.b16 %v1375, %v1371
  %v2296 = vpack.c.b16 %v1376, %v1372
  %v2297 = vpack.c.b16 %v1381, %v1377
  %v2298 = vpack.c.b16 %v1382, %v1378
  %v2299 = vpack.c.b16 %v1383, %v1379
  %v2300 = vpack.c.b16 %v1384, %v1380
  %v2301 = vpack.c.b16 %v1389, %v1385
  %v2302 = vpack.c.b16 %v1390, %v1386
  %v2303 = vpack.c.b16 %v1391, %v1387
  %v2304 = vpack.c.b16 %v1392, %v1388
  %v2305 = vpack.c.b16 %v1397, %v1393
  %v2306 = vpack.c.b16 %v1398, %v1394
  %v2307 = vpack.c.b16 %v1399, %v1395
  %v2308 = vpack.c.b16 %v1400, %v1396
  %v2309 = vpack.c.b16 %v1405, %v1401
  %v2310 = vpack.c.b16 %v1406, %v1402
  %v2311 = vpack.c.b16 %v1407, %v1403
  %v2312 = vpack.c.b16 %v1408, %v1404
  %v2313 = vpack.c.b16 %v1413, %v1409
  %v2314 = vpack.c.b16 %v1414, %v1410
  %v2315 = vpack.c.b16 %v1415, %v1411
  %v2316 = vpack.c.b16 %v1416, %v1412
  %v2317 = vpack.c.b16 %v1421, %v1417
  %v2318 = vpack.c.b16 %v1422, %v1418
  %v2319 = vpack.c.b16 %v1423, %v1419
  %v2320 = vpack.c.b16 %v1424, %v1420
  %v2321 = vpack.c.b16 %v1429, %v1425
  %v2322 = vpack.c.b16 %v1430, %v1426
  %v2323 = vpack.c.b16 %v1431, %v1427
  %v2324 = vpack.c.b16 %v1432, %v1428
  %v2325 = vpack.c.b16 %v1437, %v1433
  %v2326 = vpack.c.b16 %v1438, %v1434
  %v2327 = vpack.c.b16 %v1439, %v1435
  %v2328 = vpack.c.b16 %v1440, %v1436
  %v2329 = vpack.c.b16 %v1445, %v1441
  %v2330 = vpack.c.b16 %v1446, %v1442
  %v2331 = vpack.c.b16 %v1447, %v1443
  %v2332 = vpack.c.b16 %v1448, %v1444
  %v2333 = vpack.c.b16 %v1453, %v1449
  %v2334 = vpack.c.b16 %v1454, %v1450
  %v2335 = vpack.c.b16 %v1455, %v1451
  %v2336 = vpack.c.b16 %v1456, %v1452
  %v2337 = vpack.c.b16 %v1461, %v1457
  %v2338 = vpack.c.b16 %v1462, %v1458
  %v2339 = vpack.c.b16 %v1463, %v1459
  %v2340 = vpack.c.b16 %v1464, %v1460
  %v2341 = vpack.c.b16 %v1469, %v1465
  %v2342 = vpack.c.b16 %v1470, %v1466
  %v2343 = vpack.c.b16 %v1471, %v1467
  %v2344 = vpack.c.b16 %v1472, %v1468
  %v2345 = vpack.c.b16 %v1477, %v1473
  %v2346 = vpack.c.b16 %v1478, %v1474
  %v2347 = vpack.c.b16 %v1479, %v1475
  %v2348 = vpack.c.b16 %v1480, %v1476
  %v2349 = vpack.c.b16 %v1485, %v1481
  %v2350 = vpack.c.b16 %v1486, %v1482
  %v2351 = vpack.c.b16 %v1487, %v1483
  %v2352 = vpack.c.b16 %v1488, %v1484
  %v2353 = vpack.c.b16 %v1493, %v1489
  %v2354 = vpack.c.b16 %v1494, %v1490
  %v2355 = vpack.c.b16 %v1495, %v1491
  %v2356 = vpack.c.b16 %v1496, %v1492
  %v2357 = vpack.c.b16 %v1501, %v1497
  %v2358 = vpack.c.b16 %v1502, %v1498
  %v2359 = vpack.c.b16 %v1503, %v1499
  %v2360 = vpack.c.b16 %v1504, %v1500
  %v2361 = vpack.c.b16 %v1509, %v1505
  %v2362 = vpack.c.b16 %v1510, %v1506
  %v2363 = vpack.c.b16 %v1511, %v1507
  %v2364 = vpack.c.b16 %v1512, %v1508
  %v2365 = vpack.c.b16 %v1517, %v1513
  %v2366 = vpack.c.b16 %v1518, %v1514
  %v2367 = vpack.c.b16 %v1519, %v1515
  %v2368 = vpack.c.b16 %v1520, %v1516
  %v2369 = vpack.c.b16 %v1525, %v1521
  %v2370 = vpack.c.b16 %v1526, %v1522
  %v2371 = vpack.c.b16 %v1527, %v1523
  %v2372 = vpack.c.b16 %v1528, %v1524
  %v2373 = vpack.c.b16 %v1533, %v1529
  %v2374 = vpack.c.b16 %v1534, %v1530
  %v2375 = vpack.c.b16 %v1535, %v1531
  %v2376 = vpack.c.b16 %v1536, %v1532
  %v2377 = vpack.c.b16 %v1541, %v1537
  %v2378 = vpack.c.b16 %v1542, %v1538
  %v2379 = vpack.c.b16 %v1543, %v1539
  %v2380 = vpack.c.b16 %v1544, %v1540
  %v2381 = vpack.c.b16 %v1549, %v1545
  %v2382 = vpack.c.b16 %v1550, %v1546
  %v2383 = vpack.c.b16 %v1551, %v1547
  %v2384 = vpack.c.b16 %v1552, %v1548
  %v2385 = vpack.c.b16 %v1557, %v1553
  %v2386 = vpack.c.b16 %v1558, %v1554
  %v2387 = vpack.c.b16 %v1559, %v1555
  %v2388 = vpack.c.b16 %v1560, %v1556
  %v2389 = vpack.c.b16 %v1565, %v1561
  %v2390 = vpack.c.b16 %v1566, %v1562
  %v2391 = vpack.c.b16 %v1567, %v1563
  %v2392 = vpack.c.b16 %v1568, %v1564
  %v2393 = vpack.c.b16 %v1573, %v1569
  %v2394 = vpack.c.b16 %v1574, %v1570
  %v2395 = vpack.c.b16 %v1575, %v1571
  %v2396 = vpack.c.b16 %v1576, %v1572
  %v2397 = vpack.c.b16 %v1581, %v1577
  %v2398 = vpack.c.b16 %v1582, %v1578
  %v2399 = vpack.c.b16 %v1583, %v1579
  %v2400 = vpack.c.b16 %v1584, %v1580
  %v2401 = vpack.c.b16 %v1589, %v1585
  %v2402 = vpack.c.b16 %v1590, %v1586
  %v2403 = vpack.c.b16 %v1591, %v1587
  %v2404 = vpack.c.b16 %v1592, %v1588
  %v2405 = vpack.c.b16 %v1597, %v1593
  %v2406 = vpack.c.b16 %v1598, %v1594
  %v2407 = vpack.c.b16 %v1599, %v1595
  %v2408 = vpack.c.b16 %v1600, %v1596
  %v2409 = vpack.c.b16 %v1605, %v1601
  %v2410 = vpack.c.b16 %v1606, %v1602
  %v2411 = vpack.c.b16 %v1607, %v1603
  %v2412 = vpack.c.b16 %v1608, %v1604
  %v2413 = vpack.c.b16 %v1613, %v1609
  %v2414 = vpack.c.b16 %v1614, %v1610
  %v2415 = vpack.c.b16 %v1615, %v1611
  %v2416 = vpack.c.b16 %v1616, %v1612
  %v2417 = vpack.c.b16 %v1621, %v1617
  %v2418 = vpack.c.b16 %v1622, %v1618
  %v2419 = vpack.c.b16 %v1623, %v1619
  %v2420 = vpack.c.b16 %v1624, %v1620
  %v2421 = vpack.c.b16 %v1629, %v1625
  %v2422 = vpack.c.b16 %v1630, %v1626
  %v2423 = vpack.c.b16 %v1631, %v1627
  %v2424 = vpack.c.b16 %v1632, %v1628
  %v2425 = vpack.c.b16 %v1637, %v1633
  %v2426 = vpack.c.b16 %v1638, %v1634
  %v2427 = vpack.c.b16 %v1639, %v1635
  %v2428 = vpack.c.b16 %v1640, %v1636
  %v2429 = vpack.c.b16 %v1645, %v1641
  %v2430 = vpack.c.b16 %v1646, %v1642
  %v2431 = vpack.c.b16 %v1647, %v1643
  %v2432 = vpack.c.b16 %v1648, %v1644
  %v2433 = vpack.c.b16 %v1653, %v1649
  %v2434 = vpack.c.b16 %v1654, %v1650
  %v2435 = vpack.c.b16 %v1655, %v1651
  %v2436 = vpack.c.b16 %v1656, %v1652
  %v2437 = vpack.c.b16 %v1661, %v1657
  %v2438 = vpack.c.b16 %v1662, %v1658
  %v2439 = vpack.c.b16 %v1663, %v1659
  %v2440 = vpack.c.b16 %v1664, %v1660
  %v2441 = vpack.c.b16 %v1669, %v1665
  %v2442 = vpack.c.b16 %v1670, %v1666
  %v2443 = vpack.c.b16 %v1671, %v1667
  %v2444 = vpack.c.b16 %v1672, %v1668
  %v2445 = vpack.c.b16 %v1677, %v1673
  %v2446 = vpack.c.b16 %v1678, %v1674
  %v2447 = vpack.c.b16 %v1679, %v1675
  %v2448 = vpack.c.b16 %v1680, %v1676
  %v2449 = vpack.c.b16 %v1685, %v1681
  %v2450 = vpack.c.b16 %v1686, %v1682
  %v2451 = vpack.c.b16 %v1687, %v1683
  %v2452 = vpack.c.b16 %v1688, %v1684
  %v2453 = vpack.c.b16 %v1693, %v1689
  %v2454 = vpack.c.b16 %v1694, %v1690
  %v2455 = vpack.c.b16 %v1695, %v1691
  %v2456 = vpack.c.b16 %v1696, %v1692
  %v2457 = vpack.c.b16 %v1701, %v1697
  %v2458 = vpack.c.b16 %v1702, %v1698
  %v2459 = vpack.c.b16 %v1703, %v1699
  %v2460 = vpack.c.b16 %v1704, %v1700
  %v2461 = vpack.c.b16 %v1709, %v1705
  %v2462 = vpack.c.b16 %v1710, %v1706
  %v2463 = vpack.c.b16 %v1711, %v1707
  %v2464 = vpack.c.b16 %v1712, %v1708
  %v2465 = vpack.c.b16 %v1717, %v1713
  %v2466 = vpack.c.b16 %v1718, %v1714
  %v2467 = vpack.c.b16 %v1719, %v1715
  %v2468 = vpack.c.b16 %v1720, %v1716
  %v2469 = vpack.c.b16 %v1725, %v1721
  %v2470 = vpack.c.b16 %v1726, %v1722
  %v2471 = vpack.c.b16 %v1727, %v1723
  %v2472 = vpack.c.b16 %v1728, %v1724
  %v2473 = vpack.c.b16 %v1733, %v1729
  %v2474 = vpack.c.b16 %v1734, %v1730
  %v2475 = vpack.c.b16 %v1735, %v1731
  %v2476 = vpack.c.b16 %v1736, %v1732
  %v2477 = vpack.c.b16 %v1741, %v1737
  %v2478 = vpack.c.b16 %v1742, %v1738
  %v2479 = vpack.c.b16 %v1743, %v1739
  %v2480 = vpack.c.b16 %v1744, %v1740
  %v2481 = vpack.c.b16 %v1749, %v1745
  %v2482 = vpack.c.b16 %v1750, %v1746
  %v2483 = vpack.c.b16 %v1751, %v1747
  %v2484 = vpack.c.b16 %v1752, %v1748
  %v2485 = vpack.c.b16 %v1757, %v1753
  %v2486 = vpack.c.b16 %v1758, %v1754
  %v2487 = vpack.c.b16 %v1759, %v1755
  %v2488 = vpack.c.b16 %v1760, %v1756
  %v2489 = vpack.c.b16 %v1765, %v1761
  %v2490 = vpack.c.b16 %v1766, %v1762
  %v2491 = vpack.c.b16 %v1767, %v1763
  %v2492 = vpack.c.b16 %v1768, %v1764
  %v2493 = vpack.c.b16 %v1773, %v1769
  %v2494 = vpack.c.b16 %v1774, %v1770
  %v2495 = vpack.c.b16 %v1775, %v1771
  %v2496 = vpack.c.b16 %v1776, %v1772
  %v2497 = vpack.c.b16 %v1781, %v1777
  %v2498 = vpack.c.b16 %v1782, %v1778
  %v2499 = vpack.c.b16 %v1783, %v1779
  %v2500 = vpack.c.b16 %v1784, %v1780
  %v2501 = vpack.c.b16 %v1789, %v1785
  %v2502 = vpack.c.b16 %v1790, %v1786
  %v2503 = vpack.c.b16 %v1791, %v1787
  %v2504 = vpack.c.b16 %v1792, %v1788
  %v2505 = vpack.c.b16 %v1797, %v1793
  %v2506 = vpack.c.b16 %v1798, %v1794
  %v2507 = vpack.c.b16 %v1799, %v1795
  %v2508 = vpack.c.b16 %v1800, %v1796
  %v2509 = vpack.c.b16 %v1805, %v1801
  %v2510 = vpack.c.b16 %v1806, %v1802
  %v2511 = vpack.c.b16 %v1807, %v1803
  %v2512 = vpack.c.b16 %v1808, %v1804
  %v2513 = vpack.c.b16 %v1813, %v1809
  %v2514 = vpack.c.b16 %v1814, %v1810
  %v2515 = vpack.c.b16 %v1815, %v1811
  %v2516 = vpack.c.b16 %v1816, %v1812
  %v2517 = vpack.c.b16 %v1821, %v1817
  %v2518 = vpack.c.b16 %v1822, %v1818
  %v2519 = vpack.c.b16 %v1823, %v1819
  %v2520 = vpack.c.b16 %v1824, %v1820
  %v2521 = vpack.c.b16 %v1829, %v1825
  %v2522 = vpack.c.b16 %v1830, %v1826
  %v2523 = vpack.c.b16 %v1831, %v1827
  %v2524 = vpack.c.b16 %v1832, %v1828
  %v2525 = vpack.c.b16 %v1837, %v1833
  %v2526 = vpack.c.b16 %v1838, %v1834
  %v2527 = vpack.c.b16 %v1839, %v1835
  %v2528 = vpack.c.b16 %v1840, %v1836
  %v2529 = vpack.c.b16 %v1845, %v1841
  %v2530 = vpack.c.b16 %v1846, %v1842
  %v2531 = vpack.c.b16 %v1847, %v1843
  %v2532 = vpack.c.b16 %v1848, %v1844
  %v2533 = vpack.c.b16 %v1853, %v1849
  %v2534 = vpack.c.b16 %v1854, %v1850
  %v2535 = vpack.c.b16 %v1855, %v1851
  %v2536 = vpack.c.b16 %v1856, %v1852
  %v2537 = vpack.c.b16 %v1861, %v1857
  %v2538 = vpack.c.b16 %v1862, %v1858
  %v2539 = vpack.c.b16 %v1863, %v1859
  %v2540 = vpack.c.b16 %v1864, %v1860
  %v2541 = vpack.c.b16 %v1869, %v1865
  %v2542 = vpack.c.b16 %v1870, %v1866
  %v2543 = vpack.c.b16 %v1871, %v1867
  %v2544 = vpack.c.b16 %v1872, %v1868
  %v2545 = vpack.c.b16 %v1877, %v1873
  %v2546 = vpack.c.b16 %v1878, %v1874
  %v2547 = vpack.c.b16 %v1879, %v1875
  %v2548 = vpack.c.b16 %v1880, %v1876
  %v2549 = vpack.c.b16 %v1885, %v1881
  %v2550 = vpack.c.b16 %v1886, %v1882
  %v2551 = vpack.c.b16 %v1887, %v1883
  %v2552 = vpack.c.b16 %v1888, %v1884
  %v2553 = vpack.c.b16 %v1893, %v1889
  %v2554 = vpack.c.b16 %v1894, %v1890
  %v2555 = vpack.c.b16 %v1895, %v1891
  %v2556 = vpack.c.b16 %v1896, %v1892
  %v2557 = vpack.c.b16 %v1901, %v1897
  %v2558 = vpack.c.b16 %v1902, %v1898
  %v2559 = vpack.c.b16 %v1903, %v1899
  %v2560 = vpack.c.b16 %v1904, %v1900
  %v2561 = vpack.c.b16 %v1909, %v1905
  %v2562 = vpack.c.b16 %v1910, %v1906
  %v2563 = vpack.c.b16 %v1911, %v1907
  %v2564 = vpack.c.b16 %v1912, %v1908
  %v2565 = vpack.c.b16 %v1917, %v1913
  %v2566 = vpack.c.b16 %v1918, %v1914
  %v2567 = vpack.c.b16 %v1919, %v1915
  %v2568 = vpack.c.b16 %v1920, %v1916
  %v2569 = vpack.c.b16 %v1925, %v1921
  %v2570 = vpack.c.b16 %v1926, %v1922
  %v2571 = vpack.c.b16 %v1927, %v1923
  %v2572 = vpack.c.b16 %v1928, %v1924
  %v2573 = vpack.c.b16 %v1933, %v1929
  %v2574 = vpack.c.b16 %v1934, %v1930
  %v2575 = vpack.c.b16 %v1935, %v1931
  %v2576 = vpack.c.b16 %v1936, %v1932
  %v2577 = vpack.c.b16 %v1941, %v1937
  %v2578 = vpack.c.b16 %v1942, %v1938
  %v2579 = vpack.c.b16 %v1943, %v1939
  %v2580 = vpack.c.b16 %v1944, %v1940
  %v2581 = vpack.c.b16 %v1949, %v1945
  %v2582 = vpack.c.b16 %v1950, %v1946
  %v2583 = vpack.c.b16 %v1951, %v1947
  %v2584 = vpack.c.b16 %v1952, %v1948
  %v2585 = vpack.c.b16 %v1957, %v1953
  %v2586 = vpack.c.b16 %v1958, %v1954
  %v2587 = vpack.c.b16 %v1959, %v1955
  %v2588 = vpack.c.b16 %v1960, %v1956
  %v2589 = vpack.c.b16 %v1965, %v1961
  %v2590 = vpack.c.b16 %v1966, %v1962
  %v2591 = vpack.c.b16 %v1967, %v1963
  %v2592 = vpack.c.b16 %v1968, %v1964
  %v2593 = vpack.c.b16 %v1973, %v1969
  %v2594 = vpack.c.b16 %v1974, %v1970
  %v2595 = vpack.c.b16 %v1975, %v1971
  %v2596 = vpack.c.b16 %v1976, %v1972
  %v2597 = vpack.c.b16 %v1981, %v1977
  %v2598 = vpack.c.b16 %v1982, %v1978
  %v2599 = vpack.c.b16 %v1983, %v1979
  %v2600 = vpack.c.b16 %v1984, %v1980
  %v2601 = vpack.c.b16 %v1989, %v1985
  %v2602 = vpack.c.b16 %v1990, %v1986
  %v2603 = vpack.c.b16 %v1991, %v1987
  %v2604 = vpack.c.b16 %v1992, %v1988
  %v2605 = vpack.c.b16 %v1997, %v1993
  %v2606 = vpack.c.b16 %v1998, %v1994
  %v2607 = vpack.c.b16 %v1999, %v1995
  %v2608 = vpack.c.b16 %v2000, %v1996
  %v2609 = vpack.c.b16 %v2005, %v2001
  %v2610 = vpack.c.b16 %v2006, %v2002
  %v2611 = vpack.c.b16 %v2007, %v2003
  %v2612 = vpack.c.b16 %v2008, %v2004
  %v2613 = vpack.c.b16 %v2013, %v2009
  %v2614 = vpack.c.b16 %v2014, %v2010
  %v2615 = vpack.c.b16 %v2015, %v2011
  %v2616 = vpack.c.b16 %v2016, %v2012
  %v2617 = vpack.c.b16 %v2021, %v2017
  %v2618 = vpack.c.b16 %v2022, %v2018
  %v2619 = vpack.c.b16 %v2023, %v2019
  %v2620 = vpack.c.b16 %v2024, %v2020
  %v2621 = vpack.c.b16 %v2029, %v2025
  %v2622 = vpack.c.b16 %v2030, %v2026
  %v2623 = vpack.c.b16 %v2031, %v2027
  %v2624 = vpack.c.b16 %v2032, %v2028
  %v2625 = vpack.c.b16 %v2037, %v2033
  %v2626 = vpack.c.b16 %v2038, %v2034
  %v2627 = vpack.c.b16 %v2039, %v2035
  %v2628 = vpack.c.b16 %v2040, %v2036
  %v2629 = vpack.c.b16 %v2045, %v2041
  %v2630 = vpack.c.b16 %v2046, %v2042
  %v2631 = vpack.c.b16 %v2047, %v2043
  %v2632 = vpack.c.b16 %v2048, %v2044
  %v2633 = vpack.c.b16 %v2053, %v2049
  %v2634 = vpack.c.b16 %v2054, %v2050
  %v2635 = vpack.c.b16 %v2055, %v2051
  %v2636 = vpack.c.b16 %v2056, %v2052
  %v2637 = vpack.c.b16 %v2061, %v2057
  %v2638 = vpack.c.b16 %v2062, %v2058
  %v2639 = vpack.c.b16 %v2063, %v2059
  %v2640 = vpack.c.b16 %v2064, %v2060
  %v2641 = vpack.c.b16 %v2069, %v2065
  %v2642 = vpack.c.b16 %v2070, %v2066
  %v2643 = vpack.c.b16 %v2071, %v2067
  %v2644 = vpack.c.b16 %v2072, %v2068
  %v2645 = vpack.c.b16 %v2077, %v2073
  %v2646 = vpack.c.b16 %v2078, %v2074
  %v2647 = vpack.c.b16 %v2079, %v2075
  %v2648 = vpack.c.b16 %v2080, %v2076
  %v2649 = vpack.c.b16 %v2085, %v2081
  %v2650 = vpack.c.b16 %v2086, %v2082
  %v2651 = vpack.c.b16 %v2087, %v2083
  %v2652 = vpack.c.b16 %v2088, %v2084
  %v2653 = vpack.c.b16 %v2093, %v2089
  %v2654 = vpack.c.b16 %v2094, %v2090
  %v2655 = vpack.c.b16 %v2095, %v2091
  %v2656 = vpack.c.b16 %v2096, %v2092
  %v2657 = vpack.c.b16 %v2101, %v2097
  %v2658 = vpack.c.b16 %v2102, %v2098
  %v2659 = vpack.c.b16 %v2103, %v2099
  %v2660 = vpack.c.b16 %v2104, %v2100
  %v2661 = vpack.c.b16 %v2109, %v2105
  %v2662 = vpack.c.b16 %v2110, %v2106
  %v2663 = vpack.c.b16 %v2111, %v2107
  %v2664 = vpack.c.b16 %v2112, %v2108
  %v2665 = vpack.c.b16 %v2117, %v2113
  %v2666 = vpack.c.b16 %v2118, %v2114
  %v2667 = vpack.c.b16 %v2119, %v2115
  %v2668 = vpack.c.b16 %v2120, %v2116
  %v2669 = vpack.c.b16 %v2125, %v2121
  %v2670 = vpack.c.b16 %v2126, %v2122
  %v2671 = vpack.c.b16 %v2127, %v2123
  %v2672 = vpack.c.b16 %v2128, %v2124
  %v2673 = vpack.c.b16 %v2133, %v2129
  %v2674 = vpack.c.b16 %v2134, %v2130
  %v2675 = vpack.c.b16 %v2135, %v2131
  %v2676 = vpack.c.b16 %v2136, %v2132
  %v2677 = vpack.c.b16 %v2141, %v2137
  %v2678 = vpack.c.b16 %v2142, %v2138
  %v2679 = vpack.c.b16 %v2143, %v2139
  %v2680 = vpack.c.b16 %v2144, %v2140
  %v2681 = vpack.c.b16 %v2149, %v2145
  %v2682 = vpack.c.b16 %v2150, %v2146
  %v2683 = vpack.c.b16 %v2151, %v2147
  %v2684 = vpack.c.b16 %v2152, %v2148
  %v2685 = vpack.c.b16 %v2157, %v2153
  %v2686 = vpack.c.b16 %v2158, %v2154
  %v2687 = vpack.c.b16 %v2159, %v2155
  %v2688 = vpack.c.b16 %v2160, %v2156
  %v2689 = vpack.c.b16 %v2165, %v2161
  %v2690 = vpack.c.b16 %v2166, %v2162
  %v2691 = vpack.c.b16 %v2167, %v2163
  %v2692 = vpack.c.b16 %v2168, %v2164
  %v2693 = vpack.c.b16 %v2173, %v2169
  %v2694 = vpack.c.b16 %v2174, %v2170
  %v2695 = vpack.c.b16 %v2175, %v2171
  %v2696 = vpack.c.b16 %v2176, %v2172
  %v2697 = vpack.c.b16 %v2181, %v2177
  %v2698 = vpack.c.b16 %v2182, %v2178
  %v2699 = vpack.c.b16 %v2183, %v2179
  %v2700 = vpack.c.b16 %v2184, %v2180
  %v2701 = vpack.c.b16 %v2189, %v2185
  %v2702 = vpack.c.b16 %v2190, %v2186
  %v2703 = vpack.c.b16 %v2191, %v2187
  %v2704 = vpack.c.b16 %v2192, %v2188
  %3217 = vmatprep.subr.bf16.mxu0 %v2194
  %3218 = vmatpush1.bf16.msra.mxu0 %v2193
  %3219 = vmatprep.subr.bf16.mxu0 %v2198
  %3220 = vmatpush1.bf16.msra.mxu0 %v2197
  %3221 = vmatprep.subr.bf16.mxu0 %v2202
  %3222 = vmatpush1.bf16.msra.mxu0 %v2201
  %3223 = vmatprep.subr.bf16.mxu0 %v2206
  %3224 = vmatpush1.bf16.msra.mxu0 %v2205
  %3225 = vmatprep.subr.bf16.mxu0 %v2210
  %3226 = vmatpush1.bf16.msra.mxu0 %v2209
  %3227 = vmatprep.subr.bf16.mxu0 %v2214
  %3228 = vmatpush1.bf16.msra.mxu0 %v2213
  %3229 = vmatprep.subr.bf16.mxu0 %v2218
  %3230 = vmatpush1.bf16.msra.mxu0 %v2217
  %3231 = vmatprep.subr.bf16.mxu0 %v2222
  %3232 = vmatpush1.bf16.msra.mxu0 %v2221
  %3233 = vmatprep.subr.bf16.mxu0 %v2226
  %3234 = vmatpush1.bf16.msra.mxu0 %v2225
  %3235 = vmatprep.subr.bf16.mxu0 %v2230
  %3236 = vmatpush1.bf16.msra.mxu0 %v2229
  %3237 = vmatprep.subr.bf16.mxu0 %v2234
  %3238 = vmatpush1.bf16.msra.mxu0 %v2233
  %3239 = vmatprep.subr.bf16.mxu0 %v2238
  %3240 = vmatpush1.bf16.msra.mxu0 %v2237
  %3241 = vmatprep.subr.bf16.mxu0 %v2242
  %3242 = vmatpush1.bf16.msra.mxu0 %v2241
  %3243 = vmatprep.subr.bf16.mxu0 %v2246
  %3244 = vmatpush1.bf16.msra.mxu0 %v2245
  %3245 = vmatprep.subr.bf16.mxu0 %v2250
  %3246 = vmatpush1.bf16.msra.mxu0 %v2249
  %3247 = vmatprep.subr.bf16.mxu0 %v2254
  %3248 = vmatpush1.bf16.msra.mxu0 %v2253
  %3249 = vmatprep.mubr.bf16.mxu0 %v626
  %3250 = vmatmul.mubr.bf16.gmra.mrb[0].mxu0 %v625
  %v3251 = vpop.f32.mrb[0].mxu0
  %v3252 = vadd.f32 %v560, %v3251
  %v3253 = vpop.f32.mrb[0].mxu0
  %v3254 = vadd.f32 %v564, %v3253
  %v3255 = vpop.f32.mrb[0].mxu0
  %v3256 = vadd.f32 %v560, %v3255
  %v3257 = vpop.f32.mrb[0].mxu0
  %v3258 = vadd.f32 %v564, %v3257
  %3259 = vdwg.mxu0
  %3260 = vmatprep.subr.bf16.mxu0 %v2258
  %3261 = vmatpush1.bf16.msra.mxu0 %v2257
  %3262 = vmatprep.subr.bf16.mxu0 %v2262
  %3263 = vmatpush1.bf16.msra.mxu0 %v2261
  %3264 = vmatprep.subr.bf16.mxu0 %v2266
  %3265 = vmatpush1.bf16.msra.mxu0 %v2265
  %3266 = vmatprep.subr.bf16.mxu0 %v2270
  %3267 = vmatpush1.bf16.msra.mxu0 %v2269
  %3268 = vmatprep.subr.bf16.mxu0 %v2274
  %3269 = vmatpush1.bf16.msra.mxu0 %v2273
  %3270 = vmatprep.subr.bf16.mxu0 %v2278
  %3271 = vmatpush1.bf16.msra.mxu0 %v2277
  %3272 = vmatprep.subr.bf16.mxu0 %v2282
  %3273 = vmatpush1.bf16.msra.mxu0 %v2281
  %3274 = vmatprep.subr.bf16.mxu0 %v2286
  %3275 = vmatpush1.bf16.msra.mxu0 %v2285
  %3276 = vmatprep.subr.bf16.mxu0 %v2290
  %3277 = vmatpush1.bf16.msra.mxu0 %v2289
  %3278 = vmatprep.subr.bf16.mxu0 %v2294
  %3279 = vmatpush1.bf16.msra.mxu0 %v2293
  %3280 = vmatprep.subr.bf16.mxu0 %v2298
  %3281 = vmatpush1.bf16.msra.mxu0 %v2297
  %3282 = vmatprep.subr.bf16.mxu0 %v2302
  %3283 = vmatpush1.bf16.msra.mxu0 %v2301
  %3284 = vmatprep.subr.bf16.mxu0 %v2306
  %3285 = vmatpush1.bf16.msra.mxu0 %v2305
  %3286 = vmatprep.subr.bf16.mxu0 %v2310
  %3287 = vmatpush1.bf16.msra.mxu0 %v2309
  %3288 = vmatprep.subr.bf16.mxu0 %v2314
  %3289 = vmatpush1.bf16.msra.mxu0 %v2313
  %3290 = vmatprep.subr.bf16.mxu0 %v2318
  %3291 = vmatpush1.bf16.msra.mxu0 %v2317
  %3292 = vmatprep.mubr.bf16.mxu0 %v628
  %3293 = vmatmul.mubr.bf16.gmra.mrb[0].mxu0 %v627
  %v3294 = vpop.f32.mrb[0].mxu0
  %v3295 = vadd.f32 %v3252, %v3294
  %v3296 = vpop.f32.mrb[0].mxu0
  %v3297 = vadd.f32 %v3254, %v3296
  %v3298 = vpop.f32.mrb[0].mxu0
  %v3299 = vadd.f32 %v3256, %v3298
  %v3300 = vpop.f32.mrb[0].mxu0
  %v3301 = vadd.f32 %v3258, %v3300
  %3302 = vdwg.mxu0
  %3303 = vmatprep.subr.bf16.mxu0 %v2322
  %3304 = vmatpush1.bf16.msra.mxu0 %v2321
  %3305 = vmatprep.subr.bf16.mxu0 %v2326
  %3306 = vmatpush1.bf16.msra.mxu0 %v2325
  %3307 = vmatprep.subr.bf16.mxu0 %v2330
  %3308 = vmatpush1.bf16.msra.mxu0 %v2329
  %3309 = vmatprep.subr.bf16.mxu0 %v2334
  %3310 = vmatpush1.bf16.msra.mxu0 %v2333
  %3311 = vmatprep.subr.bf16.mxu0 %v2338
  %3312 = vmatpush1.bf16.msra.mxu0 %v2337
  %3313 = vmatprep.subr.bf16.mxu0 %v2342
  %3314 = vmatpush1.bf16.msra.mxu0 %v2341
  %3315 = vmatprep.subr.bf16.mxu0 %v2346
  %3316 = vmatpush1.bf16.msra.mxu0 %v2345
  %3317 = vmatprep.subr.bf16.mxu0 %v2350
  %3318 = vmatpush1.bf16.msra.mxu0 %v2349
  %3319 = vmatprep.subr.bf16.mxu0 %v2354
  %3320 = vmatpush1.bf16.msra.mxu0 %v2353
  %3321 = vmatprep.subr.bf16.mxu0 %v2358
  %3322 = vmatpush1.bf16.msra.mxu0 %v2357
  %3323 = vmatprep.subr.bf16.mxu0 %v2362
  %3324 = vmatpush1.bf16.msra.mxu0 %v2361
  %3325 = vmatprep.subr.bf16.mxu0 %v2366
  %3326 = vmatpush1.bf16.msra.mxu0 %v2365
  %3327 = vmatprep.subr.bf16.mxu0 %v2370
  %3328 = vmatpush1.bf16.msra.mxu0 %v2369
  %3329 = vmatprep.subr.bf16.mxu0 %v2374
  %3330 = vmatpush1.bf16.msra.mxu0 %v2373
  %3331 = vmatprep.subr.bf16.mxu0 %v2378
  %3332 = vmatpush1.bf16.msra.mxu0 %v2377
  %3333 = vmatprep.subr.bf16.mxu0 %v2382
  %3334 = vmatpush1.bf16.msra.mxu0 %v2381
  %3335 = vmatprep.mubr.bf16.mxu0 %v630
  %3336 = vmatmul.mubr.bf16.gmra.mrb[0].mxu0 %v629
  %v3337 = vpop.f32.mrb[0].mxu0
  %v3338 = vadd.f32 %v3295, %v3337
  %v3339 = vpop.f32.mrb[0].mxu0
  %v3340 = vadd.f32 %v3297, %v3339
  %v3341 = vpop.f32.mrb[0].mxu0
  %v3342 = vadd.f32 %v3299, %v3341
  %v3343 = vpop.f32.mrb[0].mxu0
  %v3344 = vadd.f32 %v3301, %v3343
  %3345 = vdwg.mxu0
  %3346 = vmatprep.subr.bf16.mxu0 %v2386
  %3347 = vmatpush1.bf16.msra.mxu0 %v2385
  %3348 = vmatprep.subr.bf16.mxu0 %v2390
  %3349 = vmatpush1.bf16.msra.mxu0 %v2389
  %3350 = vmatprep.subr.bf16.mxu0 %v2394
  %3351 = vmatpush1.bf16.msra.mxu0 %v2393
  %3352 = vmatprep.subr.bf16.mxu0 %v2398
  %3353 = vmatpush1.bf16.msra.mxu0 %v2397
  %3354 = vmatprep.subr.bf16.mxu0 %v2402
  %3355 = vmatpush1.bf16.msra.mxu0 %v2401
  %3356 = vmatprep.subr.bf16.mxu0 %v2406
  %3357 = vmatpush1.bf16.msra.mxu0 %v2405
  %3358 = vmatprep.subr.bf16.mxu0 %v2410
  %3359 = vmatpush1.bf16.msra.mxu0 %v2409
  %3360 = vmatprep.subr.bf16.mxu0 %v2414
  %3361 = vmatpush1.bf16.msra.mxu0 %v2413
  %3362 = vmatprep.subr.bf16.mxu0 %v2418
  %3363 = vmatpush1.bf16.msra.mxu0 %v2417
  %3364 = vmatprep.subr.bf16.mxu0 %v2422
  %3365 = vmatpush1.bf16.msra.mxu0 %v2421
  %3366 = vmatprep.subr.bf16.mxu0 %v2426
  %3367 = vmatpush1.bf16.msra.mxu0 %v2425
  %3368 = vmatprep.subr.bf16.mxu0 %v2430
  %3369 = vmatpush1.bf16.msra.mxu0 %v2429
  %3370 = vmatprep.subr.bf16.mxu0 %v2434
  %3371 = vmatpush1.bf16.msra.mxu0 %v2433
  %3372 = vmatprep.subr.bf16.mxu0 %v2438
  %3373 = vmatpush1.bf16.msra.mxu0 %v2437
  %3374 = vmatprep.subr.bf16.mxu0 %v2442
  %3375 = vmatpush1.bf16.msra.mxu0 %v2441
  %3376 = vmatprep.subr.bf16.mxu0 %v2446
  %3377 = vmatpush1.bf16.msra.mxu0 %v2445
  %3378 = vmatprep.mubr.bf16.mxu0 %v632
  %3379 = vmatmul.mubr.bf16.gmra.mrb[0].mxu0 %v631
  %v3380 = vpop.f32.mrb[0].mxu0
  %v3381 = vadd.f32 %v3338, %v3380
  %v3382 = vpop.f32.mrb[0].mxu0
  %v3383 = vadd.f32 %v3340, %v3382
  %v3384 = vpop.f32.mrb[0].mxu0
  %v3385 = vadd.f32 %v3342, %v3384
  %v3386 = vpop.f32.mrb[0].mxu0
  %v3387 = vadd.f32 %v3344, %v3386
  %3388 = vdwg.mxu0
  %3389 = vmatprep.subr.bf16.mxu0 %v2450
  %3390 = vmatpush1.bf16.msra.mxu0 %v2449
  %3391 = vmatprep.subr.bf16.mxu0 %v2454
  %3392 = vmatpush1.bf16.msra.mxu0 %v2453
  %3393 = vmatprep.subr.bf16.mxu0 %v2458
  %3394 = vmatpush1.bf16.msra.mxu0 %v2457
  %3395 = vmatprep.subr.bf16.mxu0 %v2462
  %3396 = vmatpush1.bf16.msra.mxu0 %v2461
  %3397 = vmatprep.subr.bf16.mxu0 %v2466
  %3398 = vmatpush1.bf16.msra.mxu0 %v2465
  %3399 = vmatprep.subr.bf16.mxu0 %v2470
  %3400 = vmatpush1.bf16.msra.mxu0 %v2469
  %3401 = vmatprep.subr.bf16.mxu0 %v2474
  %3402 = vmatpush1.bf16.msra.mxu0 %v2473
  %3403 = vmatprep.subr.bf16.mxu0 %v2478
  %3404 = vmatpush1.bf16.msra.mxu0 %v2477
  %3405 = vmatprep.subr.bf16.mxu0 %v2482
  %3406 = vmatpush1.bf16.msra.mxu0 %v2481
  %3407 = vmatprep.subr.bf16.mxu0 %v2486
  %3408 = vmatpush1.bf16.msra.mxu0 %v2485
  %3409 = vmatprep.subr.bf16.mxu0 %v2490
  %3410 = vmatpush1.bf16.msra.mxu0 %v2489
  %3411 = vmatprep.subr.bf16.mxu0 %v2494
  %3412 = vmatpush1.bf16.msra.mxu0 %v2493
  %3413 = vmatprep.subr.bf16.mxu0 %v2498
  %3414 = vmatpush1.bf16.msra.mxu0 %v2497
  %3415 = vmatprep.subr.bf16.mxu0 %v2502
  %3416 = vmatpush1.bf16.msra.mxu0 %v2501
  %3417 = vmatprep.subr.bf16.mxu0 %v2506
  %3418 = vmatpush1.bf16.msra.mxu0 %v2505
  %3419 = vmatprep.subr.bf16.mxu0 %v2510
  %3420 = vmatpush1.bf16.msra.mxu0 %v2509
  %3421 = vmatprep.mubr.bf16.mxu0 %v634
  %3422 = vmatmul.mubr.bf16.gmra.mrb[0].mxu0 %v633
  %v3423 = vpop.f32.mrb[0].mxu0
  %v3424 = vadd.f32 %v3381, %v3423
  %v3425 = vpop.f32.mrb[0].mxu0
  %v3426 = vadd.f32 %v3383, %v3425
  %v3427 = vpop.f32.mrb[0].mxu0
  %v3428 = vadd.f32 %v3385, %v3427
  %v3429 = vpop.f32.mrb[0].mxu0
  %v3430 = vadd.f32 %v3387, %v3429
  %3431 = vdwg.mxu0
  %3432 = vmatprep.subr.bf16.mxu0 %v2514
  %3433 = vmatpush1.bf16.msra.mxu0 %v2513
  %3434 = vmatprep.subr.bf16.mxu0 %v2518
  %3435 = vmatpush1.bf16.msra.mxu0 %v2517
  %3436 = vmatprep.subr.bf16.mxu0 %v2522
  %3437 = vmatpush1.bf16.msra.mxu0 %v2521
  %3438 = vmatprep.subr.bf16.mxu0 %v2526
  %3439 = vmatpush1.bf16.msra.mxu0 %v2525
  %3440 = vmatprep.subr.bf16.mxu0 %v2530
  %3441 = vmatpush1.bf16.msra.mxu0 %v2529
  %3442 = vmatprep.subr.bf16.mxu0 %v2534
  %3443 = vmatpush1.bf16.msra.mxu0 %v2533
  %3444 = vmatprep.subr.bf16.mxu0 %v2538
  %3445 = vmatpush1.bf16.msra.mxu0 %v2537
  %3446 = vmatprep.subr.bf16.mxu0 %v2542
  %3447 = vmatpush1.bf16.msra.mxu0 %v2541
  %3448 = vmatprep.subr.bf16.mxu0 %v2546
  %3449 = vmatpush1.bf16.msra.mxu0 %v2545
  %3450 = vmatprep.subr.bf16.mxu0 %v2550
  %3451 = vmatpush1.bf16.msra.mxu0 %v2549
  %3452 = vmatprep.subr.bf16.mxu0 %v2554
  %3453 = vmatpush1.bf16.msra.mxu0 %v2553
  %3454 = vmatprep.subr.bf16.mxu0 %v2558
  %3455 = vmatpush1.bf16.msra.mxu0 %v2557
  %3456 = vmatprep.subr.bf16.mxu0 %v2562
  %3457 = vmatpush1.bf16.msra.mxu0 %v2561
  %3458 = vmatprep.subr.bf16.mxu0 %v2566
  %3459 = vmatpush1.bf16.msra.mxu0 %v2565
  %3460 = vmatprep.subr.bf16.mxu0 %v2570
  %3461 = vmatpush1.bf16.msra.mxu0 %v2569
  %3462 = vmatprep.subr.bf16.mxu0 %v2574
  %3463 = vmatpush1.bf16.msra.mxu0 %v2573
  %3464 = vmatprep.mubr.bf16.mxu0 %v636
  %3465 = vmatmul.mubr.bf16.gmra.mrb[0].mxu0 %v635
  %v3466 = vpop.f32.mrb[0].mxu0
  %v3467 = vadd.f32 %v3424, %v3466
  %v3468 = vpop.f32.mrb[0].mxu0
  %v3469 = vadd.f32 %v3426, %v3468
  %v3470 = vpop.f32.mrb[0].mxu0
  %v3471 = vadd.f32 %v3428, %v3470
  %v3472 = vpop.f32.mrb[0].mxu0
  %v3473 = vadd.f32 %v3430, %v3472
  %3474 = vdwg.mxu0
  %3475 = vmatprep.subr.bf16.mxu0 %v2578
  %3476 = vmatpush1.bf16.msra.mxu0 %v2577
  %3477 = vmatprep.subr.bf16.mxu0 %v2582
  %3478 = vmatpush1.bf16.msra.mxu0 %v2581
  %3479 = vmatprep.subr.bf16.mxu0 %v2586
  %3480 = vmatpush1.bf16.msra.mxu0 %v2585
  %3481 = vmatprep.subr.bf16.mxu0 %v2590
  %3482 = vmatpush1.bf16.msra.mxu0 %v2589
  %3483 = vmatprep.subr.bf16.mxu0 %v2594
  %3484 = vmatpush1.bf16.msra.mxu0 %v2593
  %3485 = vmatprep.subr.bf16.mxu0 %v2598
  %3486 = vmatpush1.bf16.msra.mxu0 %v2597
  %3487 = vmatprep.subr.bf16.mxu0 %v2602
  %3488 = vmatpush1.bf16.msra.mxu0 %v2601
  %3489 = vmatprep.subr.bf16.mxu0 %v2606
  %3490 = vmatpush1.bf16.msra.mxu0 %v2605
  %3491 = vmatprep.subr.bf16.mxu0 %v2610
  %3492 = vmatpush1.bf16.msra.mxu0 %v2609
  %3493 = vmatprep.subr.bf16.mxu0 %v2614
  %3494 = vmatpush1.bf16.msra.mxu0 %v2613
  %3495 = vmatprep.subr.bf16.mxu0 %v2618
  %3496 = vmatpush1.bf16.msra.mxu0 %v2617
  %3497 = vmatprep.subr.bf16.mxu0 %v2622
  %3498 = vmatpush1.bf16.msra.mxu0 %v2621
  %3499 = vmatprep.subr.bf16.mxu0 %v2626
  %3500 = vmatpush1.bf16.msra.mxu0 %v2625
  %3501 = vmatprep.subr.bf16.mxu0 %v2630
  %3502 = vmatpush1.bf16.msra.mxu0 %v2629
  %3503 = vmatprep.subr.bf16.mxu0 %v2634
  %3504 = vmatpush1.bf16.msra.mxu0 %v2633
  %3505 = vmatprep.subr.bf16.mxu0 %v2638
  %3506 = vmatpush1.bf16.msra.mxu0 %v2637
  %3507 = vmatprep.mubr.bf16.mxu0 %v638
  %3508 = vmatmul.mubr.bf16.gmra.mrb[0].mxu0 %v637
  %v3509 = vpop.f32.mrb[0].mxu0
  %v3510 = vadd.f32 %v3467, %v3509
  %v3511 = vpop.f32.mrb[0].mxu0
  %v3512 = vadd.f32 %v3469, %v3511
  %v3513 = vpop.f32.mrb[0].mxu0
  %v3514 = vadd.f32 %v3471, %v3513
  %v3515 = vpop.f32.mrb[0].mxu0
  %v3516 = vadd.f32 %v3473, %v3515
  %3517 = vdwg.mxu0
  %3518 = vmatprep.subr.bf16.mxu0 %v2642
  %3519 = vmatpush1.bf16.msra.mxu0 %v2641
  %3520 = vmatprep.subr.bf16.mxu0 %v2646
  %3521 = vmatpush1.bf16.msra.mxu0 %v2645
  %3522 = vmatprep.subr.bf16.mxu0 %v2650
  %3523 = vmatpush1.bf16.msra.mxu0 %v2649
  %3524 = vmatprep.subr.bf16.mxu0 %v2654
  %3525 = vmatpush1.bf16.msra.mxu0 %v2653
  %3526 = vmatprep.subr.bf16.mxu0 %v2658
  %3527 = vmatpush1.bf16.msra.mxu0 %v2657
  %3528 = vmatprep.subr.bf16.mxu0 %v2662
  %3529 = vmatpush1.bf16.msra.mxu0 %v2661
  %3530 = vmatprep.subr.bf16.mxu0 %v2666
  %3531 = vmatpush1.bf16.msra.mxu0 %v2665
  %3532 = vmatprep.subr.bf16.mxu0 %v2670
  %3533 = vmatpush1.bf16.msra.mxu0 %v2669
  %3534 = vmatprep.subr.bf16.mxu0 %v2674
  %3535 = vmatpush1.bf16.msra.mxu0 %v2673
  %3536 = vmatprep.subr.bf16.mxu0 %v2678
  %3537 = vmatpush1.bf16.msra.mxu0 %v2677
  %3538 = vmatprep.subr.bf16.mxu0 %v2682
  %3539 = vmatpush1.bf16.msra.mxu0 %v2681
  %3540 = vmatprep.subr.bf16.mxu0 %v2686
  %3541 = vmatpush1.bf16.msra.mxu0 %v2685
  %3542 = vmatprep.subr.bf16.mxu0 %v2690
  %3543 = vmatpush1.bf16.msra.mxu0 %v2689
  %3544 = vmatprep.subr.bf16.mxu0 %v2694
  %3545 = vmatpush1.bf16.msra.mxu0 %v2693
  %3546 = vmatprep.subr.bf16.mxu0 %v2698
  %3547 = vmatpush1.bf16.msra.mxu0 %v2697
  %3548 = vmatprep.subr.bf16.mxu0 %v2702
  %3549 = vmatpush1.bf16.msra.mxu0 %v2701
  %3550 = vmatprep.mubr.bf16.mxu0 %v640
  %3551 = vmatmul.mubr.bf16.gmra.mrb[0].mxu0 %v639
  %v3552 = vpop.f32.mrb[0].mxu0
  %v3553 = vadd.f32 %v3510, %v3552
  %v3554 = vpop.f32.mrb[0].mxu0
  %v3555 = vadd.f32 %v3512, %v3554
  %v3556 = vpop.f32.mrb[0].mxu0
  %v3557 = vadd.f32 %v3514, %v3556
  %v3558 = vpop.f32.mrb[0].mxu0
  %v3559 = vadd.f32 %v3516, %v3558
  %3560 = vdwg.mxu0
  %3561 = vmatprep.subr.bf16.mxu0 %v2196
  %3562 = vmatpush1.bf16.msra.mxu0 %v2195
  %3563 = vmatprep.subr.bf16.mxu0 %v2200
  %3564 = vmatpush1.bf16.msra.mxu0 %v2199
  %3565 = vmatprep.subr.bf16.mxu0 %v2204
  %3566 = vmatpush1.bf16.msra.mxu0 %v2203
  %3567 = vmatprep.subr.bf16.mxu0 %v2208
  %3568 = vmatpush1.bf16.msra.mxu0 %v2207
  %3569 = vmatprep.subr.bf16.mxu0 %v2212
  %3570 = vmatpush1.bf16.msra.mxu0 %v2211
  %3571 = vmatprep.subr.bf16.mxu0 %v2216
  %3572 = vmatpush1.bf16.msra.mxu0 %v2215
  %3573 = vmatprep.subr.bf16.mxu0 %v2220
  %3574 = vmatpush1.bf16.msra.mxu0 %v2219
  %3575 = vmatprep.subr.bf16.mxu0 %v2224
  %3576 = vmatpush1.bf16.msra.mxu0 %v2223
  %3577 = vmatprep.subr.bf16.mxu0 %v2228
  %3578 = vmatpush1.bf16.msra.mxu0 %v2227
  %3579 = vmatprep.subr.bf16.mxu0 %v2232
  %3580 = vmatpush1.bf16.msra.mxu0 %v2231
  %3581 = vmatprep.subr.bf16.mxu0 %v2236
  %3582 = vmatpush1.bf16.msra.mxu0 %v2235
  %3583 = vmatprep.subr.bf16.mxu0 %v2240
  %3584 = vmatpush1.bf16.msra.mxu0 %v2239
  %3585 = vmatprep.subr.bf16.mxu0 %v2244
  %3586 = vmatpush1.bf16.msra.mxu0 %v2243
  %3587 = vmatprep.subr.bf16.mxu0 %v2248
  %3588 = vmatpush1.bf16.msra.mxu0 %v2247
  %3589 = vmatprep.subr.bf16.mxu0 %v2252
  %3590 = vmatpush1.bf16.msra.mxu0 %v2251
  %3591 = vmatprep.subr.bf16.mxu0 %v2256
  %3592 = vmatpush1.bf16.msra.mxu0 %v2255
  %3593 = vmatprep.mubr.bf16.mxu0 %v626
  %3594 = vmatmul.mubr.bf16.gmra.mrb[0].mxu0 %v625
  %v3595 = vpop.f32.mrb[0].mxu0
  %v3596 = vadd.f32 %v568, %v3595
  %v3597 = vpop.f32.mrb[0].mxu0
  %v3598 = vadd.f32 %v572, %v3597
  %v3599 = vpop.f32.mrb[0].mxu0
  %v3600 = vadd.f32 %v568, %v3599
  %v3601 = vpop.f32.mrb[0].mxu0
  %v3602 = vadd.f32 %v572, %v3601
  %3603 = vdwg.mxu0
  %3604 = vmatprep.subr.bf16.mxu0 %v2260
  %3605 = vmatpush1.bf16.msra.mxu0 %v2259
  %3606 = vmatprep.subr.bf16.mxu0 %v2264
  %3607 = vmatpush1.bf16.msra.mxu0 %v2263
  %3608 = vmatprep.subr.bf16.mxu0 %v2268
  %3609 = vmatpush1.bf16.msra.mxu0 %v2267
  %3610 = vmatprep.subr.bf16.mxu0 %v2272
  %3611 = vmatpush1.bf16.msra.mxu0 %v2271
  %3612 = vmatprep.subr.bf16.mxu0 %v2276
  %3613 = vmatpush1.bf16.msra.mxu0 %v2275
  %3614 = vmatprep.subr.bf16.mxu0 %v2280
  %3615 = vmatpush1.bf16.msra.mxu0 %v2279
  %3616 = vmatprep.subr.bf16.mxu0 %v2284
  %3617 = vmatpush1.bf16.msra.mxu0 %v2283
  %3618 = vmatprep.subr.bf16.mxu0 %v2288
  %3619 = vmatpush1.bf16.msra.mxu0 %v2287
  %3620 = vmatprep.subr.bf16.mxu0 %v2292
  %3621 = vmatpush1.bf16.msra.mxu0 %v2291
  %3622 = vmatprep.subr.bf16.mxu0 %v2296
  %3623 = vmatpush1.bf16.msra.mxu0 %v2295
  %3624 = vmatprep.subr.bf16.mxu0 %v2300
  %3625 = vmatpush1.bf16.msra.mxu0 %v2299
  %3626 = vmatprep.subr.bf16.mxu0 %v2304
  %3627 = vmatpush1.bf16.msra.mxu0 %v2303
  %3628 = vmatprep.subr.bf16.mxu0 %v2308
  %3629 = vmatpush1.bf16.msra.mxu0 %v2307
  %3630 = vmatprep.subr.bf16.mxu0 %v2312
  %3631 = vmatpush1.bf16.msra.mxu0 %v2311
  %3632 = vmatprep.subr.bf16.mxu0 %v2316
  %3633 = vmatpush1.bf16.msra.mxu0 %v2315
  %3634 = vmatprep.subr.bf16.mxu0 %v2320
  %3635 = vmatpush1.bf16.msra.mxu0 %v2319
  %3636 = vmatprep.mubr.bf16.mxu0 %v628
  %3637 = vmatmul.mubr.bf16.gmra.mrb[0].mxu0 %v627
  %v3638 = vpop.f32.mrb[0].mxu0
  %v3639 = vadd.f32 %v3596, %v3638
  %v3640 = vpop.f32.mrb[0].mxu0
  %v3641 = vadd.f32 %v3598, %v3640
  %v3642 = vpop.f32.mrb[0].mxu0
  %v3643 = vadd.f32 %v3600, %v3642
  %v3644 = vpop.f32.mrb[0].mxu0
  %v3645 = vadd.f32 %v3602, %v3644
  %3646 = vdwg.mxu0
  %3647 = vmatprep.subr.bf16.mxu0 %v2324
  %3648 = vmatpush1.bf16.msra.mxu0 %v2323
  %3649 = vmatprep.subr.bf16.mxu0 %v2328
  %3650 = vmatpush1.bf16.msra.mxu0 %v2327
  %3651 = vmatprep.subr.bf16.mxu0 %v2332
  %3652 = vmatpush1.bf16.msra.mxu0 %v2331
  %3653 = vmatprep.subr.bf16.mxu0 %v2336
  %3654 = vmatpush1.bf16.msra.mxu0 %v2335
  %3655 = vmatprep.subr.bf16.mxu0 %v2340
  %3656 = vmatpush1.bf16.msra.mxu0 %v2339
  %3657 = vmatprep.subr.bf16.mxu0 %v2344
  %3658 = vmatpush1.bf16.msra.mxu0 %v2343
  %3659 = vmatprep.subr.bf16.mxu0 %v2348
  %3660 = vmatpush1.bf16.msra.mxu0 %v2347
  %3661 = vmatprep.subr.bf16.mxu0 %v2352
  %3662 = vmatpush1.bf16.msra.mxu0 %v2351
  %3663 = vmatprep.subr.bf16.mxu0 %v2356
  %3664 = vmatpush1.bf16.msra.mxu0 %v2355
  %3665 = vmatprep.subr.bf16.mxu0 %v2360
  %3666 = vmatpush1.bf16.msra.mxu0 %v2359
  %3667 = vmatprep.subr.bf16.mxu0 %v2364
  %3668 = vmatpush1.bf16.msra.mxu0 %v2363
  %3669 = vmatprep.subr.bf16.mxu0 %v2368
  %3670 = vmatpush1.bf16.msra.mxu0 %v2367
  %3671 = vmatprep.subr.bf16.mxu0 %v2372
  %3672 = vmatpush1.bf16.msra.mxu0 %v2371
  %3673 = vmatprep.subr.bf16.mxu0 %v2376
  %3674 = vmatpush1.bf16.msra.mxu0 %v2375
  %3675 = vmatprep.subr.bf16.mxu0 %v2380
  %3676 = vmatpush1.bf16.msra.mxu0 %v2379
  %3677 = vmatprep.subr.bf16.mxu0 %v2384
  %3678 = vmatpush1.bf16.msra.mxu0 %v2383
  %3679 = vmatprep.mubr.bf16.mxu0 %v630
  %3680 = vmatmul.mubr.bf16.gmra.mrb[0].mxu0 %v629
  %v3681 = vpop.f32.mrb[0].mxu0
  %v3682 = vadd.f32 %v3639, %v3681
  %v3683 = vpop.f32.mrb[0].mxu0
  %v3684 = vadd.f32 %v3641, %v3683
  %v3685 = vpop.f32.mrb[0].mxu0
  %v3686 = vadd.f32 %v3643, %v3685
  %v3687 = vpop.f32.mrb[0].mxu0
  %v3688 = vadd.f32 %v3645, %v3687
  %3689 = vdwg.mxu0
  %3690 = vmatprep.subr.bf16.mxu0 %v2388
  %3691 = vmatpush1.bf16.msra.mxu0 %v2387
  %3692 = vmatprep.subr.bf16.mxu0 %v2392
  %3693 = vmatpush1.bf16.msra.mxu0 %v2391
  %3694 = vmatprep.subr.bf16.mxu0 %v2396
  %3695 = vmatpush1.bf16.msra.mxu0 %v2395
  %3696 = vmatprep.subr.bf16.mxu0 %v2400
  %3697 = vmatpush1.bf16.msra.mxu0 %v2399
  %3698 = vmatprep.subr.bf16.mxu0 %v2404
  %3699 = vmatpush1.bf16.msra.mxu0 %v2403
  %3700 = vmatprep.subr.bf16.mxu0 %v2408
  %3701 = vmatpush1.bf16.msra.mxu0 %v2407
  %3702 = vmatprep.subr.bf16.mxu0 %v2412
  %3703 = vmatpush1.bf16.msra.mxu0 %v2411
  %3704 = vmatprep.subr.bf16.mxu0 %v2416
  %3705 = vmatpush1.bf16.msra.mxu0 %v2415
  %3706 = vmatprep.subr.bf16.mxu0 %v2420
  %3707 = vmatpush1.bf16.msra.mxu0 %v2419
  %3708 = vmatprep.subr.bf16.mxu0 %v2424
  %3709 = vmatpush1.bf16.msra.mxu0 %v2423
  %3710 = vmatprep.subr.bf16.mxu0 %v2428
  %3711 = vmatpush1.bf16.msra.mxu0 %v2427
  %3712 = vmatprep.subr.bf16.mxu0 %v2432
  %3713 = vmatpush1.bf16.msra.mxu0 %v2431
  %3714 = vmatprep.subr.bf16.mxu0 %v2436
  %3715 = vmatpush1.bf16.msra.mxu0 %v2435
  %3716 = vmatprep.subr.bf16.mxu0 %v2440
  %3717 = vmatpush1.bf16.msra.mxu0 %v2439
  %3718 = vmatprep.subr.bf16.mxu0 %v2444
  %3719 = vmatpush1.bf16.msra.mxu0 %v2443
  %3720 = vmatprep.subr.bf16.mxu0 %v2448
  %3721 = vmatpush1.bf16.msra.mxu0 %v2447
  %3722 = vmatprep.mubr.bf16.mxu0 %v632
  %3723 = vmatmul.mubr.bf16.gmra.mrb[0].mxu0 %v631
  %v3724 = vpop.f32.mrb[0].mxu0
  %v3725 = vadd.f32 %v3682, %v3724
  %v3726 = vpop.f32.mrb[0].mxu0
  %v3727 = vadd.f32 %v3684, %v3726
  %v3728 = vpop.f32.mrb[0].mxu0
  %v3729 = vadd.f32 %v3686, %v3728
  %v3730 = vpop.f32.mrb[0].mxu0
  %v3731 = vadd.f32 %v3688, %v3730
  %3732 = vdwg.mxu0
  %3733 = vmatprep.subr.bf16.mxu0 %v2452
  %3734 = vmatpush1.bf16.msra.mxu0 %v2451
  %3735 = vmatprep.subr.bf16.mxu0 %v2456
  %3736 = vmatpush1.bf16.msra.mxu0 %v2455
  %3737 = vmatprep.subr.bf16.mxu0 %v2460
  %3738 = vmatpush1.bf16.msra.mxu0 %v2459
  %3739 = vmatprep.subr.bf16.mxu0 %v2464
  %3740 = vmatpush1.bf16.msra.mxu0 %v2463
  %3741 = vmatprep.subr.bf16.mxu0 %v2468
  %3742 = vmatpush1.bf16.msra.mxu0 %v2467
  %3743 = vmatprep.subr.bf16.mxu0 %v2472
  %3744 = vmatpush1.bf16.msra.mxu0 %v2471
  %3745 = vmatprep.subr.bf16.mxu0 %v2476
  %3746 = vmatpush1.bf16.msra.mxu0 %v2475
  %3747 = vmatprep.subr.bf16.mxu0 %v2480
  %3748 = vmatpush1.bf16.msra.mxu0 %v2479
  %3749 = vmatprep.subr.bf16.mxu0 %v2484
  %3750 = vmatpush1.bf16.msra.mxu0 %v2483
  %3751 = vmatprep.subr.bf16.mxu0 %v2488
  %3752 = vmatpush1.bf16.msra.mxu0 %v2487
  %3753 = vmatprep.subr.bf16.mxu0 %v2492
  %3754 = vmatpush1.bf16.msra.mxu0 %v2491
  %3755 = vmatprep.subr.bf16.mxu0 %v2496
  %3756 = vmatpush1.bf16.msra.mxu0 %v2495
  %3757 = vmatprep.subr.bf16.mxu0 %v2500
  %3758 = vmatpush1.bf16.msra.mxu0 %v2499
  %3759 = vmatprep.subr.bf16.mxu0 %v2504
  %3760 = vmatpush1.bf16.msra.mxu0 %v2503
  %3761 = vmatprep.subr.bf16.mxu0 %v2508
  %3762 = vmatpush1.bf16.msra.mxu0 %v2507
  %3763 = vmatprep.subr.bf16.mxu0 %v2512
  %3764 = vmatpush1.bf16.msra.mxu0 %v2511
  %3765 = vmatprep.mubr.bf16.mxu0 %v634
  %3766 = vmatmul.mubr.bf16.gmra.mrb[0].mxu0 %v633
  %v3767 = vpop.f32.mrb[0].mxu0
  %v3768 = vadd.f32 %v3725, %v3767
  %v3769 = vpop.f32.mrb[0].mxu0
  %v3770 = vadd.f32 %v3727, %v3769
  %v3771 = vpop.f32.mrb[0].mxu0
  %v3772 = vadd.f32 %v3729, %v3771
  %v3773 = vpop.f32.mrb[0].mxu0
  %v3774 = vadd.f32 %v3731, %v3773
  %3775 = vdwg.mxu0
  %3776 = vmatprep.subr.bf16.mxu0 %v2516
  %3777 = vmatpush1.bf16.msra.mxu0 %v2515
  %3778 = vmatprep.subr.bf16.mxu0 %v2520
  %3779 = vmatpush1.bf16.msra.mxu0 %v2519
  %3780 = vmatprep.subr.bf16.mxu0 %v2524
  %3781 = vmatpush1.bf16.msra.mxu0 %v2523
  %3782 = vmatprep.subr.bf16.mxu0 %v2528
  %3783 = vmatpush1.bf16.msra.mxu0 %v2527
  %3784 = vmatprep.subr.bf16.mxu0 %v2532
  %3785 = vmatpush1.bf16.msra.mxu0 %v2531
  %3786 = vmatprep.subr.bf16.mxu0 %v2536
  %3787 = vmatpush1.bf16.msra.mxu0 %v2535
  %3788 = vmatprep.subr.bf16.mxu0 %v2540
  %3789 = vmatpush1.bf16.msra.mxu0 %v2539
  %3790 = vmatprep.subr.bf16.mxu0 %v2544
  %3791 = vmatpush1.bf16.msra.mxu0 %v2543
  %3792 = vmatprep.subr.bf16.mxu0 %v2548
  %3793 = vmatpush1.bf16.msra.mxu0 %v2547
  %3794 = vmatprep.subr.bf16.mxu0 %v2552
  %3795 = vmatpush1.bf16.msra.mxu0 %v2551
  %3796 = vmatprep.subr.bf16.mxu0 %v2556
  %3797 = vmatpush1.bf16.msra.mxu0 %v2555
  %3798 = vmatprep.subr.bf16.mxu0 %v2560
  %3799 = vmatpush1.bf16.msra.mxu0 %v2559
  %3800 = vmatprep.subr.bf16.mxu0 %v2564
  %3801 = vmatpush1.bf16.msra.mxu0 %v2563
  %3802 = vmatprep.subr.bf16.mxu0 %v2568
  %3803 = vmatpush1.bf16.msra.mxu0 %v2567
  %3804 = vmatprep.subr.bf16.mxu0 %v2572
  %3805 = vmatpush1.bf16.msra.mxu0 %v2571
  %3806 = vmatprep.subr.bf16.mxu0 %v2576
  %3807 = vmatpush1.bf16.msra.mxu0 %v2575
  %3808 = vmatprep.mubr.bf16.mxu0 %v636
  %3809 = vmatmul.mubr.bf16.gmra.mrb[0].mxu0 %v635
  %v3810 = vpop.f32.mrb[0].mxu0
  %v3811 = vadd.f32 %v3768, %v3810
  %v3812 = vpop.f32.mrb[0].mxu0
  %v3813 = vadd.f32 %v3770, %v3812
  %v3814 = vpop.f32.mrb[0].mxu0
  %v3815 = vadd.f32 %v3772, %v3814
  %v3816 = vpop.f32.mrb[0].mxu0
  %v3817 = vadd.f32 %v3774, %v3816
  %3818 = vdwg.mxu0
  %3819 = vmatprep.subr.bf16.mxu0 %v2580
  %3820 = vmatpush1.bf16.msra.mxu0 %v2579
  %3821 = vmatprep.subr.bf16.mxu0 %v2584
  %3822 = vmatpush1.bf16.msra.mxu0 %v2583
  %3823 = vmatprep.subr.bf16.mxu0 %v2588
  %3824 = vmatpush1.bf16.msra.mxu0 %v2587
  %3825 = vmatprep.subr.bf16.mxu0 %v2592
  %3826 = vmatpush1.bf16.msra.mxu0 %v2591
  %3827 = vmatprep.subr.bf16.mxu0 %v2596
  %3828 = vmatpush1.bf16.msra.mxu0 %v2595
  %3829 = vmatprep.subr.bf16.mxu0 %v2600
  %3830 = vmatpush1.bf16.msra.mxu0 %v2599
  %3831 = vmatprep.subr.bf16.mxu0 %v2604
  %3832 = vmatpush1.bf16.msra.mxu0 %v2603
  %3833 = vmatprep.subr.bf16.mxu0 %v2608
  %3834 = vmatpush1.bf16.msra.mxu0 %v2607
  %3835 = vmatprep.subr.bf16.mxu0 %v2612
  %3836 = vmatpush1.bf16.msra.mxu0 %v2611
  %3837 = vmatprep.subr.bf16.mxu0 %v2616
  %3838 = vmatpush1.bf16.msra.mxu0 %v2615
  %3839 = vmatprep.subr.bf16.mxu0 %v2620
  %3840 = vmatpush1.bf16.msra.mxu0 %v2619
  %3841 = vmatprep.subr.bf16.mxu0 %v2624
  %3842 = vmatpush1.bf16.msra.mxu0 %v2623
  %3843 = vmatprep.subr.bf16.mxu0 %v2628
  %3844 = vmatpush1.bf16.msra.mxu0 %v2627
  %3845 = vmatprep.subr.bf16.mxu0 %v2632
  %3846 = vmatpush1.bf16.msra.mxu0 %v2631
  %3847 = vmatprep.subr.bf16.mxu0 %v2636
  %3848 = vmatpush1.bf16.msra.mxu0 %v2635
  %3849 = vmatprep.subr.bf16.mxu0 %v2640
  %3850 = vmatpush1.bf16.msra.mxu0 %v2639
  %3851 = vmatprep.mubr.bf16.mxu0 %v638
  %3852 = vmatmul.mubr.bf16.gmra.mrb[0].mxu0 %v637
  %v3853 = vpop.f32.mrb[0].mxu0
  %v3854 = vadd.f32 %v3811, %v3853
  %v3855 = vpop.f32.mrb[0].mxu0
  %v3856 = vadd.f32 %v3813, %v3855
  %v3857 = vpop.f32.mrb[0].mxu0
  %v3858 = vadd.f32 %v3815, %v3857
  %v3859 = vpop.f32.mrb[0].mxu0
  %v3860 = vadd.f32 %v3817, %v3859
  %3861 = vdwg.mxu0
  %3862 = vmatprep.subr.bf16.mxu0 %v2644
  %3863 = vmatpush1.bf16.msra.mxu0 %v2643
  %3864 = vmatprep.subr.bf16.mxu0 %v2648
  %3865 = vmatpush1.bf16.msra.mxu0 %v2647
  %3866 = vmatprep.subr.bf16.mxu0 %v2652
  %3867 = vmatpush1.bf16.msra.mxu0 %v2651
  %3868 = vmatprep.subr.bf16.mxu0 %v2656
  %3869 = vmatpush1.bf16.msra.mxu0 %v2655
  %3870 = vmatprep.subr.bf16.mxu0 %v2660
  %3871 = vmatpush1.bf16.msra.mxu0 %v2659
  %3872 = vmatprep.subr.bf16.mxu0 %v2664
  %3873 = vmatpush1.bf16.msra.mxu0 %v2663
  %3874 = vmatprep.subr.bf16.mxu0 %v2668
  %3875 = vmatpush1.bf16.msra.mxu0 %v2667
  %3876 = vmatprep.subr.bf16.mxu0 %v2672
  %3877 = vmatpush1.bf16.msra.mxu0 %v2671
  %3878 = vmatprep.subr.bf16.mxu0 %v2676
  %3879 = vmatpush1.bf16.msra.mxu0 %v2675
  %3880 = vmatprep.subr.bf16.mxu0 %v2680
  %3881 = vmatpush1.bf16.msra.mxu0 %v2679
  %3882 = vmatprep.subr.bf16.mxu0 %v2684
  %3883 = vmatpush1.bf16.msra.mxu0 %v2683
  %3884 = vmatprep.subr.bf16.mxu0 %v2688
  %3885 = vmatpush1.bf16.msra.mxu0 %v2687
  %3886 = vmatprep.subr.bf16.mxu0 %v2692
  %3887 = vmatpush1.bf16.msra.mxu0 %v2691
  %3888 = vmatprep.subr.bf16.mxu0 %v2696
  %3889 = vmatpush1.bf16.msra.mxu0 %v2695
  %3890 = vmatprep.subr.bf16.mxu0 %v2700
  %3891 = vmatpush1.bf16.msra.mxu0 %v2699
  %3892 = vmatprep.subr.bf16.mxu0 %v2704
  %3893 = vmatpush1.bf16.msra.mxu0 %v2703
  %3894 = vmatprep.mubr.bf16.mxu0 %v640
  %3895 = vmatmul.mubr.bf16.gmra.mrb[0].mxu0 %v639
  %v3896 = vpop.f32.mrb[0].mxu0
  %v3897 = vadd.f32 %v3854, %v3896
  %v3898 = vpop.f32.mrb[0].mxu0
  %v3899 = vadd.f32 %v3856, %v3898
  %v3900 = vpop.f32.mrb[0].mxu0
  %v3901 = vadd.f32 %v3858, %v3900
  %v3902 = vpop.f32.mrb[0].mxu0
  %v3903 = vadd.f32 %v3860, %v3902
  %3904 = vdwg.mxu0
  %v3905 = vmax.f32 %v3553, 0.0
  %v3906 = vmax.f32 %v3555, 0.0
  %v3907 = vmax.f32 %v3897, 0.0
  %v3908 = vmax.f32 %v3899, 0.0
  %v3909 = vmax.f32 %v3557, 0.0
  %v3910 = vmax.f32 %v3559, 0.0
  %v3911 = vmax.f32 %v3901, 0.0
  %v3912 = vmax.f32 %v3903, 0.0
  %v3913 = vpack.c.bf16 %v3909, %v3905
  %v3914 = vpack.c.bf16 %v3910, %v3906
  %v3915 = vpack.c.bf16 %v3911, %v3907
  %v3916 = vpack.c.bf16 %v3912, %v3908
  %v3917 = vld [vmem:[%s3] sm:$0xf]
  %v3918 = vld [vmem:[%s3 + $0x4] sm:$0xf]
  %v3919 = vld [vmem:[%s3 + $0x8] sm:$0xf]
  %v3920 = vld [vmem:[%s3 + $0xc] sm:$0xf]
  %v3921 = vld [vmem:[%s3 + $0x10] sm:$0xf]
  %v3922 = vld [vmem:[%s3 + $0x14] sm:$0xf]
  %v3923 = vld [vmem:[%s3 + $0x18] sm:$0xf]
  %v3924 = vld [vmem:[%s3 + $0x1c] sm:$0xf]
  %v3925 = vld [vmem:[%s3 + $0x20] sm:$0xf]
  %v3926 = vld [vmem:[%s3 + $0x24] sm:$0xf]
  %v3927 = vld [vmem:[%s3 + $0x28] sm:$0xf]
  %v3928 = vld [vmem:[%s3 + $0x2c] sm:$0xf]
  %v3929 = vld [vmem:[%s3 + $0x30] sm:$0xf]
  %v3930 = vld [vmem:[%s3 + $0x34] sm:$0xf]
  %v3931 = vld [vmem:[%s3 + $0x38] sm:$0xf]
  %v3932 = vld [vmem:[%s3 + $0x3c] sm:$0xf]
  %v3933 = vld [vmem:[%s3 + $0x40] sm:$0xf]
  %v3934 = vld [vmem:[%s3 + $0x44] sm:$0xf]
  %v3935 = vld [vmem:[%s3 + $0x48] sm:$0xf]
  %v3936 = vld [vmem:[%s3 + $0x4c] sm:$0xf]
  %v3937 = vld [vmem:[%s3 + $0x50] sm:$0xf]
  %v3938 = vld [vmem:[%s3 + $0x54] sm:$0xf]
  %v3939 = vld [vmem:[%s3 + $0x58] sm:$0xf]
  %v3940 = vld [vmem:[%s3 + $0x5c] sm:$0xf]
  %v3941 = vld [vmem:[%s3 + $0x60] sm:$0xf]
  %v3942 = vld [vmem:[%s3 + $0x64] sm:$0xf]
  %v3943 = vld [vmem:[%s3 + $0x68] sm:$0xf]
  %v3944 = vld [vmem:[%s3 + $0x6c] sm:$0xf]
  %v3945 = vld [vmem:[%s3 + $0x70] sm:$0xf]
  %v3946 = vld [vmem:[%s3 + $0x74] sm:$0xf]
  %v3947 = vld [vmem:[%s3 + $0x78] sm:$0xf]
  %v3948 = vld [vmem:[%s3 + $0x7c] sm:$0xf]
  %v3949 = vld [vmem:[%s3 + $0x80] sm:$0xf]
  %v3950 = vld [vmem:[%s3 + $0x84] sm:$0xf]
  %v3951 = vld [vmem:[%s3 + $0x88] sm:$0xf]
  %v3952 = vld [vmem:[%s3 + $0x8c] sm:$0xf]
  %v3953 = vld [vmem:[%s3 + $0x90] sm:$0xf]
  %v3954 = vld [vmem:[%s3 + $0x94] sm:$0xf]
  %v3955 = vld [vmem:[%s3 + $0x98] sm:$0xf]
  %v3956 = vld [vmem:[%s3 + $0x9c] sm:$0xf]
  %v3957 = vld [vmem:[%s3 + $0xa0] sm:$0xf]
  %v3958 = vld [vmem:[%s3 + $0xa4] sm:$0xf]
  %v3959 = vld [vmem:[%s3 + $0xa8] sm:$0xf]
  %v3960 = vld [vmem:[%s3 + $0xac] sm:$0xf]
  %v3961 = vld [vmem:[%s3 + $0xb0] sm:$0xf]
  %v3962 = vld [vmem:[%s3 + $0xb4] sm:$0xf]
  %v3963 = vld [vmem:[%s3 + $0xb8] sm:$0xf]
  %v3964 = vld [vmem:[%s3 + $0xbc] sm:$0xf]
  %v3965 = vld [vmem:[%s3 + $0xc0] sm:$0xf]
  %v3966 = vld [vmem:[%s3 + $0xc4] sm:$0xf]
  %v3967 = vld [vmem:[%s3 + $0xc8] sm:$0xf]
  %v3968 = vld [vmem:[%s3 + $0xcc] sm:$0xf]
  %v3969 = vld [vmem:[%s3 + $0xd0] sm:$0xf]
  %v3970 = vld [vmem:[%s3 + $0xd4] sm:$0xf]
  %v3971 = vld [vmem:[%s3 + $0xd8] sm:$0xf]
  %v3972 = vld [vmem:[%s3 + $0xdc] sm:$0xf]
  %v3973 = vld [vmem:[%s3 + $0xe0] sm:$0xf]
  %v3974 = vld [vmem:[%s3 + $0xe4] sm:$0xf]
  %v3975 = vld [vmem:[%s3 + $0xe8] sm:$0xf]
  %v3976 = vld [vmem:[%s3 + $0xec] sm:$0xf]
  %v3977 = vld [vmem:[%s3 + $0xf0] sm:$0xf]
  %v3978 = vld [vmem:[%s3 + $0xf4] sm:$0xf]
  %v3979 = vld [vmem:[%s3 + $0xf8] sm:$0xf]
  %v3980 = vld [vmem:[%s3 + $0xfc] sm:$0xf]
  %v3981 = vld [vmem:[%s4] sm:$0x1]
  %v3983 = vlaneseq
  %v3984 = vshrl.u32 %v3983, 7
  %v3985 = vsub.s32 0, %v3984
  %v3986 = vrot.slane %v3981, %v3985
  %v4052 = vunpack.c.l.b16 %v3917
  %v4053 = vunpack.c.l.b16 %v3918
  %v4054 = vunpack.c.l.b16 %v3919
  %v4055 = vunpack.c.l.b16 %v3920
  %v4056 = vunpack.c.l.b16 %v3921
  %v4057 = vunpack.c.l.b16 %v3922
  %v4058 = vunpack.c.l.b16 %v3923
  %v4059 = vunpack.c.l.b16 %v3924
  %v4060 = vunpack.c.l.b16 %v3925
  %v4061 = vunpack.c.l.b16 %v3926
  %v4062 = vunpack.c.l.b16 %v3927
  %v4063 = vunpack.c.l.b16 %v3928
  %v4064 = vunpack.c.l.b16 %v3929
  %v4065 = vunpack.c.l.b16 %v3930
  %v4066 = vunpack.c.l.b16 %v3931
  %v4067 = vunpack.c.l.b16 %v3932
  %v4068 = vunpack.c.l.b16 %v3933
  %v4069 = vunpack.c.l.b16 %v3934
  %v4070 = vunpack.c.l.b16 %v3935
  %v4071 = vunpack.c.l.b16 %v3936
  %v4072 = vunpack.c.l.b16 %v3937
  %v4073 = vunpack.c.l.b16 %v3938
  %v4074 = vunpack.c.l.b16 %v3939
  %v4075 = vunpack.c.l.b16 %v3940
  %v4076 = vunpack.c.l.b16 %v3941
  %v4077 = vunpack.c.l.b16 %v3942
  %v4078 = vunpack.c.l.b16 %v3943
  %v4079 = vunpack.c.l.b16 %v3944
  %v4080 = vunpack.c.l.b16 %v3945
  %v4081 = vunpack.c.l.b16 %v3946
  %v4082 = vunpack.c.l.b16 %v3947
  %v4083 = vunpack.c.l.b16 %v3948
  %v4084 = vunpack.c.l.b16 %v3949
  %v4085 = vunpack.c.l.b16 %v3950
  %v4086 = vunpack.c.l.b16 %v3951
  %v4087 = vunpack.c.l.b16 %v3952
  %v4088 = vunpack.c.l.b16 %v3953
  %v4089 = vunpack.c.l.b16 %v3954
  %v4090 = vunpack.c.l.b16 %v3955
  %v4091 = vunpack.c.l.b16 %v3956
  %v4092 = vunpack.c.l.b16 %v3957
  %v4093 = vunpack.c.l.b16 %v3958
  %v4094 = vunpack.c.l.b16 %v3959
  %v4095 = vunpack.c.l.b16 %v3960
  %v4096 = vunpack.c.l.b16 %v3961
  %v4097 = vunpack.c.l.b16 %v3962
  %v4098 = vunpack.c.l.b16 %v3963
  %v4099 = vunpack.c.l.b16 %v3964
  %v4100 = vunpack.c.l.b16 %v3965
  %v4101 = vunpack.c.l.b16 %v3966
  %v4102 = vunpack.c.l.b16 %v3967
  %v4103 = vunpack.c.l.b16 %v3968
  %v4104 = vunpack.c.l.b16 %v3969
  %v4105 = vunpack.c.l.b16 %v3970
  %v4106 = vunpack.c.l.b16 %v3971
  %v4107 = vunpack.c.l.b16 %v3972
  %v4108 = vunpack.c.l.b16 %v3973
  %v4109 = vunpack.c.l.b16 %v3974
  %v4110 = vunpack.c.l.b16 %v3975
  %v4111 = vunpack.c.l.b16 %v3976
  %v4112 = vunpack.c.l.b16 %v3977
  %v4113 = vunpack.c.l.b16 %v3978
  %v4114 = vunpack.c.l.b16 %v3979
  %v4115 = vunpack.c.l.b16 %v3980
  %v4116 = vpack.c.b16 %v4053, %v4052
  %v4117 = vpack.c.b16 %v4055, %v4054
  %v4118 = vpack.c.b16 %v4057, %v4056
  %v4119 = vpack.c.b16 %v4059, %v4058
  %v4120 = vpack.c.b16 %v4061, %v4060
  %v4121 = vpack.c.b16 %v4063, %v4062
  %v4122 = vpack.c.b16 %v4065, %v4064
  %v4123 = vpack.c.b16 %v4067, %v4066
  %v4124 = vpack.c.b16 %v4069, %v4068
  %v4125 = vpack.c.b16 %v4071, %v4070
  %v4126 = vpack.c.b16 %v4073, %v4072
  %v4127 = vpack.c.b16 %v4075, %v4074
  %v4128 = vpack.c.b16 %v4077, %v4076
  %v4129 = vpack.c.b16 %v4079, %v4078
  %v4130 = vpack.c.b16 %v4081, %v4080
  %v4131 = vpack.c.b16 %v4083, %v4082
  %v4132 = vpack.c.b16 %v4085, %v4084
  %v4133 = vpack.c.b16 %v4087, %v4086
  %v4134 = vpack.c.b16 %v4089, %v4088
  %v4135 = vpack.c.b16 %v4091, %v4090
  %v4136 = vpack.c.b16 %v4093, %v4092
  %v4137 = vpack.c.b16 %v4095, %v4094
  %v4138 = vpack.c.b16 %v4097, %v4096
  %v4139 = vpack.c.b16 %v4099, %v4098
  %v4140 = vpack.c.b16 %v4101, %v4100
  %v4141 = vpack.c.b16 %v4103, %v4102
  %v4142 = vpack.c.b16 %v4105, %v4104
  %v4143 = vpack.c.b16 %v4107, %v4106
  %v4144 = vpack.c.b16 %v4109, %v4108
  %v4145 = vpack.c.b16 %v4111, %v4110
  %v4146 = vpack.c.b16 %v4113, %v4112
  %v4147 = vpack.c.b16 %v4115, %v4114
  %4180 = vmatprep.subr.bf16.mxu0 0
  %4181 = vmatpush1.bf16.msra.mxu0 %v4116
  %4182 = vmatprep.subr.bf16.mxu0 0
  %4183 = vmatpush1.bf16.msra.mxu0 %v4117
  %4184 = vmatprep.subr.bf16.mxu0 0
  %4185 = vmatpush1.bf16.msra.mxu0 %v4118
  %4186 = vmatprep.subr.bf16.mxu0 0
  %4187 = vmatpush1.bf16.msra.mxu0 %v4119
  %4188 = vmatprep.subr.bf16.mxu0 0
  %4189 = vmatpush1.bf16.msra.mxu0 %v4120
  %4190 = vmatprep.subr.bf16.mxu0 0
  %4191 = vmatpush1.bf16.msra.mxu0 %v4121
  %4192 = vmatprep.subr.bf16.mxu0 0
  %4193 = vmatpush1.bf16.msra.mxu0 %v4122
  %4194 = vmatprep.subr.bf16.mxu0 0
  %4195 = vmatpush1.bf16.msra.mxu0 %v4123
  %4196 = vmatprep.subr.bf16.mxu0 0
  %4197 = vmatpush1.bf16.msra.mxu0 %v4124
  %4198 = vmatprep.subr.bf16.mxu0 0
  %4199 = vmatpush1.bf16.msra.mxu0 %v4125
  %4200 = vmatprep.subr.bf16.mxu0 0
  %4201 = vmatpush1.bf16.msra.mxu0 %v4126
  %4202 = vmatprep.subr.bf16.mxu0 0
  %4203 = vmatpush1.bf16.msra.mxu0 %v4127
  %4204 = vmatprep.subr.bf16.mxu0 0
  %4205 = vmatpush1.bf16.msra.mxu0 %v4128
  %4206 = vmatprep.subr.bf16.mxu0 0
  %4207 = vmatpush1.bf16.msra.mxu0 %v4129
  %4208 = vmatprep.subr.bf16.mxu0 0
  %4209 = vmatpush1.bf16.msra.mxu0 %v4130
  %4210 = vmatprep.subr.bf16.mxu0 0
  %4211 = vmatpush1.bf16.msra.mxu0 %v4131
  %4212 = vmatprep.mubr.bf16.mxu0 %v3914
  %4213 = vmatmul.mubr.bf16.gmra.mrb[0].mxu0 %v3913
  %v4214 = vpop.f32.mrb[0].mxu0
  %v4215 = vadd.f32 %v3986, %v4214
  %v4216 = vpop.f32.mrb[0].mxu0
  %v4217 = vpop.f32.mrb[0].mxu0
  %v4218 = vadd.f32 %v3986, %v4217
  %v4219 = vpop.f32.mrb[0].mxu0
  %4220 = vdwg.mxu0
  %4221 = vmatprep.subr.bf16.mxu0 0
  %4222 = vmatpush1.bf16.msra.mxu0 %v4132
  %4223 = vmatprep.subr.bf16.mxu0 0
  %4224 = vmatpush1.bf16.msra.mxu0 %v4133
  %4225 = vmatprep.subr.bf16.mxu0 0
  %4226 = vmatpush1.bf16.msra.mxu0 %v4134
  %4227 = vmatprep.subr.bf16.mxu0 0
  %4228 = vmatpush1.bf16.msra.mxu0 %v4135
  %4229 = vmatprep.subr.bf16.mxu0 0
  %4230 = vmatpush1.bf16.msra.mxu0 %v4136
  %4231 = vmatprep.subr.bf16.mxu0 0
  %4232 = vmatpush1.bf16.msra.mxu0 %v4137
  %4233 = vmatprep.subr.bf16.mxu0 0
  %4234 = vmatpush1.bf16.msra.mxu0 %v4138
  %4235 = vmatprep.subr.bf16.mxu0 0
  %4236 = vmatpush1.bf16.msra.mxu0 %v4139
  %4237 = vmatprep.subr.bf16.mxu0 0
  %4238 = vmatpush1.bf16.msra.mxu0 %v4140
  %4239 = vmatprep.subr.bf16.mxu0 0
  %4240 = vmatpush1.bf16.msra.mxu0 %v4141
  %4241 = vmatprep.subr.bf16.mxu0 0
  %4242 = vmatpush1.bf16.msra.mxu0 %v4142
  %4243 = vmatprep.subr.bf16.mxu0 0
  %4244 = vmatpush1.bf16.msra.mxu0 %v4143
  %4245 = vmatprep.subr.bf16.mxu0 0
  %4246 = vmatpush1.bf16.msra.mxu0 %v4144
  %4247 = vmatprep.subr.bf16.mxu0 0
  %4248 = vmatpush1.bf16.msra.mxu0 %v4145
  %4249 = vmatprep.subr.bf16.mxu0 0
  %4250 = vmatpush1.bf16.msra.mxu0 %v4146
  %4251 = vmatprep.subr.bf16.mxu0 0
  %4252 = vmatpush1.bf16.msra.mxu0 %v4147
  %4253 = vmatprep.mubr.bf16.mxu0 %v3916
  %4254 = vmatmul.mubr.bf16.gmra.mrb[0].mxu0 %v3915
  %v4255 = vpop.f32.mrb[0].mxu0
  %v4256 = vadd.f32 %v4215, %v4255
  %v4257 = vpop.f32.mrb[0].mxu0
  %v4258 = vpop.f32.mrb[0].mxu0
  %v4259 = vadd.f32 %v4218, %v4258
  %v4260 = vpop.f32.mrb[0].mxu0
  %4261 = vdwg.mxu0
  %v4262 = vmax.f32 %v4256, 0.0
  %v4263 = vmax.f32 %v4259, 0.0
  %v4264 = vpack.c.bf16 %v4263, %v4262
  %v4265 = vld [vmem:[%s5] sm:$0xf]
  %v4266 = vld [vmem:[%s5 + $0x4] sm:$0xf]
  %v4267 = vld [vmem:[%s5 + $0x8] sm:$0xf]
  %v4268 = vld [vmem:[%s5 + $0xc] sm:$0xf]
  %v4269 = vld [vmem:[%s5 + $0x10] sm:$0xf]
  %v4270 = vld [vmem:[%s5 + $0x14] sm:$0xf]
  %v4271 = vld [vmem:[%s5 + $0x18] sm:$0xf]
  %v4272 = vld [vmem:[%s5 + $0x1c] sm:$0xf]
  %v4273 = vld [vmem:[%s5 + $0x20] sm:$0xf]
  %v4274 = vld [vmem:[%s5 + $0x24] sm:$0xf]
  %v4275 = vld [vmem:[%s5 + $0x28] sm:$0xf]
  %v4276 = vld [vmem:[%s5 + $0x2c] sm:$0xf]
  %v4277 = vld [vmem:[%s5 + $0x30] sm:$0xf]
  %v4278 = vld [vmem:[%s5 + $0x34] sm:$0xf]
  %v4279 = vld [vmem:[%s5 + $0x38] sm:$0xf]
  %v4280 = vld [vmem:[%s5 + $0x3c] sm:$0xf]
  %v4281 = vld [vmem:[%s6] sm:$0x1]
  %v4283 = vlaneseq
  %v4284 = vshrl.u32 %v4283, 7
  %v4285 = vsub.s32 0, %v4284
  %v4286 = vrot.slane %v4281, %v4285
  %v4304 = vunpack.c.l.b16 %v4265
  %v4305 = vunpack.c.l.b16 %v4266
  %v4306 = vunpack.c.l.b16 %v4267
  %v4307 = vunpack.c.l.b16 %v4268
  %v4308 = vunpack.c.l.b16 %v4269
  %v4309 = vunpack.c.l.b16 %v4270
  %v4310 = vunpack.c.l.b16 %v4271
  %v4311 = vunpack.c.l.b16 %v4272
  %v4312 = vunpack.c.l.b16 %v4273
  %v4313 = vunpack.c.l.b16 %v4274
  %v4314 = vunpack.c.l.b16 %v4275
  %v4315 = vunpack.c.l.b16 %v4276
  %v4316 = vunpack.c.l.b16 %v4277
  %v4317 = vunpack.c.l.b16 %v4278
  %v4318 = vunpack.c.l.b16 %v4279
  %v4319 = vunpack.c.l.b16 %v4280
  %v4320 = vpack.c.b16 %v4305, %v4304
  %v4321 = vpack.c.b16 %v4307, %v4306
  %v4322 = vpack.c.b16 %v4309, %v4308
  %v4323 = vpack.c.b16 %v4311, %v4310
  %v4324 = vpack.c.b16 %v4313, %v4312
  %v4325 = vpack.c.b16 %v4315, %v4314
  %v4326 = vpack.c.b16 %v4317, %v4316
  %v4327 = vpack.c.b16 %v4319, %v4318
  %4336 = vmatprep.subr.bf16.mxu0 0
  %4337 = vmatpush1.bf16.msra.mxu0 %v4320
  %4338 = vmatprep.subr.bf16.mxu0 0
  %4339 = vmatpush1.bf16.msra.mxu0 %v4321
  %4340 = vmatprep.subr.bf16.mxu0 0
  %4341 = vmatpush1.bf16.msra.mxu0 %v4322
  %4342 = vmatprep.subr.bf16.mxu0 0
  %4343 = vmatpush1.bf16.msra.mxu0 %v4323
  %4344 = vmatprep.subr.bf16.mxu0 0
  %4345 = vmatpush1.bf16.msra.mxu0 %v4324
  %4346 = vmatprep.subr.bf16.mxu0 0
  %4347 = vmatpush1.bf16.msra.mxu0 %v4325
  %4348 = vmatprep.subr.bf16.mxu0 0
  %4349 = vmatpush1.bf16.msra.mxu0 %v4326
  %4350 = vmatprep.subr.bf16.mxu0 0
  %4351 = vmatpush1.bf16.msra.mxu0 %v4327
  %4352 = vmatprep.subr.bf16.mxu0 0
  %4353 = vmatpush1.bf16.msra.mxu0 0
  %4354 = vmatprep.subr.bf16.mxu0 0
  %4355 = vmatpush1.bf16.msra.mxu0 0
  %4356 = vmatprep.subr.bf16.mxu0 0
  %4357 = vmatpush1.bf16.msra.mxu0 0
  %4358 = vmatprep.subr.bf16.mxu0 0
  %4359 = vmatpush1.bf16.msra.mxu0 0
  %4360 = vmatprep.subr.bf16.mxu0 0
  %4361 = vmatpush1.bf16.msra.mxu0 0
  %4362 = vmatprep.subr.bf16.mxu0 0
  %4363 = vmatpush1.bf16.msra.mxu0 0
  %4364 = vmatprep.subr.bf16.mxu0 0
  %4365 = vmatpush1.bf16.msra.mxu0 0
  %4366 = vmatprep.subr.bf16.mxu0 0
  %4367 = vmatpush1.bf16.msra.mxu0 0
  %4368 = vmatprep.mubr.bf16.mxu0 0
  %4369 = vmatmul.mubr.bf16.gmra.mrb[0].mxu0 %v4264
  %v4370 = vpop.f32.mrb[0].mxu0
  %v4371 = vadd.f32 %v4286, %v4370
  %v4372 = vpop.f32.mrb[0].mxu0
  %v4373 = vpop.f32.mrb[0].mxu0
  %v4374 = vadd.f32 %v4286, %v4373
  %v4375 = vpop.f32.mrb[0].mxu0
  %4376 = vdwg.mxu0
  %4377 = vst [vmem:[%s7] sm:$0xff] %v4371
  %4378 = vst [vmem:[%s7 + $0x8] sm:$0xff] %v4374
  // Predicated region
  $region30: #{model_forward.7} parent=0 // pred_check
    _
  $region31: #{model_forward.7} parent=0 // pred_check_branch
    %4380 = sbr.rel (0) target = $region33
  $region32: #{model_forward.7} parent=0 // pred_region
    _
  $region33: #{model_forward.7} parent=0 // pred_fallthru
    _
  // Predicated region
  $region34: #{model_forward.7} parent=0 // pred_check
    _
  $region35: #{model_forward.7} parent=0 // pred_check_branch
    %4382 = sbr.rel (0) target = $region37
  $region36: #{model_forward.7} parent=0 // pred_region
    _
  $region37: #{model_forward.7} parent=0 // pred_fallthru
    _

</llo_original>
